<compile_context>
chip_gen: v7x
topology: tpu7x:2x2x1
jax: 0.10.0
libtpu: 0.0.40
codegen_flags: <defaults>
</compile_context>

<pallas_src>
import math
import functools
import itertools

import numpy as np
import jax
import jax.numpy as jnp
from jax import lax
from jax.experimental import pallas as pl
from jax.experimental.pallas import tpu as pltpu

# tcnn hash primes (first prime is 1 so that coarse dims stay coherent)
PRIMES = (1, 2654435761, 805459861)


def _round_up(a, b):
    return ((a + b - 1) // b) * b


def _hashgrid_kernel(xt_ref, tables_ref, o_ref, *,
                     scales, resolutions, n_active, table_size,
                     n_features, n_levels, in_dims):
    D = in_dims
    F = n_features
    xt = xt_ref[...].astype(jnp.float32)               # (D, tile_n), lane-dense
    tile_n = xt.shape[1]

    for l in range(n_levels):
        if l >= n_active:
            # progressively masked-off level: no hashing / one-hot / matmul,
            # just zero its output rows (mask folded in statically).
            o_ref[l * F:(l + 1) * F, :] = jnp.zeros((F, tile_n), jnp.float32)
            continue

        scale = scales[l]
        res = resolutions[l]
        # static per-level choice: dense indexing if the full grid fits the table
        use_hash = (res ** D) > table_size
        K = table_size if use_hash else min(_round_up(res ** D, 128), table_size)

        # tcnn grid positioning: pos = x * scale + 0.5
        pos = xt * jnp.float32(scale) + jnp.float32(0.5)
        p0f = jnp.floor(pos)
        w = pos - p0f                                   # (D, tile_n)
        wm = 1.0 - w
        p0 = p0f.astype(jnp.int32)

        # per-dim / per-offset weight rows and index terms, computed ONCE per level
        wsel, terms = [], []
        stride = 1
        for d in range(D):
            wsel.append((wm[d:d + 1, :], w[d:d + 1, :]))          # each (1, tile_n)
            c0 = p0[d:d + 1, :]
            c1 = c0 + 1
            if use_hash:
                prime = jnp.uint32(PRIMES[d])
                terms.append((c0.astype(jnp.uint32) * prime,
                              c1.astype(jnp.uint32) * prime))
            else:
                terms.append((jnp.clip(c0, 0, res - 1) * stride,
                              jnp.clip(c1, 0, res - 1) * stride))
                stride *= res

        # fused weighted one-hot over all 2^D corners: W[k, n] = sum of the corner
        # weights of point n whose (hashed/dense) index equals k.  The add handles
        # hash collisions between corners exactly like the per-corner matmul sum.
        iota = lax.broadcasted_iota(jnp.int32, (K, tile_n), 0)
        wone = jnp.zeros((K, tile_n), jnp.float32)
        for offsets in itertools.product((0, 1), repeat=D):
            weight = wsel[0][offsets[0]]                # (1, tile_n)
            idx = terms[0][offsets[0]]
            for d in range(1, D):
                weight = weight * wsel[d][offsets[d]]
                if use_hash:
                    idx = idx ^ terms[d][offsets[d]]
                else:
                    idx = idx + terms[d][offsets[d]]
            if use_hash:
                idx = (idx & jnp.uint32(table_size - 1)).astype(jnp.int32)
            wone = wone + jnp.where(iota == idx, weight, 0.0)

        # single MXU pass per level: (F, K) @ (K, tile_n) -> (F, tile_n).
        # Slice the table through the Ref so dense levels only load K columns.
        table_l = tables_ref[l * F:(l + 1) * F, :K]
        feat = lax.dot_general(table_l, wone,
                               dimension_numbers=(((1,), (0,)), ((), ())),
                               preferred_element_type=jnp.float32)
        o_ref[l * F:(l + 1) * F, :] = feat


def progressive_band_hashgrid(x, tables, current_level, *, scales, resolutions,
                              table_size, n_features, tile_n=512):
    """x: (N, D) coords in [0,1]; tables: (L, F, table_size) params (native lane-dense
    layout); current_level: static Python int — progressive-band training state,
    consumed without any device->host sync (wrapper stays jittable)."""
    N, D = x.shape
    L = tables.shape[0]
    F = n_features
    out_dim = L * F
    n_active = int(min(max(int(current_level), 0), L))
    if n_active == 0 or N == 0:
        return jnp.zeros((N, out_dim), jnp.float32)

    n_pad = _round_up(N, tile_n)

    # lane-dense layouts: points (D, Npad); active tables flattened to (La*F, T)
    # (no F=2 -> 8 sublane padding, no per-step transpose of the parameters).
    x_t = jnp.zeros((D, n_pad), jnp.float32).at[:, :N].set(
        jnp.asarray(x, jnp.float32).T)
    tables_act = jnp.asarray(tables, jnp.float32)[:n_active].reshape(
        n_active * F, table_size)

    kernel = functools.partial(
        _hashgrid_kernel,
        scales=tuple(float(s) for s in scales),
        resolutions=tuple(int(r) for r in resolutions),
        n_active=n_active,
        table_size=int(table_size),
        n_features=int(F),
        n_levels=int(L),
        in_dims=int(D),
    )

    # TODO(synk): at tcnn-production table sizes (2^19+ entries) on v7x (64 MiB VMEM)
    # the all-levels-resident table block must be replaced by per-level streaming
    # (level grid axis or manual make_async_copy double-buffering).
    out_t = pl.pallas_call(
        kernel,
        out_shape=jax.ShapeDtypeStruct((out_dim, n_pad), jnp.float32),
        grid_spec=pltpu.PrefetchScalarGridSpec(
            num_scalar_prefetch=0,
            grid=(n_pad // tile_n,),
            in_specs=[
                pl.BlockSpec((D, tile_n), lambda i: (0, i)),                # points^T
                pl.BlockSpec((n_active * F, table_size), lambda i: (0, 0)),  # tables
            ],
            out_specs=pl.BlockSpec((out_dim, tile_n), lambda i: (0, i)),
        ),
        compiler_params=pltpu.CompilerParams(
            dimension_semantics=("parallel",),
            vmem_limit_bytes=32 * 1024 * 1024),
    )(x_t, tables_act)

    # TODO(synk): consumers that can take the (L*F, N) layout directly should skip
    # this transpose (pure layout plumbing / extra HBM pass for large N).
    return out_t[:, :N].T                               # (N, L*F)


def _reference(x, tables, mask, scales, resolutions, table_size, n_features):
    # pure-JAX reference with identical math (tables laid out (L, F, T))
    N, D = x.shape
    outs = []
    for l, (scale, res) in enumerate(zip(scales, resolutions)):
        pos = x * scale + 0.5
        p0 = jnp.floor(pos)
        w = pos - p0
        p0 = p0.astype(jnp.int32)
        use_hash = (res ** D) > table_size
        acc = jnp.zeros((N, n_features), jnp.float32)
        for offsets in itertools.product((0, 1), repeat=D):
            weight = jnp.ones((N, 1), jnp.float32)
            idx = jnp.zeros((N,), jnp.uint32 if use_hash else jnp.int32)
            stride = 1
            for d, off in enumerate(offsets):
                wd = w[:, d]
                weight = weight * (wd if off else 1.0 - wd)[:, None]
                cd = p0[:, d] + off
                if use_hash:
                    idx = idx ^ (cd.astype(jnp.uint32) * jnp.uint32(PRIMES[d]))
                else:
                    idx = idx + jnp.clip(cd, 0, res - 1) * stride
                    stride *= res
            if use_hash:
                idx = (idx & jnp.uint32(table_size - 1)).astype(jnp.int32)
            acc = acc + weight * jnp.take(tables[l], idx, axis=1).T
        outs.append(acc)
    return jnp.concatenate(outs, axis=-1) * mask[None, :]


if __name__ == "__main__":
    # config (small, consistent with a tcnn HashGrid encoding config)
    in_channels = 3
    n_levels = 4
    n_features_per_level = 2
    log2_hashmap_size = 10
    base_resolution = 4
    per_level_scale = 1.5
    table_size = 2 ** log2_hashmap_size

    # per-level scales / grid resolutions (tcnn convention)
    scales = [base_resolution * (per_level_scale ** l) - 1.0 for l in range(n_levels)]
    resolutions = [int(math.ceil(s)) + 1 for s in scales]

    key = jax.random.PRNGKey(0)
    kx, kt = jax.random.split(key)

    N = 1111                                            # tail padding + 3 grid steps
    x = jax.random.uniform(kx, (N, in_channels), dtype=jnp.float32)
    # tcnn initializes hash-table params uniformly in [-1e-4, 1e-4]; stored (L, F, T)
    tables = jax.random.uniform(kt, (n_levels, n_features_per_level, table_size),
                                dtype=jnp.float32, minval=-1e-4, maxval=1e-4)

    # progressive band: check both a partially-enabled and the fully-enabled state
    for current_level in (2, n_levels):
        out = progressive_band_hashgrid(
            x, tables, current_level,
            scales=scales, resolutions=resolutions,
            table_size=table_size, n_features=n_features_per_level,
            tile_n=512,
        )
        out = jax.block_until_ready(out)

        mask = np.zeros((n_levels * n_features_per_level,), np.float32)
        mask[: current_level * n_features_per_level] = 1.0
        ref = _reference(x, tables, jnp.asarray(mask), scales, resolutions,
                         table_size, n_features_per_level)
        np.testing.assert_allclose(np.asarray(out), np.asarray(ref),
                                   rtol=1e-5, atol=1e-7)

    # TODO(synk): update_step / current_level advancement is host-side training logic,
    # not part of the forward pass; it is consumed here as a static Python int.
    print("KERNEL_OK")
</pallas_src>

<mosaic_0001>
module attributes {stable_mosaic.version = 11 : i64} {
  func.func @_hashgrid_kernel(%arg0: i32, %arg1: memref<3x512xf32, #tpu.memory_space<vmem>>, %arg2: memref<4x1024xf32, #tpu.memory_space<vmem>>, %arg3: memref<8x512xf32, #tpu.memory_space<vmem>>) attributes {dimension_semantics = [#tpu.dimension_semantics<parallel>], iteration_bounds = array<i64: 3>, scalar_prefetch = 0 : i64, scratch_operands = 0 : i64, tpu.core_type = #tpu.core_type<tc>, window_params = [{transform_indices = @transform_0, window_bounds = array<i64: 3, 512>}, {pipeline_mode = #tpu.pipeline_mode<synchronous>, transform_indices = @transform_1, window_bounds = array<i64: 4, 1024>}, {transform_indices = @transform_2, window_bounds = array<i64: 8, 512>}]} {
    %c0 = arith.constant 0 : index
    %c0_0 = arith.constant 0 : index
    %0 = vector.load %arg1[%c0, %c0_0] : memref<3x512xf32, #tpu.memory_space<vmem>>, vector<3x512xf32>
    %cst = arith.constant 3.000000e+00 : f32
    %1 = vector.broadcast %cst : f32 to vector<3x512xf32>
    %2 = arith.mulf %0, %1 : vector<3x512xf32>
    %cst_1 = arith.constant 5.000000e-01 : f32
    %3 = vector.broadcast %cst_1 : f32 to vector<3x512xf32>
    %4 = arith.addf %2, %3 : vector<3x512xf32>
    %5 = math.floor %4 : vector<3x512xf32>
    %6 = arith.subf %4, %5 : vector<3x512xf32>
    %cst_2 = arith.constant 1.000000e+00 : f32
    %7 = vector.broadcast %cst_2 : f32 to vector<3x512xf32>
    %8 = arith.subf %7, %6 : vector<3x512xf32>
    %9 = arith.fptosi %5 : vector<3x512xf32> to vector<3x512xi32>
    %10 = vector.extract_strided_slice %8 {offsets = [0, 0], sizes = [1, 512], strides = [1, 1]} : vector<3x512xf32> to vector<1x512xf32>
    %11 = vector.extract_strided_slice %6 {offsets = [0, 0], sizes = [1, 512], strides = [1, 1]} : vector<3x512xf32> to vector<1x512xf32>
    %12 = vector.extract_strided_slice %9 {offsets = [0, 0], sizes = [1, 512], strides = [1, 1]} : vector<3x512xi32> to vector<1x512xi32>
    %c1_i32 = arith.constant 1 : i32
    %13 = vector.broadcast %c1_i32 : i32 to vector<1x512xi32>
    %14 = arith.addi %12, %13 : vector<1x512xi32>
    %c0_i32 = arith.constant 0 : i32
    %c3_i32 = arith.constant 3 : i32
    %15 = vector.broadcast %c0_i32 : i32 to vector<1x512xi32>
    %16 = arith.maxsi %15, %12 : vector<1x512xi32>
    %17 = vector.broadcast %c3_i32 : i32 to vector<1x512xi32>
    %18 = arith.minsi %17, %16 : vector<1x512xi32>
    %c1_i32_3 = arith.constant 1 : i32
    %19 = vector.broadcast %c1_i32_3 : i32 to vector<1x512xi32>
    %20 = arith.muli %18, %19 : vector<1x512xi32>
    %c0_i32_4 = arith.constant 0 : i32
    %c3_i32_5 = arith.constant 3 : i32
    %21 = vector.broadcast %c0_i32_4 : i32 to vector<1x512xi32>
    %22 = arith.maxsi %21, %14 : vector<1x512xi32>
    %23 = vector.broadcast %c3_i32_5 : i32 to vector<1x512xi32>
    %24 = arith.minsi %23, %22 : vector<1x512xi32>
    %c1_i32_6 = arith.constant 1 : i32
    %25 = vector.broadcast %c1_i32_6 : i32 to vector<1x512xi32>
    %26 = arith.muli %24, %25 : vector<1x512xi32>
    %27 = vector.extract_strided_slice %8 {offsets = [1, 0], sizes = [1, 512], strides = [1, 1]} : vector<3x512xf32> to vector<1x512xf32>
    %28 = vector.extract_strided_slice %6 {offsets = [1, 0], sizes = [1, 512], strides = [1, 1]} : vector<3x512xf32> to vector<1x512xf32>
    %29 = vector.extract_strided_slice %9 {offsets = [1, 0], sizes = [1, 512], strides = [1, 1]} : vector<3x512xi32> to vector<1x512xi32>
    %c1_i32_7 = arith.constant 1 : i32
    %30 = vector.broadcast %c1_i32_7 : i32 to vector<1x512xi32>
    %31 = arith.addi %29, %30 : vector<1x512xi32>
    %c0_i32_8 = arith.constant 0 : i32
    %c3_i32_9 = arith.constant 3 : i32
    %32 = vector.broadcast %c0_i32_8 : i32 to vector<1x512xi32>
    %33 = arith.maxsi %32, %29 : vector<1x512xi32>
    %34 = vector.broadcast %c3_i32_9 : i32 to vector<1x512xi32>
    %35 = arith.minsi %34, %33 : vector<1x512xi32>
    %c4_i32 = arith.constant 4 : i32
    %36 = vector.broadcast %c4_i32 : i32 to vector<1x512xi32>
    %37 = arith.muli %35, %36 : vector<1x512xi32>
    %c0_i32_10 = arith.constant 0 : i32
    %c3_i32_11 = arith.constant 3 : i32
    %38 = vector.broadcast %c0_i32_10 : i32 to vector<1x512xi32>
    %39 = arith.maxsi %38, %31 : vector<1x512xi32>
    %40 = vector.broadcast %c3_i32_11 : i32 to vector<1x512xi32>
    %41 = arith.minsi %40, %39 : vector<1x512xi32>
    %c4_i32_12 = arith.constant 4 : i32
    %42 = vector.broadcast %c4_i32_12 : i32 to vector<1x512xi32>
    %43 = arith.muli %41, %42 : vector<1x512xi32>
    %44 = vector.extract_strided_slice %8 {offsets = [2, 0], sizes = [1, 512], strides = [1, 1]} : vector<3x512xf32> to vector<1x512xf32>
    %45 = vector.extract_strided_slice %6 {offsets = [2, 0], sizes = [1, 512], strides = [1, 1]} : vector<3x512xf32> to vector<1x512xf32>
    %46 = vector.extract_strided_slice %9 {offsets = [2, 0], sizes = [1, 512], strides = [1, 1]} : vector<3x512xi32> to vector<1x512xi32>
    %c1_i32_13 = arith.constant 1 : i32
    %47 = vector.broadcast %c1_i32_13 : i32 to vector<1x512xi32>
    %48 = arith.addi %46, %47 : vector<1x512xi32>
    %c0_i32_14 = arith.constant 0 : i32
    %c3_i32_15 = arith.constant 3 : i32
    %49 = vector.broadcast %c0_i32_14 : i32 to vector<1x512xi32>
    %50 = arith.maxsi %49, %46 : vector<1x512xi32>
    %51 = vector.broadcast %c3_i32_15 : i32 to vector<1x512xi32>
    %52 = arith.minsi %51, %50 : vector<1x512xi32>
    %c16_i32 = arith.constant 16 : i32
    %53 = vector.broadcast %c16_i32 : i32 to vector<1x512xi32>
    %54 = arith.muli %52, %53 : vector<1x512xi32>
    %c0_i32_16 = arith.constant 0 : i32
    %c3_i32_17 = arith.constant 3 : i32
    %55 = vector.broadcast %c0_i32_16 : i32 to vector<1x512xi32>
    %56 = arith.maxsi %55, %48 : vector<1x512xi32>
    %57 = vector.broadcast %c3_i32_17 : i32 to vector<1x512xi32>
    %58 = arith.minsi %57, %56 : vector<1x512xi32>
    %c16_i32_18 = arith.constant 16 : i32
    %59 = vector.broadcast %c16_i32_18 : i32 to vector<1x512xi32>
    %60 = arith.muli %58, %59 : vector<1x512xi32>
    %61 = tpu.iota {dimensions = array<i32: 0>} : vector<128x512xi32>
    %cst_19 = arith.constant 0.000000e+00 : f32
    %62 = vector.broadcast %cst_19 : f32 to vector<128x512xf32>
    %63 = arith.mulf %10, %27 : vector<1x512xf32>
    %64 = arith.addi %20, %37 : vector<1x512xi32>
    %65 = arith.mulf %63, %44 : vector<1x512xf32>
    %66 = arith.addi %64, %54 : vector<1x512xi32>
    %67 = vector.broadcast %66 : vector<1x512xi32> to vector<128x512xi32>
    %68 = arith.cmpi eq, %61, %67 : vector<128x512xi32>
    %cst_20 = arith.constant 0.000000e+00 : f32
    %69 = vector.shape_cast %65 : vector<1x512xf32> to vector<1x512xf32>
    %70 = vector.broadcast %69 : vector<1x512xf32> to vector<128x512xf32>
    %71 = vector.broadcast %cst_20 : f32 to vector<128x512xf32>
    %72 = arith.select %68, %70, %71 : vector<128x512xi1>, vector<128x512xf32>
    %73 = arith.addf %62, %72 : vector<128x512xf32>
    %74 = arith.mulf %10, %27 : vector<1x512xf32>
    %75 = arith.addi %20, %37 : vector<1x512xi32>
    %76 = arith.mulf %74, %45 : vector<1x512xf32>
    %77 = arith.addi %75, %60 : vector<1x512xi32>
    %78 = vector.broadcast %77 : vector<1x512xi32> to vector<128x512xi32>
    %79 = arith.cmpi eq, %61, %78 : vector<128x512xi32>
    %cst_21 = arith.constant 0.000000e+00 : f32
    %80 = vector.shape_cast %76 : vector<1x512xf32> to vector<1x512xf32>
    %81 = vector.broadcast %80 : vector<1x512xf32> to vector<128x512xf32>
    %82 = vector.broadcast %cst_21 : f32 to vector<128x512xf32>
    %83 = arith.select %79, %81, %82 : vector<128x512xi1>, vector<128x512xf32>
    %84 = arith.addf %73, %83 : vector<128x512xf32>
    %85 = arith.mulf %10, %28 : vector<1x512xf32>
    %86 = arith.addi %20, %43 : vector<1x512xi32>
    %87 = arith.mulf %85, %44 : vector<1x512xf32>
    %88 = arith.addi %86, %54 : vector<1x512xi32>
    %89 = vector.broadcast %88 : vector<1x512xi32> to vector<128x512xi32>
    %90 = arith.cmpi eq, %61, %89 : vector<128x512xi32>
    %cst_22 = arith.constant 0.000000e+00 : f32
    %91 = vector.shape_cast %87 : vector<1x512xf32> to vector<1x512xf32>
    %92 = vector.broadcast %91 : vector<1x512xf32> to vector<128x512xf32>
    %93 = vector.broadcast %cst_22 : f32 to vector<128x512xf32>
    %94 = arith.select %90, %92, %93 : vector<128x512xi1>, vector<128x512xf32>
    %95 = arith.addf %84, %94 : vector<128x512xf32>
    %96 = arith.mulf %10, %28 : vector<1x512xf32>
    %97 = arith.addi %20, %43 : vector<1x512xi32>
    %98 = arith.mulf %96, %45 : vector<1x512xf32>
    %99 = arith.addi %97, %60 : vector<1x512xi32>
    %100 = vector.broadcast %99 : vector<1x512xi32> to vector<128x512xi32>
    %101 = arith.cmpi eq, %61, %100 : vector<128x512xi32>
    %cst_23 = arith.constant 0.000000e+00 : f32
    %102 = vector.shape_cast %98 : vector<1x512xf32> to vector<1x512xf32>
    %103 = vector.broadcast %102 : vector<1x512xf32> to vector<128x512xf32>
    %104 = vector.broadcast %cst_23 : f32 to vector<128x512xf32>
    %105 = arith.select %101, %103, %104 : vector<128x512xi1>, vector<128x512xf32>
    %106 = arith.addf %95, %105 : vector<128x512xf32>
    %107 = arith.mulf %11, %27 : vector<1x512xf32>
    %108 = arith.addi %26, %37 : vector<1x512xi32>
    %109 = arith.mulf %107, %44 : vector<1x512xf32>
    %110 = arith.addi %108, %54 : vector<1x512xi32>
    %111 = vector.broadcast %110 : vector<1x512xi32> to vector<128x512xi32>
    %112 = arith.cmpi eq, %61, %111 : vector<128x512xi32>
    %cst_24 = arith.constant 0.000000e+00 : f32
    %113 = vector.shape_cast %109 : vector<1x512xf32> to vector<1x512xf32>
    %114 = vector.broadcast %113 : vector<1x512xf32> to vector<128x512xf32>
    %115 = vector.broadcast %cst_24 : f32 to vector<128x512xf32>
    %116 = arith.select %112, %114, %115 : vector<128x512xi1>, vector<128x512xf32>
    %117 = arith.addf %106, %116 : vector<128x512xf32>
    %118 = arith.mulf %11, %27 : vector<1x512xf32>
    %119 = arith.addi %26, %37 : vector<1x512xi32>
    %120 = arith.mulf %118, %45 : vector<1x512xf32>
    %121 = arith.addi %119, %60 : vector<1x512xi32>
    %122 = vector.broadcast %121 : vector<1x512xi32> to vector<128x512xi32>
    %123 = arith.cmpi eq, %61, %122 : vector<128x512xi32>
    %cst_25 = arith.constant 0.000000e+00 : f32
    %124 = vector.shape_cast %120 : vector<1x512xf32> to vector<1x512xf32>
    %125 = vector.broadcast %124 : vector<1x512xf32> to vector<128x512xf32>
    %126 = vector.broadcast %cst_25 : f32 to vector<128x512xf32>
    %127 = arith.select %123, %125, %126 : vector<128x512xi1>, vector<128x512xf32>
    %128 = arith.addf %117, %127 : vector<128x512xf32>
    %129 = arith.mulf %11, %28 : vector<1x512xf32>
    %130 = arith.addi %26, %43 : vector<1x512xi32>
    %131 = arith.mulf %129, %44 : vector<1x512xf32>
    %132 = arith.addi %130, %54 : vector<1x512xi32>
    %133 = vector.broadcast %132 : vector<1x512xi32> to vector<128x512xi32>
    %134 = arith.cmpi eq, %61, %133 : vector<128x512xi32>
    %cst_26 = arith.constant 0.000000e+00 : f32
    %135 = vector.shape_cast %131 : vector<1x512xf32> to vector<1x512xf32>
    %136 = vector.broadcast %135 : vector<1x512xf32> to vector<128x512xf32>
    %137 = vector.broadcast %cst_26 : f32 to vector<128x512xf32>
    %138 = arith.select %134, %136, %137 : vector<128x512xi1>, vector<128x512xf32>
    %139 = arith.addf %128, %138 : vector<128x512xf32>
    %140 = arith.mulf %11, %28 : vector<1x512xf32>
    %141 = arith.addi %26, %43 : vector<1x512xi32>
    %142 = arith.mulf %140, %45 : vector<1x512xf32>
    %143 = arith.addi %141, %60 : vector<1x512xi32>
    %144 = vector.broadcast %143 : vector<1x512xi32> to vector<128x512xi32>
    %145 = arith.cmpi eq, %61, %144 : vector<128x512xi32>
    %cst_27 = arith.constant 0.000000e+00 : f32
    %146 = vector.shape_cast %142 : vector<1x512xf32> to vector<1x512xf32>
    %147 = vector.broadcast %146 : vector<1x512xf32> to vector<128x512xf32>
    %148 = vector.broadcast %cst_27 : f32 to vector<128x512xf32>
    %149 = arith.select %145, %147, %148 : vector<128x512xi1>, vector<128x512xf32>
    %150 = arith.addf %139, %149 : vector<128x512xf32>
    %c0_28 = arith.constant 0 : index
    %c0_29 = arith.constant 0 : index
    %151 = vector.load %arg2[%c0_28, %c0_29] : memref<4x1024xf32, #tpu.memory_space<vmem>>, vector<2x128xf32>
    %cst_30 = arith.constant dense<0.000000e+00> : vector<2x512xf32>
    %152 = tpu.matmul %151, %150, %cst_30 {dimension_numbers = #tpu.dot_dimension_numbers<[1], [0], [0], [1], [0, 0, 1, 1], [], []>} : vector<2x128xf32>, vector<128x512xf32>, vector<2x512xf32> -> vector<2x512xf32>
    %c0_31 = arith.constant 0 : index
    %c0_32 = arith.constant 0 : index
    %153 = vector.load %arg3[%c0_31, %c0_32] : memref<8x512xf32, #tpu.memory_space<vmem>>, vector<2x512xf32>
    tpu.vector_store %arg3[%c0_31, %c0_32], %152 {strides = array<i32>} : memref<8x512xf32, #tpu.memory_space<vmem>>, vector<2x512xf32>,
    %cst_33 = arith.constant 5.000000e+00 : f32
    %154 = vector.broadcast %cst_33 : f32 to vector<3x512xf32>
    %155 = arith.mulf %0, %154 : vector<3x512xf32>
    %cst_34 = arith.constant 5.000000e-01 : f32
    %156 = vector.broadcast %cst_34 : f32 to vector<3x512xf32>
    %157 = arith.addf %155, %156 : vector<3x512xf32>
    %158 = math.floor %157 : vector<3x512xf32>
    %159 = arith.subf %157, %158 : vector<3x512xf32>
    %cst_35 = arith.constant 1.000000e+00 : f32
    %160 = vector.broadcast %cst_35 : f32 to vector<3x512xf32>
    %161 = arith.subf %160, %159 : vector<3x512xf32>
    %162 = arith.fptosi %158 : vector<3x512xf32> to vector<3x512xi32>
    %163 = vector.extract_strided_slice %161 {offsets = [0, 0], sizes = [1, 512], strides = [1, 1]} : vector<3x512xf32> to vector<1x512xf32>
    %164 = vector.extract_strided_slice %159 {offsets = [0, 0], sizes = [1, 512], strides = [1, 1]} : vector<3x512xf32> to vector<1x512xf32>
    %165 = vector.extract_strided_slice %162 {offsets = [0, 0], sizes = [1, 512], strides = [1, 1]} : vector<3x512xi32> to vector<1x512xi32>
    %c1_i32_36 = arith.constant 1 : i32
    %166 = vector.broadcast %c1_i32_36 : i32 to vector<1x512xi32>
    %167 = arith.addi %165, %166 : vector<1x512xi32>
    %c0_i32_37 = arith.constant 0 : i32
    %c5_i32 = arith.constant 5 : i32
    %168 = vector.broadcast %c0_i32_37 : i32 to vector<1x512xi32>
    %169 = arith.maxsi %168, %165 : vector<1x512xi32>
    %170 = vector.broadcast %c5_i32 : i32 to vector<1x512xi32>
    %171 = arith.minsi %170, %169 : vector<1x512xi32>
    %c1_i32_38 = arith.constant 1 : i32
    %172 = vector.broadcast %c1_i32_38 : i32 to vector<1x512xi32>
    %173 = arith.muli %171, %172 : vector<1x512xi32>
    %c0_i32_39 = arith.constant 0 : i32
    %c5_i32_40 = arith.constant 5 : i32
    %174 = vector.broadcast %c0_i32_39 : i32 to vector<1x512xi32>
    %175 = arith.maxsi %174, %167 : vector<1x512xi32>
    %176 = vector.broadcast %c5_i32_40 : i32 to vector<1x512xi32>
    %177 = arith.minsi %176, %175 : vector<1x512xi32>
    %c1_i32_41 = arith.constant 1 : i32
    %178 = vector.broadcast %c1_i32_41 : i32 to vector<1x512xi32>
    %179 = arith.muli %177, %178 : vector<1x512xi32>
    %180 = vector.extract_strided_slice %161 {offsets = [1, 0], sizes = [1, 512], strides = [1, 1]} : vector<3x512xf32> to vector<1x512xf32>
    %181 = vector.extract_strided_slice %159 {offsets = [1, 0], sizes = [1, 512], strides = [1, 1]} : vector<3x512xf32> to vector<1x512xf32>
    %182 = vector.extract_strided_slice %162 {offsets = [1, 0], sizes = [1, 512], strides = [1, 1]} : vector<3x512xi32> to vector<1x512xi32>
    %c1_i32_42 = arith.constant 1 : i32
    %183 = vector.broadcast %c1_i32_42 : i32 to vector<1x512xi32>
    %184 = arith.addi %182, %183 : vector<1x512xi32>
    %c0_i32_43 = arith.constant 0 : i32
    %c5_i32_44 = arith.constant 5 : i32
    %185 = vector.broadcast %c0_i32_43 : i32 to vector<1x512xi32>
    %186 = arith.maxsi %185, %182 : vector<1x512xi32>
    %187 = vector.broadcast %c5_i32_44 : i32 to vector<1x512xi32>
    %188 = arith.minsi %187, %186 : vector<1x512xi32>
    %c6_i32 = arith.constant 6 : i32
    %189 = vector.broadcast %c6_i32 : i32 to vector<1x512xi32>
    %190 = arith.muli %188, %189 : vector<1x512xi32>
    %c0_i32_45 = arith.constant 0 : i32
    %c5_i32_46 = arith.constant 5 : i32
    %191 = vector.broadcast %c0_i32_45 : i32 to vector<1x512xi32>
    %192 = arith.maxsi %191, %184 : vector<1x512xi32>
    %193 = vector.broadcast %c5_i32_46 : i32 to vector<1x512xi32>
    %194 = arith.minsi %193, %192 : vector<1x512xi32>
    %c6_i32_47 = arith.constant 6 : i32
    %195 = vector.broadcast %c6_i32_47 : i32 to vector<1x512xi32>
    %196 = arith.muli %194, %195 : vector<1x512xi32>
    %197 = vector.extract_strided_slice %161 {offsets = [2, 0], sizes = [1, 512], strides = [1, 1]} : vector<3x512xf32> to vector<1x512xf32>
    %198 = vector.extract_strided_slice %159 {offsets = [2, 0], sizes = [1, 512], strides = [1, 1]} : vector<3x512xf32> to vector<1x512xf32>
    %199 = vector.extract_strided_slice %162 {offsets = [2, 0], sizes = [1, 512], strides = [1, 1]} : vector<3x512xi32> to vector<1x512xi32>
    %c1_i32_48 = arith.constant 1 : i32
    %200 = vector.broadcast %c1_i32_48 : i32 to vector<1x512xi32>
    %201 = arith.addi %199, %200 : vector<1x512xi32>
    %c0_i32_49 = arith.constant 0 : i32
    %c5_i32_50 = arith.constant 5 : i32
    %202 = vector.broadcast %c0_i32_49 : i32 to vector<1x512xi32>
    %203 = arith.maxsi %202, %199 : vector<1x512xi32>
    %204 = vector.broadcast %c5_i32_50 : i32 to vector<1x512xi32>
    %205 = arith.minsi %204, %203 : vector<1x512xi32>
    %c36_i32 = arith.constant 36 : i32
    %206 = vector.broadcast %c36_i32 : i32 to vector<1x512xi32>
    %207 = arith.muli %205, %206 : vector<1x512xi32>
    %c0_i32_51 = arith.constant 0 : i32
    %c5_i32_52 = arith.constant 5 : i32
    %208 = vector.broadcast %c0_i32_51 : i32 to vector<1x512xi32>
    %209 = arith.maxsi %208, %201 : vector<1x512xi32>
    %210 = vector.broadcast %c5_i32_52 : i32 to vector<1x512xi32>
    %211 = arith.minsi %210, %209 : vector<1x512xi32>
    %c36_i32_53 = arith.constant 36 : i32
    %212 = vector.broadcast %c36_i32_53 : i32 to vector<1x512xi32>
    %213 = arith.muli %211, %212 : vector<1x512xi32>
    %214 = tpu.iota {dimensions = array<i32: 0>} : vector<256x512xi32>
    %cst_54 = arith.constant 0.000000e+00 : f32
    %215 = vector.broadcast %cst_54 : f32 to vector<256x512xf32>
    %216 = arith.mulf %163, %180 : vector<1x512xf32>
    %217 = arith.addi %173, %190 : vector<1x512xi32>
    %218 = arith.mulf %216, %197 : vector<1x512xf32>
    %219 = arith.addi %217, %207 : vector<1x512xi32>
    %220 = vector.broadcast %219 : vector<1x512xi32> to vector<256x512xi32>
    %221 = arith.cmpi eq, %214, %220 : vector<256x512xi32>
    %cst_55 = arith.constant 0.000000e+00 : f32
    %222 = vector.shape_cast %218 : vector<1x512xf32> to vector<1x512xf32>
    %223 = vector.broadcast %222 : vector<1x512xf32> to vector<256x512xf32>
    %224 = vector.broadcast %cst_55 : f32 to vector<256x512xf32>
    %225 = arith.select %221, %223, %224 : vector<256x512xi1>, vector<256x512xf32>
    %226 = arith.addf %215, %225 : vector<256x512xf32>
    %227 = arith.mulf %163, %180 : vector<1x512xf32>
    %228 = arith.addi %173, %190 : vector<1x512xi32>
    %229 = arith.mulf %227, %198 : vector<1x512xf32>
    %230 = arith.addi %228, %213 : vector<1x512xi32>
    %231 = vector.broadcast %230 : vector<1x512xi32> to vector<256x512xi32>
    %232 = arith.cmpi eq, %214, %231 : vector<256x512xi32>
    %cst_56 = arith.constant 0.000000e+00 : f32
    %233 = vector.shape_cast %229 : vector<1x512xf32> to vector<1x512xf32>
    %234 = vector.broadcast %233 : vector<1x512xf32> to vector<256x512xf32>
    %235 = vector.broadcast %cst_56 : f32 to vector<256x512xf32>
    %236 = arith.select %232, %234, %235 : vector<256x512xi1>, vector<256x512xf32>
    %237 = arith.addf %226, %236 : vector<256x512xf32>
    %238 = arith.mulf %163, %181 : vector<1x512xf32>
    %239 = arith.addi %173, %196 : vector<1x512xi32>
    %240 = arith.mulf %238, %197 : vector<1x512xf32>
    %241 = arith.addi %239, %207 : vector<1x512xi32>
    %242 = vector.broadcast %241 : vector<1x512xi32> to vector<256x512xi32>
    %243 = arith.cmpi eq, %214, %242 : vector<256x512xi32>
    %cst_57 = arith.constant 0.000000e+00 : f32
    %244 = vector.shape_cast %240 : vector<1x512xf32> to vector<1x512xf32>
    %245 = vector.broadcast %244 : vector<1x512xf32> to vector<256x512xf32>
    %246 = vector.broadcast %cst_57 : f32 to vector<256x512xf32>
    %247 = arith.select %243, %245, %246 : vector<256x512xi1>, vector<256x512xf32>
    %248 = arith.addf %237, %247 : vector<256x512xf32>
    %249 = arith.mulf %163, %181 : vector<1x512xf32>
    %250 = arith.addi %173, %196 : vector<1x512xi32>
    %251 = arith.mulf %249, %198 : vector<1x512xf32>
    %252 = arith.addi %250, %213 : vector<1x512xi32>
    %253 = vector.broadcast %252 : vector<1x512xi32> to vector<256x512xi32>
    %254 = arith.cmpi eq, %214, %253 : vector<256x512xi32>
    %cst_58 = arith.constant 0.000000e+00 : f32
    %255 = vector.shape_cast %251 : vector<1x512xf32> to vector<1x512xf32>
    %256 = vector.broadcast %255 : vector<1x512xf32> to vector<256x512xf32>
    %257 = vector.broadcast %cst_58 : f32 to vector<256x512xf32>
    %258 = arith.select %254, %256, %257 : vector<256x512xi1>, vector<256x512xf32>
    %259 = arith.addf %248, %258 : vector<256x512xf32>
    %260 = arith.mulf %164, %180 : vector<1x512xf32>
    %261 = arith.addi %179, %190 : vector<1x512xi32>
    %262 = arith.mulf %260, %197 : vector<1x512xf32>
    %263 = arith.addi %261, %207 : vector<1x512xi32>
    %264 = vector.broadcast %263 : vector<1x512xi32> to vector<256x512xi32>
    %265 = arith.cmpi eq, %214, %264 : vector<256x512xi32>
    %cst_59 = arith.constant 0.000000e+00 : f32
    %266 = vector.shape_cast %262 : vector<1x512xf32> to vector<1x512xf32>
    %267 = vector.broadcast %266 : vector<1x512xf32> to vector<256x512xf32>
    %268 = vector.broadcast %cst_59 : f32 to vector<256x512xf32>
    %269 = arith.select %265, %267, %268 : vector<256x512xi1>, vector<256x512xf32>
    %270 = arith.addf %259, %269 : vector<256x512xf32>
    %271 = arith.mulf %164, %180 : vector<1x512xf32>
    %272 = arith.addi %179, %190 : vector<1x512xi32>
    %273 = arith.mulf %271, %198 : vector<1x512xf32>
    %274 = arith.addi %272, %213 : vector<1x512xi32>
    %275 = vector.broadcast %274 : vector<1x512xi32> to vector<256x512xi32>
    %276 = arith.cmpi eq, %214, %275 : vector<256x512xi32>
    %cst_60 = arith.constant 0.000000e+00 : f32
    %277 = vector.shape_cast %273 : vector<1x512xf32> to vector<1x512xf32>
    %278 = vector.broadcast %277 : vector<1x512xf32> to vector<256x512xf32>
    %279 = vector.broadcast %cst_60 : f32 to vector<256x512xf32>
    %280 = arith.select %276, %278, %279 : vector<256x512xi1>, vector<256x512xf32>
    %281 = arith.addf %270, %280 : vector<256x512xf32>
    %282 = arith.mulf %164, %181 : vector<1x512xf32>
    %283 = arith.addi %179, %196 : vector<1x512xi32>
    %284 = arith.mulf %282, %197 : vector<1x512xf32>
    %285 = arith.addi %283, %207 : vector<1x512xi32>
    %286 = vector.broadcast %285 : vector<1x512xi32> to vector<256x512xi32>
    %287 = arith.cmpi eq, %214, %286 : vector<256x512xi32>
    %cst_61 = arith.constant 0.000000e+00 : f32
    %288 = vector.shape_cast %284 : vector<1x512xf32> to vector<1x512xf32>
    %289 = vector.broadcast %288 : vector<1x512xf32> to vector<256x512xf32>
    %290 = vector.broadcast %cst_61 : f32 to vector<256x512xf32>
    %291 = arith.select %287, %289, %290 : vector<256x512xi1>, vector<256x512xf32>
    %292 = arith.addf %281, %291 : vector<256x512xf32>
    %293 = arith.mulf %164, %181 : vector<1x512xf32>
    %294 = arith.addi %179, %196 : vector<1x512xi32>
    %295 = arith.mulf %293, %198 : vector<1x512xf32>
    %296 = arith.addi %294, %213 : vector<1x512xi32>
    %297 = vector.broadcast %296 : vector<1x512xi32> to vector<256x512xi32>
    %298 = arith.cmpi eq, %214, %297 : vector<256x512xi32>
    %cst_62 = arith.constant 0.000000e+00 : f32
    %299 = vector.shape_cast %295 : vector<1x512xf32> to vector<1x512xf32>
    %300 = vector.broadcast %299 : vector<1x512xf32> to vector<256x512xf32>
    %301 = vector.broadcast %cst_62 : f32 to vector<256x512xf32>
    %302 = arith.select %298, %300, %301 : vector<256x512xi1>, vector<256x512xf32>
    %303 = arith.addf %292, %302 : vector<256x512xf32>
    %c2 = arith.constant 2 : index
    %c0_63 = arith.constant 0 : index
    %304 = vector.load %arg2[%c2, %c0_63] : memref<4x1024xf32, #tpu.memory_space<vmem>>, vector<2x256xf32>
    %cst_64 = arith.constant dense<0.000000e+00> : vector<2x512xf32>
    %305 = tpu.matmul %304, %303, %cst_64 {dimension_numbers = #tpu.dot_dimension_numbers<[1], [0], [0], [1], [0, 0, 1, 1], [], []>} : vector<2x256xf32>, vector<256x512xf32>, vector<2x512xf32> -> vector<2x512xf32>
    %c2_65 = arith.constant 2 : index
    %c0_66 = arith.constant 0 : index
    %306 = vector.load %arg3[%c2_65, %c0_66] : memref<8x512xf32, #tpu.memory_space<vmem>>, vector<2x512xf32>
    tpu.vector_store %arg3[%c2_65, %c0_66], %305 {strides = array<i32>} : memref<8x512xf32, #tpu.memory_space<vmem>>, vector<2x512xf32>,
    %cst_67 = arith.constant 0.000000e+00 : f32
    %307 = vector.broadcast %cst_67 : f32 to vector<2x512xf32>
    %c4 = arith.constant 4 : index
    %c0_68 = arith.constant 0 : index
    %308 = vector.load %arg3[%c4, %c0_68] : memref<8x512xf32, #tpu.memory_space<vmem>>, vector<2x512xf32>
    tpu.vector_store %arg3[%c4, %c0_68], %307 {strides = array<i32>} : memref<8x512xf32, #tpu.memory_space<vmem>>, vector<2x512xf32>,
    %cst_69 = arith.constant 0.000000e+00 : f32
    %309 = vector.broadcast %cst_69 : f32 to vector<2x512xf32>
    %c6 = arith.constant 6 : index
    %c0_70 = arith.constant 0 : index
    %310 = vector.load %arg3[%c6, %c0_70] : memref<8x512xf32, #tpu.memory_space<vmem>>, vector<2x512xf32>
    tpu.vector_store %arg3[%c6, %c0_70], %309 {strides = array<i32>} : memref<8x512xf32, #tpu.memory_space<vmem>>, vector<2x512xf32>,
    return
  }
  func.func @transform_0(%arg0: i32) -> (i32, i32) {
    %c0_i32 = arith.constant 0 : i32
    %c0_i32_0 = arith.constant 0 : i32
    return %c0_i32, %arg0 : i32, i32
  }
  func.func @transform_1(%arg0: i32) -> (i32, i32) {
    %c0_i32 = arith.constant 0 : i32
    %c0_i32_0 = arith.constant 0 : i32
    %c0_i32_1 = arith.constant 0 : i32
    return %c0_i32, %c0_i32_0 : i32, i32
  }
  func.func @transform_2(%arg0: i32) -> (i32, i32) {
    %c0_i32 = arith.constant 0 : i32
    %c0_i32_0 = arith.constant 0 : i32
    return %c0_i32, %arg0 : i32, i32
  }
}

</mosaic_0001>

<llo_original>
// kernel: tpu_custom_call.1
$region0: #{tpu_custom_call.1}
  #allocation0 [shape = 'u32[]', space=smem, size = 0x4, offset = 0x4, fixed_abs, tag = 'smem constant byte address 0x4 - core index']
  #allocation1 [shape = 'u32[144,128]{1,0:T(1,128)}', space=vmem, size = 0x12000, scoped, tag = 'internal scratch']
  %s0 = inlined_call_operand.hbm [shape: f32[3,1536], index: 0, kind: input, shape index: {}]
  %s1 = inlined_call_operand.hbm [shape: f32[4,1024], index: 1, kind: input, shape index: {}]
  %s2 = inlined_call_operand.hbm [shape: f32[8,1536], index: 2, kind: output, shape index: {}]
  %s3 = sld [smem:[#allocation0]]
  $region49: #{tpu_custom_call.1} parent=0
    _
  %s5 = ssub.s32 1, %s3
  %s6 = scalar_select 0, %s5, %s3
  $region1: #{tpu_custom_call.1} parent=0
    #allocation2 [shape = 'u8[16384]{0}', space=vmem, size = 0x4000, scoped, tag = 'input window, operand 0']
    #allocation3 [shape = 's32[2]{0}', space=sflag, size = 0x8, scoped, tag = 'scoped memory for tpu_custom_call.1']
    #allocation4 [shape = 's32[2]{0}', space=sflag, size = 0x8, scoped, tag = 'scoped memory for tpu_custom_call.1']
    #allocation5 [shape = 'u8[16384]{0}', space=vmem, size = 0x4000, scoped, tag = 'input window, operand 1, single buffered']
    #allocation6 [shape = 's32[1]{0}', space=sflag, size = 0x4, scoped, tag = 'scoped memory for tpu_custom_call.1']
    #allocation7 [shape = 'u8[32768]{0}', space=vmem, size = 0x8000, scoped, tag = 'output window, operand 0']
    %7 = vsyncpa [#allocation3], 0
    %s8 = scalar_lea.sflag [#allocation3], 1
    %9 = vsyncpa %s8, 0
    %10 = vsyncpa [#allocation6], 0
    %11 = vsyncpa [#allocation4], 0
    %s12 = scalar_lea.sflag [#allocation4], 1
    %13 = vsyncpa %s12, 0
    loop: start=0, step=1, limit=5
    $region2: #{tpu_custom_call.1} parent=1 // loop_pre_header
      _
    $region3: #{tpu_custom_call.1} parent=1 // loop_header
      %s15 = sphi 0, %s19
      %p16 = scmp.ge.s32.totalorder %s15, 5
      %s25 = sphi 0, %s27
      %s28 = sphi 0, %s25
      %s29 = sphi 0, %s28
      %s45 = sphi 0, %s29
      %s49 = sphi 0, %s49
      %s51 = sphi 0, %s49
      %s52 = sphi 0, %s51
      %s66 = sphi 0, %s52
      %s72 = sphi 0, %s74
      %s75 = sphi 0, %s72
      %s76 = sphi 0, %s75
      %s92 = sphi 0, %s76
    $region4: #{tpu_custom_call.1} parent=1 // loop_header_branch
      %18 = sbr.rel (%p16) target = $region8
    $region5: #{tpu_custom_call.1} parent=1 // loop_body
      %s20 = ssub.s32 %s15, 1
      %s21 = ssub.s32 %s15, 2
      %s22 = sadd.s32 %s15, 1
      %s23 = ssub.s32 %s15, %s22
      %p24 = scmp.eq.s32.totalorder %s23, 0
      %s26 = sadd.s32 %s25, 1
      %s27 = scalar_select %p24, %s25, %s26
      %p30 = pneg %p24
      %p31 = scmp.eq.s32.totalorder %s15, 2
      %p32 = por %p30, %p31
      %p33 = scmp.ne.s32.totalorder %s25, %s28
      %p34 = scmp.eq.s32.totalorder %s15, 0
      %p35 = por %p33, %p34
      %p36 = scmp.ne.s32.totalorder %s25, %s28
      %p37 = scmp.eq.s32.totalorder %s20, 2
      %p38 = por %p36, %p37
      %p39 = scmp.ne.s32.totalorder %s28, %s29
      %p40 = scmp.eq.s32.totalorder %s20, 0
      %p41 = por %p39, %p40
      %p42 = scmp.ne.s32.totalorder %s28, %s29
      %p43 = scmp.eq.s32.totalorder %s21, 2
      %p44 = por %p42, %p43
      %p46 = scmp.ne.s32.totalorder %s29, %s45
      %p47 = scmp.eq.s32.totalorder %s21, 0
      %p48 = por %p46, %p47
      %s50 = sadd.s32 %s49, 1
      %p53 = scmp.eq.s32.totalorder %s15, 2
      %p54 = scmp.ne.s32.totalorder %s49, %s51
      %p55 = scmp.eq.s32.totalorder %s15, 0
      %p56 = por %p54, %p55
      %p57 = scmp.ne.s32.totalorder %s49, %s51
      %p58 = scmp.eq.s32.totalorder %s20, 2
      %p59 = por %p57, %p58
      %p60 = scmp.ne.s32.totalorder %s51, %s52
      %p61 = scmp.eq.s32.totalorder %s20, 0
      %p62 = por %p60, %p61
      %p63 = scmp.ne.s32.totalorder %s51, %s52
      %p64 = scmp.eq.s32.totalorder %s21, 2
      %p65 = por %p63, %p64
      %p67 = scmp.ne.s32.totalorder %s52, %s66
      %p68 = scmp.eq.s32.totalorder %s21, 0
      %p69 = por %p67, %p68
      %s70 = ssub.s32 %s15, %s22
      %p71 = scmp.eq.s32.totalorder %s70, 0
      %s73 = sadd.s32 %s72, 1
      %s74 = scalar_select %p71, %s72, %s73
      %p77 = pneg %p71
      %p78 = scmp.eq.s32.totalorder %s15, 2
      %p79 = por %p77, %p78
      %p80 = scmp.ne.s32.totalorder %s72, %s75
      %p81 = scmp.eq.s32.totalorder %s15, 0
      %p82 = por %p80, %p81
      %p83 = scmp.ne.s32.totalorder %s72, %s75
      %p84 = scmp.eq.s32.totalorder %s20, 2
      %p85 = por %p83, %p84
      %p86 = scmp.ne.s32.totalorder %s75, %s76
      %p87 = scmp.eq.s32.totalorder %s20, 0
      %p88 = por %p86, %p87
      %p89 = scmp.ne.s32.totalorder %s75, %s76
      %p90 = scmp.eq.s32.totalorder %s21, 2
      %p91 = por %p89, %p90
      %p93 = scmp.ne.s32.totalorder %s76, %s92
      %p94 = scmp.eq.s32.totalorder %s21, 0
      %p95 = por %p93, %p94
      %p96 = scmp.le.s32.totalorder 1, %s15
      %p97 = scmp.lt.s32.totalorder %s15, 4
      %p98 = pnand %p96, %p97
      %p99 = pneg %p98
      // Predicated region
      $region9: #{tpu_custom_call.1} parent=5 // pred_check
        _
      $region10: #{tpu_custom_call.1} parent=5 // pred_check_branch
        %101 = sbr.rel (%p98) target = $region12
      $region11: #{tpu_custom_call.1} parent=5 // pred_region
        %s102 = ssub.s32 %s15, 1
        // Predicated region
        $region13: #{tpu_custom_call.1} parent=11 // pred_check
          %p103 = pneg %p62
        $region14: #{tpu_custom_call.1} parent=11 // pred_check_branch
          %105 = sbr.rel (%p103) target = $region16
        $region15: #{tpu_custom_call.1} parent=11 // pred_region
          %s107 = ssub.s32 512, 512
          %108 = vsyncadd [#allocation6], %s107
          %s110 = sshll.u32 [#allocation5], 4
          %s111 = int_to_ptr.vmem [resolvable:$true] %s110
          %113 = dma.hbm_to_vmem [thread:$0]  %s1, 512, %s111, [#allocation6]
        $region16: #{tpu_custom_call.1} parent=11 // pred_fallthru
          _
      $region12: #{tpu_custom_call.1} parent=5 // pred_fallthru
        _
      %p114 = scmp.lt.s32.totalorder %s15, 3
      // Predicated region
      $region17: #{tpu_custom_call.1} parent=5 // pred_check
        %p115 = pneg %p114
      $region18: #{tpu_custom_call.1} parent=5 // pred_check_branch
        %117 = sbr.rel (%p115) target = $region20
      $region19: #{tpu_custom_call.1} parent=5 // pred_region
        // Predicated region
        $region21: #{tpu_custom_call.1} parent=19 // pred_check
          %p118 = pneg %p35
        $region22: #{tpu_custom_call.1} parent=19 // pred_check_branch
          %120 = sbr.rel (%p118) target = $region24
        $region23: #{tpu_custom_call.1} parent=19 // pred_region
          %s121 = sand.u32 %s25, 1
          %s122 = scalar_lea.sflag [#allocation3], %s121
          %s123 = sand.u32 %s25, 1
          %s124 = smul.addr %s123, 16
          %s125 = scalar_lea.vmem [#allocation2], %s124
          %s126 = smul.u32 4, %s15
          %s128 = ssub.s32 256, 256
          %129 = vsyncadd %s122, %s128
          %s130 = smul.addr %s126, 64
          %s131 = scalar_lea.hbm %s0, %s130
          %s133 = sshll.u32 %s125, 4
          %s134 = int_to_ptr.vmem [resolvable:$true] %s133
          %136 = dma.hbm_to_vmem [thread:$0]  %s131, 256, %s134, %s122
        $region24: #{tpu_custom_call.1} parent=19 // pred_fallthru
          _
      $region20: #{tpu_custom_call.1} parent=5 // pred_fallthru
        _
      %p137 = scmp.le.s32.totalorder 1, %s15
      %p138 = scmp.lt.s32.totalorder %s15, 4
      %p139 = pnand %p137, %p138
      %p140 = pneg %p139
      // Predicated region
      $region25: #{tpu_custom_call.1} parent=5 // pred_check
        _
      $region26: #{tpu_custom_call.1} parent=5 // pred_check_branch
        %142 = sbr.rel (%p139) target = $region28
      $region27: #{tpu_custom_call.1} parent=5 // pred_region
        %s143 = ssub.s32 %s15, 1
        %s144 = sand.u32 %s28, 1
        %s145 = scalar_lea.sflag [#allocation3], %s144
        %s146 = sand.u32 %s28, 1
        %s147 = smul.addr %s146, 16
        %s148 = scalar_lea.vmem [#allocation2], %s147
        // Predicated region
        $region29: #{tpu_custom_call.1} parent=27 // pred_check
          %p149 = pneg %p41
        $region30: #{tpu_custom_call.1} parent=27 // pred_check_branch
          %151 = sbr.rel (%p149) target = $region32
        $region31: #{tpu_custom_call.1} parent=27 // pred_region
          %152 = dma.done %s145, 256
        $region32: #{tpu_custom_call.1} parent=27 // pred_fallthru
          _
        // Predicated region
        $region33: #{tpu_custom_call.1} parent=27 // pred_check
          %p153 = pneg %p62
        $region34: #{tpu_custom_call.1} parent=27 // pred_check_branch
          %155 = sbr.rel (%p153) target = $region36
        $region35: #{tpu_custom_call.1} parent=27 // pred_region
          %156 = dma.done [#allocation6], 512
        $region36: #{tpu_custom_call.1} parent=27 // pred_fallthru
          _
        %s157 = sand.u32 %s28, 1
        %s158 = scalar_lea.sflag [#allocation3], %s157
        %s159 = sand.u32 %s28, 1
        %s160 = smul.addr %s159, 16
        %s161 = scalar_lea.vmem [#allocation2], %s160
        %p162 = pneg %p41
        %p163 = pneg %p38
        %p164 = pneg %p62
        %p165 = pneg %p59
        %p166 = pneg %p88
        %p167 = pneg %p85
        %s168 = sand.u32 %s75, 1
        %s169 = scalar_lea.sflag [#allocation4], %s168
        %s170 = sand.u32 %s75, 1
        %s171 = smul.addr %s170, 32
        %s172 = scalar_lea.vmem [#allocation7], %s171
        %s173 = smul.u32 4, %s20
        %s174 = smul.u32 4, %s20
        %v175 = vld [vmem:[%s148] sm:$0x77]
        %v176 = vld [vmem:[%s148 + $0x8] sm:$0x77]
        %v177 = vmul.f32 %v175, 3.0
        %v178 = vmul.f32 %v176, 3.0
        %v179 = vadd.f32 %v177, 0.5
        %v180 = vadd.f32 %v178, 0.5
        %v181 = vfloor.f32 %v179
        %v182 = vfloor.f32 %v180
        %v183 = vsub.f32 %v179, %v181
        %v184 = vsub.f32 %v180, %v182
        %v185 = vsub.f32 1.0, %v183
        %v186 = vsub.f32 1.0, %v184
        %v187 = vcvt.f32.s32.to.zero.pseudo %v181
        %v188 = vcvt.f32.s32.to.zero.pseudo %v182
        %v189 = vadd.s32 %v187, 1
        %v190 = vadd.s32 %v188, 1
        %vm191 = vcmp.gt.s32.totalorder %v187, 0
        %v192 = vsel %vm191, %v187, 0
        %vm193 = vcmp.gt.s32.totalorder %v188, 0
        %v194 = vsel %vm193, %v188, 0
        %vm195 = vcmp.lt.s32.totalorder %v192, 3
        %v196 = vsel %vm195, %v192, 3
        %vm197 = vcmp.lt.s32.totalorder %v194, 3
        %v198 = vsel %vm197, %v194, 3
        %vm199 = vcmp.gt.s32.totalorder %v189, 0
        %v200 = vsel %vm199, %v189, 0
        %vm201 = vcmp.gt.s32.totalorder %v190, 0
        %v202 = vsel %vm201, %v190, 0
        %vm203 = vcmp.lt.s32.totalorder %v200, 3
        %v204 = vsel %vm203, %v200, 3
        %vm205 = vcmp.lt.s32.totalorder %v202, 3
        %v206 = vsel %vm205, %v202, 3
        %v207 = vmul.u32 %v196, 4
        %v208 = vmul.u32 %v198, 4
        %v209 = vmul.u32 %v204, 4
        %v210 = vmul.u32 %v206, 4
        %v211 = vmul.u32 %v196, 16
        %v212 = vmul.u32 %v198, 16
        %v213 = vmul.u32 %v204, 16
        %v214 = vmul.u32 %v206, 16
        %v215 = vlaneseq
        %v216 = vshrl.u32 %v215, 7
        %v217 = vadd.s32 %v216, 8
        %v218 = vadd.s32 %v216, 16
        %v219 = vadd.s32 %v216, 24
        %v220 = vadd.s32 %v216, 32
        %v221 = vadd.s32 %v216, 40
        %v222 = vadd.s32 %v216, 48
        %v223 = vadd.s32 %v216, 56
        %v224 = vadd.s32 %v216, 64
        %v225 = vadd.s32 %v216, 72
        %v226 = vadd.s32 %v216, 80
        %v227 = vadd.s32 %v216, 88
        %v228 = vadd.s32 %v216, 96
        %v229 = vadd.s32 %v216, 104
        %v230 = vadd.s32 %v216, 112
        %v231 = vadd.s32 %v216, 120
        %v234 = vrot.slane %v185, 5
        %v235 = vrot.slane %v234, 4
        %v236 = vrot.slane %v186, 5
        %v237 = vrot.slane %v236, 4
        %v240 = vmul.f32 %v185, %v235
        %v241 = vmul.f32 %v186, %v237
        %v242 = vrot.slane %v207, 5
        %v243 = vrot.slane %v242, 4
        %v244 = vrot.slane %v208, 5
        %v245 = vrot.slane %v244, 4
        %v246 = vadd.s32 %v196, %v243
        %v247 = vadd.s32 %v198, %v245
        %v248 = vrot.slane %v185, 6
        %v249 = vrot.slane %v248, 4
        %v250 = vrot.slane %v186, 6
        %v251 = vrot.slane %v250, 4
        %v254 = vmul.f32 %v240, %v249
        %v255 = vmul.f32 %v241, %v251
        %v256 = vrot.slane %v211, 6
        %v257 = vrot.slane %v256, 4
        %v258 = vrot.slane %v212, 6
        %v259 = vrot.slane %v258, 4
        %v260 = vadd.s32 %v246, %v257
        %v261 = vadd.s32 %v247, %v259
        %v262 = vlaneseq
        %v263 = vshrl.u32 %v262, 7
        %v264 = vsub.s32 0, %v263
        %v265 = vrot.slane %v260, %v264
        %v266 = vlaneseq
        %v267 = vshrl.u32 %v266, 7
        %v268 = vsub.s32 4, %v267
        %v269 = vrot.slane %v260, %v268
        %v270 = vlaneseq
        %v271 = vshrl.u32 %v270, 7
        %v272 = vsub.s32 0, %v271
        %v273 = vrot.slane %v261, %v272
        %v274 = vlaneseq
        %v275 = vshrl.u32 %v274, 7
        %v276 = vsub.s32 4, %v275
        %v277 = vrot.slane %v261, %v276
        %v278 = vlaneseq
        %v279 = vshrl.u32 %v278, 7
        %v280 = vsub.s32 0, %v279
        %v281 = vrot.slane %v265, %v280
        %v282 = vlaneseq
        %v283 = vshrl.u32 %v282, 7
        %v284 = vsub.s32 0, %v283
        %v285 = vrot.slane %v269, %v284
        %v286 = vlaneseq
        %v287 = vshrl.u32 %v286, 7
        %v288 = vsub.s32 0, %v287
        %v289 = vrot.slane %v273, %v288
        %v290 = vlaneseq
        %v291 = vshrl.u32 %v290, 7
        %v292 = vsub.s32 0, %v291
        %v293 = vrot.slane %v277, %v292
        %vm294 = vcmp.eq.s32.totalorder %v216, %v281
        %vm295 = vcmp.eq.s32.totalorder %v216, %v285
        %vm296 = vcmp.eq.s32.totalorder %v216, %v289
        %vm297 = vcmp.eq.s32.totalorder %v216, %v293
        %vm298 = vcmp.eq.s32.totalorder %v217, %v281
        %vm299 = vcmp.eq.s32.totalorder %v217, %v285
        %vm300 = vcmp.eq.s32.totalorder %v217, %v289
        %vm301 = vcmp.eq.s32.totalorder %v217, %v293
        %vm302 = vcmp.eq.s32.totalorder %v218, %v281
        %vm303 = vcmp.eq.s32.totalorder %v218, %v285
        %vm304 = vcmp.eq.s32.totalorder %v218, %v289
        %vm305 = vcmp.eq.s32.totalorder %v218, %v293
        %vm306 = vcmp.eq.s32.totalorder %v219, %v281
        %vm307 = vcmp.eq.s32.totalorder %v219, %v285
        %vm308 = vcmp.eq.s32.totalorder %v219, %v289
        %vm309 = vcmp.eq.s32.totalorder %v219, %v293
        %vm310 = vcmp.eq.s32.totalorder %v220, %v281
        %vm311 = vcmp.eq.s32.totalorder %v220, %v285
        %vm312 = vcmp.eq.s32.totalorder %v220, %v289
        %vm313 = vcmp.eq.s32.totalorder %v220, %v293
        %vm314 = vcmp.eq.s32.totalorder %v221, %v281
        %vm315 = vcmp.eq.s32.totalorder %v221, %v285
        %vm316 = vcmp.eq.s32.totalorder %v221, %v289
        %vm317 = vcmp.eq.s32.totalorder %v221, %v293
        %vm318 = vcmp.eq.s32.totalorder %v222, %v281
        %vm319 = vcmp.eq.s32.totalorder %v222, %v285
        %vm320 = vcmp.eq.s32.totalorder %v222, %v289
        %vm321 = vcmp.eq.s32.totalorder %v222, %v293
        %vm322 = vcmp.eq.s32.totalorder %v223, %v281
        %vm323 = vcmp.eq.s32.totalorder %v223, %v285
        %vm324 = vcmp.eq.s32.totalorder %v223, %v289
        %vm325 = vcmp.eq.s32.totalorder %v223, %v293
        %vm326 = vcmp.eq.s32.totalorder %v224, %v281
        %vm327 = vcmp.eq.s32.totalorder %v224, %v285
        %vm328 = vcmp.eq.s32.totalorder %v224, %v289
        %vm329 = vcmp.eq.s32.totalorder %v224, %v293
        %vm330 = vcmp.eq.s32.totalorder %v225, %v281
        %vm331 = vcmp.eq.s32.totalorder %v225, %v285
        %vm332 = vcmp.eq.s32.totalorder %v225, %v289
        %vm333 = vcmp.eq.s32.totalorder %v225, %v293
        %vm334 = vcmp.eq.s32.totalorder %v226, %v281
        %vm335 = vcmp.eq.s32.totalorder %v226, %v285
        %vm336 = vcmp.eq.s32.totalorder %v226, %v289
        %vm337 = vcmp.eq.s32.totalorder %v226, %v293
        %vm338 = vcmp.eq.s32.totalorder %v227, %v281
        %vm339 = vcmp.eq.s32.totalorder %v227, %v285
        %vm340 = vcmp.eq.s32.totalorder %v227, %v289
        %vm341 = vcmp.eq.s32.totalorder %v227, %v293
        %vm342 = vcmp.eq.s32.totalorder %v228, %v281
        %vm343 = vcmp.eq.s32.totalorder %v228, %v285
        %vm344 = vcmp.eq.s32.totalorder %v228, %v289
        %vm345 = vcmp.eq.s32.totalorder %v228, %v293
        %vm346 = vcmp.eq.s32.totalorder %v229, %v281
        %vm347 = vcmp.eq.s32.totalorder %v229, %v285
        %vm348 = vcmp.eq.s32.totalorder %v229, %v289
        %vm349 = vcmp.eq.s32.totalorder %v229, %v293
        %vm350 = vcmp.eq.s32.totalorder %v230, %v281
        %vm351 = vcmp.eq.s32.totalorder %v230, %v285
        %vm352 = vcmp.eq.s32.totalorder %v230, %v289
        %vm353 = vcmp.eq.s32.totalorder %v230, %v293
        %vm354 = vcmp.eq.s32.totalorder %v231, %v281
        %vm355 = vcmp.eq.s32.totalorder %v231, %v285
        %vm356 = vcmp.eq.s32.totalorder %v231, %v289
        %vm357 = vcmp.eq.s32.totalorder %v231, %v293
        %v360 = vlaneseq
        %v361 = vshrl.u32 %v360, 7
        %v362 = vsub.s32 0, %v361
        %v363 = vrot.slane %v254, %v362
        %v364 = vlaneseq
        %v365 = vshrl.u32 %v364, 7
        %v366 = vsub.s32 4, %v365
        %v367 = vrot.slane %v254, %v366
        %v368 = vlaneseq
        %v369 = vshrl.u32 %v368, 7
        %v370 = vsub.s32 0, %v369
        %v371 = vrot.slane %v255, %v370
        %v372 = vlaneseq
        %v373 = vshrl.u32 %v372, 7
        %v374 = vsub.s32 4, %v373
        %v375 = vrot.slane %v255, %v374
        %v380 = vlaneseq
        %v381 = vshrl.u32 %v380, 7
        %v382 = vsub.s32 0, %v381
        %v383 = vrot.slane %v363, %v382
        %v384 = vlaneseq
        %v385 = vshrl.u32 %v384, 7
        %v386 = vsub.s32 0, %v385
        %v387 = vrot.slane %v367, %v386
        %v388 = vlaneseq
        %v389 = vshrl.u32 %v388, 7
        %v390 = vsub.s32 0, %v389
        %v391 = vrot.slane %v371, %v390
        %v392 = vlaneseq
        %v393 = vshrl.u32 %v392, 7
        %v394 = vsub.s32 0, %v393
        %v395 = vrot.slane %v375, %v394
        %v396 = vsel %vm294, %v383, 0.0
        %v397 = vsel %vm295, %v387, 0.0
        %v398 = vsel %vm296, %v391, 0.0
        %v399 = vsel %vm297, %v395, 0.0
        %v400 = vsel %vm298, %v383, 0.0
        %v401 = vsel %vm299, %v387, 0.0
        %v402 = vsel %vm300, %v391, 0.0
        %v403 = vsel %vm301, %v395, 0.0
        %v404 = vsel %vm302, %v383, 0.0
        %v405 = vsel %vm303, %v387, 0.0
        %v406 = vsel %vm304, %v391, 0.0
        %v407 = vsel %vm305, %v395, 0.0
        %v408 = vsel %vm306, %v383, 0.0
        %v409 = vsel %vm307, %v387, 0.0
        %v410 = vsel %vm308, %v391, 0.0
        %v411 = vsel %vm309, %v395, 0.0
        %v412 = vsel %vm310, %v383, 0.0
        %v413 = vsel %vm311, %v387, 0.0
        %v414 = vsel %vm312, %v391, 0.0
        %v415 = vsel %vm313, %v395, 0.0
        %v416 = vsel %vm314, %v383, 0.0
        %v417 = vsel %vm315, %v387, 0.0
        %v418 = vsel %vm316, %v391, 0.0
        %v419 = vsel %vm317, %v395, 0.0
        %v420 = vsel %vm318, %v383, 0.0
        %v421 = vsel %vm319, %v387, 0.0
        %v422 = vsel %vm320, %v391, 0.0
        %v423 = vsel %vm321, %v395, 0.0
        %v424 = vsel %vm322, %v383, 0.0
        %v425 = vsel %vm323, %v387, 0.0
        %v426 = vsel %vm324, %v391, 0.0
        %v427 = vsel %vm325, %v395, 0.0
        %v428 = vsel %vm326, %v383, 0.0
        %v429 = vsel %vm327, %v387, 0.0
        %v430 = vsel %vm328, %v391, 0.0
        %v431 = vsel %vm329, %v395, 0.0
        %v432 = vsel %vm330, %v383, 0.0
        %v433 = vsel %vm331, %v387, 0.0
        %v434 = vsel %vm332, %v391, 0.0
        %v435 = vsel %vm333, %v395, 0.0
        %v436 = vsel %vm334, %v383, 0.0
        %v437 = vsel %vm335, %v387, 0.0
        %v438 = vsel %vm336, %v391, 0.0
        %v439 = vsel %vm337, %v395, 0.0
        %v440 = vsel %vm338, %v383, 0.0
        %v441 = vsel %vm339, %v387, 0.0
        %v442 = vsel %vm340, %v391, 0.0
        %v443 = vsel %vm341, %v395, 0.0
        %v444 = vsel %vm342, %v383, 0.0
        %v445 = vsel %vm343, %v387, 0.0
        %v446 = vsel %vm344, %v391, 0.0
        %v447 = vsel %vm345, %v395, 0.0
        %v448 = vsel %vm346, %v383, 0.0
        %v449 = vsel %vm347, %v387, 0.0
        %v450 = vsel %vm348, %v391, 0.0
        %v451 = vsel %vm349, %v395, 0.0
        %v452 = vsel %vm350, %v383, 0.0
        %v453 = vsel %vm351, %v387, 0.0
        %v454 = vsel %vm352, %v391, 0.0
        %v455 = vsel %vm353, %v395, 0.0
        %v456 = vsel %vm354, %v383, 0.0
        %v457 = vsel %vm355, %v387, 0.0
        %v458 = vsel %vm356, %v391, 0.0
        %v459 = vsel %vm357, %v395, 0.0
        %v460 = vadd.f32 %v396, 0.0
        %v461 = vadd.f32 %v397, 0.0
        %v462 = vadd.f32 %v398, 0.0
        %v463 = vadd.f32 %v399, 0.0
        %v464 = vadd.f32 %v400, 0.0
        %v465 = vadd.f32 %v401, 0.0
        %v466 = vadd.f32 %v402, 0.0
        %v467 = vadd.f32 %v403, 0.0
        %v468 = vadd.f32 %v404, 0.0
        %v469 = vadd.f32 %v405, 0.0
        %v470 = vadd.f32 %v406, 0.0
        %v471 = vadd.f32 %v407, 0.0
        %v472 = vadd.f32 %v408, 0.0
        %v473 = vadd.f32 %v409, 0.0
        %v474 = vadd.f32 %v410, 0.0
        %v475 = vadd.f32 %v411, 0.0
        %v476 = vadd.f32 %v412, 0.0
        %v477 = vadd.f32 %v413, 0.0
        %v478 = vadd.f32 %v414, 0.0
        %v479 = vadd.f32 %v415, 0.0
        %v480 = vadd.f32 %v416, 0.0
        %v481 = vadd.f32 %v417, 0.0
        %v482 = vadd.f32 %v418, 0.0
        %v483 = vadd.f32 %v419, 0.0
        %v484 = vadd.f32 %v420, 0.0
        %v485 = vadd.f32 %v421, 0.0
        %v486 = vadd.f32 %v422, 0.0
        %v487 = vadd.f32 %v423, 0.0
        %v488 = vadd.f32 %v424, 0.0
        %v489 = vadd.f32 %v425, 0.0
        %v490 = vadd.f32 %v426, 0.0
        %v491 = vadd.f32 %v427, 0.0
        %v492 = vadd.f32 %v428, 0.0
        %v493 = vadd.f32 %v429, 0.0
        %v494 = vadd.f32 %v430, 0.0
        %v495 = vadd.f32 %v431, 0.0
        %v496 = vadd.f32 %v432, 0.0
        %v497 = vadd.f32 %v433, 0.0
        %v498 = vadd.f32 %v434, 0.0
        %v499 = vadd.f32 %v435, 0.0
        %v500 = vadd.f32 %v436, 0.0
        %v501 = vadd.f32 %v437, 0.0
        %v502 = vadd.f32 %v438, 0.0
        %v503 = vadd.f32 %v439, 0.0
        %v504 = vadd.f32 %v440, 0.0
        %v505 = vadd.f32 %v441, 0.0
        %v506 = vadd.f32 %v442, 0.0
        %v507 = vadd.f32 %v443, 0.0
        %v508 = vadd.f32 %v444, 0.0
        %v509 = vadd.f32 %v445, 0.0
        %v510 = vadd.f32 %v446, 0.0
        %v511 = vadd.f32 %v447, 0.0
        %v512 = vadd.f32 %v448, 0.0
        %v513 = vadd.f32 %v449, 0.0
        %v514 = vadd.f32 %v450, 0.0
        %v515 = vadd.f32 %v451, 0.0
        %v516 = vadd.f32 %v452, 0.0
        %v517 = vadd.f32 %v453, 0.0
        %v518 = vadd.f32 %v454, 0.0
        %v519 = vadd.f32 %v455, 0.0
        %v520 = vadd.f32 %v456, 0.0
        %v521 = vadd.f32 %v457, 0.0
        %v522 = vadd.f32 %v458, 0.0
        %v523 = vadd.f32 %v459, 0.0
        %v526 = vrot.slane %v183, 6
        %v527 = vrot.slane %v526, 4
        %v528 = vrot.slane %v184, 6
        %v529 = vrot.slane %v528, 4
        %v532 = vmul.f32 %v240, %v527
        %v533 = vmul.f32 %v241, %v529
        %v534 = vrot.slane %v213, 6
        %v535 = vrot.slane %v534, 4
        %v536 = vrot.slane %v214, 6
        %v537 = vrot.slane %v536, 4
        %v538 = vadd.s32 %v246, %v535
        %v539 = vadd.s32 %v247, %v537
        %v540 = vlaneseq
        %v541 = vshrl.u32 %v540, 7
        %v542 = vsub.s32 0, %v541
        %v543 = vrot.slane %v538, %v542
        %v544 = vlaneseq
        %v545 = vshrl.u32 %v544, 7
        %v546 = vsub.s32 4, %v545
        %v547 = vrot.slane %v538, %v546
        %v548 = vlaneseq
        %v549 = vshrl.u32 %v548, 7
        %v550 = vsub.s32 0, %v549
        %v551 = vrot.slane %v539, %v550
        %v552 = vlaneseq
        %v553 = vshrl.u32 %v552, 7
        %v554 = vsub.s32 4, %v553
        %v555 = vrot.slane %v539, %v554
        %v556 = vlaneseq
        %v557 = vshrl.u32 %v556, 7
        %v558 = vsub.s32 0, %v557
        %v559 = vrot.slane %v543, %v558
        %v560 = vlaneseq
        %v561 = vshrl.u32 %v560, 7
        %v562 = vsub.s32 0, %v561
        %v563 = vrot.slane %v547, %v562
        %v564 = vlaneseq
        %v565 = vshrl.u32 %v564, 7
        %v566 = vsub.s32 0, %v565
        %v567 = vrot.slane %v551, %v566
        %v568 = vlaneseq
        %v569 = vshrl.u32 %v568, 7
        %v570 = vsub.s32 0, %v569
        %v571 = vrot.slane %v555, %v570
        %vm572 = vcmp.eq.s32.totalorder %v216, %v559
        %vm573 = vcmp.eq.s32.totalorder %v216, %v563
        %vm574 = vcmp.eq.s32.totalorder %v216, %v567
        %vm575 = vcmp.eq.s32.totalorder %v216, %v571
        %vm576 = vcmp.eq.s32.totalorder %v217, %v559
        %vm577 = vcmp.eq.s32.totalorder %v217, %v563
        %vm578 = vcmp.eq.s32.totalorder %v217, %v567
        %vm579 = vcmp.eq.s32.totalorder %v217, %v571
        %vm580 = vcmp.eq.s32.totalorder %v218, %v559
        %vm581 = vcmp.eq.s32.totalorder %v218, %v563
        %vm582 = vcmp.eq.s32.totalorder %v218, %v567
        %vm583 = vcmp.eq.s32.totalorder %v218, %v571
        %vm584 = vcmp.eq.s32.totalorder %v219, %v559
        %vm585 = vcmp.eq.s32.totalorder %v219, %v563
        %vm586 = vcmp.eq.s32.totalorder %v219, %v567
        %vm587 = vcmp.eq.s32.totalorder %v219, %v571
        %vm588 = vcmp.eq.s32.totalorder %v220, %v559
        %vm589 = vcmp.eq.s32.totalorder %v220, %v563
        %vm590 = vcmp.eq.s32.totalorder %v220, %v567
        %vm591 = vcmp.eq.s32.totalorder %v220, %v571
        %vm592 = vcmp.eq.s32.totalorder %v221, %v559
        %vm593 = vcmp.eq.s32.totalorder %v221, %v563
        %vm594 = vcmp.eq.s32.totalorder %v221, %v567
        %vm595 = vcmp.eq.s32.totalorder %v221, %v571
        %vm596 = vcmp.eq.s32.totalorder %v222, %v559
        %vm597 = vcmp.eq.s32.totalorder %v222, %v563
        %vm598 = vcmp.eq.s32.totalorder %v222, %v567
        %vm599 = vcmp.eq.s32.totalorder %v222, %v571
        %vm600 = vcmp.eq.s32.totalorder %v223, %v559
        %vm601 = vcmp.eq.s32.totalorder %v223, %v563
        %vm602 = vcmp.eq.s32.totalorder %v223, %v567
        %vm603 = vcmp.eq.s32.totalorder %v223, %v571
        %vm604 = vcmp.eq.s32.totalorder %v224, %v559
        %vm605 = vcmp.eq.s32.totalorder %v224, %v563
        %vm606 = vcmp.eq.s32.totalorder %v224, %v567
        %vm607 = vcmp.eq.s32.totalorder %v224, %v571
        %vm608 = vcmp.eq.s32.totalorder %v225, %v559
        %vm609 = vcmp.eq.s32.totalorder %v225, %v563
        %vm610 = vcmp.eq.s32.totalorder %v225, %v567
        %vm611 = vcmp.eq.s32.totalorder %v225, %v571
        %vm612 = vcmp.eq.s32.totalorder %v226, %v559
        %vm613 = vcmp.eq.s32.totalorder %v226, %v563
        %vm614 = vcmp.eq.s32.totalorder %v226, %v567
        %vm615 = vcmp.eq.s32.totalorder %v226, %v571
        %vm616 = vcmp.eq.s32.totalorder %v227, %v559
        %vm617 = vcmp.eq.s32.totalorder %v227, %v563
        %vm618 = vcmp.eq.s32.totalorder %v227, %v567
        %vm619 = vcmp.eq.s32.totalorder %v227, %v571
        %vm620 = vcmp.eq.s32.totalorder %v228, %v559
        %vm621 = vcmp.eq.s32.totalorder %v228, %v563
        %vm622 = vcmp.eq.s32.totalorder %v228, %v567
        %vm623 = vcmp.eq.s32.totalorder %v228, %v571
        %vm624 = vcmp.eq.s32.totalorder %v229, %v559
        %vm625 = vcmp.eq.s32.totalorder %v229, %v563
        %vm626 = vcmp.eq.s32.totalorder %v229, %v567
        %vm627 = vcmp.eq.s32.totalorder %v229, %v571
        %vm628 = vcmp.eq.s32.totalorder %v230, %v559
        %vm629 = vcmp.eq.s32.totalorder %v230, %v563
        %vm630 = vcmp.eq.s32.totalorder %v230, %v567
        %vm631 = vcmp.eq.s32.totalorder %v230, %v571
        %vm632 = vcmp.eq.s32.totalorder %v231, %v559
        %vm633 = vcmp.eq.s32.totalorder %v231, %v563
        %vm634 = vcmp.eq.s32.totalorder %v231, %v567
        %vm635 = vcmp.eq.s32.totalorder %v231, %v571
        %v638 = vlaneseq
        %v639 = vshrl.u32 %v638, 7
        %v640 = vsub.s32 0, %v639
        %v641 = vrot.slane %v532, %v640
        %v642 = vlaneseq
        %v643 = vshrl.u32 %v642, 7
        %v644 = vsub.s32 4, %v643
        %v645 = vrot.slane %v532, %v644
        %v646 = vlaneseq
        %v647 = vshrl.u32 %v646, 7
        %v648 = vsub.s32 0, %v647
        %v649 = vrot.slane %v533, %v648
        %v650 = vlaneseq
        %v651 = vshrl.u32 %v650, 7
        %v652 = vsub.s32 4, %v651
        %v653 = vrot.slane %v533, %v652
        %v658 = vlaneseq
        %v659 = vshrl.u32 %v658, 7
        %v660 = vsub.s32 0, %v659
        %v661 = vrot.slane %v641, %v660
        %v662 = vlaneseq
        %v663 = vshrl.u32 %v662, 7
        %v664 = vsub.s32 0, %v663
        %v665 = vrot.slane %v645, %v664
        %v666 = vlaneseq
        %v667 = vshrl.u32 %v666, 7
        %v668 = vsub.s32 0, %v667
        %v669 = vrot.slane %v649, %v668
        %v670 = vlaneseq
        %v671 = vshrl.u32 %v670, 7
        %v672 = vsub.s32 0, %v671
        %v673 = vrot.slane %v653, %v672
        %v674 = vsel %vm572, %v661, 0.0
        %v675 = vsel %vm573, %v665, 0.0
        %v676 = vsel %vm574, %v669, 0.0
        %v677 = vsel %vm575, %v673, 0.0
        %v678 = vsel %vm576, %v661, 0.0
        %v679 = vsel %vm577, %v665, 0.0
        %v680 = vsel %vm578, %v669, 0.0
        %v681 = vsel %vm579, %v673, 0.0
        %v682 = vsel %vm580, %v661, 0.0
        %v683 = vsel %vm581, %v665, 0.0
        %v684 = vsel %vm582, %v669, 0.0
        %v685 = vsel %vm583, %v673, 0.0
        %v686 = vsel %vm584, %v661, 0.0
        %v687 = vsel %vm585, %v665, 0.0
        %v688 = vsel %vm586, %v669, 0.0
        %v689 = vsel %vm587, %v673, 0.0
        %v690 = vsel %vm588, %v661, 0.0
        %v691 = vsel %vm589, %v665, 0.0
        %v692 = vsel %vm590, %v669, 0.0
        %v693 = vsel %vm591, %v673, 0.0
        %v694 = vsel %vm592, %v661, 0.0
        %v695 = vsel %vm593, %v665, 0.0
        %v696 = vsel %vm594, %v669, 0.0
        %v697 = vsel %vm595, %v673, 0.0
        %v698 = vsel %vm596, %v661, 0.0
        %v699 = vsel %vm597, %v665, 0.0
        %v700 = vsel %vm598, %v669, 0.0
        %v701 = vsel %vm599, %v673, 0.0
        %v702 = vsel %vm600, %v661, 0.0
        %v703 = vsel %vm601, %v665, 0.0
        %v704 = vsel %vm602, %v669, 0.0
        %v705 = vsel %vm603, %v673, 0.0
        %v706 = vsel %vm604, %v661, 0.0
        %v707 = vsel %vm605, %v665, 0.0
        %v708 = vsel %vm606, %v669, 0.0
        %v709 = vsel %vm607, %v673, 0.0
        %v710 = vsel %vm608, %v661, 0.0
        %v711 = vsel %vm609, %v665, 0.0
        %v712 = vsel %vm610, %v669, 0.0
        %v713 = vsel %vm611, %v673, 0.0
        %v714 = vsel %vm612, %v661, 0.0
        %v715 = vsel %vm613, %v665, 0.0
        %v716 = vsel %vm614, %v669, 0.0
        %v717 = vsel %vm615, %v673, 0.0
        %v718 = vsel %vm616, %v661, 0.0
        %v719 = vsel %vm617, %v665, 0.0
        %v720 = vsel %vm618, %v669, 0.0
        %v721 = vsel %vm619, %v673, 0.0
        %v722 = vsel %vm620, %v661, 0.0
        %v723 = vsel %vm621, %v665, 0.0
        %v724 = vsel %vm622, %v669, 0.0
        %v725 = vsel %vm623, %v673, 0.0
        %v726 = vsel %vm624, %v661, 0.0
        %v727 = vsel %vm625, %v665, 0.0
        %v728 = vsel %vm626, %v669, 0.0
        %v729 = vsel %vm627, %v673, 0.0
        %v730 = vsel %vm628, %v661, 0.0
        %v731 = vsel %vm629, %v665, 0.0
        %v732 = vsel %vm630, %v669, 0.0
        %v733 = vsel %vm631, %v673, 0.0
        %v734 = vsel %vm632, %v661, 0.0
        %v735 = vsel %vm633, %v665, 0.0
        %v736 = vsel %vm634, %v669, 0.0
        %v737 = vsel %vm635, %v673, 0.0
        %v738 = vadd.f32 %v460, %v674
        %v739 = vadd.f32 %v461, %v675
        %v740 = vadd.f32 %v462, %v676
        %v741 = vadd.f32 %v463, %v677
        %v742 = vadd.f32 %v464, %v678
        %v743 = vadd.f32 %v465, %v679
        %v744 = vadd.f32 %v466, %v680
        %v745 = vadd.f32 %v467, %v681
        %v746 = vadd.f32 %v468, %v682
        %v747 = vadd.f32 %v469, %v683
        %v748 = vadd.f32 %v470, %v684
        %v749 = vadd.f32 %v471, %v685
        %v750 = vadd.f32 %v472, %v686
        %v751 = vadd.f32 %v473, %v687
        %v752 = vadd.f32 %v474, %v688
        %v753 = vadd.f32 %v475, %v689
        %v754 = vadd.f32 %v476, %v690
        %v755 = vadd.f32 %v477, %v691
        %v756 = vadd.f32 %v478, %v692
        %v757 = vadd.f32 %v479, %v693
        %v758 = vadd.f32 %v480, %v694
        %v759 = vadd.f32 %v481, %v695
        %v760 = vadd.f32 %v482, %v696
        %v761 = vadd.f32 %v483, %v697
        %v762 = vadd.f32 %v484, %v698
        %v763 = vadd.f32 %v485, %v699
        %v764 = vadd.f32 %v486, %v700
        %v765 = vadd.f32 %v487, %v701
        %v766 = vadd.f32 %v488, %v702
        %v767 = vadd.f32 %v489, %v703
        %v768 = vadd.f32 %v490, %v704
        %v769 = vadd.f32 %v491, %v705
        %v770 = vadd.f32 %v492, %v706
        %v771 = vadd.f32 %v493, %v707
        %v772 = vadd.f32 %v494, %v708
        %v773 = vadd.f32 %v495, %v709
        %v774 = vadd.f32 %v496, %v710
        %v775 = vadd.f32 %v497, %v711
        %v776 = vadd.f32 %v498, %v712
        %v777 = vadd.f32 %v499, %v713
        %v778 = vadd.f32 %v500, %v714
        %v779 = vadd.f32 %v501, %v715
        %v780 = vadd.f32 %v502, %v716
        %v781 = vadd.f32 %v503, %v717
        %v782 = vadd.f32 %v504, %v718
        %v783 = vadd.f32 %v505, %v719
        %v784 = vadd.f32 %v506, %v720
        %v785 = vadd.f32 %v507, %v721
        %v786 = vadd.f32 %v508, %v722
        %v787 = vadd.f32 %v509, %v723
        %v788 = vadd.f32 %v510, %v724
        %v789 = vadd.f32 %v511, %v725
        %v790 = vadd.f32 %v512, %v726
        %v791 = vadd.f32 %v513, %v727
        %v792 = vadd.f32 %v514, %v728
        %v793 = vadd.f32 %v515, %v729
        %v794 = vadd.f32 %v516, %v730
        %v795 = vadd.f32 %v517, %v731
        %v796 = vadd.f32 %v518, %v732
        %v797 = vadd.f32 %v519, %v733
        %v798 = vadd.f32 %v520, %v734
        %v799 = vadd.f32 %v521, %v735
        %v800 = vadd.f32 %v522, %v736
        %v801 = vadd.f32 %v523, %v737
        %v802 = vrot.slane %v183, 5
        %v803 = vrot.slane %v802, 4
        %v804 = vrot.slane %v184, 5
        %v805 = vrot.slane %v804, 4
        %v808 = vmul.f32 %v185, %v803
        %v809 = vmul.f32 %v186, %v805
        %v810 = vrot.slane %v209, 5
        %v811 = vrot.slane %v810, 4
        %v812 = vrot.slane %v210, 5
        %v813 = vrot.slane %v812, 4
        %v814 = vadd.s32 %v196, %v811
        %v815 = vadd.s32 %v198, %v813
        %v816 = vmul.f32 %v808, %v249
        %v817 = vmul.f32 %v809, %v251
        %v818 = vadd.s32 %v814, %v257
        %v819 = vadd.s32 %v815, %v259
        %v820 = vlaneseq
        %v821 = vshrl.u32 %v820, 7
        %v822 = vsub.s32 0, %v821
        %v823 = vrot.slane %v818, %v822
        %v824 = vlaneseq
        %v825 = vshrl.u32 %v824, 7
        %v826 = vsub.s32 4, %v825
        %v827 = vrot.slane %v818, %v826
        %v828 = vlaneseq
        %v829 = vshrl.u32 %v828, 7
        %v830 = vsub.s32 0, %v829
        %v831 = vrot.slane %v819, %v830
        %v832 = vlaneseq
        %v833 = vshrl.u32 %v832, 7
        %v834 = vsub.s32 4, %v833
        %v835 = vrot.slane %v819, %v834
        %v836 = vlaneseq
        %v837 = vshrl.u32 %v836, 7
        %v838 = vsub.s32 0, %v837
        %v839 = vrot.slane %v823, %v838
        %v840 = vlaneseq
        %v841 = vshrl.u32 %v840, 7
        %v842 = vsub.s32 0, %v841
        %v843 = vrot.slane %v827, %v842
        %v844 = vlaneseq
        %v845 = vshrl.u32 %v844, 7
        %v846 = vsub.s32 0, %v845
        %v847 = vrot.slane %v831, %v846
        %v848 = vlaneseq
        %v849 = vshrl.u32 %v848, 7
        %v850 = vsub.s32 0, %v849
        %v851 = vrot.slane %v835, %v850
        %vm852 = vcmp.eq.s32.totalorder %v216, %v839
        %vm853 = vcmp.eq.s32.totalorder %v216, %v843
        %vm854 = vcmp.eq.s32.totalorder %v216, %v847
        %vm855 = vcmp.eq.s32.totalorder %v216, %v851
        %vm856 = vcmp.eq.s32.totalorder %v217, %v839
        %vm857 = vcmp.eq.s32.totalorder %v217, %v843
        %vm858 = vcmp.eq.s32.totalorder %v217, %v847
        %vm859 = vcmp.eq.s32.totalorder %v217, %v851
        %vm860 = vcmp.eq.s32.totalorder %v218, %v839
        %vm861 = vcmp.eq.s32.totalorder %v218, %v843
        %vm862 = vcmp.eq.s32.totalorder %v218, %v847
        %vm863 = vcmp.eq.s32.totalorder %v218, %v851
        %vm864 = vcmp.eq.s32.totalorder %v219, %v839
        %vm865 = vcmp.eq.s32.totalorder %v219, %v843
        %vm866 = vcmp.eq.s32.totalorder %v219, %v847
        %vm867 = vcmp.eq.s32.totalorder %v219, %v851
        %vm868 = vcmp.eq.s32.totalorder %v220, %v839
        %vm869 = vcmp.eq.s32.totalorder %v220, %v843
        %vm870 = vcmp.eq.s32.totalorder %v220, %v847
        %vm871 = vcmp.eq.s32.totalorder %v220, %v851
        %vm872 = vcmp.eq.s32.totalorder %v221, %v839
        %vm873 = vcmp.eq.s32.totalorder %v221, %v843
        %vm874 = vcmp.eq.s32.totalorder %v221, %v847
        %vm875 = vcmp.eq.s32.totalorder %v221, %v851
        %vm876 = vcmp.eq.s32.totalorder %v222, %v839
        %vm877 = vcmp.eq.s32.totalorder %v222, %v843
        %vm878 = vcmp.eq.s32.totalorder %v222, %v847
        %vm879 = vcmp.eq.s32.totalorder %v222, %v851
        %vm880 = vcmp.eq.s32.totalorder %v223, %v839
        %vm881 = vcmp.eq.s32.totalorder %v223, %v843
        %vm882 = vcmp.eq.s32.totalorder %v223, %v847
        %vm883 = vcmp.eq.s32.totalorder %v223, %v851
        %vm884 = vcmp.eq.s32.totalorder %v224, %v839
        %vm885 = vcmp.eq.s32.totalorder %v224, %v843
        %vm886 = vcmp.eq.s32.totalorder %v224, %v847
        %vm887 = vcmp.eq.s32.totalorder %v224, %v851
        %vm888 = vcmp.eq.s32.totalorder %v225, %v839
        %vm889 = vcmp.eq.s32.totalorder %v225, %v843
        %vm890 = vcmp.eq.s32.totalorder %v225, %v847
        %vm891 = vcmp.eq.s32.totalorder %v225, %v851
        %vm892 = vcmp.eq.s32.totalorder %v226, %v839
        %vm893 = vcmp.eq.s32.totalorder %v226, %v843
        %vm894 = vcmp.eq.s32.totalorder %v226, %v847
        %vm895 = vcmp.eq.s32.totalorder %v226, %v851
        %vm896 = vcmp.eq.s32.totalorder %v227, %v839
        %vm897 = vcmp.eq.s32.totalorder %v227, %v843
        %vm898 = vcmp.eq.s32.totalorder %v227, %v847
        %vm899 = vcmp.eq.s32.totalorder %v227, %v851
        %vm900 = vcmp.eq.s32.totalorder %v228, %v839
        %vm901 = vcmp.eq.s32.totalorder %v228, %v843
        %vm902 = vcmp.eq.s32.totalorder %v228, %v847
        %vm903 = vcmp.eq.s32.totalorder %v228, %v851
        %vm904 = vcmp.eq.s32.totalorder %v229, %v839
        %vm905 = vcmp.eq.s32.totalorder %v229, %v843
        %vm906 = vcmp.eq.s32.totalorder %v229, %v847
        %vm907 = vcmp.eq.s32.totalorder %v229, %v851
        %vm908 = vcmp.eq.s32.totalorder %v230, %v839
        %vm909 = vcmp.eq.s32.totalorder %v230, %v843
        %vm910 = vcmp.eq.s32.totalorder %v230, %v847
        %vm911 = vcmp.eq.s32.totalorder %v230, %v851
        %vm912 = vcmp.eq.s32.totalorder %v231, %v839
        %vm913 = vcmp.eq.s32.totalorder %v231, %v843
        %vm914 = vcmp.eq.s32.totalorder %v231, %v847
        %vm915 = vcmp.eq.s32.totalorder %v231, %v851
        %v918 = vlaneseq
        %v919 = vshrl.u32 %v918, 7
        %v920 = vsub.s32 0, %v919
        %v921 = vrot.slane %v816, %v920
        %v922 = vlaneseq
        %v923 = vshrl.u32 %v922, 7
        %v924 = vsub.s32 4, %v923
        %v925 = vrot.slane %v816, %v924
        %v926 = vlaneseq
        %v927 = vshrl.u32 %v926, 7
        %v928 = vsub.s32 0, %v927
        %v929 = vrot.slane %v817, %v928
        %v930 = vlaneseq
        %v931 = vshrl.u32 %v930, 7
        %v932 = vsub.s32 4, %v931
        %v933 = vrot.slane %v817, %v932
        %v938 = vlaneseq
        %v939 = vshrl.u32 %v938, 7
        %v940 = vsub.s32 0, %v939
        %v941 = vrot.slane %v921, %v940
        %v942 = vlaneseq
        %v943 = vshrl.u32 %v942, 7
        %v944 = vsub.s32 0, %v943
        %v945 = vrot.slane %v925, %v944
        %v946 = vlaneseq
        %v947 = vshrl.u32 %v946, 7
        %v948 = vsub.s32 0, %v947
        %v949 = vrot.slane %v929, %v948
        %v950 = vlaneseq
        %v951 = vshrl.u32 %v950, 7
        %v952 = vsub.s32 0, %v951
        %v953 = vrot.slane %v933, %v952
        %v954 = vsel %vm852, %v941, 0.0
        %v955 = vsel %vm853, %v945, 0.0
        %v956 = vsel %vm854, %v949, 0.0
        %v957 = vsel %vm855, %v953, 0.0
        %v958 = vsel %vm856, %v941, 0.0
        %v959 = vsel %vm857, %v945, 0.0
        %v960 = vsel %vm858, %v949, 0.0
        %v961 = vsel %vm859, %v953, 0.0
        %v962 = vsel %vm860, %v941, 0.0
        %v963 = vsel %vm861, %v945, 0.0
        %v964 = vsel %vm862, %v949, 0.0
        %v965 = vsel %vm863, %v953, 0.0
        %v966 = vsel %vm864, %v941, 0.0
        %v967 = vsel %vm865, %v945, 0.0
        %v968 = vsel %vm866, %v949, 0.0
        %v969 = vsel %vm867, %v953, 0.0
        %v970 = vsel %vm868, %v941, 0.0
        %v971 = vsel %vm869, %v945, 0.0
        %v972 = vsel %vm870, %v949, 0.0
        %v973 = vsel %vm871, %v953, 0.0
        %v974 = vsel %vm872, %v941, 0.0
        %v975 = vsel %vm873, %v945, 0.0
        %v976 = vsel %vm874, %v949, 0.0
        %v977 = vsel %vm875, %v953, 0.0
        %v978 = vsel %vm876, %v941, 0.0
        %v979 = vsel %vm877, %v945, 0.0
        %v980 = vsel %vm878, %v949, 0.0
        %v981 = vsel %vm879, %v953, 0.0
        %v982 = vsel %vm880, %v941, 0.0
        %v983 = vsel %vm881, %v945, 0.0
        %v984 = vsel %vm882, %v949, 0.0
        %v985 = vsel %vm883, %v953, 0.0
        %v986 = vsel %vm884, %v941, 0.0
        %v987 = vsel %vm885, %v945, 0.0
        %v988 = vsel %vm886, %v949, 0.0
        %v989 = vsel %vm887, %v953, 0.0
        %v990 = vsel %vm888, %v941, 0.0
        %v991 = vsel %vm889, %v945, 0.0
        %v992 = vsel %vm890, %v949, 0.0
        %v993 = vsel %vm891, %v953, 0.0
        %v994 = vsel %vm892, %v941, 0.0
        %v995 = vsel %vm893, %v945, 0.0
        %v996 = vsel %vm894, %v949, 0.0
        %v997 = vsel %vm895, %v953, 0.0
        %v998 = vsel %vm896, %v941, 0.0
        %v999 = vsel %vm897, %v945, 0.0
        %v1000 = vsel %vm898, %v949, 0.0
        %v1001 = vsel %vm899, %v953, 0.0
        %v1002 = vsel %vm900, %v941, 0.0
        %v1003 = vsel %vm901, %v945, 0.0
        %v1004 = vsel %vm902, %v949, 0.0
        %v1005 = vsel %vm903, %v953, 0.0
        %v1006 = vsel %vm904, %v941, 0.0
        %v1007 = vsel %vm905, %v945, 0.0
        %v1008 = vsel %vm906, %v949, 0.0
        %v1009 = vsel %vm907, %v953, 0.0
        %v1010 = vsel %vm908, %v941, 0.0
        %v1011 = vsel %vm909, %v945, 0.0
        %v1012 = vsel %vm910, %v949, 0.0
        %v1013 = vsel %vm911, %v953, 0.0
        %v1014 = vsel %vm912, %v941, 0.0
        %v1015 = vsel %vm913, %v945, 0.0
        %v1016 = vsel %vm914, %v949, 0.0
        %v1017 = vsel %vm915, %v953, 0.0
        %v1018 = vadd.f32 %v738, %v954
        %v1019 = vadd.f32 %v739, %v955
        %v1020 = vadd.f32 %v740, %v956
        %v1021 = vadd.f32 %v741, %v957
        %v1022 = vadd.f32 %v742, %v958
        %v1023 = vadd.f32 %v743, %v959
        %v1024 = vadd.f32 %v744, %v960
        %v1025 = vadd.f32 %v745, %v961
        %v1026 = vadd.f32 %v746, %v962
        %v1027 = vadd.f32 %v747, %v963
        %v1028 = vadd.f32 %v748, %v964
        %v1029 = vadd.f32 %v749, %v965
        %v1030 = vadd.f32 %v750, %v966
        %v1031 = vadd.f32 %v751, %v967
        %v1032 = vadd.f32 %v752, %v968
        %v1033 = vadd.f32 %v753, %v969
        %v1034 = vadd.f32 %v754, %v970
        %v1035 = vadd.f32 %v755, %v971
        %v1036 = vadd.f32 %v756, %v972
        %v1037 = vadd.f32 %v757, %v973
        %v1038 = vadd.f32 %v758, %v974
        %v1039 = vadd.f32 %v759, %v975
        %v1040 = vadd.f32 %v760, %v976
        %v1041 = vadd.f32 %v761, %v977
        %v1042 = vadd.f32 %v762, %v978
        %v1043 = vadd.f32 %v763, %v979
        %v1044 = vadd.f32 %v764, %v980
        %v1045 = vadd.f32 %v765, %v981
        %v1046 = vadd.f32 %v766, %v982
        %v1047 = vadd.f32 %v767, %v983
        %v1048 = vadd.f32 %v768, %v984
        %v1049 = vadd.f32 %v769, %v985
        %v1050 = vadd.f32 %v770, %v986
        %v1051 = vadd.f32 %v771, %v987
        %v1052 = vadd.f32 %v772, %v988
        %v1053 = vadd.f32 %v773, %v989
        %v1054 = vadd.f32 %v774, %v990
        %v1055 = vadd.f32 %v775, %v991
        %v1056 = vadd.f32 %v776, %v992
        %v1057 = vadd.f32 %v777, %v993
        %v1058 = vadd.f32 %v778, %v994
        %v1059 = vadd.f32 %v779, %v995
        %v1060 = vadd.f32 %v780, %v996
        %v1061 = vadd.f32 %v781, %v997
        %v1062 = vadd.f32 %v782, %v998
        %v1063 = vadd.f32 %v783, %v999
        %v1064 = vadd.f32 %v784, %v1000
        %v1065 = vadd.f32 %v785, %v1001
        %v1066 = vadd.f32 %v786, %v1002
        %v1067 = vadd.f32 %v787, %v1003
        %v1068 = vadd.f32 %v788, %v1004
        %v1069 = vadd.f32 %v789, %v1005
        %v1070 = vadd.f32 %v790, %v1006
        %v1071 = vadd.f32 %v791, %v1007
        %v1072 = vadd.f32 %v792, %v1008
        %v1073 = vadd.f32 %v793, %v1009
        %v1074 = vadd.f32 %v794, %v1010
        %v1075 = vadd.f32 %v795, %v1011
        %v1076 = vadd.f32 %v796, %v1012
        %v1077 = vadd.f32 %v797, %v1013
        %v1078 = vadd.f32 %v798, %v1014
        %v1079 = vadd.f32 %v799, %v1015
        %v1080 = vadd.f32 %v800, %v1016
        %v1081 = vadd.f32 %v801, %v1017
        %v1082 = vmul.f32 %v808, %v527
        %v1083 = vmul.f32 %v809, %v529
        %v1084 = vadd.s32 %v814, %v535
        %v1085 = vadd.s32 %v815, %v537
        %v1086 = vlaneseq
        %v1087 = vshrl.u32 %v1086, 7
        %v1088 = vsub.s32 0, %v1087
        %v1089 = vrot.slane %v1084, %v1088
        %v1090 = vlaneseq
        %v1091 = vshrl.u32 %v1090, 7
        %v1092 = vsub.s32 4, %v1091
        %v1093 = vrot.slane %v1084, %v1092
        %v1094 = vlaneseq
        %v1095 = vshrl.u32 %v1094, 7
        %v1096 = vsub.s32 0, %v1095
        %v1097 = vrot.slane %v1085, %v1096
        %v1098 = vlaneseq
        %v1099 = vshrl.u32 %v1098, 7
        %v1100 = vsub.s32 4, %v1099
        %v1101 = vrot.slane %v1085, %v1100
        %v1102 = vlaneseq
        %v1103 = vshrl.u32 %v1102, 7
        %v1104 = vsub.s32 0, %v1103
        %v1105 = vrot.slane %v1089, %v1104
        %v1106 = vlaneseq
        %v1107 = vshrl.u32 %v1106, 7
        %v1108 = vsub.s32 0, %v1107
        %v1109 = vrot.slane %v1093, %v1108
        %v1110 = vlaneseq
        %v1111 = vshrl.u32 %v1110, 7
        %v1112 = vsub.s32 0, %v1111
        %v1113 = vrot.slane %v1097, %v1112
        %v1114 = vlaneseq
        %v1115 = vshrl.u32 %v1114, 7
        %v1116 = vsub.s32 0, %v1115
        %v1117 = vrot.slane %v1101, %v1116
        %vm1118 = vcmp.eq.s32.totalorder %v216, %v1105
        %vm1119 = vcmp.eq.s32.totalorder %v216, %v1109
        %vm1120 = vcmp.eq.s32.totalorder %v216, %v1113
        %vm1121 = vcmp.eq.s32.totalorder %v216, %v1117
        %vm1122 = vcmp.eq.s32.totalorder %v217, %v1105
        %vm1123 = vcmp.eq.s32.totalorder %v217, %v1109
        %vm1124 = vcmp.eq.s32.totalorder %v217, %v1113
        %vm1125 = vcmp.eq.s32.totalorder %v217, %v1117
        %vm1126 = vcmp.eq.s32.totalorder %v218, %v1105
        %vm1127 = vcmp.eq.s32.totalorder %v218, %v1109
        %vm1128 = vcmp.eq.s32.totalorder %v218, %v1113
        %vm1129 = vcmp.eq.s32.totalorder %v218, %v1117
        %vm1130 = vcmp.eq.s32.totalorder %v219, %v1105
        %vm1131 = vcmp.eq.s32.totalorder %v219, %v1109
        %vm1132 = vcmp.eq.s32.totalorder %v219, %v1113
        %vm1133 = vcmp.eq.s32.totalorder %v219, %v1117
        %vm1134 = vcmp.eq.s32.totalorder %v220, %v1105
        %vm1135 = vcmp.eq.s32.totalorder %v220, %v1109
        %vm1136 = vcmp.eq.s32.totalorder %v220, %v1113
        %vm1137 = vcmp.eq.s32.totalorder %v220, %v1117
        %vm1138 = vcmp.eq.s32.totalorder %v221, %v1105
        %vm1139 = vcmp.eq.s32.totalorder %v221, %v1109
        %vm1140 = vcmp.eq.s32.totalorder %v221, %v1113
        %vm1141 = vcmp.eq.s32.totalorder %v221, %v1117
        %vm1142 = vcmp.eq.s32.totalorder %v222, %v1105
        %vm1143 = vcmp.eq.s32.totalorder %v222, %v1109
        %vm1144 = vcmp.eq.s32.totalorder %v222, %v1113
        %vm1145 = vcmp.eq.s32.totalorder %v222, %v1117
        %vm1146 = vcmp.eq.s32.totalorder %v223, %v1105
        %vm1147 = vcmp.eq.s32.totalorder %v223, %v1109
        %vm1148 = vcmp.eq.s32.totalorder %v223, %v1113
        %vm1149 = vcmp.eq.s32.totalorder %v223, %v1117
        %vm1150 = vcmp.eq.s32.totalorder %v224, %v1105
        %vm1151 = vcmp.eq.s32.totalorder %v224, %v1109
        %vm1152 = vcmp.eq.s32.totalorder %v224, %v1113
        %vm1153 = vcmp.eq.s32.totalorder %v224, %v1117
        %vm1154 = vcmp.eq.s32.totalorder %v225, %v1105
        %vm1155 = vcmp.eq.s32.totalorder %v225, %v1109
        %vm1156 = vcmp.eq.s32.totalorder %v225, %v1113
        %vm1157 = vcmp.eq.s32.totalorder %v225, %v1117
        %vm1158 = vcmp.eq.s32.totalorder %v226, %v1105
        %vm1159 = vcmp.eq.s32.totalorder %v226, %v1109
        %vm1160 = vcmp.eq.s32.totalorder %v226, %v1113
        %vm1161 = vcmp.eq.s32.totalorder %v226, %v1117
        %vm1162 = vcmp.eq.s32.totalorder %v227, %v1105
        %vm1163 = vcmp.eq.s32.totalorder %v227, %v1109
        %vm1164 = vcmp.eq.s32.totalorder %v227, %v1113
        %vm1165 = vcmp.eq.s32.totalorder %v227, %v1117
        %vm1166 = vcmp.eq.s32.totalorder %v228, %v1105
        %vm1167 = vcmp.eq.s32.totalorder %v228, %v1109
        %vm1168 = vcmp.eq.s32.totalorder %v228, %v1113
        %vm1169 = vcmp.eq.s32.totalorder %v228, %v1117
        %vm1170 = vcmp.eq.s32.totalorder %v229, %v1105
        %vm1171 = vcmp.eq.s32.totalorder %v229, %v1109
        %vm1172 = vcmp.eq.s32.totalorder %v229, %v1113
        %vm1173 = vcmp.eq.s32.totalorder %v229, %v1117
        %vm1174 = vcmp.eq.s32.totalorder %v230, %v1105
        %vm1175 = vcmp.eq.s32.totalorder %v230, %v1109
        %vm1176 = vcmp.eq.s32.totalorder %v230, %v1113
        %vm1177 = vcmp.eq.s32.totalorder %v230, %v1117
        %vm1178 = vcmp.eq.s32.totalorder %v231, %v1105
        %vm1179 = vcmp.eq.s32.totalorder %v231, %v1109
        %vm1180 = vcmp.eq.s32.totalorder %v231, %v1113
        %vm1181 = vcmp.eq.s32.totalorder %v231, %v1117
        %v1184 = vlaneseq
        %v1185 = vshrl.u32 %v1184, 7
        %v1186 = vsub.s32 0, %v1185
        %v1187 = vrot.slane %v1082, %v1186
        %v1188 = vlaneseq
        %v1189 = vshrl.u32 %v1188, 7
        %v1190 = vsub.s32 4, %v1189
        %v1191 = vrot.slane %v1082, %v1190
        %v1192 = vlaneseq
        %v1193 = vshrl.u32 %v1192, 7
        %v1194 = vsub.s32 0, %v1193
        %v1195 = vrot.slane %v1083, %v1194
        %v1196 = vlaneseq
        %v1197 = vshrl.u32 %v1196, 7
        %v1198 = vsub.s32 4, %v1197
        %v1199 = vrot.slane %v1083, %v1198
        %v1204 = vlaneseq
        %v1205 = vshrl.u32 %v1204, 7
        %v1206 = vsub.s32 0, %v1205
        %v1207 = vrot.slane %v1187, %v1206
        %v1208 = vlaneseq
        %v1209 = vshrl.u32 %v1208, 7
        %v1210 = vsub.s32 0, %v1209
        %v1211 = vrot.slane %v1191, %v1210
        %v1212 = vlaneseq
        %v1213 = vshrl.u32 %v1212, 7
        %v1214 = vsub.s32 0, %v1213
        %v1215 = vrot.slane %v1195, %v1214
        %v1216 = vlaneseq
        %v1217 = vshrl.u32 %v1216, 7
        %v1218 = vsub.s32 0, %v1217
        %v1219 = vrot.slane %v1199, %v1218
        %v1220 = vsel %vm1118, %v1207, 0.0
        %v1221 = vsel %vm1119, %v1211, 0.0
        %v1222 = vsel %vm1120, %v1215, 0.0
        %v1223 = vsel %vm1121, %v1219, 0.0
        %v1224 = vsel %vm1122, %v1207, 0.0
        %v1225 = vsel %vm1123, %v1211, 0.0
        %v1226 = vsel %vm1124, %v1215, 0.0
        %v1227 = vsel %vm1125, %v1219, 0.0
        %v1228 = vsel %vm1126, %v1207, 0.0
        %v1229 = vsel %vm1127, %v1211, 0.0
        %v1230 = vsel %vm1128, %v1215, 0.0
        %v1231 = vsel %vm1129, %v1219, 0.0
        %v1232 = vsel %vm1130, %v1207, 0.0
        %v1233 = vsel %vm1131, %v1211, 0.0
        %v1234 = vsel %vm1132, %v1215, 0.0
        %v1235 = vsel %vm1133, %v1219, 0.0
        %v1236 = vsel %vm1134, %v1207, 0.0
        %v1237 = vsel %vm1135, %v1211, 0.0
        %v1238 = vsel %vm1136, %v1215, 0.0
        %v1239 = vsel %vm1137, %v1219, 0.0
        %v1240 = vsel %vm1138, %v1207, 0.0
        %v1241 = vsel %vm1139, %v1211, 0.0
        %v1242 = vsel %vm1140, %v1215, 0.0
        %v1243 = vsel %vm1141, %v1219, 0.0
        %v1244 = vsel %vm1142, %v1207, 0.0
        %v1245 = vsel %vm1143, %v1211, 0.0
        %v1246 = vsel %vm1144, %v1215, 0.0
        %v1247 = vsel %vm1145, %v1219, 0.0
        %v1248 = vsel %vm1146, %v1207, 0.0
        %v1249 = vsel %vm1147, %v1211, 0.0
        %v1250 = vsel %vm1148, %v1215, 0.0
        %v1251 = vsel %vm1149, %v1219, 0.0
        %v1252 = vsel %vm1150, %v1207, 0.0
        %v1253 = vsel %vm1151, %v1211, 0.0
        %v1254 = vsel %vm1152, %v1215, 0.0
        %v1255 = vsel %vm1153, %v1219, 0.0
        %v1256 = vsel %vm1154, %v1207, 0.0
        %v1257 = vsel %vm1155, %v1211, 0.0
        %v1258 = vsel %vm1156, %v1215, 0.0
        %v1259 = vsel %vm1157, %v1219, 0.0
        %v1260 = vsel %vm1158, %v1207, 0.0
        %v1261 = vsel %vm1159, %v1211, 0.0
        %v1262 = vsel %vm1160, %v1215, 0.0
        %v1263 = vsel %vm1161, %v1219, 0.0
        %v1264 = vsel %vm1162, %v1207, 0.0
        %v1265 = vsel %vm1163, %v1211, 0.0
        %v1266 = vsel %vm1164, %v1215, 0.0
        %v1267 = vsel %vm1165, %v1219, 0.0
        %v1268 = vsel %vm1166, %v1207, 0.0
        %v1269 = vsel %vm1167, %v1211, 0.0
        %v1270 = vsel %vm1168, %v1215, 0.0
        %v1271 = vsel %vm1169, %v1219, 0.0
        %v1272 = vsel %vm1170, %v1207, 0.0
        %v1273 = vsel %vm1171, %v1211, 0.0
        %v1274 = vsel %vm1172, %v1215, 0.0
        %v1275 = vsel %vm1173, %v1219, 0.0
        %v1276 = vsel %vm1174, %v1207, 0.0
        %v1277 = vsel %vm1175, %v1211, 0.0
        %v1278 = vsel %vm1176, %v1215, 0.0
        %v1279 = vsel %vm1177, %v1219, 0.0
        %v1280 = vsel %vm1178, %v1207, 0.0
        %v1281 = vsel %vm1179, %v1211, 0.0
        %v1282 = vsel %vm1180, %v1215, 0.0
        %v1283 = vsel %vm1181, %v1219, 0.0
        %v1284 = vadd.f32 %v1018, %v1220
        %v1285 = vadd.f32 %v1019, %v1221
        %v1286 = vadd.f32 %v1020, %v1222
        %v1287 = vadd.f32 %v1021, %v1223
        %v1288 = vadd.f32 %v1022, %v1224
        %v1289 = vadd.f32 %v1023, %v1225
        %v1290 = vadd.f32 %v1024, %v1226
        %v1291 = vadd.f32 %v1025, %v1227
        %v1292 = vadd.f32 %v1026, %v1228
        %v1293 = vadd.f32 %v1027, %v1229
        %v1294 = vadd.f32 %v1028, %v1230
        %v1295 = vadd.f32 %v1029, %v1231
        %v1296 = vadd.f32 %v1030, %v1232
        %v1297 = vadd.f32 %v1031, %v1233
        %v1298 = vadd.f32 %v1032, %v1234
        %v1299 = vadd.f32 %v1033, %v1235
        %v1300 = vadd.f32 %v1034, %v1236
        %v1301 = vadd.f32 %v1035, %v1237
        %v1302 = vadd.f32 %v1036, %v1238
        %v1303 = vadd.f32 %v1037, %v1239
        %v1304 = vadd.f32 %v1038, %v1240
        %v1305 = vadd.f32 %v1039, %v1241
        %v1306 = vadd.f32 %v1040, %v1242
        %v1307 = vadd.f32 %v1041, %v1243
        %v1308 = vadd.f32 %v1042, %v1244
        %v1309 = vadd.f32 %v1043, %v1245
        %v1310 = vadd.f32 %v1044, %v1246
        %v1311 = vadd.f32 %v1045, %v1247
        %v1312 = vadd.f32 %v1046, %v1248
        %v1313 = vadd.f32 %v1047, %v1249
        %v1314 = vadd.f32 %v1048, %v1250
        %v1315 = vadd.f32 %v1049, %v1251
        %v1316 = vadd.f32 %v1050, %v1252
        %v1317 = vadd.f32 %v1051, %v1253
        %v1318 = vadd.f32 %v1052, %v1254
        %v1319 = vadd.f32 %v1053, %v1255
        %v1320 = vadd.f32 %v1054, %v1256
        %v1321 = vadd.f32 %v1055, %v1257
        %v1322 = vadd.f32 %v1056, %v1258
        %v1323 = vadd.f32 %v1057, %v1259
        %v1324 = vadd.f32 %v1058, %v1260
        %v1325 = vadd.f32 %v1059, %v1261
        %v1326 = vadd.f32 %v1060, %v1262
        %v1327 = vadd.f32 %v1061, %v1263
        %v1328 = vadd.f32 %v1062, %v1264
        %v1329 = vadd.f32 %v1063, %v1265
        %v1330 = vadd.f32 %v1064, %v1266
        %v1331 = vadd.f32 %v1065, %v1267
        %v1332 = vadd.f32 %v1066, %v1268
        %v1333 = vadd.f32 %v1067, %v1269
        %v1334 = vadd.f32 %v1068, %v1270
        %v1335 = vadd.f32 %v1069, %v1271
        %v1336 = vadd.f32 %v1070, %v1272
        %v1337 = vadd.f32 %v1071, %v1273
        %v1338 = vadd.f32 %v1072, %v1274
        %v1339 = vadd.f32 %v1073, %v1275
        %v1340 = vadd.f32 %v1074, %v1276
        %v1341 = vadd.f32 %v1075, %v1277
        %v1342 = vadd.f32 %v1076, %v1278
        %v1343 = vadd.f32 %v1077, %v1279
        %v1344 = vadd.f32 %v1078, %v1280
        %v1345 = vadd.f32 %v1079, %v1281
        %v1346 = vadd.f32 %v1080, %v1282
        %v1347 = vadd.f32 %v1081, %v1283
        %v1348 = vmul.f32 %v183, %v235
        %v1349 = vmul.f32 %v184, %v237
        %v1350 = vadd.s32 %v204, %v243
        %v1351 = vadd.s32 %v206, %v245
        %v1352 = vmul.f32 %v1348, %v249
        %v1353 = vmul.f32 %v1349, %v251
        %v1354 = vadd.s32 %v1350, %v257
        %v1355 = vadd.s32 %v1351, %v259
        %v1356 = vlaneseq
        %v1357 = vshrl.u32 %v1356, 7
        %v1358 = vsub.s32 0, %v1357
        %v1359 = vrot.slane %v1354, %v1358
        %v1360 = vlaneseq
        %v1361 = vshrl.u32 %v1360, 7
        %v1362 = vsub.s32 4, %v1361
        %v1363 = vrot.slane %v1354, %v1362
        %v1364 = vlaneseq
        %v1365 = vshrl.u32 %v1364, 7
        %v1366 = vsub.s32 0, %v1365
        %v1367 = vrot.slane %v1355, %v1366
        %v1368 = vlaneseq
        %v1369 = vshrl.u32 %v1368, 7
        %v1370 = vsub.s32 4, %v1369
        %v1371 = vrot.slane %v1355, %v1370
        %v1372 = vlaneseq
        %v1373 = vshrl.u32 %v1372, 7
        %v1374 = vsub.s32 0, %v1373
        %v1375 = vrot.slane %v1359, %v1374
        %v1376 = vlaneseq
        %v1377 = vshrl.u32 %v1376, 7
        %v1378 = vsub.s32 0, %v1377
        %v1379 = vrot.slane %v1363, %v1378
        %v1380 = vlaneseq
        %v1381 = vshrl.u32 %v1380, 7
        %v1382 = vsub.s32 0, %v1381
        %v1383 = vrot.slane %v1367, %v1382
        %v1384 = vlaneseq
        %v1385 = vshrl.u32 %v1384, 7
        %v1386 = vsub.s32 0, %v1385
        %v1387 = vrot.slane %v1371, %v1386
        %vm1388 = vcmp.eq.s32.totalorder %v216, %v1375
        %vm1389 = vcmp.eq.s32.totalorder %v216, %v1379
        %vm1390 = vcmp.eq.s32.totalorder %v216, %v1383
        %vm1391 = vcmp.eq.s32.totalorder %v216, %v1387
        %vm1392 = vcmp.eq.s32.totalorder %v217, %v1375
        %vm1393 = vcmp.eq.s32.totalorder %v217, %v1379
        %vm1394 = vcmp.eq.s32.totalorder %v217, %v1383
        %vm1395 = vcmp.eq.s32.totalorder %v217, %v1387
        %vm1396 = vcmp.eq.s32.totalorder %v218, %v1375
        %vm1397 = vcmp.eq.s32.totalorder %v218, %v1379
        %vm1398 = vcmp.eq.s32.totalorder %v218, %v1383
        %vm1399 = vcmp.eq.s32.totalorder %v218, %v1387
        %vm1400 = vcmp.eq.s32.totalorder %v219, %v1375
        %vm1401 = vcmp.eq.s32.totalorder %v219, %v1379
        %vm1402 = vcmp.eq.s32.totalorder %v219, %v1383
        %vm1403 = vcmp.eq.s32.totalorder %v219, %v1387
        %vm1404 = vcmp.eq.s32.totalorder %v220, %v1375
        %vm1405 = vcmp.eq.s32.totalorder %v220, %v1379
        %vm1406 = vcmp.eq.s32.totalorder %v220, %v1383
        %vm1407 = vcmp.eq.s32.totalorder %v220, %v1387
        %vm1408 = vcmp.eq.s32.totalorder %v221, %v1375
        %vm1409 = vcmp.eq.s32.totalorder %v221, %v1379
        %vm1410 = vcmp.eq.s32.totalorder %v221, %v1383
        %vm1411 = vcmp.eq.s32.totalorder %v221, %v1387
        %vm1412 = vcmp.eq.s32.totalorder %v222, %v1375
        %vm1413 = vcmp.eq.s32.totalorder %v222, %v1379
        %vm1414 = vcmp.eq.s32.totalorder %v222, %v1383
        %vm1415 = vcmp.eq.s32.totalorder %v222, %v1387
        %vm1416 = vcmp.eq.s32.totalorder %v223, %v1375
        %vm1417 = vcmp.eq.s32.totalorder %v223, %v1379
        %vm1418 = vcmp.eq.s32.totalorder %v223, %v1383
        %vm1419 = vcmp.eq.s32.totalorder %v223, %v1387
        %vm1420 = vcmp.eq.s32.totalorder %v224, %v1375
        %vm1421 = vcmp.eq.s32.totalorder %v224, %v1379
        %vm1422 = vcmp.eq.s32.totalorder %v224, %v1383
        %vm1423 = vcmp.eq.s32.totalorder %v224, %v1387
        %vm1424 = vcmp.eq.s32.totalorder %v225, %v1375
        %vm1425 = vcmp.eq.s32.totalorder %v225, %v1379
        %vm1426 = vcmp.eq.s32.totalorder %v225, %v1383
        %vm1427 = vcmp.eq.s32.totalorder %v225, %v1387
        %vm1428 = vcmp.eq.s32.totalorder %v226, %v1375
        %vm1429 = vcmp.eq.s32.totalorder %v226, %v1379
        %vm1430 = vcmp.eq.s32.totalorder %v226, %v1383
        %vm1431 = vcmp.eq.s32.totalorder %v226, %v1387
        %vm1432 = vcmp.eq.s32.totalorder %v227, %v1375
        %vm1433 = vcmp.eq.s32.totalorder %v227, %v1379
        %vm1434 = vcmp.eq.s32.totalorder %v227, %v1383
        %vm1435 = vcmp.eq.s32.totalorder %v227, %v1387
        %vm1436 = vcmp.eq.s32.totalorder %v228, %v1375
        %vm1437 = vcmp.eq.s32.totalorder %v228, %v1379
        %vm1438 = vcmp.eq.s32.totalorder %v228, %v1383
        %vm1439 = vcmp.eq.s32.totalorder %v228, %v1387
        %vm1440 = vcmp.eq.s32.totalorder %v229, %v1375
        %vm1441 = vcmp.eq.s32.totalorder %v229, %v1379
        %vm1442 = vcmp.eq.s32.totalorder %v229, %v1383
        %vm1443 = vcmp.eq.s32.totalorder %v229, %v1387
        %vm1444 = vcmp.eq.s32.totalorder %v230, %v1375
        %vm1445 = vcmp.eq.s32.totalorder %v230, %v1379
        %vm1446 = vcmp.eq.s32.totalorder %v230, %v1383
        %vm1447 = vcmp.eq.s32.totalorder %v230, %v1387
        %vm1448 = vcmp.eq.s32.totalorder %v231, %v1375
        %vm1449 = vcmp.eq.s32.totalorder %v231, %v1379
        %vm1450 = vcmp.eq.s32.totalorder %v231, %v1383
        %vm1451 = vcmp.eq.s32.totalorder %v231, %v1387
        %v1454 = vlaneseq
        %v1455 = vshrl.u32 %v1454, 7
        %v1456 = vsub.s32 0, %v1455
        %v1457 = vrot.slane %v1352, %v1456
        %v1458 = vlaneseq
        %v1459 = vshrl.u32 %v1458, 7
        %v1460 = vsub.s32 4, %v1459
        %v1461 = vrot.slane %v1352, %v1460
        %v1462 = vlaneseq
        %v1463 = vshrl.u32 %v1462, 7
        %v1464 = vsub.s32 0, %v1463
        %v1465 = vrot.slane %v1353, %v1464
        %v1466 = vlaneseq
        %v1467 = vshrl.u32 %v1466, 7
        %v1468 = vsub.s32 4, %v1467
        %v1469 = vrot.slane %v1353, %v1468
        %v1474 = vlaneseq
        %v1475 = vshrl.u32 %v1474, 7
        %v1476 = vsub.s32 0, %v1475
        %v1477 = vrot.slane %v1457, %v1476
        %v1478 = vlaneseq
        %v1479 = vshrl.u32 %v1478, 7
        %v1480 = vsub.s32 0, %v1479
        %v1481 = vrot.slane %v1461, %v1480
        %v1482 = vlaneseq
        %v1483 = vshrl.u32 %v1482, 7
        %v1484 = vsub.s32 0, %v1483
        %v1485 = vrot.slane %v1465, %v1484
        %v1486 = vlaneseq
        %v1487 = vshrl.u32 %v1486, 7
        %v1488 = vsub.s32 0, %v1487
        %v1489 = vrot.slane %v1469, %v1488
        %v1490 = vsel %vm1388, %v1477, 0.0
        %v1491 = vsel %vm1389, %v1481, 0.0
        %v1492 = vsel %vm1390, %v1485, 0.0
        %v1493 = vsel %vm1391, %v1489, 0.0
        %v1494 = vsel %vm1392, %v1477, 0.0
        %v1495 = vsel %vm1393, %v1481, 0.0
        %v1496 = vsel %vm1394, %v1485, 0.0
        %v1497 = vsel %vm1395, %v1489, 0.0
        %v1498 = vsel %vm1396, %v1477, 0.0
        %v1499 = vsel %vm1397, %v1481, 0.0
        %v1500 = vsel %vm1398, %v1485, 0.0
        %v1501 = vsel %vm1399, %v1489, 0.0
        %v1502 = vsel %vm1400, %v1477, 0.0
        %v1503 = vsel %vm1401, %v1481, 0.0
        %v1504 = vsel %vm1402, %v1485, 0.0
        %v1505 = vsel %vm1403, %v1489, 0.0
        %v1506 = vsel %vm1404, %v1477, 0.0
        %v1507 = vsel %vm1405, %v1481, 0.0
        %v1508 = vsel %vm1406, %v1485, 0.0
        %v1509 = vsel %vm1407, %v1489, 0.0
        %v1510 = vsel %vm1408, %v1477, 0.0
        %v1511 = vsel %vm1409, %v1481, 0.0
        %v1512 = vsel %vm1410, %v1485, 0.0
        %v1513 = vsel %vm1411, %v1489, 0.0
        %v1514 = vsel %vm1412, %v1477, 0.0
        %v1515 = vsel %vm1413, %v1481, 0.0
        %v1516 = vsel %vm1414, %v1485, 0.0
        %v1517 = vsel %vm1415, %v1489, 0.0
        %v1518 = vsel %vm1416, %v1477, 0.0
        %v1519 = vsel %vm1417, %v1481, 0.0
        %v1520 = vsel %vm1418, %v1485, 0.0
        %v1521 = vsel %vm1419, %v1489, 0.0
        %v1522 = vsel %vm1420, %v1477, 0.0
        %v1523 = vsel %vm1421, %v1481, 0.0
        %v1524 = vsel %vm1422, %v1485, 0.0
        %v1525 = vsel %vm1423, %v1489, 0.0
        %v1526 = vsel %vm1424, %v1477, 0.0
        %v1527 = vsel %vm1425, %v1481, 0.0
        %v1528 = vsel %vm1426, %v1485, 0.0
        %v1529 = vsel %vm1427, %v1489, 0.0
        %v1530 = vsel %vm1428, %v1477, 0.0
        %v1531 = vsel %vm1429, %v1481, 0.0
        %v1532 = vsel %vm1430, %v1485, 0.0
        %v1533 = vsel %vm1431, %v1489, 0.0
        %v1534 = vsel %vm1432, %v1477, 0.0
        %v1535 = vsel %vm1433, %v1481, 0.0
        %v1536 = vsel %vm1434, %v1485, 0.0
        %v1537 = vsel %vm1435, %v1489, 0.0
        %v1538 = vsel %vm1436, %v1477, 0.0
        %v1539 = vsel %vm1437, %v1481, 0.0
        %v1540 = vsel %vm1438, %v1485, 0.0
        %v1541 = vsel %vm1439, %v1489, 0.0
        %v1542 = vsel %vm1440, %v1477, 0.0
        %v1543 = vsel %vm1441, %v1481, 0.0
        %v1544 = vsel %vm1442, %v1485, 0.0
        %v1545 = vsel %vm1443, %v1489, 0.0
        %v1546 = vsel %vm1444, %v1477, 0.0
        %v1547 = vsel %vm1445, %v1481, 0.0
        %v1548 = vsel %vm1446, %v1485, 0.0
        %v1549 = vsel %vm1447, %v1489, 0.0
        %v1550 = vsel %vm1448, %v1477, 0.0
        %v1551 = vsel %vm1449, %v1481, 0.0
        %v1552 = vsel %vm1450, %v1485, 0.0
        %v1553 = vsel %vm1451, %v1489, 0.0
        %v1554 = vadd.f32 %v1284, %v1490
        %v1555 = vadd.f32 %v1285, %v1491
        %v1556 = vadd.f32 %v1286, %v1492
        %v1557 = vadd.f32 %v1287, %v1493
        %v1558 = vadd.f32 %v1288, %v1494
        %v1559 = vadd.f32 %v1289, %v1495
        %v1560 = vadd.f32 %v1290, %v1496
        %v1561 = vadd.f32 %v1291, %v1497
        %v1562 = vadd.f32 %v1292, %v1498
        %v1563 = vadd.f32 %v1293, %v1499
        %v1564 = vadd.f32 %v1294, %v1500
        %v1565 = vadd.f32 %v1295, %v1501
        %v1566 = vadd.f32 %v1296, %v1502
        %v1567 = vadd.f32 %v1297, %v1503
        %v1568 = vadd.f32 %v1298, %v1504
        %v1569 = vadd.f32 %v1299, %v1505
        %v1570 = vadd.f32 %v1300, %v1506
        %v1571 = vadd.f32 %v1301, %v1507
        %v1572 = vadd.f32 %v1302, %v1508
        %v1573 = vadd.f32 %v1303, %v1509
        %v1574 = vadd.f32 %v1304, %v1510
        %v1575 = vadd.f32 %v1305, %v1511
        %v1576 = vadd.f32 %v1306, %v1512
        %v1577 = vadd.f32 %v1307, %v1513
        %v1578 = vadd.f32 %v1308, %v1514
        %v1579 = vadd.f32 %v1309, %v1515
        %v1580 = vadd.f32 %v1310, %v1516
        %v1581 = vadd.f32 %v1311, %v1517
        %v1582 = vadd.f32 %v1312, %v1518
        %v1583 = vadd.f32 %v1313, %v1519
        %v1584 = vadd.f32 %v1314, %v1520
        %v1585 = vadd.f32 %v1315, %v1521
        %v1586 = vadd.f32 %v1316, %v1522
        %v1587 = vadd.f32 %v1317, %v1523
        %v1588 = vadd.f32 %v1318, %v1524
        %v1589 = vadd.f32 %v1319, %v1525
        %v1590 = vadd.f32 %v1320, %v1526
        %v1591 = vadd.f32 %v1321, %v1527
        %v1592 = vadd.f32 %v1322, %v1528
        %v1593 = vadd.f32 %v1323, %v1529
        %v1594 = vadd.f32 %v1324, %v1530
        %v1595 = vadd.f32 %v1325, %v1531
        %v1596 = vadd.f32 %v1326, %v1532
        %v1597 = vadd.f32 %v1327, %v1533
        %v1598 = vadd.f32 %v1328, %v1534
        %v1599 = vadd.f32 %v1329, %v1535
        %v1600 = vadd.f32 %v1330, %v1536
        %v1601 = vadd.f32 %v1331, %v1537
        %v1602 = vadd.f32 %v1332, %v1538
        %v1603 = vadd.f32 %v1333, %v1539
        %v1604 = vadd.f32 %v1334, %v1540
        %v1605 = vadd.f32 %v1335, %v1541
        %v1606 = vadd.f32 %v1336, %v1542
        %v1607 = vadd.f32 %v1337, %v1543
        %v1608 = vadd.f32 %v1338, %v1544
        %v1609 = vadd.f32 %v1339, %v1545
        %v1610 = vadd.f32 %v1340, %v1546
        %v1611 = vadd.f32 %v1341, %v1547
        %v1612 = vadd.f32 %v1342, %v1548
        %v1613 = vadd.f32 %v1343, %v1549
        %v1614 = vadd.f32 %v1344, %v1550
        %v1615 = vadd.f32 %v1345, %v1551
        %v1616 = vadd.f32 %v1346, %v1552
        %v1617 = vadd.f32 %v1347, %v1553
        %v1618 = vmul.f32 %v1348, %v527
        %v1619 = vmul.f32 %v1349, %v529
        %v1620 = vadd.s32 %v1350, %v535
        %v1621 = vadd.s32 %v1351, %v537
        %v1622 = vlaneseq
        %v1623 = vshrl.u32 %v1622, 7
        %v1624 = vsub.s32 0, %v1623
        %v1625 = vrot.slane %v1620, %v1624
        %v1626 = vlaneseq
        %v1627 = vshrl.u32 %v1626, 7
        %v1628 = vsub.s32 4, %v1627
        %v1629 = vrot.slane %v1620, %v1628
        %v1630 = vlaneseq
        %v1631 = vshrl.u32 %v1630, 7
        %v1632 = vsub.s32 0, %v1631
        %v1633 = vrot.slane %v1621, %v1632
        %v1634 = vlaneseq
        %v1635 = vshrl.u32 %v1634, 7
        %v1636 = vsub.s32 4, %v1635
        %v1637 = vrot.slane %v1621, %v1636
        %v1638 = vlaneseq
        %v1639 = vshrl.u32 %v1638, 7
        %v1640 = vsub.s32 0, %v1639
        %v1641 = vrot.slane %v1625, %v1640
        %v1642 = vlaneseq
        %v1643 = vshrl.u32 %v1642, 7
        %v1644 = vsub.s32 0, %v1643
        %v1645 = vrot.slane %v1629, %v1644
        %v1646 = vlaneseq
        %v1647 = vshrl.u32 %v1646, 7
        %v1648 = vsub.s32 0, %v1647
        %v1649 = vrot.slane %v1633, %v1648
        %v1650 = vlaneseq
        %v1651 = vshrl.u32 %v1650, 7
        %v1652 = vsub.s32 0, %v1651
        %v1653 = vrot.slane %v1637, %v1652
        %vm1654 = vcmp.eq.s32.totalorder %v216, %v1641
        %vm1655 = vcmp.eq.s32.totalorder %v216, %v1645
        %vm1656 = vcmp.eq.s32.totalorder %v216, %v1649
        %vm1657 = vcmp.eq.s32.totalorder %v216, %v1653
        %vm1658 = vcmp.eq.s32.totalorder %v217, %v1641
        %vm1659 = vcmp.eq.s32.totalorder %v217, %v1645
        %vm1660 = vcmp.eq.s32.totalorder %v217, %v1649
        %vm1661 = vcmp.eq.s32.totalorder %v217, %v1653
        %vm1662 = vcmp.eq.s32.totalorder %v218, %v1641
        %vm1663 = vcmp.eq.s32.totalorder %v218, %v1645
        %vm1664 = vcmp.eq.s32.totalorder %v218, %v1649
        %vm1665 = vcmp.eq.s32.totalorder %v218, %v1653
        %vm1666 = vcmp.eq.s32.totalorder %v219, %v1641
        %vm1667 = vcmp.eq.s32.totalorder %v219, %v1645
        %vm1668 = vcmp.eq.s32.totalorder %v219, %v1649
        %vm1669 = vcmp.eq.s32.totalorder %v219, %v1653
        %vm1670 = vcmp.eq.s32.totalorder %v220, %v1641
        %vm1671 = vcmp.eq.s32.totalorder %v220, %v1645
        %vm1672 = vcmp.eq.s32.totalorder %v220, %v1649
        %vm1673 = vcmp.eq.s32.totalorder %v220, %v1653
        %vm1674 = vcmp.eq.s32.totalorder %v221, %v1641
        %vm1675 = vcmp.eq.s32.totalorder %v221, %v1645
        %vm1676 = vcmp.eq.s32.totalorder %v221, %v1649
        %vm1677 = vcmp.eq.s32.totalorder %v221, %v1653
        %vm1678 = vcmp.eq.s32.totalorder %v222, %v1641
        %vm1679 = vcmp.eq.s32.totalorder %v222, %v1645
        %vm1680 = vcmp.eq.s32.totalorder %v222, %v1649
        %vm1681 = vcmp.eq.s32.totalorder %v222, %v1653
        %vm1682 = vcmp.eq.s32.totalorder %v223, %v1641
        %vm1683 = vcmp.eq.s32.totalorder %v223, %v1645
        %vm1684 = vcmp.eq.s32.totalorder %v223, %v1649
        %vm1685 = vcmp.eq.s32.totalorder %v223, %v1653
        %vm1686 = vcmp.eq.s32.totalorder %v224, %v1641
        %vm1687 = vcmp.eq.s32.totalorder %v224, %v1645
        %vm1688 = vcmp.eq.s32.totalorder %v224, %v1649
        %vm1689 = vcmp.eq.s32.totalorder %v224, %v1653
        %vm1690 = vcmp.eq.s32.totalorder %v225, %v1641
        %vm1691 = vcmp.eq.s32.totalorder %v225, %v1645
        %vm1692 = vcmp.eq.s32.totalorder %v225, %v1649
        %vm1693 = vcmp.eq.s32.totalorder %v225, %v1653
        %vm1694 = vcmp.eq.s32.totalorder %v226, %v1641
        %vm1695 = vcmp.eq.s32.totalorder %v226, %v1645
        %vm1696 = vcmp.eq.s32.totalorder %v226, %v1649
        %vm1697 = vcmp.eq.s32.totalorder %v226, %v1653
        %vm1698 = vcmp.eq.s32.totalorder %v227, %v1641
        %vm1699 = vcmp.eq.s32.totalorder %v227, %v1645
        %vm1700 = vcmp.eq.s32.totalorder %v227, %v1649
        %vm1701 = vcmp.eq.s32.totalorder %v227, %v1653
        %vm1702 = vcmp.eq.s32.totalorder %v228, %v1641
        %vm1703 = vcmp.eq.s32.totalorder %v228, %v1645
        %vm1704 = vcmp.eq.s32.totalorder %v228, %v1649
        %vm1705 = vcmp.eq.s32.totalorder %v228, %v1653
        %vm1706 = vcmp.eq.s32.totalorder %v229, %v1641
        %vm1707 = vcmp.eq.s32.totalorder %v229, %v1645
        %vm1708 = vcmp.eq.s32.totalorder %v229, %v1649
        %vm1709 = vcmp.eq.s32.totalorder %v229, %v1653
        %vm1710 = vcmp.eq.s32.totalorder %v230, %v1641
        %vm1711 = vcmp.eq.s32.totalorder %v230, %v1645
        %vm1712 = vcmp.eq.s32.totalorder %v230, %v1649
        %vm1713 = vcmp.eq.s32.totalorder %v230, %v1653
        %vm1714 = vcmp.eq.s32.totalorder %v231, %v1641
        %vm1715 = vcmp.eq.s32.totalorder %v231, %v1645
        %vm1716 = vcmp.eq.s32.totalorder %v231, %v1649
        %vm1717 = vcmp.eq.s32.totalorder %v231, %v1653
        %v1720 = vlaneseq
        %v1721 = vshrl.u32 %v1720, 7
        %v1722 = vsub.s32 0, %v1721
        %v1723 = vrot.slane %v1618, %v1722
        %v1724 = vlaneseq
        %v1725 = vshrl.u32 %v1724, 7
        %v1726 = vsub.s32 4, %v1725
        %v1727 = vrot.slane %v1618, %v1726
        %v1728 = vlaneseq
        %v1729 = vshrl.u32 %v1728, 7
        %v1730 = vsub.s32 0, %v1729
        %v1731 = vrot.slane %v1619, %v1730
        %v1732 = vlaneseq
        %v1733 = vshrl.u32 %v1732, 7
        %v1734 = vsub.s32 4, %v1733
        %v1735 = vrot.slane %v1619, %v1734
        %v1740 = vlaneseq
        %v1741 = vshrl.u32 %v1740, 7
        %v1742 = vsub.s32 0, %v1741
        %v1743 = vrot.slane %v1723, %v1742
        %v1744 = vlaneseq
        %v1745 = vshrl.u32 %v1744, 7
        %v1746 = vsub.s32 0, %v1745
        %v1747 = vrot.slane %v1727, %v1746
        %v1748 = vlaneseq
        %v1749 = vshrl.u32 %v1748, 7
        %v1750 = vsub.s32 0, %v1749
        %v1751 = vrot.slane %v1731, %v1750
        %v1752 = vlaneseq
        %v1753 = vshrl.u32 %v1752, 7
        %v1754 = vsub.s32 0, %v1753
        %v1755 = vrot.slane %v1735, %v1754
        %v1756 = vsel %vm1654, %v1743, 0.0
        %v1757 = vsel %vm1655, %v1747, 0.0
        %v1758 = vsel %vm1656, %v1751, 0.0
        %v1759 = vsel %vm1657, %v1755, 0.0
        %v1760 = vsel %vm1658, %v1743, 0.0
        %v1761 = vsel %vm1659, %v1747, 0.0
        %v1762 = vsel %vm1660, %v1751, 0.0
        %v1763 = vsel %vm1661, %v1755, 0.0
        %v1764 = vsel %vm1662, %v1743, 0.0
        %v1765 = vsel %vm1663, %v1747, 0.0
        %v1766 = vsel %vm1664, %v1751, 0.0
        %v1767 = vsel %vm1665, %v1755, 0.0
        %v1768 = vsel %vm1666, %v1743, 0.0
        %v1769 = vsel %vm1667, %v1747, 0.0
        %v1770 = vsel %vm1668, %v1751, 0.0
        %v1771 = vsel %vm1669, %v1755, 0.0
        %v1772 = vsel %vm1670, %v1743, 0.0
        %v1773 = vsel %vm1671, %v1747, 0.0
        %v1774 = vsel %vm1672, %v1751, 0.0
        %v1775 = vsel %vm1673, %v1755, 0.0
        %v1776 = vsel %vm1674, %v1743, 0.0
        %v1777 = vsel %vm1675, %v1747, 0.0
        %v1778 = vsel %vm1676, %v1751, 0.0
        %v1779 = vsel %vm1677, %v1755, 0.0
        %v1780 = vsel %vm1678, %v1743, 0.0
        %v1781 = vsel %vm1679, %v1747, 0.0
        %v1782 = vsel %vm1680, %v1751, 0.0
        %v1783 = vsel %vm1681, %v1755, 0.0
        %v1784 = vsel %vm1682, %v1743, 0.0
        %v1785 = vsel %vm1683, %v1747, 0.0
        %v1786 = vsel %vm1684, %v1751, 0.0
        %v1787 = vsel %vm1685, %v1755, 0.0
        %v1788 = vsel %vm1686, %v1743, 0.0
        %v1789 = vsel %vm1687, %v1747, 0.0
        %v1790 = vsel %vm1688, %v1751, 0.0
        %v1791 = vsel %vm1689, %v1755, 0.0
        %v1792 = vsel %vm1690, %v1743, 0.0
        %v1793 = vsel %vm1691, %v1747, 0.0
        %v1794 = vsel %vm1692, %v1751, 0.0
        %v1795 = vsel %vm1693, %v1755, 0.0
        %v1796 = vsel %vm1694, %v1743, 0.0
        %v1797 = vsel %vm1695, %v1747, 0.0
        %v1798 = vsel %vm1696, %v1751, 0.0
        %v1799 = vsel %vm1697, %v1755, 0.0
        %v1800 = vsel %vm1698, %v1743, 0.0
        %v1801 = vsel %vm1699, %v1747, 0.0
        %v1802 = vsel %vm1700, %v1751, 0.0
        %v1803 = vsel %vm1701, %v1755, 0.0
        %v1804 = vsel %vm1702, %v1743, 0.0
        %v1805 = vsel %vm1703, %v1747, 0.0
        %v1806 = vsel %vm1704, %v1751, 0.0
        %v1807 = vsel %vm1705, %v1755, 0.0
        %v1808 = vsel %vm1706, %v1743, 0.0
        %v1809 = vsel %vm1707, %v1747, 0.0
        %v1810 = vsel %vm1708, %v1751, 0.0
        %v1811 = vsel %vm1709, %v1755, 0.0
        %v1812 = vsel %vm1710, %v1743, 0.0
        %v1813 = vsel %vm1711, %v1747, 0.0
        %v1814 = vsel %vm1712, %v1751, 0.0
        %v1815 = vsel %vm1713, %v1755, 0.0
        %v1816 = vsel %vm1714, %v1743, 0.0
        %v1817 = vsel %vm1715, %v1747, 0.0
        %v1818 = vsel %vm1716, %v1751, 0.0
        %v1819 = vsel %vm1717, %v1755, 0.0
        %v1820 = vadd.f32 %v1554, %v1756
        %v1821 = vadd.f32 %v1555, %v1757
        %v1822 = vadd.f32 %v1556, %v1758
        %v1823 = vadd.f32 %v1557, %v1759
        %v1824 = vadd.f32 %v1558, %v1760
        %v1825 = vadd.f32 %v1559, %v1761
        %v1826 = vadd.f32 %v1560, %v1762
        %v1827 = vadd.f32 %v1561, %v1763
        %v1828 = vadd.f32 %v1562, %v1764
        %v1829 = vadd.f32 %v1563, %v1765
        %v1830 = vadd.f32 %v1564, %v1766
        %v1831 = vadd.f32 %v1565, %v1767
        %v1832 = vadd.f32 %v1566, %v1768
        %v1833 = vadd.f32 %v1567, %v1769
        %v1834 = vadd.f32 %v1568, %v1770
        %v1835 = vadd.f32 %v1569, %v1771
        %v1836 = vadd.f32 %v1570, %v1772
        %v1837 = vadd.f32 %v1571, %v1773
        %v1838 = vadd.f32 %v1572, %v1774
        %v1839 = vadd.f32 %v1573, %v1775
        %v1840 = vadd.f32 %v1574, %v1776
        %v1841 = vadd.f32 %v1575, %v1777
        %v1842 = vadd.f32 %v1576, %v1778
        %v1843 = vadd.f32 %v1577, %v1779
        %v1844 = vadd.f32 %v1578, %v1780
        %v1845 = vadd.f32 %v1579, %v1781
        %v1846 = vadd.f32 %v1580, %v1782
        %v1847 = vadd.f32 %v1581, %v1783
        %v1848 = vadd.f32 %v1582, %v1784
        %v1849 = vadd.f32 %v1583, %v1785
        %v1850 = vadd.f32 %v1584, %v1786
        %v1851 = vadd.f32 %v1585, %v1787
        %v1852 = vadd.f32 %v1586, %v1788
        %v1853 = vadd.f32 %v1587, %v1789
        %v1854 = vadd.f32 %v1588, %v1790
        %v1855 = vadd.f32 %v1589, %v1791
        %v1856 = vadd.f32 %v1590, %v1792
        %v1857 = vadd.f32 %v1591, %v1793
        %v1858 = vadd.f32 %v1592, %v1794
        %v1859 = vadd.f32 %v1593, %v1795
        %v1860 = vadd.f32 %v1594, %v1796
        %v1861 = vadd.f32 %v1595, %v1797
        %v1862 = vadd.f32 %v1596, %v1798
        %v1863 = vadd.f32 %v1597, %v1799
        %v1864 = vadd.f32 %v1598, %v1800
        %v1865 = vadd.f32 %v1599, %v1801
        %v1866 = vadd.f32 %v1600, %v1802
        %v1867 = vadd.f32 %v1601, %v1803
        %v1868 = vadd.f32 %v1602, %v1804
        %v1869 = vadd.f32 %v1603, %v1805
        %v1870 = vadd.f32 %v1604, %v1806
        %v1871 = vadd.f32 %v1605, %v1807
        %v1872 = vadd.f32 %v1606, %v1808
        %v1873 = vadd.f32 %v1607, %v1809
        %v1874 = vadd.f32 %v1608, %v1810
        %v1875 = vadd.f32 %v1609, %v1811
        %v1876 = vadd.f32 %v1610, %v1812
        %v1877 = vadd.f32 %v1611, %v1813
        %v1878 = vadd.f32 %v1612, %v1814
        %v1879 = vadd.f32 %v1613, %v1815
        %v1880 = vadd.f32 %v1614, %v1816
        %v1881 = vadd.f32 %v1615, %v1817
        %v1882 = vadd.f32 %v1616, %v1818
        %v1883 = vadd.f32 %v1617, %v1819
        %v1884 = vmul.f32 %v183, %v803
        %v1885 = vmul.f32 %v184, %v805
        %v1886 = vadd.s32 %v204, %v811
        %v1887 = vadd.s32 %v206, %v813
        %v1888 = vmul.f32 %v1884, %v249
        %v1889 = vmul.f32 %v1885, %v251
        %v1890 = vadd.s32 %v1886, %v257
        %v1891 = vadd.s32 %v1887, %v259
        %v1892 = vlaneseq
        %v1893 = vshrl.u32 %v1892, 7
        %v1894 = vsub.s32 0, %v1893
        %v1895 = vrot.slane %v1890, %v1894
        %v1896 = vlaneseq
        %v1897 = vshrl.u32 %v1896, 7
        %v1898 = vsub.s32 4, %v1897
        %v1899 = vrot.slane %v1890, %v1898
        %v1900 = vlaneseq
        %v1901 = vshrl.u32 %v1900, 7
        %v1902 = vsub.s32 0, %v1901
        %v1903 = vrot.slane %v1891, %v1902
        %v1904 = vlaneseq
        %v1905 = vshrl.u32 %v1904, 7
        %v1906 = vsub.s32 4, %v1905
        %v1907 = vrot.slane %v1891, %v1906
        %v1908 = vlaneseq
        %v1909 = vshrl.u32 %v1908, 7
        %v1910 = vsub.s32 0, %v1909
        %v1911 = vrot.slane %v1895, %v1910
        %v1912 = vlaneseq
        %v1913 = vshrl.u32 %v1912, 7
        %v1914 = vsub.s32 0, %v1913
        %v1915 = vrot.slane %v1899, %v1914
        %v1916 = vlaneseq
        %v1917 = vshrl.u32 %v1916, 7
        %v1918 = vsub.s32 0, %v1917
        %v1919 = vrot.slane %v1903, %v1918
        %v1920 = vlaneseq
        %v1921 = vshrl.u32 %v1920, 7
        %v1922 = vsub.s32 0, %v1921
        %v1923 = vrot.slane %v1907, %v1922
        %vm1924 = vcmp.eq.s32.totalorder %v216, %v1911
        %vm1925 = vcmp.eq.s32.totalorder %v216, %v1915
        %vm1926 = vcmp.eq.s32.totalorder %v216, %v1919
        %vm1927 = vcmp.eq.s32.totalorder %v216, %v1923
        %vm1928 = vcmp.eq.s32.totalorder %v217, %v1911
        %vm1929 = vcmp.eq.s32.totalorder %v217, %v1915
        %vm1930 = vcmp.eq.s32.totalorder %v217, %v1919
        %vm1931 = vcmp.eq.s32.totalorder %v217, %v1923
        %vm1932 = vcmp.eq.s32.totalorder %v218, %v1911
        %vm1933 = vcmp.eq.s32.totalorder %v218, %v1915
        %vm1934 = vcmp.eq.s32.totalorder %v218, %v1919
        %vm1935 = vcmp.eq.s32.totalorder %v218, %v1923
        %vm1936 = vcmp.eq.s32.totalorder %v219, %v1911
        %vm1937 = vcmp.eq.s32.totalorder %v219, %v1915
        %vm1938 = vcmp.eq.s32.totalorder %v219, %v1919
        %vm1939 = vcmp.eq.s32.totalorder %v219, %v1923
        %vm1940 = vcmp.eq.s32.totalorder %v220, %v1911
        %vm1941 = vcmp.eq.s32.totalorder %v220, %v1915
        %vm1942 = vcmp.eq.s32.totalorder %v220, %v1919
        %vm1943 = vcmp.eq.s32.totalorder %v220, %v1923
        %vm1944 = vcmp.eq.s32.totalorder %v221, %v1911
        %vm1945 = vcmp.eq.s32.totalorder %v221, %v1915
        %vm1946 = vcmp.eq.s32.totalorder %v221, %v1919
        %vm1947 = vcmp.eq.s32.totalorder %v221, %v1923
        %vm1948 = vcmp.eq.s32.totalorder %v222, %v1911
        %vm1949 = vcmp.eq.s32.totalorder %v222, %v1915
        %vm1950 = vcmp.eq.s32.totalorder %v222, %v1919
        %vm1951 = vcmp.eq.s32.totalorder %v222, %v1923
        %vm1952 = vcmp.eq.s32.totalorder %v223, %v1911
        %vm1953 = vcmp.eq.s32.totalorder %v223, %v1915
        %vm1954 = vcmp.eq.s32.totalorder %v223, %v1919
        %vm1955 = vcmp.eq.s32.totalorder %v223, %v1923
        %vm1956 = vcmp.eq.s32.totalorder %v224, %v1911
        %vm1957 = vcmp.eq.s32.totalorder %v224, %v1915
        %vm1958 = vcmp.eq.s32.totalorder %v224, %v1919
        %vm1959 = vcmp.eq.s32.totalorder %v224, %v1923
        %vm1960 = vcmp.eq.s32.totalorder %v225, %v1911
        %vm1961 = vcmp.eq.s32.totalorder %v225, %v1915
        %vm1962 = vcmp.eq.s32.totalorder %v225, %v1919
        %vm1963 = vcmp.eq.s32.totalorder %v225, %v1923
        %vm1964 = vcmp.eq.s32.totalorder %v226, %v1911
        %vm1965 = vcmp.eq.s32.totalorder %v226, %v1915
        %vm1966 = vcmp.eq.s32.totalorder %v226, %v1919
        %vm1967 = vcmp.eq.s32.totalorder %v226, %v1923
        %vm1968 = vcmp.eq.s32.totalorder %v227, %v1911
        %vm1969 = vcmp.eq.s32.totalorder %v227, %v1915
        %vm1970 = vcmp.eq.s32.totalorder %v227, %v1919
        %vm1971 = vcmp.eq.s32.totalorder %v227, %v1923
        %vm1972 = vcmp.eq.s32.totalorder %v228, %v1911
        %vm1973 = vcmp.eq.s32.totalorder %v228, %v1915
        %vm1974 = vcmp.eq.s32.totalorder %v228, %v1919
        %vm1975 = vcmp.eq.s32.totalorder %v228, %v1923
        %vm1976 = vcmp.eq.s32.totalorder %v229, %v1911
        %vm1977 = vcmp.eq.s32.totalorder %v229, %v1915
        %vm1978 = vcmp.eq.s32.totalorder %v229, %v1919
        %vm1979 = vcmp.eq.s32.totalorder %v229, %v1923
        %vm1980 = vcmp.eq.s32.totalorder %v230, %v1911
        %vm1981 = vcmp.eq.s32.totalorder %v230, %v1915
        %vm1982 = vcmp.eq.s32.totalorder %v230, %v1919
        %vm1983 = vcmp.eq.s32.totalorder %v230, %v1923
        %vm1984 = vcmp.eq.s32.totalorder %v231, %v1911
        %vm1985 = vcmp.eq.s32.totalorder %v231, %v1915
        %vm1986 = vcmp.eq.s32.totalorder %v231, %v1919
        %vm1987 = vcmp.eq.s32.totalorder %v231, %v1923
        %v1990 = vlaneseq
        %v1991 = vshrl.u32 %v1990, 7
        %v1992 = vsub.s32 0, %v1991
        %v1993 = vrot.slane %v1888, %v1992
        %v1994 = vlaneseq
        %v1995 = vshrl.u32 %v1994, 7
        %v1996 = vsub.s32 4, %v1995
        %v1997 = vrot.slane %v1888, %v1996
        %v1998 = vlaneseq
        %v1999 = vshrl.u32 %v1998, 7
        %v2000 = vsub.s32 0, %v1999
        %v2001 = vrot.slane %v1889, %v2000
        %v2002 = vlaneseq
        %v2003 = vshrl.u32 %v2002, 7
        %v2004 = vsub.s32 4, %v2003
        %v2005 = vrot.slane %v1889, %v2004
        %v2010 = vlaneseq
        %v2011 = vshrl.u32 %v2010, 7
        %v2012 = vsub.s32 0, %v2011
        %v2013 = vrot.slane %v1993, %v2012
        %v2014 = vlaneseq
        %v2015 = vshrl.u32 %v2014, 7
        %v2016 = vsub.s32 0, %v2015
        %v2017 = vrot.slane %v1997, %v2016
        %v2018 = vlaneseq
        %v2019 = vshrl.u32 %v2018, 7
        %v2020 = vsub.s32 0, %v2019
        %v2021 = vrot.slane %v2001, %v2020
        %v2022 = vlaneseq
        %v2023 = vshrl.u32 %v2022, 7
        %v2024 = vsub.s32 0, %v2023
        %v2025 = vrot.slane %v2005, %v2024
        %v2026 = vsel %vm1924, %v2013, 0.0
        %v2027 = vsel %vm1925, %v2017, 0.0
        %v2028 = vsel %vm1926, %v2021, 0.0
        %v2029 = vsel %vm1927, %v2025, 0.0
        %v2030 = vsel %vm1928, %v2013, 0.0
        %v2031 = vsel %vm1929, %v2017, 0.0
        %v2032 = vsel %vm1930, %v2021, 0.0
        %v2033 = vsel %vm1931, %v2025, 0.0
        %v2034 = vsel %vm1932, %v2013, 0.0
        %v2035 = vsel %vm1933, %v2017, 0.0
        %v2036 = vsel %vm1934, %v2021, 0.0
        %v2037 = vsel %vm1935, %v2025, 0.0
        %v2038 = vsel %vm1936, %v2013, 0.0
        %v2039 = vsel %vm1937, %v2017, 0.0
        %v2040 = vsel %vm1938, %v2021, 0.0
        %v2041 = vsel %vm1939, %v2025, 0.0
        %v2042 = vsel %vm1940, %v2013, 0.0
        %v2043 = vsel %vm1941, %v2017, 0.0
        %v2044 = vsel %vm1942, %v2021, 0.0
        %v2045 = vsel %vm1943, %v2025, 0.0
        %v2046 = vsel %vm1944, %v2013, 0.0
        %v2047 = vsel %vm1945, %v2017, 0.0
        %v2048 = vsel %vm1946, %v2021, 0.0
        %v2049 = vsel %vm1947, %v2025, 0.0
        %v2050 = vsel %vm1948, %v2013, 0.0
        %v2051 = vsel %vm1949, %v2017, 0.0
        %v2052 = vsel %vm1950, %v2021, 0.0
        %v2053 = vsel %vm1951, %v2025, 0.0
        %v2054 = vsel %vm1952, %v2013, 0.0
        %v2055 = vsel %vm1953, %v2017, 0.0
        %v2056 = vsel %vm1954, %v2021, 0.0
        %v2057 = vsel %vm1955, %v2025, 0.0
        %v2058 = vsel %vm1956, %v2013, 0.0
        %v2059 = vsel %vm1957, %v2017, 0.0
        %v2060 = vsel %vm1958, %v2021, 0.0
        %v2061 = vsel %vm1959, %v2025, 0.0
        %v2062 = vsel %vm1960, %v2013, 0.0
        %v2063 = vsel %vm1961, %v2017, 0.0
        %v2064 = vsel %vm1962, %v2021, 0.0
        %v2065 = vsel %vm1963, %v2025, 0.0
        %v2066 = vsel %vm1964, %v2013, 0.0
        %v2067 = vsel %vm1965, %v2017, 0.0
        %v2068 = vsel %vm1966, %v2021, 0.0
        %v2069 = vsel %vm1967, %v2025, 0.0
        %v2070 = vsel %vm1968, %v2013, 0.0
        %v2071 = vsel %vm1969, %v2017, 0.0
        %v2072 = vsel %vm1970, %v2021, 0.0
        %v2073 = vsel %vm1971, %v2025, 0.0
        %v2074 = vsel %vm1972, %v2013, 0.0
        %v2075 = vsel %vm1973, %v2017, 0.0
        %v2076 = vsel %vm1974, %v2021, 0.0
        %v2077 = vsel %vm1975, %v2025, 0.0
        %v2078 = vsel %vm1976, %v2013, 0.0
        %v2079 = vsel %vm1977, %v2017, 0.0
        %v2080 = vsel %vm1978, %v2021, 0.0
        %v2081 = vsel %vm1979, %v2025, 0.0
        %v2082 = vsel %vm1980, %v2013, 0.0
        %v2083 = vsel %vm1981, %v2017, 0.0
        %v2084 = vsel %vm1982, %v2021, 0.0
        %v2085 = vsel %vm1983, %v2025, 0.0
        %v2086 = vsel %vm1984, %v2013, 0.0
        %v2087 = vsel %vm1985, %v2017, 0.0
        %v2088 = vsel %vm1986, %v2021, 0.0
        %v2089 = vsel %vm1987, %v2025, 0.0
        %v2090 = vadd.f32 %v1820, %v2026
        %v2091 = vadd.f32 %v1821, %v2027
        %v2092 = vadd.f32 %v1822, %v2028
        %v2093 = vadd.f32 %v1823, %v2029
        %v2094 = vadd.f32 %v1824, %v2030
        %v2095 = vadd.f32 %v1825, %v2031
        %v2096 = vadd.f32 %v1826, %v2032
        %v2097 = vadd.f32 %v1827, %v2033
        %v2098 = vadd.f32 %v1828, %v2034
        %v2099 = vadd.f32 %v1829, %v2035
        %v2100 = vadd.f32 %v1830, %v2036
        %v2101 = vadd.f32 %v1831, %v2037
        %v2102 = vadd.f32 %v1832, %v2038
        %v2103 = vadd.f32 %v1833, %v2039
        %v2104 = vadd.f32 %v1834, %v2040
        %v2105 = vadd.f32 %v1835, %v2041
        %v2106 = vadd.f32 %v1836, %v2042
        %v2107 = vadd.f32 %v1837, %v2043
        %v2108 = vadd.f32 %v1838, %v2044
        %v2109 = vadd.f32 %v1839, %v2045
        %v2110 = vadd.f32 %v1840, %v2046
        %v2111 = vadd.f32 %v1841, %v2047
        %v2112 = vadd.f32 %v1842, %v2048
        %v2113 = vadd.f32 %v1843, %v2049
        %v2114 = vadd.f32 %v1844, %v2050
        %v2115 = vadd.f32 %v1845, %v2051
        %v2116 = vadd.f32 %v1846, %v2052
        %v2117 = vadd.f32 %v1847, %v2053
        %v2118 = vadd.f32 %v1848, %v2054
        %v2119 = vadd.f32 %v1849, %v2055
        %v2120 = vadd.f32 %v1850, %v2056
        %v2121 = vadd.f32 %v1851, %v2057
        %v2122 = vadd.f32 %v1852, %v2058
        %v2123 = vadd.f32 %v1853, %v2059
        %v2124 = vadd.f32 %v1854, %v2060
        %v2125 = vadd.f32 %v1855, %v2061
        %v2126 = vadd.f32 %v1856, %v2062
        %v2127 = vadd.f32 %v1857, %v2063
        %v2128 = vadd.f32 %v1858, %v2064
        %v2129 = vadd.f32 %v1859, %v2065
        %v2130 = vadd.f32 %v1860, %v2066
        %v2131 = vadd.f32 %v1861, %v2067
        %v2132 = vadd.f32 %v1862, %v2068
        %v2133 = vadd.f32 %v1863, %v2069
        %v2134 = vadd.f32 %v1864, %v2070
        %v2135 = vadd.f32 %v1865, %v2071
        %v2136 = vadd.f32 %v1866, %v2072
        %v2137 = vadd.f32 %v1867, %v2073
        %v2138 = vadd.f32 %v1868, %v2074
        %v2139 = vadd.f32 %v1869, %v2075
        %v2140 = vadd.f32 %v1870, %v2076
        %v2141 = vadd.f32 %v1871, %v2077
        %v2142 = vadd.f32 %v1872, %v2078
        %v2143 = vadd.f32 %v1873, %v2079
        %v2144 = vadd.f32 %v1874, %v2080
        %v2145 = vadd.f32 %v1875, %v2081
        %v2146 = vadd.f32 %v1876, %v2082
        %v2147 = vadd.f32 %v1877, %v2083
        %v2148 = vadd.f32 %v1878, %v2084
        %v2149 = vadd.f32 %v1879, %v2085
        %v2150 = vadd.f32 %v1880, %v2086
        %v2151 = vadd.f32 %v1881, %v2087
        %v2152 = vadd.f32 %v1882, %v2088
        %v2153 = vadd.f32 %v1883, %v2089
        %v2154 = vmul.f32 %v1884, %v527
        %v2155 = vmul.f32 %v1885, %v529
        %v2156 = vadd.s32 %v1886, %v535
        %v2157 = vadd.s32 %v1887, %v537
        %v2158 = vlaneseq
        %v2159 = vshrl.u32 %v2158, 7
        %v2160 = vsub.s32 0, %v2159
        %v2161 = vrot.slane %v2156, %v2160
        %v2162 = vlaneseq
        %v2163 = vshrl.u32 %v2162, 7
        %v2164 = vsub.s32 4, %v2163
        %v2165 = vrot.slane %v2156, %v2164
        %v2166 = vlaneseq
        %v2167 = vshrl.u32 %v2166, 7
        %v2168 = vsub.s32 0, %v2167
        %v2169 = vrot.slane %v2157, %v2168
        %v2170 = vlaneseq
        %v2171 = vshrl.u32 %v2170, 7
        %v2172 = vsub.s32 4, %v2171
        %v2173 = vrot.slane %v2157, %v2172
        %v2174 = vlaneseq
        %v2175 = vshrl.u32 %v2174, 7
        %v2176 = vsub.s32 0, %v2175
        %v2177 = vrot.slane %v2161, %v2176
        %v2178 = vlaneseq
        %v2179 = vshrl.u32 %v2178, 7
        %v2180 = vsub.s32 0, %v2179
        %v2181 = vrot.slane %v2165, %v2180
        %v2182 = vlaneseq
        %v2183 = vshrl.u32 %v2182, 7
        %v2184 = vsub.s32 0, %v2183
        %v2185 = vrot.slane %v2169, %v2184
        %v2186 = vlaneseq
        %v2187 = vshrl.u32 %v2186, 7
        %v2188 = vsub.s32 0, %v2187
        %v2189 = vrot.slane %v2173, %v2188
        %vm2190 = vcmp.eq.s32.totalorder %v216, %v2177
        %vm2191 = vcmp.eq.s32.totalorder %v216, %v2181
        %vm2192 = vcmp.eq.s32.totalorder %v216, %v2185
        %vm2193 = vcmp.eq.s32.totalorder %v216, %v2189
        %vm2194 = vcmp.eq.s32.totalorder %v217, %v2177
        %vm2195 = vcmp.eq.s32.totalorder %v217, %v2181
        %vm2196 = vcmp.eq.s32.totalorder %v217, %v2185
        %vm2197 = vcmp.eq.s32.totalorder %v217, %v2189
        %vm2198 = vcmp.eq.s32.totalorder %v218, %v2177
        %vm2199 = vcmp.eq.s32.totalorder %v218, %v2181
        %vm2200 = vcmp.eq.s32.totalorder %v218, %v2185
        %vm2201 = vcmp.eq.s32.totalorder %v218, %v2189
        %vm2202 = vcmp.eq.s32.totalorder %v219, %v2177
        %vm2203 = vcmp.eq.s32.totalorder %v219, %v2181
        %vm2204 = vcmp.eq.s32.totalorder %v219, %v2185
        %vm2205 = vcmp.eq.s32.totalorder %v219, %v2189
        %vm2206 = vcmp.eq.s32.totalorder %v220, %v2177
        %vm2207 = vcmp.eq.s32.totalorder %v220, %v2181
        %vm2208 = vcmp.eq.s32.totalorder %v220, %v2185
        %vm2209 = vcmp.eq.s32.totalorder %v220, %v2189
        %vm2210 = vcmp.eq.s32.totalorder %v221, %v2177
        %vm2211 = vcmp.eq.s32.totalorder %v221, %v2181
        %vm2212 = vcmp.eq.s32.totalorder %v221, %v2185
        %vm2213 = vcmp.eq.s32.totalorder %v221, %v2189
        %vm2214 = vcmp.eq.s32.totalorder %v222, %v2177
        %vm2215 = vcmp.eq.s32.totalorder %v222, %v2181
        %vm2216 = vcmp.eq.s32.totalorder %v222, %v2185
        %vm2217 = vcmp.eq.s32.totalorder %v222, %v2189
        %vm2218 = vcmp.eq.s32.totalorder %v223, %v2177
        %vm2219 = vcmp.eq.s32.totalorder %v223, %v2181
        %vm2220 = vcmp.eq.s32.totalorder %v223, %v2185
        %vm2221 = vcmp.eq.s32.totalorder %v223, %v2189
        %vm2222 = vcmp.eq.s32.totalorder %v224, %v2177
        %vm2223 = vcmp.eq.s32.totalorder %v224, %v2181
        %vm2224 = vcmp.eq.s32.totalorder %v224, %v2185
        %vm2225 = vcmp.eq.s32.totalorder %v224, %v2189
        %vm2226 = vcmp.eq.s32.totalorder %v225, %v2177
        %vm2227 = vcmp.eq.s32.totalorder %v225, %v2181
        %vm2228 = vcmp.eq.s32.totalorder %v225, %v2185
        %vm2229 = vcmp.eq.s32.totalorder %v225, %v2189
        %vm2230 = vcmp.eq.s32.totalorder %v226, %v2177
        %vm2231 = vcmp.eq.s32.totalorder %v226, %v2181
        %vm2232 = vcmp.eq.s32.totalorder %v226, %v2185
        %vm2233 = vcmp.eq.s32.totalorder %v226, %v2189
        %vm2234 = vcmp.eq.s32.totalorder %v227, %v2177
        %vm2235 = vcmp.eq.s32.totalorder %v227, %v2181
        %vm2236 = vcmp.eq.s32.totalorder %v227, %v2185
        %vm2237 = vcmp.eq.s32.totalorder %v227, %v2189
        %vm2238 = vcmp.eq.s32.totalorder %v228, %v2177
        %vm2239 = vcmp.eq.s32.totalorder %v228, %v2181
        %vm2240 = vcmp.eq.s32.totalorder %v228, %v2185
        %vm2241 = vcmp.eq.s32.totalorder %v228, %v2189
        %vm2242 = vcmp.eq.s32.totalorder %v229, %v2177
        %vm2243 = vcmp.eq.s32.totalorder %v229, %v2181
        %vm2244 = vcmp.eq.s32.totalorder %v229, %v2185
        %vm2245 = vcmp.eq.s32.totalorder %v229, %v2189
        %vm2246 = vcmp.eq.s32.totalorder %v230, %v2177
        %vm2247 = vcmp.eq.s32.totalorder %v230, %v2181
        %vm2248 = vcmp.eq.s32.totalorder %v230, %v2185
        %vm2249 = vcmp.eq.s32.totalorder %v230, %v2189
        %vm2250 = vcmp.eq.s32.totalorder %v231, %v2177
        %vm2251 = vcmp.eq.s32.totalorder %v231, %v2181
        %vm2252 = vcmp.eq.s32.totalorder %v231, %v2185
        %vm2253 = vcmp.eq.s32.totalorder %v231, %v2189
        %v2256 = vlaneseq
        %v2257 = vshrl.u32 %v2256, 7
        %v2258 = vsub.s32 0, %v2257
        %v2259 = vrot.slane %v2154, %v2258
        %v2260 = vlaneseq
        %v2261 = vshrl.u32 %v2260, 7
        %v2262 = vsub.s32 4, %v2261
        %v2263 = vrot.slane %v2154, %v2262
        %v2264 = vlaneseq
        %v2265 = vshrl.u32 %v2264, 7
        %v2266 = vsub.s32 0, %v2265
        %v2267 = vrot.slane %v2155, %v2266
        %v2268 = vlaneseq
        %v2269 = vshrl.u32 %v2268, 7
        %v2270 = vsub.s32 4, %v2269
        %v2271 = vrot.slane %v2155, %v2270
        %v2276 = vlaneseq
        %v2277 = vshrl.u32 %v2276, 7
        %v2278 = vsub.s32 0, %v2277
        %v2279 = vrot.slane %v2259, %v2278
        %v2280 = vlaneseq
        %v2281 = vshrl.u32 %v2280, 7
        %v2282 = vsub.s32 0, %v2281
        %v2283 = vrot.slane %v2263, %v2282
        %v2284 = vlaneseq
        %v2285 = vshrl.u32 %v2284, 7
        %v2286 = vsub.s32 0, %v2285
        %v2287 = vrot.slane %v2267, %v2286
        %v2288 = vlaneseq
        %v2289 = vshrl.u32 %v2288, 7
        %v2290 = vsub.s32 0, %v2289
        %v2291 = vrot.slane %v2271, %v2290
        %v2292 = vsel %vm2190, %v2279, 0.0
        %v2293 = vsel %vm2191, %v2283, 0.0
        %v2294 = vsel %vm2192, %v2287, 0.0
        %v2295 = vsel %vm2193, %v2291, 0.0
        %v2296 = vsel %vm2194, %v2279, 0.0
        %v2297 = vsel %vm2195, %v2283, 0.0
        %v2298 = vsel %vm2196, %v2287, 0.0
        %v2299 = vsel %vm2197, %v2291, 0.0
        %v2300 = vsel %vm2198, %v2279, 0.0
        %v2301 = vsel %vm2199, %v2283, 0.0
        %v2302 = vsel %vm2200, %v2287, 0.0
        %v2303 = vsel %vm2201, %v2291, 0.0
        %v2304 = vsel %vm2202, %v2279, 0.0
        %v2305 = vsel %vm2203, %v2283, 0.0
        %v2306 = vsel %vm2204, %v2287, 0.0
        %v2307 = vsel %vm2205, %v2291, 0.0
        %v2308 = vsel %vm2206, %v2279, 0.0
        %v2309 = vsel %vm2207, %v2283, 0.0
        %v2310 = vsel %vm2208, %v2287, 0.0
        %v2311 = vsel %vm2209, %v2291, 0.0
        %v2312 = vsel %vm2210, %v2279, 0.0
        %v2313 = vsel %vm2211, %v2283, 0.0
        %v2314 = vsel %vm2212, %v2287, 0.0
        %v2315 = vsel %vm2213, %v2291, 0.0
        %v2316 = vsel %vm2214, %v2279, 0.0
        %v2317 = vsel %vm2215, %v2283, 0.0
        %v2318 = vsel %vm2216, %v2287, 0.0
        %v2319 = vsel %vm2217, %v2291, 0.0
        %v2320 = vsel %vm2218, %v2279, 0.0
        %v2321 = vsel %vm2219, %v2283, 0.0
        %v2322 = vsel %vm2220, %v2287, 0.0
        %v2323 = vsel %vm2221, %v2291, 0.0
        %v2324 = vsel %vm2222, %v2279, 0.0
        %v2325 = vsel %vm2223, %v2283, 0.0
        %v2326 = vsel %vm2224, %v2287, 0.0
        %v2327 = vsel %vm2225, %v2291, 0.0
        %v2328 = vsel %vm2226, %v2279, 0.0
        %v2329 = vsel %vm2227, %v2283, 0.0
        %v2330 = vsel %vm2228, %v2287, 0.0
        %v2331 = vsel %vm2229, %v2291, 0.0
        %v2332 = vsel %vm2230, %v2279, 0.0
        %v2333 = vsel %vm2231, %v2283, 0.0
        %v2334 = vsel %vm2232, %v2287, 0.0
        %v2335 = vsel %vm2233, %v2291, 0.0
        %v2336 = vsel %vm2234, %v2279, 0.0
        %v2337 = vsel %vm2235, %v2283, 0.0
        %v2338 = vsel %vm2236, %v2287, 0.0
        %v2339 = vsel %vm2237, %v2291, 0.0
        %v2340 = vsel %vm2238, %v2279, 0.0
        %v2341 = vsel %vm2239, %v2283, 0.0
        %v2342 = vsel %vm2240, %v2287, 0.0
        %v2343 = vsel %vm2241, %v2291, 0.0
        %v2344 = vsel %vm2242, %v2279, 0.0
        %v2345 = vsel %vm2243, %v2283, 0.0
        %v2346 = vsel %vm2244, %v2287, 0.0
        %v2347 = vsel %vm2245, %v2291, 0.0
        %v2348 = vsel %vm2246, %v2279, 0.0
        %v2349 = vsel %vm2247, %v2283, 0.0
        %v2350 = vsel %vm2248, %v2287, 0.0
        %v2351 = vsel %vm2249, %v2291, 0.0
        %v2352 = vsel %vm2250, %v2279, 0.0
        %v2353 = vsel %vm2251, %v2283, 0.0
        %v2354 = vsel %vm2252, %v2287, 0.0
        %v2355 = vsel %vm2253, %v2291, 0.0
        %v2356 = vadd.f32 %v2090, %v2292
        %v2357 = vadd.f32 %v2091, %v2293
        %v2358 = vadd.f32 %v2092, %v2294
        %v2359 = vadd.f32 %v2093, %v2295
        %v2360 = vadd.f32 %v2094, %v2296
        %v2361 = vadd.f32 %v2095, %v2297
        %v2362 = vadd.f32 %v2096, %v2298
        %v2363 = vadd.f32 %v2097, %v2299
        %v2364 = vadd.f32 %v2098, %v2300
        %v2365 = vadd.f32 %v2099, %v2301
        %v2366 = vadd.f32 %v2100, %v2302
        %v2367 = vadd.f32 %v2101, %v2303
        %v2368 = vadd.f32 %v2102, %v2304
        %v2369 = vadd.f32 %v2103, %v2305
        %v2370 = vadd.f32 %v2104, %v2306
        %v2371 = vadd.f32 %v2105, %v2307
        %v2372 = vadd.f32 %v2106, %v2308
        %v2373 = vadd.f32 %v2107, %v2309
        %v2374 = vadd.f32 %v2108, %v2310
        %v2375 = vadd.f32 %v2109, %v2311
        %v2376 = vadd.f32 %v2110, %v2312
        %v2377 = vadd.f32 %v2111, %v2313
        %v2378 = vadd.f32 %v2112, %v2314
        %v2379 = vadd.f32 %v2113, %v2315
        %v2380 = vadd.f32 %v2114, %v2316
        %v2381 = vadd.f32 %v2115, %v2317
        %v2382 = vadd.f32 %v2116, %v2318
        %v2383 = vadd.f32 %v2117, %v2319
        %v2384 = vadd.f32 %v2118, %v2320
        %v2385 = vadd.f32 %v2119, %v2321
        %v2386 = vadd.f32 %v2120, %v2322
        %v2387 = vadd.f32 %v2121, %v2323
        %v2388 = vadd.f32 %v2122, %v2324
        %v2389 = vadd.f32 %v2123, %v2325
        %v2390 = vadd.f32 %v2124, %v2326
        %v2391 = vadd.f32 %v2125, %v2327
        %v2392 = vadd.f32 %v2126, %v2328
        %v2393 = vadd.f32 %v2127, %v2329
        %v2394 = vadd.f32 %v2128, %v2330
        %v2395 = vadd.f32 %v2129, %v2331
        %v2396 = vadd.f32 %v2130, %v2332
        %v2397 = vadd.f32 %v2131, %v2333
        %v2398 = vadd.f32 %v2132, %v2334
        %v2399 = vadd.f32 %v2133, %v2335
        %v2400 = vadd.f32 %v2134, %v2336
        %v2401 = vadd.f32 %v2135, %v2337
        %v2402 = vadd.f32 %v2136, %v2338
        %v2403 = vadd.f32 %v2137, %v2339
        %v2404 = vadd.f32 %v2138, %v2340
        %v2405 = vadd.f32 %v2139, %v2341
        %v2406 = vadd.f32 %v2140, %v2342
        %v2407 = vadd.f32 %v2141, %v2343
        %v2408 = vadd.f32 %v2142, %v2344
        %v2409 = vadd.f32 %v2143, %v2345
        %v2410 = vadd.f32 %v2144, %v2346
        %v2411 = vadd.f32 %v2145, %v2347
        %v2412 = vadd.f32 %v2146, %v2348
        %v2413 = vadd.f32 %v2147, %v2349
        %v2414 = vadd.f32 %v2148, %v2350
        %v2415 = vadd.f32 %v2149, %v2351
        %v2416 = vadd.f32 %v2150, %v2352
        %v2417 = vadd.f32 %v2151, %v2353
        %v2418 = vadd.f32 %v2152, %v2354
        %v2419 = vadd.f32 %v2153, %v2355
        %v2420 = vld [vmem:[#allocation5] sm:$0x3]
        %2421 = vmatprep.subr.mxu0 %v2357
        %2422 = vmatpush1.msra.mxu0 %v2356
        %2423 = vmatprep.subr.mxu0 %v2361
        %2424 = vmatpush1.msra.mxu0 %v2360
        %2425 = vmatprep.subr.mxu0 %v2365
        %2426 = vmatpush1.msra.mxu0 %v2364
        %2427 = vmatprep.subr.mxu0 %v2369
        %2428 = vmatpush1.msra.mxu0 %v2368
        %2429 = vmatprep.subr.mxu0 %v2373
        %2430 = vmatpush1.msra.mxu0 %v2372
        %2431 = vmatprep.subr.mxu0 %v2377
        %2432 = vmatpush1.msra.mxu0 %v2376
        %2433 = vmatprep.subr.mxu0 %v2381
        %2434 = vmatpush1.msra.mxu0 %v2380
        %2435 = vmatprep.subr.mxu0 %v2385
        %2436 = vmatpush1.msra.mxu0 %v2384
        %2437 = vmatprep.subr.mxu0 %v2389
        %2438 = vmatpush1.msra.mxu0 %v2388
        %2439 = vmatprep.subr.mxu0 %v2393
        %2440 = vmatpush1.msra.mxu0 %v2392
        %2441 = vmatprep.subr.mxu0 %v2397
        %2442 = vmatpush1.msra.mxu0 %v2396
        %2443 = vmatprep.subr.mxu0 %v2401
        %2444 = vmatpush1.msra.mxu0 %v2400
        %2445 = vmatprep.subr.mxu0 %v2405
        %2446 = vmatpush1.msra.mxu0 %v2404
        %2447 = vmatprep.subr.mxu0 %v2409
        %2448 = vmatpush1.msra.mxu0 %v2408
        %2449 = vmatprep.subr.mxu0 %v2413
        %2450 = vmatpush1.msra.mxu0 %v2412
        %2451 = vmatprep.subr.mxu0 %v2417
        %2452 = vmatpush1.msra.mxu0 %v2416
        %2453 = vmatprep.subr.mxu0 0.0
        %2454 = vmatpush1.msra.mxu0 0.0
        %2455 = vmatprep.subr.mxu0 0.0
        %2456 = vmatpush1.msra.mxu0 0.0
        %2457 = vmatprep.subr.mxu0 0.0
        %2458 = vmatpush1.msra.mxu0 0.0
        %2459 = vmatprep.subr.mxu0 0.0
        %2460 = vmatpush1.msra.mxu0 0.0
        %2461 = vmatprep.subr.mxu0 0.0
        %2462 = vmatpush1.msra.mxu0 0.0
        %2463 = vmatprep.subr.mxu0 0.0
        %2464 = vmatpush1.msra.mxu0 0.0
        %2465 = vmatprep.subr.mxu0 0.0
        %2466 = vmatpush1.msra.mxu0 0.0
        %2467 = vmatprep.subr.mxu0 0.0
        %2468 = vmatpush1.msra.mxu0 0.0
        %2469 = vmatprep.subr.mxu0 0.0
        %2470 = vmatpush1.msra.mxu0 0.0
        %2471 = vmatprep.subr.mxu0 0.0
        %2472 = vmatpush1.msra.mxu0 0.0
        %2473 = vmatprep.subr.mxu0 0.0
        %2474 = vmatpush1.msra.mxu0 0.0
        %2475 = vmatprep.subr.mxu0 0.0
        %2476 = vmatpush1.msra.mxu0 0.0
        %2477 = vmatprep.subr.mxu0 0.0
        %2478 = vmatpush1.msra.mxu0 0.0
        %2479 = vmatprep.subr.mxu0 0.0
        %2480 = vmatpush1.msra.mxu0 0.0
        %2481 = vmatprep.subr.mxu0 0.0
        %2482 = vmatpush1.msra.mxu0 0.0
        %2483 = vmatprep.subr.mxu0 0.0
        %2484 = vmatpush1.msra.mxu0 0.0
        %2485 = vmatprep.mubr.f32.mxu0 0.0
        %2486 = vmatmul.mubr.f32.gmra.mrb[0].mxu0 %v2420
        %v2487 = vpop.f32.mrb[0].mxu0
        %v2488 = vadd.f32 0.0, %v2487
        %v2489 = vpop.f32.mrb[0].mxu0
        %v2490 = vadd.f32 0.0, %v2489
        %2491 = vdwg.mxu0
        %2492 = vmatprep.subr.mxu0 %v2359
        %2493 = vmatpush1.msra.mxu0 %v2358
        %2494 = vmatprep.subr.mxu0 %v2363
        %2495 = vmatpush1.msra.mxu0 %v2362
        %2496 = vmatprep.subr.mxu0 %v2367
        %2497 = vmatpush1.msra.mxu0 %v2366
        %2498 = vmatprep.subr.mxu0 %v2371
        %2499 = vmatpush1.msra.mxu0 %v2370
        %2500 = vmatprep.subr.mxu0 %v2375
        %2501 = vmatpush1.msra.mxu0 %v2374
        %2502 = vmatprep.subr.mxu0 %v2379
        %2503 = vmatpush1.msra.mxu0 %v2378
        %2504 = vmatprep.subr.mxu0 %v2383
        %2505 = vmatpush1.msra.mxu0 %v2382
        %2506 = vmatprep.subr.mxu0 %v2387
        %2507 = vmatpush1.msra.mxu0 %v2386
        %2508 = vmatprep.subr.mxu0 %v2391
        %2509 = vmatpush1.msra.mxu0 %v2390
        %2510 = vmatprep.subr.mxu0 %v2395
        %2511 = vmatpush1.msra.mxu0 %v2394
        %2512 = vmatprep.subr.mxu0 %v2399
        %2513 = vmatpush1.msra.mxu0 %v2398
        %2514 = vmatprep.subr.mxu0 %v2403
        %2515 = vmatpush1.msra.mxu0 %v2402
        %2516 = vmatprep.subr.mxu0 %v2407
        %2517 = vmatpush1.msra.mxu0 %v2406
        %2518 = vmatprep.subr.mxu0 %v2411
        %2519 = vmatpush1.msra.mxu0 %v2410
        %2520 = vmatprep.subr.mxu0 %v2415
        %2521 = vmatpush1.msra.mxu0 %v2414
        %2522 = vmatprep.subr.mxu0 %v2419
        %2523 = vmatpush1.msra.mxu0 %v2418
        %2524 = vmatprep.subr.mxu0 0.0
        %2525 = vmatpush1.msra.mxu0 0.0
        %2526 = vmatprep.subr.mxu0 0.0
        %2527 = vmatpush1.msra.mxu0 0.0
        %2528 = vmatprep.subr.mxu0 0.0
        %2529 = vmatpush1.msra.mxu0 0.0
        %2530 = vmatprep.subr.mxu0 0.0
        %2531 = vmatpush1.msra.mxu0 0.0
        %2532 = vmatprep.subr.mxu0 0.0
        %2533 = vmatpush1.msra.mxu0 0.0
        %2534 = vmatprep.subr.mxu0 0.0
        %2535 = vmatpush1.msra.mxu0 0.0
        %2536 = vmatprep.subr.mxu0 0.0
        %2537 = vmatpush1.msra.mxu0 0.0
        %2538 = vmatprep.subr.mxu0 0.0
        %2539 = vmatpush1.msra.mxu0 0.0
        %2540 = vmatprep.subr.mxu0 0.0
        %2541 = vmatpush1.msra.mxu0 0.0
        %2542 = vmatprep.subr.mxu0 0.0
        %2543 = vmatpush1.msra.mxu0 0.0
        %2544 = vmatprep.subr.mxu0 0.0
        %2545 = vmatpush1.msra.mxu0 0.0
        %2546 = vmatprep.subr.mxu0 0.0
        %2547 = vmatpush1.msra.mxu0 0.0
        %2548 = vmatprep.subr.mxu0 0.0
        %2549 = vmatpush1.msra.mxu0 0.0
        %2550 = vmatprep.subr.mxu0 0.0
        %2551 = vmatpush1.msra.mxu0 0.0
        %2552 = vmatprep.subr.mxu0 0.0
        %2553 = vmatpush1.msra.mxu0 0.0
        %2554 = vmatprep.subr.mxu0 0.0
        %2555 = vmatpush1.msra.mxu0 0.0
        %2556 = vmatprep.mubr.f32.mxu0 0.0
        %2557 = vmatmul.mubr.f32.gmra.mrb[0].mxu0 %v2420
        %v2558 = vpop.f32.mrb[0].mxu0
        %v2559 = vadd.f32 0.0, %v2558
        %v2560 = vpop.f32.mrb[0].mxu0
        %v2561 = vadd.f32 0.0, %v2560
        %2562 = vdwg.mxu0
        %2563 = vst [vmem:[%s172] sm:$0x3] %v2488
        %2564 = vst [vmem:[%s172 + $0x8] sm:$0x3] %v2490
        %2565 = vst [vmem:[%s172 + $0x10] sm:$0x3] %v2559
        %2566 = vst [vmem:[%s172 + $0x18] sm:$0x3] %v2561
        %v2567 = vmul.f32 %v175, 5.0
        %v2568 = vmul.f32 %v176, 5.0
        %v2569 = vadd.f32 %v2567, 0.5
        %v2570 = vadd.f32 %v2568, 0.5
        %v2571 = vfloor.f32 %v2569
        %v2572 = vfloor.f32 %v2570
        %v2573 = vsub.f32 %v2569, %v2571
        %v2574 = vsub.f32 %v2570, %v2572
        %v2575 = vsub.f32 1.0, %v2573
        %v2576 = vsub.f32 1.0, %v2574
        %v2577 = vcvt.f32.s32.to.zero.pseudo %v2571
        %v2578 = vcvt.f32.s32.to.zero.pseudo %v2572
        %v2579 = vadd.s32 %v2577, 1
        %v2580 = vadd.s32 %v2578, 1
        %vm2581 = vcmp.gt.s32.totalorder %v2577, 0
        %v2582 = vsel %vm2581, %v2577, 0
        %vm2583 = vcmp.gt.s32.totalorder %v2578, 0
        %v2584 = vsel %vm2583, %v2578, 0
        %vm2585 = vcmp.lt.s32.totalorder %v2582, 5
        %v2586 = vsel %vm2585, %v2582, 5
        %vm2587 = vcmp.lt.s32.totalorder %v2584, 5
        %v2588 = vsel %vm2587, %v2584, 5
        %vm2589 = vcmp.gt.s32.totalorder %v2579, 0
        %v2590 = vsel %vm2589, %v2579, 0
        %vm2591 = vcmp.gt.s32.totalorder %v2580, 0
        %v2592 = vsel %vm2591, %v2580, 0
        %vm2593 = vcmp.lt.s32.totalorder %v2590, 5
        %v2594 = vsel %vm2593, %v2590, 5
        %vm2595 = vcmp.lt.s32.totalorder %v2592, 5
        %v2596 = vsel %vm2595, %v2592, 5
        %v2597 = vmul.u32 %v2586, 6
        %v2598 = vmul.u32 %v2588, 6
        %v2599 = vmul.u32 %v2594, 6
        %v2600 = vmul.u32 %v2596, 6
        %v2601 = vmul.u32 %v2586, 36
        %v2602 = vmul.u32 %v2588, 36
        %v2603 = vmul.u32 %v2594, 36
        %v2604 = vmul.u32 %v2596, 36
        %v2605 = vadd.s32 %v216, 128
        %v2606 = vadd.s32 %v216, 136
        %v2607 = vadd.s32 %v216, 144
        %v2608 = vadd.s32 %v216, 152
        %v2609 = vadd.s32 %v216, 160
        %v2610 = vadd.s32 %v216, 168
        %v2611 = vadd.s32 %v216, 176
        %v2612 = vadd.s32 %v216, 184
        %v2613 = vadd.s32 %v216, 192
        %v2614 = vadd.s32 %v216, 200
        %v2615 = vadd.s32 %v216, 208
        %v2616 = vadd.s32 %v216, 216
        %v2617 = vadd.s32 %v216, 224
        %v2618 = vadd.s32 %v216, 232
        %v2619 = vadd.s32 %v216, 240
        %v2620 = vadd.s32 %v216, 248
        %v2623 = vrot.slane %v2575, 5
        %v2624 = vrot.slane %v2623, 4
        %v2625 = vrot.slane %v2576, 5
        %v2626 = vrot.slane %v2625, 4
        %v2629 = vmul.f32 %v2575, %v2624
        %v2630 = vmul.f32 %v2576, %v2626
        %v2631 = vrot.slane %v2597, 5
        %v2632 = vrot.slane %v2631, 4
        %v2633 = vrot.slane %v2598, 5
        %v2634 = vrot.slane %v2633, 4
        %v2635 = vadd.s32 %v2586, %v2632
        %v2636 = vadd.s32 %v2588, %v2634
        %v2637 = vrot.slane %v2575, 6
        %v2638 = vrot.slane %v2637, 4
        %v2639 = vrot.slane %v2576, 6
        %v2640 = vrot.slane %v2639, 4
        %v2643 = vmul.f32 %v2629, %v2638
        %v2644 = vmul.f32 %v2630, %v2640
        %v2645 = vrot.slane %v2601, 6
        %v2646 = vrot.slane %v2645, 4
        %v2647 = vrot.slane %v2602, 6
        %v2648 = vrot.slane %v2647, 4
        %v2649 = vadd.s32 %v2635, %v2646
        %v2650 = vadd.s32 %v2636, %v2648
        %v2651 = vlaneseq
        %v2652 = vshrl.u32 %v2651, 7
        %v2653 = vsub.s32 0, %v2652
        %v2654 = vrot.slane %v2649, %v2653
        %v2655 = vlaneseq
        %v2656 = vshrl.u32 %v2655, 7
        %v2657 = vsub.s32 4, %v2656
        %v2658 = vrot.slane %v2649, %v2657
        %v2659 = vlaneseq
        %v2660 = vshrl.u32 %v2659, 7
        %v2661 = vsub.s32 0, %v2660
        %v2662 = vrot.slane %v2650, %v2661
        %v2663 = vlaneseq
        %v2664 = vshrl.u32 %v2663, 7
        %v2665 = vsub.s32 4, %v2664
        %v2666 = vrot.slane %v2650, %v2665
        %v2667 = vlaneseq
        %v2668 = vshrl.u32 %v2667, 7
        %v2669 = vsub.s32 0, %v2668
        %v2670 = vrot.slane %v2654, %v2669
        %v2671 = vlaneseq
        %v2672 = vshrl.u32 %v2671, 7
        %v2673 = vsub.s32 0, %v2672
        %v2674 = vrot.slane %v2658, %v2673
        %v2675 = vlaneseq
        %v2676 = vshrl.u32 %v2675, 7
        %v2677 = vsub.s32 0, %v2676
        %v2678 = vrot.slane %v2662, %v2677
        %v2679 = vlaneseq
        %v2680 = vshrl.u32 %v2679, 7
        %v2681 = vsub.s32 0, %v2680
        %v2682 = vrot.slane %v2666, %v2681
        %vm2683 = vcmp.eq.s32.totalorder %v216, %v2670
        %vm2684 = vcmp.eq.s32.totalorder %v216, %v2674
        %vm2685 = vcmp.eq.s32.totalorder %v216, %v2678
        %vm2686 = vcmp.eq.s32.totalorder %v216, %v2682
        %vm2687 = vcmp.eq.s32.totalorder %v217, %v2670
        %vm2688 = vcmp.eq.s32.totalorder %v217, %v2674
        %vm2689 = vcmp.eq.s32.totalorder %v217, %v2678
        %vm2690 = vcmp.eq.s32.totalorder %v217, %v2682
        %vm2691 = vcmp.eq.s32.totalorder %v218, %v2670
        %vm2692 = vcmp.eq.s32.totalorder %v218, %v2674
        %vm2693 = vcmp.eq.s32.totalorder %v218, %v2678
        %vm2694 = vcmp.eq.s32.totalorder %v218, %v2682
        %vm2695 = vcmp.eq.s32.totalorder %v219, %v2670
        %vm2696 = vcmp.eq.s32.totalorder %v219, %v2674
        %vm2697 = vcmp.eq.s32.totalorder %v219, %v2678
        %vm2698 = vcmp.eq.s32.totalorder %v219, %v2682
        %vm2699 = vcmp.eq.s32.totalorder %v220, %v2670
        %vm2700 = vcmp.eq.s32.totalorder %v220, %v2674
        %vm2701 = vcmp.eq.s32.totalorder %v220, %v2678
        %vm2702 = vcmp.eq.s32.totalorder %v220, %v2682
        %vm2703 = vcmp.eq.s32.totalorder %v221, %v2670
        %vm2704 = vcmp.eq.s32.totalorder %v221, %v2674
        %vm2705 = vcmp.eq.s32.totalorder %v221, %v2678
        %vm2706 = vcmp.eq.s32.totalorder %v221, %v2682
        %vm2707 = vcmp.eq.s32.totalorder %v222, %v2670
        %vm2708 = vcmp.eq.s32.totalorder %v222, %v2674
        %vm2709 = vcmp.eq.s32.totalorder %v222, %v2678
        %vm2710 = vcmp.eq.s32.totalorder %v222, %v2682
        %vm2711 = vcmp.eq.s32.totalorder %v223, %v2670
        %vm2712 = vcmp.eq.s32.totalorder %v223, %v2674
        %vm2713 = vcmp.eq.s32.totalorder %v223, %v2678
        %vm2714 = vcmp.eq.s32.totalorder %v223, %v2682
        %vm2715 = vcmp.eq.s32.totalorder %v224, %v2670
        %vm2716 = vcmp.eq.s32.totalorder %v224, %v2674
        %vm2717 = vcmp.eq.s32.totalorder %v224, %v2678
        %vm2718 = vcmp.eq.s32.totalorder %v224, %v2682
        %vm2719 = vcmp.eq.s32.totalorder %v225, %v2670
        %vm2720 = vcmp.eq.s32.totalorder %v225, %v2674
        %vm2721 = vcmp.eq.s32.totalorder %v225, %v2678
        %vm2722 = vcmp.eq.s32.totalorder %v225, %v2682
        %vm2723 = vcmp.eq.s32.totalorder %v226, %v2670
        %vm2724 = vcmp.eq.s32.totalorder %v226, %v2674
        %vm2725 = vcmp.eq.s32.totalorder %v226, %v2678
        %vm2726 = vcmp.eq.s32.totalorder %v226, %v2682
        %vm2727 = vcmp.eq.s32.totalorder %v227, %v2670
        %vm2728 = vcmp.eq.s32.totalorder %v227, %v2674
        %vm2729 = vcmp.eq.s32.totalorder %v227, %v2678
        %vm2730 = vcmp.eq.s32.totalorder %v227, %v2682
        %vm2731 = vcmp.eq.s32.totalorder %v228, %v2670
        %vm2732 = vcmp.eq.s32.totalorder %v228, %v2674
        %vm2733 = vcmp.eq.s32.totalorder %v228, %v2678
        %vm2734 = vcmp.eq.s32.totalorder %v228, %v2682
        %vm2735 = vcmp.eq.s32.totalorder %v229, %v2670
        %vm2736 = vcmp.eq.s32.totalorder %v229, %v2674
        %vm2737 = vcmp.eq.s32.totalorder %v229, %v2678
        %vm2738 = vcmp.eq.s32.totalorder %v229, %v2682
        %vm2739 = vcmp.eq.s32.totalorder %v230, %v2670
        %vm2740 = vcmp.eq.s32.totalorder %v230, %v2674
        %vm2741 = vcmp.eq.s32.totalorder %v230, %v2678
        %vm2742 = vcmp.eq.s32.totalorder %v230, %v2682
        %vm2743 = vcmp.eq.s32.totalorder %v231, %v2670
        %vm2744 = vcmp.eq.s32.totalorder %v231, %v2674
        %vm2745 = vcmp.eq.s32.totalorder %v231, %v2678
        %vm2746 = vcmp.eq.s32.totalorder %v231, %v2682
        %vm2747 = vcmp.eq.s32.totalorder %v2605, %v2670
        %vm2748 = vcmp.eq.s32.totalorder %v2605, %v2674
        %vm2749 = vcmp.eq.s32.totalorder %v2605, %v2678
        %vm2750 = vcmp.eq.s32.totalorder %v2605, %v2682
        %vm2751 = vcmp.eq.s32.totalorder %v2606, %v2670
        %vm2752 = vcmp.eq.s32.totalorder %v2606, %v2674
        %vm2753 = vcmp.eq.s32.totalorder %v2606, %v2678
        %vm2754 = vcmp.eq.s32.totalorder %v2606, %v2682
        %vm2755 = vcmp.eq.s32.totalorder %v2607, %v2670
        %vm2756 = vcmp.eq.s32.totalorder %v2607, %v2674
        %vm2757 = vcmp.eq.s32.totalorder %v2607, %v2678
        %vm2758 = vcmp.eq.s32.totalorder %v2607, %v2682
        %vm2759 = vcmp.eq.s32.totalorder %v2608, %v2670
        %vm2760 = vcmp.eq.s32.totalorder %v2608, %v2674
        %vm2761 = vcmp.eq.s32.totalorder %v2608, %v2678
        %vm2762 = vcmp.eq.s32.totalorder %v2608, %v2682
        %vm2763 = vcmp.eq.s32.totalorder %v2609, %v2670
        %vm2764 = vcmp.eq.s32.totalorder %v2609, %v2674
        %vm2765 = vcmp.eq.s32.totalorder %v2609, %v2678
        %vm2766 = vcmp.eq.s32.totalorder %v2609, %v2682
        %vm2767 = vcmp.eq.s32.totalorder %v2610, %v2670
        %vm2768 = vcmp.eq.s32.totalorder %v2610, %v2674
        %vm2769 = vcmp.eq.s32.totalorder %v2610, %v2678
        %vm2770 = vcmp.eq.s32.totalorder %v2610, %v2682
        %vm2771 = vcmp.eq.s32.totalorder %v2611, %v2670
        %vm2772 = vcmp.eq.s32.totalorder %v2611, %v2674
        %vm2773 = vcmp.eq.s32.totalorder %v2611, %v2678
        %vm2774 = vcmp.eq.s32.totalorder %v2611, %v2682
        %vm2775 = vcmp.eq.s32.totalorder %v2612, %v2670
        %vm2776 = vcmp.eq.s32.totalorder %v2612, %v2674
        %vm2777 = vcmp.eq.s32.totalorder %v2612, %v2678
        %vm2778 = vcmp.eq.s32.totalorder %v2612, %v2682
        %vm2779 = vcmp.eq.s32.totalorder %v2613, %v2670
        %vm2780 = vcmp.eq.s32.totalorder %v2613, %v2674
        %vm2781 = vcmp.eq.s32.totalorder %v2613, %v2678
        %vm2782 = vcmp.eq.s32.totalorder %v2613, %v2682
        %vm2783 = vcmp.eq.s32.totalorder %v2614, %v2670
        %vm2784 = vcmp.eq.s32.totalorder %v2614, %v2674
        %vm2785 = vcmp.eq.s32.totalorder %v2614, %v2678
        %vm2786 = vcmp.eq.s32.totalorder %v2614, %v2682
        %vm2787 = vcmp.eq.s32.totalorder %v2615, %v2670
        %vm2788 = vcmp.eq.s32.totalorder %v2615, %v2674
        %vm2789 = vcmp.eq.s32.totalorder %v2615, %v2678
        %vm2790 = vcmp.eq.s32.totalorder %v2615, %v2682
        %vm2791 = vcmp.eq.s32.totalorder %v2616, %v2670
        %vm2792 = vcmp.eq.s32.totalorder %v2616, %v2674
        %vm2793 = vcmp.eq.s32.totalorder %v2616, %v2678
        %vm2794 = vcmp.eq.s32.totalorder %v2616, %v2682
        %vm2795 = vcmp.eq.s32.totalorder %v2617, %v2670
        %vm2796 = vcmp.eq.s32.totalorder %v2617, %v2674
        %vm2797 = vcmp.eq.s32.totalorder %v2617, %v2678
        %vm2798 = vcmp.eq.s32.totalorder %v2617, %v2682
        %vm2799 = vcmp.eq.s32.totalorder %v2618, %v2670
        %vm2800 = vcmp.eq.s32.totalorder %v2618, %v2674
        %vm2801 = vcmp.eq.s32.totalorder %v2618, %v2678
        %vm2802 = vcmp.eq.s32.totalorder %v2618, %v2682
        %vm2803 = vcmp.eq.s32.totalorder %v2619, %v2670
        %vm2804 = vcmp.eq.s32.totalorder %v2619, %v2674
        %vm2805 = vcmp.eq.s32.totalorder %v2619, %v2678
        %vm2806 = vcmp.eq.s32.totalorder %v2619, %v2682
        %vm2807 = vcmp.eq.s32.totalorder %v2620, %v2670
        %vm2808 = vcmp.eq.s32.totalorder %v2620, %v2674
        %vm2809 = vcmp.eq.s32.totalorder %v2620, %v2678
        %vm2810 = vcmp.eq.s32.totalorder %v2620, %v2682
        %v2813 = vlaneseq
        %v2814 = vshrl.u32 %v2813, 7
        %v2815 = vsub.s32 0, %v2814
        %v2816 = vrot.slane %v2643, %v2815
        %v2817 = vlaneseq
        %v2818 = vshrl.u32 %v2817, 7
        %v2819 = vsub.s32 4, %v2818
        %v2820 = vrot.slane %v2643, %v2819
        %v2821 = vlaneseq
        %v2822 = vshrl.u32 %v2821, 7
        %v2823 = vsub.s32 0, %v2822
        %v2824 = vrot.slane %v2644, %v2823
        %v2825 = vlaneseq
        %v2826 = vshrl.u32 %v2825, 7
        %v2827 = vsub.s32 4, %v2826
        %v2828 = vrot.slane %v2644, %v2827
        %v2833 = vlaneseq
        %v2834 = vshrl.u32 %v2833, 7
        %v2835 = vsub.s32 0, %v2834
        %v2836 = vrot.slane %v2816, %v2835
        %v2837 = vlaneseq
        %v2838 = vshrl.u32 %v2837, 7
        %v2839 = vsub.s32 0, %v2838
        %v2840 = vrot.slane %v2820, %v2839
        %v2841 = vlaneseq
        %v2842 = vshrl.u32 %v2841, 7
        %v2843 = vsub.s32 0, %v2842
        %v2844 = vrot.slane %v2824, %v2843
        %v2845 = vlaneseq
        %v2846 = vshrl.u32 %v2845, 7
        %v2847 = vsub.s32 0, %v2846
        %v2848 = vrot.slane %v2828, %v2847
        %v2849 = vsel %vm2683, %v2836, 0.0
        %v2850 = vsel %vm2684, %v2840, 0.0
        %v2851 = vsel %vm2685, %v2844, 0.0
        %v2852 = vsel %vm2686, %v2848, 0.0
        %v2853 = vsel %vm2687, %v2836, 0.0
        %v2854 = vsel %vm2688, %v2840, 0.0
        %v2855 = vsel %vm2689, %v2844, 0.0
        %v2856 = vsel %vm2690, %v2848, 0.0
        %v2857 = vsel %vm2691, %v2836, 0.0
        %v2858 = vsel %vm2692, %v2840, 0.0
        %v2859 = vsel %vm2693, %v2844, 0.0
        %v2860 = vsel %vm2694, %v2848, 0.0
        %v2861 = vsel %vm2695, %v2836, 0.0
        %v2862 = vsel %vm2696, %v2840, 0.0
        %v2863 = vsel %vm2697, %v2844, 0.0
        %v2864 = vsel %vm2698, %v2848, 0.0
        %v2865 = vsel %vm2699, %v2836, 0.0
        %v2866 = vsel %vm2700, %v2840, 0.0
        %v2867 = vsel %vm2701, %v2844, 0.0
        %v2868 = vsel %vm2702, %v2848, 0.0
        %v2869 = vsel %vm2703, %v2836, 0.0
        %v2870 = vsel %vm2704, %v2840, 0.0
        %v2871 = vsel %vm2705, %v2844, 0.0
        %v2872 = vsel %vm2706, %v2848, 0.0
        %v2873 = vsel %vm2707, %v2836, 0.0
        %v2874 = vsel %vm2708, %v2840, 0.0
        %v2875 = vsel %vm2709, %v2844, 0.0
        %v2876 = vsel %vm2710, %v2848, 0.0
        %v2877 = vsel %vm2711, %v2836, 0.0
        %v2878 = vsel %vm2712, %v2840, 0.0
        %v2879 = vsel %vm2713, %v2844, 0.0
        %v2880 = vsel %vm2714, %v2848, 0.0
        %v2881 = vsel %vm2715, %v2836, 0.0
        %v2882 = vsel %vm2716, %v2840, 0.0
        %v2883 = vsel %vm2717, %v2844, 0.0
        %v2884 = vsel %vm2718, %v2848, 0.0
        %v2885 = vsel %vm2719, %v2836, 0.0
        %v2886 = vsel %vm2720, %v2840, 0.0
        %v2887 = vsel %vm2721, %v2844, 0.0
        %v2888 = vsel %vm2722, %v2848, 0.0
        %v2889 = vsel %vm2723, %v2836, 0.0
        %v2890 = vsel %vm2724, %v2840, 0.0
        %v2891 = vsel %vm2725, %v2844, 0.0
        %v2892 = vsel %vm2726, %v2848, 0.0
        %v2893 = vsel %vm2727, %v2836, 0.0
        %v2894 = vsel %vm2728, %v2840, 0.0
        %v2895 = vsel %vm2729, %v2844, 0.0
        %v2896 = vsel %vm2730, %v2848, 0.0
        %v2897 = vsel %vm2731, %v2836, 0.0
        %v2898 = vsel %vm2732, %v2840, 0.0
        %v2899 = vsel %vm2733, %v2844, 0.0
        %v2900 = vsel %vm2734, %v2848, 0.0
        %v2901 = vsel %vm2735, %v2836, 0.0
        %v2902 = vsel %vm2736, %v2840, 0.0
        %v2903 = vsel %vm2737, %v2844, 0.0
        %v2904 = vsel %vm2738, %v2848, 0.0
        %v2905 = vsel %vm2739, %v2836, 0.0
        %v2906 = vsel %vm2740, %v2840, 0.0
        %v2907 = vsel %vm2741, %v2844, 0.0
        %v2908 = vsel %vm2742, %v2848, 0.0
        %v2909 = vsel %vm2743, %v2836, 0.0
        %v2910 = vsel %vm2744, %v2840, 0.0
        %v2911 = vsel %vm2745, %v2844, 0.0
        %v2912 = vsel %vm2746, %v2848, 0.0
        %v2913 = vsel %vm2747, %v2836, 0.0
        %v2914 = vsel %vm2748, %v2840, 0.0
        %v2915 = vsel %vm2749, %v2844, 0.0
        %v2916 = vsel %vm2750, %v2848, 0.0
        %v2917 = vsel %vm2751, %v2836, 0.0
        %v2918 = vsel %vm2752, %v2840, 0.0
        %v2919 = vsel %vm2753, %v2844, 0.0
        %v2920 = vsel %vm2754, %v2848, 0.0
        %v2921 = vsel %vm2755, %v2836, 0.0
        %v2922 = vsel %vm2756, %v2840, 0.0
        %v2923 = vsel %vm2757, %v2844, 0.0
        %v2924 = vsel %vm2758, %v2848, 0.0
        %v2925 = vsel %vm2759, %v2836, 0.0
        %v2926 = vsel %vm2760, %v2840, 0.0
        %v2927 = vsel %vm2761, %v2844, 0.0
        %v2928 = vsel %vm2762, %v2848, 0.0
        %v2929 = vsel %vm2763, %v2836, 0.0
        %v2930 = vsel %vm2764, %v2840, 0.0
        %v2931 = vsel %vm2765, %v2844, 0.0
        %v2932 = vsel %vm2766, %v2848, 0.0
        %v2933 = vsel %vm2767, %v2836, 0.0
        %v2934 = vsel %vm2768, %v2840, 0.0
        %v2935 = vsel %vm2769, %v2844, 0.0
        %v2936 = vsel %vm2770, %v2848, 0.0
        %v2937 = vsel %vm2771, %v2836, 0.0
        %v2938 = vsel %vm2772, %v2840, 0.0
        %v2939 = vsel %vm2773, %v2844, 0.0
        %v2940 = vsel %vm2774, %v2848, 0.0
        %v2941 = vsel %vm2775, %v2836, 0.0
        %v2942 = vsel %vm2776, %v2840, 0.0
        %v2943 = vsel %vm2777, %v2844, 0.0
        %v2944 = vsel %vm2778, %v2848, 0.0
        %v2945 = vsel %vm2779, %v2836, 0.0
        %v2946 = vsel %vm2780, %v2840, 0.0
        %v2947 = vsel %vm2781, %v2844, 0.0
        %v2948 = vsel %vm2782, %v2848, 0.0
        %v2949 = vsel %vm2783, %v2836, 0.0
        %v2950 = vsel %vm2784, %v2840, 0.0
        %v2951 = vsel %vm2785, %v2844, 0.0
        %v2952 = vsel %vm2786, %v2848, 0.0
        %v2953 = vsel %vm2787, %v2836, 0.0
        %v2954 = vsel %vm2788, %v2840, 0.0
        %v2955 = vsel %vm2789, %v2844, 0.0
        %v2956 = vsel %vm2790, %v2848, 0.0
        %v2957 = vsel %vm2791, %v2836, 0.0
        %v2958 = vsel %vm2792, %v2840, 0.0
        %v2959 = vsel %vm2793, %v2844, 0.0
        %v2960 = vsel %vm2794, %v2848, 0.0
        %v2961 = vsel %vm2795, %v2836, 0.0
        %v2962 = vsel %vm2796, %v2840, 0.0
        %v2963 = vsel %vm2797, %v2844, 0.0
        %v2964 = vsel %vm2798, %v2848, 0.0
        %v2965 = vsel %vm2799, %v2836, 0.0
        %v2966 = vsel %vm2800, %v2840, 0.0
        %v2967 = vsel %vm2801, %v2844, 0.0
        %v2968 = vsel %vm2802, %v2848, 0.0
        %v2969 = vsel %vm2803, %v2836, 0.0
        %v2970 = vsel %vm2804, %v2840, 0.0
        %v2971 = vsel %vm2805, %v2844, 0.0
        %v2972 = vsel %vm2806, %v2848, 0.0
        %v2973 = vsel %vm2807, %v2836, 0.0
        %v2974 = vsel %vm2808, %v2840, 0.0
        %v2975 = vsel %vm2809, %v2844, 0.0
        %v2976 = vsel %vm2810, %v2848, 0.0
        %v2977 = vadd.f32 %v2849, 0.0
        %v2978 = vadd.f32 %v2850, 0.0
        %v2979 = vadd.f32 %v2851, 0.0
        %v2980 = vadd.f32 %v2852, 0.0
        %v2981 = vadd.f32 %v2853, 0.0
        %v2982 = vadd.f32 %v2854, 0.0
        %v2983 = vadd.f32 %v2855, 0.0
        %v2984 = vadd.f32 %v2856, 0.0
        %v2985 = vadd.f32 %v2857, 0.0
        %v2986 = vadd.f32 %v2858, 0.0
        %v2987 = vadd.f32 %v2859, 0.0
        %v2988 = vadd.f32 %v2860, 0.0
        %v2989 = vadd.f32 %v2861, 0.0
        %v2990 = vadd.f32 %v2862, 0.0
        %v2991 = vadd.f32 %v2863, 0.0
        %v2992 = vadd.f32 %v2864, 0.0
        %v2993 = vadd.f32 %v2865, 0.0
        %v2994 = vadd.f32 %v2866, 0.0
        %v2995 = vadd.f32 %v2867, 0.0
        %v2996 = vadd.f32 %v2868, 0.0
        %v2997 = vadd.f32 %v2869, 0.0
        %v2998 = vadd.f32 %v2870, 0.0
        %v2999 = vadd.f32 %v2871, 0.0
        %v3000 = vadd.f32 %v2872, 0.0
        %v3001 = vadd.f32 %v2873, 0.0
        %v3002 = vadd.f32 %v2874, 0.0
        %v3003 = vadd.f32 %v2875, 0.0
        %v3004 = vadd.f32 %v2876, 0.0
        %v3005 = vadd.f32 %v2877, 0.0
        %v3006 = vadd.f32 %v2878, 0.0
        %v3007 = vadd.f32 %v2879, 0.0
        %v3008 = vadd.f32 %v2880, 0.0
        %v3009 = vadd.f32 %v2881, 0.0
        %v3010 = vadd.f32 %v2882, 0.0
        %v3011 = vadd.f32 %v2883, 0.0
        %v3012 = vadd.f32 %v2884, 0.0
        %v3013 = vadd.f32 %v2885, 0.0
        %v3014 = vadd.f32 %v2886, 0.0
        %v3015 = vadd.f32 %v2887, 0.0
        %v3016 = vadd.f32 %v2888, 0.0
        %v3017 = vadd.f32 %v2889, 0.0
        %v3018 = vadd.f32 %v2890, 0.0
        %v3019 = vadd.f32 %v2891, 0.0
        %v3020 = vadd.f32 %v2892, 0.0
        %v3021 = vadd.f32 %v2893, 0.0
        %v3022 = vadd.f32 %v2894, 0.0
        %v3023 = vadd.f32 %v2895, 0.0
        %v3024 = vadd.f32 %v2896, 0.0
        %v3025 = vadd.f32 %v2897, 0.0
        %v3026 = vadd.f32 %v2898, 0.0
        %v3027 = vadd.f32 %v2899, 0.0
        %v3028 = vadd.f32 %v2900, 0.0
        %v3029 = vadd.f32 %v2901, 0.0
        %v3030 = vadd.f32 %v2902, 0.0
        %v3031 = vadd.f32 %v2903, 0.0
        %v3032 = vadd.f32 %v2904, 0.0
        %v3033 = vadd.f32 %v2905, 0.0
        %v3034 = vadd.f32 %v2906, 0.0
        %v3035 = vadd.f32 %v2907, 0.0
        %v3036 = vadd.f32 %v2908, 0.0
        %v3037 = vadd.f32 %v2909, 0.0
        %v3038 = vadd.f32 %v2910, 0.0
        %v3039 = vadd.f32 %v2911, 0.0
        %v3040 = vadd.f32 %v2912, 0.0
        %v3041 = vadd.f32 %v2913, 0.0
        %v3042 = vadd.f32 %v2914, 0.0
        %v3043 = vadd.f32 %v2915, 0.0
        %v3044 = vadd.f32 %v2916, 0.0
        %v3045 = vadd.f32 %v2917, 0.0
        %v3046 = vadd.f32 %v2918, 0.0
        %v3047 = vadd.f32 %v2919, 0.0
        %v3048 = vadd.f32 %v2920, 0.0
        %v3049 = vadd.f32 %v2921, 0.0
        %v3050 = vadd.f32 %v2922, 0.0
        %v3051 = vadd.f32 %v2923, 0.0
        %v3052 = vadd.f32 %v2924, 0.0
        %v3053 = vadd.f32 %v2925, 0.0
        %v3054 = vadd.f32 %v2926, 0.0
        %v3055 = vadd.f32 %v2927, 0.0
        %v3056 = vadd.f32 %v2928, 0.0
        %v3057 = vadd.f32 %v2929, 0.0
        %v3058 = vadd.f32 %v2930, 0.0
        %v3059 = vadd.f32 %v2931, 0.0
        %v3060 = vadd.f32 %v2932, 0.0
        %v3061 = vadd.f32 %v2933, 0.0
        %v3062 = vadd.f32 %v2934, 0.0
        %v3063 = vadd.f32 %v2935, 0.0
        %v3064 = vadd.f32 %v2936, 0.0
        %v3065 = vadd.f32 %v2937, 0.0
        %v3066 = vadd.f32 %v2938, 0.0
        %v3067 = vadd.f32 %v2939, 0.0
        %v3068 = vadd.f32 %v2940, 0.0
        %v3069 = vadd.f32 %v2941, 0.0
        %v3070 = vadd.f32 %v2942, 0.0
        %v3071 = vadd.f32 %v2943, 0.0
        %v3072 = vadd.f32 %v2944, 0.0
        %v3073 = vadd.f32 %v2945, 0.0
        %v3074 = vadd.f32 %v2946, 0.0
        %v3075 = vadd.f32 %v2947, 0.0
        %v3076 = vadd.f32 %v2948, 0.0
        %v3077 = vadd.f32 %v2949, 0.0
        %v3078 = vadd.f32 %v2950, 0.0
        %v3079 = vadd.f32 %v2951, 0.0
        %v3080 = vadd.f32 %v2952, 0.0
        %v3081 = vadd.f32 %v2953, 0.0
        %v3082 = vadd.f32 %v2954, 0.0
        %v3083 = vadd.f32 %v2955, 0.0
        %v3084 = vadd.f32 %v2956, 0.0
        %v3085 = vadd.f32 %v2957, 0.0
        %v3086 = vadd.f32 %v2958, 0.0
        %v3087 = vadd.f32 %v2959, 0.0
        %v3088 = vadd.f32 %v2960, 0.0
        %v3089 = vadd.f32 %v2961, 0.0
        %v3090 = vadd.f32 %v2962, 0.0
        %v3091 = vadd.f32 %v2963, 0.0
        %v3092 = vadd.f32 %v2964, 0.0
        %v3093 = vadd.f32 %v2965, 0.0
        %v3094 = vadd.f32 %v2966, 0.0
        %v3095 = vadd.f32 %v2967, 0.0
        %v3096 = vadd.f32 %v2968, 0.0
        %v3097 = vadd.f32 %v2969, 0.0
        %v3098 = vadd.f32 %v2970, 0.0
        %v3099 = vadd.f32 %v2971, 0.0
        %v3100 = vadd.f32 %v2972, 0.0
        %v3101 = vadd.f32 %v2973, 0.0
        %v3102 = vadd.f32 %v2974, 0.0
        %v3103 = vadd.f32 %v2975, 0.0
        %v3104 = vadd.f32 %v2976, 0.0
        %v3107 = vrot.slane %v2573, 6
        %v3108 = vrot.slane %v3107, 4
        %v3109 = vrot.slane %v2574, 6
        %v3110 = vrot.slane %v3109, 4
        %v3113 = vmul.f32 %v2629, %v3108
        %v3114 = vmul.f32 %v2630, %v3110
        %v3115 = vrot.slane %v2603, 6
        %v3116 = vrot.slane %v3115, 4
        %v3117 = vrot.slane %v2604, 6
        %v3118 = vrot.slane %v3117, 4
        %v3119 = vadd.s32 %v2635, %v3116
        %v3120 = vadd.s32 %v2636, %v3118
        %v3121 = vlaneseq
        %v3122 = vshrl.u32 %v3121, 7
        %v3123 = vsub.s32 0, %v3122
        %v3124 = vrot.slane %v3119, %v3123
        %v3125 = vlaneseq
        %v3126 = vshrl.u32 %v3125, 7
        %v3127 = vsub.s32 4, %v3126
        %v3128 = vrot.slane %v3119, %v3127
        %v3129 = vlaneseq
        %v3130 = vshrl.u32 %v3129, 7
        %v3131 = vsub.s32 0, %v3130
        %v3132 = vrot.slane %v3120, %v3131
        %v3133 = vlaneseq
        %v3134 = vshrl.u32 %v3133, 7
        %v3135 = vsub.s32 4, %v3134
        %v3136 = vrot.slane %v3120, %v3135
        %v3137 = vlaneseq
        %v3138 = vshrl.u32 %v3137, 7
        %v3139 = vsub.s32 0, %v3138
        %v3140 = vrot.slane %v3124, %v3139
        %v3141 = vlaneseq
        %v3142 = vshrl.u32 %v3141, 7
        %v3143 = vsub.s32 0, %v3142
        %v3144 = vrot.slane %v3128, %v3143
        %v3145 = vlaneseq
        %v3146 = vshrl.u32 %v3145, 7
        %v3147 = vsub.s32 0, %v3146
        %v3148 = vrot.slane %v3132, %v3147
        %v3149 = vlaneseq
        %v3150 = vshrl.u32 %v3149, 7
        %v3151 = vsub.s32 0, %v3150
        %v3152 = vrot.slane %v3136, %v3151
        %vm3153 = vcmp.eq.s32.totalorder %v216, %v3140
        %vm3154 = vcmp.eq.s32.totalorder %v216, %v3144
        %vm3155 = vcmp.eq.s32.totalorder %v216, %v3148
        %vm3156 = vcmp.eq.s32.totalorder %v216, %v3152
        %vm3157 = vcmp.eq.s32.totalorder %v217, %v3140
        %vm3158 = vcmp.eq.s32.totalorder %v217, %v3144
        %vm3159 = vcmp.eq.s32.totalorder %v217, %v3148
        %vm3160 = vcmp.eq.s32.totalorder %v217, %v3152
        %vm3161 = vcmp.eq.s32.totalorder %v218, %v3140
        %vm3162 = vcmp.eq.s32.totalorder %v218, %v3144
        %vm3163 = vcmp.eq.s32.totalorder %v218, %v3148
        %vm3164 = vcmp.eq.s32.totalorder %v218, %v3152
        %vm3165 = vcmp.eq.s32.totalorder %v219, %v3140
        %vm3166 = vcmp.eq.s32.totalorder %v219, %v3144
        %vm3167 = vcmp.eq.s32.totalorder %v219, %v3148
        %vm3168 = vcmp.eq.s32.totalorder %v219, %v3152
        %vm3169 = vcmp.eq.s32.totalorder %v220, %v3140
        %vm3170 = vcmp.eq.s32.totalorder %v220, %v3144
        %vm3171 = vcmp.eq.s32.totalorder %v220, %v3148
        %vm3172 = vcmp.eq.s32.totalorder %v220, %v3152
        %vm3173 = vcmp.eq.s32.totalorder %v221, %v3140
        %vm3174 = vcmp.eq.s32.totalorder %v221, %v3144
        %vm3175 = vcmp.eq.s32.totalorder %v221, %v3148
        %vm3176 = vcmp.eq.s32.totalorder %v221, %v3152
        %vm3177 = vcmp.eq.s32.totalorder %v222, %v3140
        %vm3178 = vcmp.eq.s32.totalorder %v222, %v3144
        %vm3179 = vcmp.eq.s32.totalorder %v222, %v3148
        %vm3180 = vcmp.eq.s32.totalorder %v222, %v3152
        %vm3181 = vcmp.eq.s32.totalorder %v223, %v3140
        %vm3182 = vcmp.eq.s32.totalorder %v223, %v3144
        %vm3183 = vcmp.eq.s32.totalorder %v223, %v3148
        %vm3184 = vcmp.eq.s32.totalorder %v223, %v3152
        %vm3185 = vcmp.eq.s32.totalorder %v224, %v3140
        %vm3186 = vcmp.eq.s32.totalorder %v224, %v3144
        %vm3187 = vcmp.eq.s32.totalorder %v224, %v3148
        %vm3188 = vcmp.eq.s32.totalorder %v224, %v3152
        %vm3189 = vcmp.eq.s32.totalorder %v225, %v3140
        %vm3190 = vcmp.eq.s32.totalorder %v225, %v3144
        %vm3191 = vcmp.eq.s32.totalorder %v225, %v3148
        %vm3192 = vcmp.eq.s32.totalorder %v225, %v3152
        %vm3193 = vcmp.eq.s32.totalorder %v226, %v3140
        %vm3194 = vcmp.eq.s32.totalorder %v226, %v3144
        %vm3195 = vcmp.eq.s32.totalorder %v226, %v3148
        %vm3196 = vcmp.eq.s32.totalorder %v226, %v3152
        %vm3197 = vcmp.eq.s32.totalorder %v227, %v3140
        %vm3198 = vcmp.eq.s32.totalorder %v227, %v3144
        %vm3199 = vcmp.eq.s32.totalorder %v227, %v3148
        %vm3200 = vcmp.eq.s32.totalorder %v227, %v3152
        %vm3201 = vcmp.eq.s32.totalorder %v228, %v3140
        %vm3202 = vcmp.eq.s32.totalorder %v228, %v3144
        %vm3203 = vcmp.eq.s32.totalorder %v228, %v3148
        %vm3204 = vcmp.eq.s32.totalorder %v228, %v3152
        %vm3205 = vcmp.eq.s32.totalorder %v229, %v3140
        %vm3206 = vcmp.eq.s32.totalorder %v229, %v3144
        %vm3207 = vcmp.eq.s32.totalorder %v229, %v3148
        %vm3208 = vcmp.eq.s32.totalorder %v229, %v3152
        %vm3209 = vcmp.eq.s32.totalorder %v230, %v3140
        %vm3210 = vcmp.eq.s32.totalorder %v230, %v3144
        %vm3211 = vcmp.eq.s32.totalorder %v230, %v3148
        %vm3212 = vcmp.eq.s32.totalorder %v230, %v3152
        %vm3213 = vcmp.eq.s32.totalorder %v231, %v3140
        %vm3214 = vcmp.eq.s32.totalorder %v231, %v3144
        %vm3215 = vcmp.eq.s32.totalorder %v231, %v3148
        %vm3216 = vcmp.eq.s32.totalorder %v231, %v3152
        %vm3217 = vcmp.eq.s32.totalorder %v2605, %v3140
        %vm3218 = vcmp.eq.s32.totalorder %v2605, %v3144
        %vm3219 = vcmp.eq.s32.totalorder %v2605, %v3148
        %vm3220 = vcmp.eq.s32.totalorder %v2605, %v3152
        %vm3221 = vcmp.eq.s32.totalorder %v2606, %v3140
        %vm3222 = vcmp.eq.s32.totalorder %v2606, %v3144
        %vm3223 = vcmp.eq.s32.totalorder %v2606, %v3148
        %vm3224 = vcmp.eq.s32.totalorder %v2606, %v3152
        %vm3225 = vcmp.eq.s32.totalorder %v2607, %v3140
        %vm3226 = vcmp.eq.s32.totalorder %v2607, %v3144
        %vm3227 = vcmp.eq.s32.totalorder %v2607, %v3148
        %vm3228 = vcmp.eq.s32.totalorder %v2607, %v3152
        %vm3229 = vcmp.eq.s32.totalorder %v2608, %v3140
        %vm3230 = vcmp.eq.s32.totalorder %v2608, %v3144
        %vm3231 = vcmp.eq.s32.totalorder %v2608, %v3148
        %vm3232 = vcmp.eq.s32.totalorder %v2608, %v3152
        %vm3233 = vcmp.eq.s32.totalorder %v2609, %v3140
        %vm3234 = vcmp.eq.s32.totalorder %v2609, %v3144
        %vm3235 = vcmp.eq.s32.totalorder %v2609, %v3148
        %vm3236 = vcmp.eq.s32.totalorder %v2609, %v3152
        %vm3237 = vcmp.eq.s32.totalorder %v2610, %v3140
        %vm3238 = vcmp.eq.s32.totalorder %v2610, %v3144
        %vm3239 = vcmp.eq.s32.totalorder %v2610, %v3148
        %vm3240 = vcmp.eq.s32.totalorder %v2610, %v3152
        %vm3241 = vcmp.eq.s32.totalorder %v2611, %v3140
        %vm3242 = vcmp.eq.s32.totalorder %v2611, %v3144
        %vm3243 = vcmp.eq.s32.totalorder %v2611, %v3148
        %vm3244 = vcmp.eq.s32.totalorder %v2611, %v3152
        %vm3245 = vcmp.eq.s32.totalorder %v2612, %v3140
        %vm3246 = vcmp.eq.s32.totalorder %v2612, %v3144
        %vm3247 = vcmp.eq.s32.totalorder %v2612, %v3148
        %vm3248 = vcmp.eq.s32.totalorder %v2612, %v3152
        %vm3249 = vcmp.eq.s32.totalorder %v2613, %v3140
        %vm3250 = vcmp.eq.s32.totalorder %v2613, %v3144
        %vm3251 = vcmp.eq.s32.totalorder %v2613, %v3148
        %vm3252 = vcmp.eq.s32.totalorder %v2613, %v3152
        %vm3253 = vcmp.eq.s32.totalorder %v2614, %v3140
        %vm3254 = vcmp.eq.s32.totalorder %v2614, %v3144
        %vm3255 = vcmp.eq.s32.totalorder %v2614, %v3148
        %vm3256 = vcmp.eq.s32.totalorder %v2614, %v3152
        %vm3257 = vcmp.eq.s32.totalorder %v2615, %v3140
        %vm3258 = vcmp.eq.s32.totalorder %v2615, %v3144
        %vm3259 = vcmp.eq.s32.totalorder %v2615, %v3148
        %vm3260 = vcmp.eq.s32.totalorder %v2615, %v3152
        %vm3261 = vcmp.eq.s32.totalorder %v2616, %v3140
        %vm3262 = vcmp.eq.s32.totalorder %v2616, %v3144
        %vm3263 = vcmp.eq.s32.totalorder %v2616, %v3148
        %vm3264 = vcmp.eq.s32.totalorder %v2616, %v3152
        %vm3265 = vcmp.eq.s32.totalorder %v2617, %v3140
        %vm3266 = vcmp.eq.s32.totalorder %v2617, %v3144
        %vm3267 = vcmp.eq.s32.totalorder %v2617, %v3148
        %vm3268 = vcmp.eq.s32.totalorder %v2617, %v3152
        %vm3269 = vcmp.eq.s32.totalorder %v2618, %v3140
        %vm3270 = vcmp.eq.s32.totalorder %v2618, %v3144
        %vm3271 = vcmp.eq.s32.totalorder %v2618, %v3148
        %vm3272 = vcmp.eq.s32.totalorder %v2618, %v3152
        %vm3273 = vcmp.eq.s32.totalorder %v2619, %v3140
        %vm3274 = vcmp.eq.s32.totalorder %v2619, %v3144
        %vm3275 = vcmp.eq.s32.totalorder %v2619, %v3148
        %vm3276 = vcmp.eq.s32.totalorder %v2619, %v3152
        %vm3277 = vcmp.eq.s32.totalorder %v2620, %v3140
        %vm3278 = vcmp.eq.s32.totalorder %v2620, %v3144
        %vm3279 = vcmp.eq.s32.totalorder %v2620, %v3148
        %vm3280 = vcmp.eq.s32.totalorder %v2620, %v3152
        %v3283 = vlaneseq
        %v3284 = vshrl.u32 %v3283, 7
        %v3285 = vsub.s32 0, %v3284
        %v3286 = vrot.slane %v3113, %v3285
        %v3287 = vlaneseq
        %v3288 = vshrl.u32 %v3287, 7
        %v3289 = vsub.s32 4, %v3288
        %v3290 = vrot.slane %v3113, %v3289
        %v3291 = vlaneseq
        %v3292 = vshrl.u32 %v3291, 7
        %v3293 = vsub.s32 0, %v3292
        %v3294 = vrot.slane %v3114, %v3293
        %v3295 = vlaneseq
        %v3296 = vshrl.u32 %v3295, 7
        %v3297 = vsub.s32 4, %v3296
        %v3298 = vrot.slane %v3114, %v3297
        %v3303 = vlaneseq
        %v3304 = vshrl.u32 %v3303, 7
        %v3305 = vsub.s32 0, %v3304
        %v3306 = vrot.slane %v3286, %v3305
        %v3307 = vlaneseq
        %v3308 = vshrl.u32 %v3307, 7
        %v3309 = vsub.s32 0, %v3308
        %v3310 = vrot.slane %v3290, %v3309
        %v3311 = vlaneseq
        %v3312 = vshrl.u32 %v3311, 7
        %v3313 = vsub.s32 0, %v3312
        %v3314 = vrot.slane %v3294, %v3313
        %v3315 = vlaneseq
        %v3316 = vshrl.u32 %v3315, 7
        %v3317 = vsub.s32 0, %v3316
        %v3318 = vrot.slane %v3298, %v3317
        %v3319 = vsel %vm3153, %v3306, 0.0
        %v3320 = vsel %vm3154, %v3310, 0.0
        %v3321 = vsel %vm3155, %v3314, 0.0
        %v3322 = vsel %vm3156, %v3318, 0.0
        %v3323 = vsel %vm3157, %v3306, 0.0
        %v3324 = vsel %vm3158, %v3310, 0.0
        %v3325 = vsel %vm3159, %v3314, 0.0
        %v3326 = vsel %vm3160, %v3318, 0.0
        %v3327 = vsel %vm3161, %v3306, 0.0
        %v3328 = vsel %vm3162, %v3310, 0.0
        %v3329 = vsel %vm3163, %v3314, 0.0
        %v3330 = vsel %vm3164, %v3318, 0.0
        %v3331 = vsel %vm3165, %v3306, 0.0
        %v3332 = vsel %vm3166, %v3310, 0.0
        %v3333 = vsel %vm3167, %v3314, 0.0
        %v3334 = vsel %vm3168, %v3318, 0.0
        %v3335 = vsel %vm3169, %v3306, 0.0
        %v3336 = vsel %vm3170, %v3310, 0.0
        %v3337 = vsel %vm3171, %v3314, 0.0
        %v3338 = vsel %vm3172, %v3318, 0.0
        %v3339 = vsel %vm3173, %v3306, 0.0
        %v3340 = vsel %vm3174, %v3310, 0.0
        %v3341 = vsel %vm3175, %v3314, 0.0
        %v3342 = vsel %vm3176, %v3318, 0.0
        %v3343 = vsel %vm3177, %v3306, 0.0
        %v3344 = vsel %vm3178, %v3310, 0.0
        %v3345 = vsel %vm3179, %v3314, 0.0
        %v3346 = vsel %vm3180, %v3318, 0.0
        %v3347 = vsel %vm3181, %v3306, 0.0
        %v3348 = vsel %vm3182, %v3310, 0.0
        %v3349 = vsel %vm3183, %v3314, 0.0
        %v3350 = vsel %vm3184, %v3318, 0.0
        %v3351 = vsel %vm3185, %v3306, 0.0
        %v3352 = vsel %vm3186, %v3310, 0.0
        %v3353 = vsel %vm3187, %v3314, 0.0
        %v3354 = vsel %vm3188, %v3318, 0.0
        %v3355 = vsel %vm3189, %v3306, 0.0
        %v3356 = vsel %vm3190, %v3310, 0.0
        %v3357 = vsel %vm3191, %v3314, 0.0
        %v3358 = vsel %vm3192, %v3318, 0.0
        %v3359 = vsel %vm3193, %v3306, 0.0
        %v3360 = vsel %vm3194, %v3310, 0.0
        %v3361 = vsel %vm3195, %v3314, 0.0
        %v3362 = vsel %vm3196, %v3318, 0.0
        %v3363 = vsel %vm3197, %v3306, 0.0
        %v3364 = vsel %vm3198, %v3310, 0.0
        %v3365 = vsel %vm3199, %v3314, 0.0
        %v3366 = vsel %vm3200, %v3318, 0.0
        %v3367 = vsel %vm3201, %v3306, 0.0
        %v3368 = vsel %vm3202, %v3310, 0.0
        %v3369 = vsel %vm3203, %v3314, 0.0
        %v3370 = vsel %vm3204, %v3318, 0.0
        %v3371 = vsel %vm3205, %v3306, 0.0
        %v3372 = vsel %vm3206, %v3310, 0.0
        %v3373 = vsel %vm3207, %v3314, 0.0
        %v3374 = vsel %vm3208, %v3318, 0.0
        %v3375 = vsel %vm3209, %v3306, 0.0
        %v3376 = vsel %vm3210, %v3310, 0.0
        %v3377 = vsel %vm3211, %v3314, 0.0
        %v3378 = vsel %vm3212, %v3318, 0.0
        %v3379 = vsel %vm3213, %v3306, 0.0
        %v3380 = vsel %vm3214, %v3310, 0.0
        %v3381 = vsel %vm3215, %v3314, 0.0
        %v3382 = vsel %vm3216, %v3318, 0.0
        %v3383 = vsel %vm3217, %v3306, 0.0
        %v3384 = vsel %vm3218, %v3310, 0.0
        %v3385 = vsel %vm3219, %v3314, 0.0
        %v3386 = vsel %vm3220, %v3318, 0.0
        %v3387 = vsel %vm3221, %v3306, 0.0
        %v3388 = vsel %vm3222, %v3310, 0.0
        %v3389 = vsel %vm3223, %v3314, 0.0
        %v3390 = vsel %vm3224, %v3318, 0.0
        %v3391 = vsel %vm3225, %v3306, 0.0
        %v3392 = vsel %vm3226, %v3310, 0.0
        %v3393 = vsel %vm3227, %v3314, 0.0
        %v3394 = vsel %vm3228, %v3318, 0.0
        %v3395 = vsel %vm3229, %v3306, 0.0
        %v3396 = vsel %vm3230, %v3310, 0.0
        %v3397 = vsel %vm3231, %v3314, 0.0
        %v3398 = vsel %vm3232, %v3318, 0.0
        %v3399 = vsel %vm3233, %v3306, 0.0
        %v3400 = vsel %vm3234, %v3310, 0.0
        %v3401 = vsel %vm3235, %v3314, 0.0
        %v3402 = vsel %vm3236, %v3318, 0.0
        %v3403 = vsel %vm3237, %v3306, 0.0
        %v3404 = vsel %vm3238, %v3310, 0.0
        %v3405 = vsel %vm3239, %v3314, 0.0
        %v3406 = vsel %vm3240, %v3318, 0.0
        %v3407 = vsel %vm3241, %v3306, 0.0
        %v3408 = vsel %vm3242, %v3310, 0.0
        %v3409 = vsel %vm3243, %v3314, 0.0
        %v3410 = vsel %vm3244, %v3318, 0.0
        %v3411 = vsel %vm3245, %v3306, 0.0
        %v3412 = vsel %vm3246, %v3310, 0.0
        %v3413 = vsel %vm3247, %v3314, 0.0
        %v3414 = vsel %vm3248, %v3318, 0.0
        %v3415 = vsel %vm3249, %v3306, 0.0
        %v3416 = vsel %vm3250, %v3310, 0.0
        %v3417 = vsel %vm3251, %v3314, 0.0
        %v3418 = vsel %vm3252, %v3318, 0.0
        %v3419 = vsel %vm3253, %v3306, 0.0
        %v3420 = vsel %vm3254, %v3310, 0.0
        %v3421 = vsel %vm3255, %v3314, 0.0
        %v3422 = vsel %vm3256, %v3318, 0.0
        %v3423 = vsel %vm3257, %v3306, 0.0
        %v3424 = vsel %vm3258, %v3310, 0.0
        %v3425 = vsel %vm3259, %v3314, 0.0
        %v3426 = vsel %vm3260, %v3318, 0.0
        %v3427 = vsel %vm3261, %v3306, 0.0
        %v3428 = vsel %vm3262, %v3310, 0.0
        %v3429 = vsel %vm3263, %v3314, 0.0
        %v3430 = vsel %vm3264, %v3318, 0.0
        %v3431 = vsel %vm3265, %v3306, 0.0
        %v3432 = vsel %vm3266, %v3310, 0.0
        %v3433 = vsel %vm3267, %v3314, 0.0
        %v3434 = vsel %vm3268, %v3318, 0.0
        %v3435 = vsel %vm3269, %v3306, 0.0
        %v3436 = vsel %vm3270, %v3310, 0.0
        %v3437 = vsel %vm3271, %v3314, 0.0
        %v3438 = vsel %vm3272, %v3318, 0.0
        %v3439 = vsel %vm3273, %v3306, 0.0
        %v3440 = vsel %vm3274, %v3310, 0.0
        %v3441 = vsel %vm3275, %v3314, 0.0
        %v3442 = vsel %vm3276, %v3318, 0.0
        %v3443 = vsel %vm3277, %v3306, 0.0
        %v3444 = vsel %vm3278, %v3310, 0.0
        %v3445 = vsel %vm3279, %v3314, 0.0
        %v3446 = vsel %vm3280, %v3318, 0.0
        %v3447 = vadd.f32 %v2977, %v3319
        %v3448 = vadd.f32 %v2978, %v3320
        %v3449 = vadd.f32 %v2979, %v3321
        %v3450 = vadd.f32 %v2980, %v3322
        %v3451 = vadd.f32 %v2981, %v3323
        %v3452 = vadd.f32 %v2982, %v3324
        %v3453 = vadd.f32 %v2983, %v3325
        %v3454 = vadd.f32 %v2984, %v3326
        %v3455 = vadd.f32 %v2985, %v3327
        %v3456 = vadd.f32 %v2986, %v3328
        %v3457 = vadd.f32 %v2987, %v3329
        %v3458 = vadd.f32 %v2988, %v3330
        %v3459 = vadd.f32 %v2989, %v3331
        %v3460 = vadd.f32 %v2990, %v3332
        %v3461 = vadd.f32 %v2991, %v3333
        %v3462 = vadd.f32 %v2992, %v3334
        %v3463 = vadd.f32 %v2993, %v3335
        %v3464 = vadd.f32 %v2994, %v3336
        %v3465 = vadd.f32 %v2995, %v3337
        %v3466 = vadd.f32 %v2996, %v3338
        %v3467 = vadd.f32 %v2997, %v3339
        %v3468 = vadd.f32 %v2998, %v3340
        %v3469 = vadd.f32 %v2999, %v3341
        %v3470 = vadd.f32 %v3000, %v3342
        %v3471 = vadd.f32 %v3001, %v3343
        %v3472 = vadd.f32 %v3002, %v3344
        %v3473 = vadd.f32 %v3003, %v3345
        %v3474 = vadd.f32 %v3004, %v3346
        %v3475 = vadd.f32 %v3005, %v3347
        %v3476 = vadd.f32 %v3006, %v3348
        %v3477 = vadd.f32 %v3007, %v3349
        %v3478 = vadd.f32 %v3008, %v3350
        %v3479 = vadd.f32 %v3009, %v3351
        %v3480 = vadd.f32 %v3010, %v3352
        %v3481 = vadd.f32 %v3011, %v3353
        %v3482 = vadd.f32 %v3012, %v3354
        %v3483 = vadd.f32 %v3013, %v3355
        %v3484 = vadd.f32 %v3014, %v3356
        %v3485 = vadd.f32 %v3015, %v3357
        %v3486 = vadd.f32 %v3016, %v3358
        %v3487 = vadd.f32 %v3017, %v3359
        %v3488 = vadd.f32 %v3018, %v3360
        %v3489 = vadd.f32 %v3019, %v3361
        %v3490 = vadd.f32 %v3020, %v3362
        %v3491 = vadd.f32 %v3021, %v3363
        %v3492 = vadd.f32 %v3022, %v3364
        %v3493 = vadd.f32 %v3023, %v3365
        %v3494 = vadd.f32 %v3024, %v3366
        %v3495 = vadd.f32 %v3025, %v3367
        %v3496 = vadd.f32 %v3026, %v3368
        %v3497 = vadd.f32 %v3027, %v3369
        %v3498 = vadd.f32 %v3028, %v3370
        %v3499 = vadd.f32 %v3029, %v3371
        %v3500 = vadd.f32 %v3030, %v3372
        %v3501 = vadd.f32 %v3031, %v3373
        %v3502 = vadd.f32 %v3032, %v3374
        %v3503 = vadd.f32 %v3033, %v3375
        %v3504 = vadd.f32 %v3034, %v3376
        %v3505 = vadd.f32 %v3035, %v3377
        %v3506 = vadd.f32 %v3036, %v3378
        %v3507 = vadd.f32 %v3037, %v3379
        %v3508 = vadd.f32 %v3038, %v3380
        %v3509 = vadd.f32 %v3039, %v3381
        %v3510 = vadd.f32 %v3040, %v3382
        %v3511 = vadd.f32 %v3041, %v3383
        %v3512 = vadd.f32 %v3042, %v3384
        %v3513 = vadd.f32 %v3043, %v3385
        %v3514 = vadd.f32 %v3044, %v3386
        %v3515 = vadd.f32 %v3045, %v3387
        %v3516 = vadd.f32 %v3046, %v3388
        %v3517 = vadd.f32 %v3047, %v3389
        %v3518 = vadd.f32 %v3048, %v3390
        %v3519 = vadd.f32 %v3049, %v3391
        %v3520 = vadd.f32 %v3050, %v3392
        %v3521 = vadd.f32 %v3051, %v3393
        %v3522 = vadd.f32 %v3052, %v3394
        %v3523 = vadd.f32 %v3053, %v3395
        %v3524 = vadd.f32 %v3054, %v3396
        %v3525 = vadd.f32 %v3055, %v3397
        %v3526 = vadd.f32 %v3056, %v3398
        %v3527 = vadd.f32 %v3057, %v3399
        %v3528 = vadd.f32 %v3058, %v3400
        %v3529 = vadd.f32 %v3059, %v3401
        %v3530 = vadd.f32 %v3060, %v3402
        %v3531 = vadd.f32 %v3061, %v3403
        %v3532 = vadd.f32 %v3062, %v3404
        %v3533 = vadd.f32 %v3063, %v3405
        %v3534 = vadd.f32 %v3064, %v3406
        %v3535 = vadd.f32 %v3065, %v3407
        %v3536 = vadd.f32 %v3066, %v3408
        %v3537 = vadd.f32 %v3067, %v3409
        %v3538 = vadd.f32 %v3068, %v3410
        %v3539 = vadd.f32 %v3069, %v3411
        %v3540 = vadd.f32 %v3070, %v3412
        %v3541 = vadd.f32 %v3071, %v3413
        %v3542 = vadd.f32 %v3072, %v3414
        %v3543 = vadd.f32 %v3073, %v3415
        %v3544 = vadd.f32 %v3074, %v3416
        %v3545 = vadd.f32 %v3075, %v3417
        %v3546 = vadd.f32 %v3076, %v3418
        %v3547 = vadd.f32 %v3077, %v3419
        %v3548 = vadd.f32 %v3078, %v3420
        %v3549 = vadd.f32 %v3079, %v3421
        %v3550 = vadd.f32 %v3080, %v3422
        %v3551 = vadd.f32 %v3081, %v3423
        %v3552 = vadd.f32 %v3082, %v3424
        %v3553 = vadd.f32 %v3083, %v3425
        %v3554 = vadd.f32 %v3084, %v3426
        %v3555 = vadd.f32 %v3085, %v3427
        %v3556 = vadd.f32 %v3086, %v3428
        %v3557 = vadd.f32 %v3087, %v3429
        %v3558 = vadd.f32 %v3088, %v3430
        %v3559 = vadd.f32 %v3089, %v3431
        %v3560 = vadd.f32 %v3090, %v3432
        %v3561 = vadd.f32 %v3091, %v3433
        %v3562 = vadd.f32 %v3092, %v3434
        %v3563 = vadd.f32 %v3093, %v3435
        %v3564 = vadd.f32 %v3094, %v3436
        %v3565 = vadd.f32 %v3095, %v3437
        %v3566 = vadd.f32 %v3096, %v3438
        %v3567 = vadd.f32 %v3097, %v3439
        %v3568 = vadd.f32 %v3098, %v3440
        %v3569 = vadd.f32 %v3099, %v3441
        %v3570 = vadd.f32 %v3100, %v3442
        %v3571 = vadd.f32 %v3101, %v3443
        %v3572 = vadd.f32 %v3102, %v3444
        %v3573 = vadd.f32 %v3103, %v3445
        %v3574 = vadd.f32 %v3104, %v3446
        %v3575 = vrot.slane %v2573, 5
        %v3576 = vrot.slane %v3575, 4
        %v3577 = vrot.slane %v2574, 5
        %v3578 = vrot.slane %v3577, 4
        %v3581 = vmul.f32 %v2575, %v3576
        %v3582 = vmul.f32 %v2576, %v3578
        %v3583 = vrot.slane %v2599, 5
        %v3584 = vrot.slane %v3583, 4
        %v3585 = vrot.slane %v2600, 5
        %v3586 = vrot.slane %v3585, 4
        %v3587 = vadd.s32 %v2586, %v3584
        %v3588 = vadd.s32 %v2588, %v3586
        %v3589 = vmul.f32 %v3581, %v2638
        %v3590 = vmul.f32 %v3582, %v2640
        %v3591 = vadd.s32 %v3587, %v2646
        %v3592 = vadd.s32 %v3588, %v2648
        %v3593 = vlaneseq
        %v3594 = vshrl.u32 %v3593, 7
        %v3595 = vsub.s32 0, %v3594
        %v3596 = vrot.slane %v3591, %v3595
        %v3597 = vlaneseq
        %v3598 = vshrl.u32 %v3597, 7
        %v3599 = vsub.s32 4, %v3598
        %v3600 = vrot.slane %v3591, %v3599
        %v3601 = vlaneseq
        %v3602 = vshrl.u32 %v3601, 7
        %v3603 = vsub.s32 0, %v3602
        %v3604 = vrot.slane %v3592, %v3603
        %v3605 = vlaneseq
        %v3606 = vshrl.u32 %v3605, 7
        %v3607 = vsub.s32 4, %v3606
        %v3608 = vrot.slane %v3592, %v3607
        %v3609 = vlaneseq
        %v3610 = vshrl.u32 %v3609, 7
        %v3611 = vsub.s32 0, %v3610
        %v3612 = vrot.slane %v3596, %v3611
        %v3613 = vlaneseq
        %v3614 = vshrl.u32 %v3613, 7
        %v3615 = vsub.s32 0, %v3614
        %v3616 = vrot.slane %v3600, %v3615
        %v3617 = vlaneseq
        %v3618 = vshrl.u32 %v3617, 7
        %v3619 = vsub.s32 0, %v3618
        %v3620 = vrot.slane %v3604, %v3619
        %v3621 = vlaneseq
        %v3622 = vshrl.u32 %v3621, 7
        %v3623 = vsub.s32 0, %v3622
        %v3624 = vrot.slane %v3608, %v3623
        %vm3625 = vcmp.eq.s32.totalorder %v216, %v3612
        %vm3626 = vcmp.eq.s32.totalorder %v216, %v3616
        %vm3627 = vcmp.eq.s32.totalorder %v216, %v3620
        %vm3628 = vcmp.eq.s32.totalorder %v216, %v3624
        %vm3629 = vcmp.eq.s32.totalorder %v217, %v3612
        %vm3630 = vcmp.eq.s32.totalorder %v217, %v3616
        %vm3631 = vcmp.eq.s32.totalorder %v217, %v3620
        %vm3632 = vcmp.eq.s32.totalorder %v217, %v3624
        %vm3633 = vcmp.eq.s32.totalorder %v218, %v3612
        %vm3634 = vcmp.eq.s32.totalorder %v218, %v3616
        %vm3635 = vcmp.eq.s32.totalorder %v218, %v3620
        %vm3636 = vcmp.eq.s32.totalorder %v218, %v3624
        %vm3637 = vcmp.eq.s32.totalorder %v219, %v3612
        %vm3638 = vcmp.eq.s32.totalorder %v219, %v3616
        %vm3639 = vcmp.eq.s32.totalorder %v219, %v3620
        %vm3640 = vcmp.eq.s32.totalorder %v219, %v3624
        %vm3641 = vcmp.eq.s32.totalorder %v220, %v3612
        %vm3642 = vcmp.eq.s32.totalorder %v220, %v3616
        %vm3643 = vcmp.eq.s32.totalorder %v220, %v3620
        %vm3644 = vcmp.eq.s32.totalorder %v220, %v3624
        %vm3645 = vcmp.eq.s32.totalorder %v221, %v3612
        %vm3646 = vcmp.eq.s32.totalorder %v221, %v3616
        %vm3647 = vcmp.eq.s32.totalorder %v221, %v3620
        %vm3648 = vcmp.eq.s32.totalorder %v221, %v3624
        %vm3649 = vcmp.eq.s32.totalorder %v222, %v3612
        %vm3650 = vcmp.eq.s32.totalorder %v222, %v3616
        %vm3651 = vcmp.eq.s32.totalorder %v222, %v3620
        %vm3652 = vcmp.eq.s32.totalorder %v222, %v3624
        %vm3653 = vcmp.eq.s32.totalorder %v223, %v3612
        %vm3654 = vcmp.eq.s32.totalorder %v223, %v3616
        %vm3655 = vcmp.eq.s32.totalorder %v223, %v3620
        %vm3656 = vcmp.eq.s32.totalorder %v223, %v3624
        %vm3657 = vcmp.eq.s32.totalorder %v224, %v3612
        %vm3658 = vcmp.eq.s32.totalorder %v224, %v3616
        %vm3659 = vcmp.eq.s32.totalorder %v224, %v3620
        %vm3660 = vcmp.eq.s32.totalorder %v224, %v3624
        %vm3661 = vcmp.eq.s32.totalorder %v225, %v3612
        %vm3662 = vcmp.eq.s32.totalorder %v225, %v3616
        %vm3663 = vcmp.eq.s32.totalorder %v225, %v3620
        %vm3664 = vcmp.eq.s32.totalorder %v225, %v3624
        %vm3665 = vcmp.eq.s32.totalorder %v226, %v3612
        %vm3666 = vcmp.eq.s32.totalorder %v226, %v3616
        %vm3667 = vcmp.eq.s32.totalorder %v226, %v3620
        %vm3668 = vcmp.eq.s32.totalorder %v226, %v3624
        %vm3669 = vcmp.eq.s32.totalorder %v227, %v3612
        %vm3670 = vcmp.eq.s32.totalorder %v227, %v3616
        %vm3671 = vcmp.eq.s32.totalorder %v227, %v3620
        %vm3672 = vcmp.eq.s32.totalorder %v227, %v3624
        %vm3673 = vcmp.eq.s32.totalorder %v228, %v3612
        %vm3674 = vcmp.eq.s32.totalorder %v228, %v3616
        %vm3675 = vcmp.eq.s32.totalorder %v228, %v3620
        %vm3676 = vcmp.eq.s32.totalorder %v228, %v3624
        %vm3677 = vcmp.eq.s32.totalorder %v229, %v3612
        %vm3678 = vcmp.eq.s32.totalorder %v229, %v3616
        %vm3679 = vcmp.eq.s32.totalorder %v229, %v3620
        %vm3680 = vcmp.eq.s32.totalorder %v229, %v3624
        %vm3681 = vcmp.eq.s32.totalorder %v230, %v3612
        %vm3682 = vcmp.eq.s32.totalorder %v230, %v3616
        %vm3683 = vcmp.eq.s32.totalorder %v230, %v3620
        %vm3684 = vcmp.eq.s32.totalorder %v230, %v3624
        %vm3685 = vcmp.eq.s32.totalorder %v231, %v3612
        %vm3686 = vcmp.eq.s32.totalorder %v231, %v3616
        %vm3687 = vcmp.eq.s32.totalorder %v231, %v3620
        %vm3688 = vcmp.eq.s32.totalorder %v231, %v3624
        %vm3689 = vcmp.eq.s32.totalorder %v2605, %v3612
        %vm3690 = vcmp.eq.s32.totalorder %v2605, %v3616
        %vm3691 = vcmp.eq.s32.totalorder %v2605, %v3620
        %vm3692 = vcmp.eq.s32.totalorder %v2605, %v3624
        %vm3693 = vcmp.eq.s32.totalorder %v2606, %v3612
        %vm3694 = vcmp.eq.s32.totalorder %v2606, %v3616
        %vm3695 = vcmp.eq.s32.totalorder %v2606, %v3620
        %vm3696 = vcmp.eq.s32.totalorder %v2606, %v3624
        %vm3697 = vcmp.eq.s32.totalorder %v2607, %v3612
        %vm3698 = vcmp.eq.s32.totalorder %v2607, %v3616
        %vm3699 = vcmp.eq.s32.totalorder %v2607, %v3620
        %vm3700 = vcmp.eq.s32.totalorder %v2607, %v3624
        %vm3701 = vcmp.eq.s32.totalorder %v2608, %v3612
        %vm3702 = vcmp.eq.s32.totalorder %v2608, %v3616
        %vm3703 = vcmp.eq.s32.totalorder %v2608, %v3620
        %vm3704 = vcmp.eq.s32.totalorder %v2608, %v3624
        %vm3705 = vcmp.eq.s32.totalorder %v2609, %v3612
        %vm3706 = vcmp.eq.s32.totalorder %v2609, %v3616
        %vm3707 = vcmp.eq.s32.totalorder %v2609, %v3620
        %vm3708 = vcmp.eq.s32.totalorder %v2609, %v3624
        %vm3709 = vcmp.eq.s32.totalorder %v2610, %v3612
        %vm3710 = vcmp.eq.s32.totalorder %v2610, %v3616
        %vm3711 = vcmp.eq.s32.totalorder %v2610, %v3620
        %vm3712 = vcmp.eq.s32.totalorder %v2610, %v3624
        %vm3713 = vcmp.eq.s32.totalorder %v2611, %v3612
        %vm3714 = vcmp.eq.s32.totalorder %v2611, %v3616
        %vm3715 = vcmp.eq.s32.totalorder %v2611, %v3620
        %vm3716 = vcmp.eq.s32.totalorder %v2611, %v3624
        %vm3717 = vcmp.eq.s32.totalorder %v2612, %v3612
        %vm3718 = vcmp.eq.s32.totalorder %v2612, %v3616
        %vm3719 = vcmp.eq.s32.totalorder %v2612, %v3620
        %vm3720 = vcmp.eq.s32.totalorder %v2612, %v3624
        %vm3721 = vcmp.eq.s32.totalorder %v2613, %v3612
        %vm3722 = vcmp.eq.s32.totalorder %v2613, %v3616
        %vm3723 = vcmp.eq.s32.totalorder %v2613, %v3620
        %vm3724 = vcmp.eq.s32.totalorder %v2613, %v3624
        %vm3725 = vcmp.eq.s32.totalorder %v2614, %v3612
        %vm3726 = vcmp.eq.s32.totalorder %v2614, %v3616
        %vm3727 = vcmp.eq.s32.totalorder %v2614, %v3620
        %vm3728 = vcmp.eq.s32.totalorder %v2614, %v3624
        %vm3729 = vcmp.eq.s32.totalorder %v2615, %v3612
        %vm3730 = vcmp.eq.s32.totalorder %v2615, %v3616
        %vm3731 = vcmp.eq.s32.totalorder %v2615, %v3620
        %vm3732 = vcmp.eq.s32.totalorder %v2615, %v3624
        %vm3733 = vcmp.eq.s32.totalorder %v2616, %v3612
        %vm3734 = vcmp.eq.s32.totalorder %v2616, %v3616
        %vm3735 = vcmp.eq.s32.totalorder %v2616, %v3620
        %vm3736 = vcmp.eq.s32.totalorder %v2616, %v3624
        %vm3737 = vcmp.eq.s32.totalorder %v2617, %v3612
        %vm3738 = vcmp.eq.s32.totalorder %v2617, %v3616
        %vm3739 = vcmp.eq.s32.totalorder %v2617, %v3620
        %vm3740 = vcmp.eq.s32.totalorder %v2617, %v3624
        %vm3741 = vcmp.eq.s32.totalorder %v2618, %v3612
        %vm3742 = vcmp.eq.s32.totalorder %v2618, %v3616
        %vm3743 = vcmp.eq.s32.totalorder %v2618, %v3620
        %vm3744 = vcmp.eq.s32.totalorder %v2618, %v3624
        %vm3745 = vcmp.eq.s32.totalorder %v2619, %v3612
        %vm3746 = vcmp.eq.s32.totalorder %v2619, %v3616
        %vm3747 = vcmp.eq.s32.totalorder %v2619, %v3620
        %vm3748 = vcmp.eq.s32.totalorder %v2619, %v3624
        %vm3749 = vcmp.eq.s32.totalorder %v2620, %v3612
        %vm3750 = vcmp.eq.s32.totalorder %v2620, %v3616
        %vm3751 = vcmp.eq.s32.totalorder %v2620, %v3620
        %vm3752 = vcmp.eq.s32.totalorder %v2620, %v3624
        %v3755 = vlaneseq
        %v3756 = vshrl.u32 %v3755, 7
        %v3757 = vsub.s32 0, %v3756
        %v3758 = vrot.slane %v3589, %v3757
        %v3759 = vlaneseq
        %v3760 = vshrl.u32 %v3759, 7
        %v3761 = vsub.s32 4, %v3760
        %v3762 = vrot.slane %v3589, %v3761
        %v3763 = vlaneseq
        %v3764 = vshrl.u32 %v3763, 7
        %v3765 = vsub.s32 0, %v3764
        %v3766 = vrot.slane %v3590, %v3765
        %v3767 = vlaneseq
        %v3768 = vshrl.u32 %v3767, 7
        %v3769 = vsub.s32 4, %v3768
        %v3770 = vrot.slane %v3590, %v3769
        %v3775 = vlaneseq
        %v3776 = vshrl.u32 %v3775, 7
        %v3777 = vsub.s32 0, %v3776
        %v3778 = vrot.slane %v3758, %v3777
        %v3779 = vlaneseq
        %v3780 = vshrl.u32 %v3779, 7
        %v3781 = vsub.s32 0, %v3780
        %v3782 = vrot.slane %v3762, %v3781
        %v3783 = vlaneseq
        %v3784 = vshrl.u32 %v3783, 7
        %v3785 = vsub.s32 0, %v3784
        %v3786 = vrot.slane %v3766, %v3785
        %v3787 = vlaneseq
        %v3788 = vshrl.u32 %v3787, 7
        %v3789 = vsub.s32 0, %v3788
        %v3790 = vrot.slane %v3770, %v3789
        %v3791 = vsel %vm3625, %v3778, 0.0
        %v3792 = vsel %vm3626, %v3782, 0.0
        %v3793 = vsel %vm3627, %v3786, 0.0
        %v3794 = vsel %vm3628, %v3790, 0.0
        %v3795 = vsel %vm3629, %v3778, 0.0
        %v3796 = vsel %vm3630, %v3782, 0.0
        %v3797 = vsel %vm3631, %v3786, 0.0
        %v3798 = vsel %vm3632, %v3790, 0.0
        %v3799 = vsel %vm3633, %v3778, 0.0
        %v3800 = vsel %vm3634, %v3782, 0.0
        %v3801 = vsel %vm3635, %v3786, 0.0
        %v3802 = vsel %vm3636, %v3790, 0.0
        %v3803 = vsel %vm3637, %v3778, 0.0
        %v3804 = vsel %vm3638, %v3782, 0.0
        %v3805 = vsel %vm3639, %v3786, 0.0
        %v3806 = vsel %vm3640, %v3790, 0.0
        %v3807 = vsel %vm3641, %v3778, 0.0
        %v3808 = vsel %vm3642, %v3782, 0.0
        %v3809 = vsel %vm3643, %v3786, 0.0
        %v3810 = vsel %vm3644, %v3790, 0.0
        %v3811 = vsel %vm3645, %v3778, 0.0
        %v3812 = vsel %vm3646, %v3782, 0.0
        %v3813 = vsel %vm3647, %v3786, 0.0
        %v3814 = vsel %vm3648, %v3790, 0.0
        %v3815 = vsel %vm3649, %v3778, 0.0
        %v3816 = vsel %vm3650, %v3782, 0.0
        %v3817 = vsel %vm3651, %v3786, 0.0
        %v3818 = vsel %vm3652, %v3790, 0.0
        %v3819 = vsel %vm3653, %v3778, 0.0
        %v3820 = vsel %vm3654, %v3782, 0.0
        %v3821 = vsel %vm3655, %v3786, 0.0
        %v3822 = vsel %vm3656, %v3790, 0.0
        %v3823 = vsel %vm3657, %v3778, 0.0
        %v3824 = vsel %vm3658, %v3782, 0.0
        %v3825 = vsel %vm3659, %v3786, 0.0
        %v3826 = vsel %vm3660, %v3790, 0.0
        %v3827 = vsel %vm3661, %v3778, 0.0
        %v3828 = vsel %vm3662, %v3782, 0.0
        %v3829 = vsel %vm3663, %v3786, 0.0
        %v3830 = vsel %vm3664, %v3790, 0.0
        %v3831 = vsel %vm3665, %v3778, 0.0
        %v3832 = vsel %vm3666, %v3782, 0.0
        %v3833 = vsel %vm3667, %v3786, 0.0
        %v3834 = vsel %vm3668, %v3790, 0.0
        %v3835 = vsel %vm3669, %v3778, 0.0
        %v3836 = vsel %vm3670, %v3782, 0.0
        %v3837 = vsel %vm3671, %v3786, 0.0
        %v3838 = vsel %vm3672, %v3790, 0.0
        %v3839 = vsel %vm3673, %v3778, 0.0
        %v3840 = vsel %vm3674, %v3782, 0.0
        %v3841 = vsel %vm3675, %v3786, 0.0
        %v3842 = vsel %vm3676, %v3790, 0.0
        %v3843 = vsel %vm3677, %v3778, 0.0
        %v3844 = vsel %vm3678, %v3782, 0.0
        %v3845 = vsel %vm3679, %v3786, 0.0
        %v3846 = vsel %vm3680, %v3790, 0.0
        %v3847 = vsel %vm3681, %v3778, 0.0
        %v3848 = vsel %vm3682, %v3782, 0.0
        %v3849 = vsel %vm3683, %v3786, 0.0
        %v3850 = vsel %vm3684, %v3790, 0.0
        %v3851 = vsel %vm3685, %v3778, 0.0
        %v3852 = vsel %vm3686, %v3782, 0.0
        %v3853 = vsel %vm3687, %v3786, 0.0
        %v3854 = vsel %vm3688, %v3790, 0.0
        %v3855 = vsel %vm3689, %v3778, 0.0
        %v3856 = vsel %vm3690, %v3782, 0.0
        %v3857 = vsel %vm3691, %v3786, 0.0
        %v3858 = vsel %vm3692, %v3790, 0.0
        %v3859 = vsel %vm3693, %v3778, 0.0
        %v3860 = vsel %vm3694, %v3782, 0.0
        %v3861 = vsel %vm3695, %v3786, 0.0
        %v3862 = vsel %vm3696, %v3790, 0.0
        %v3863 = vsel %vm3697, %v3778, 0.0
        %v3864 = vsel %vm3698, %v3782, 0.0
        %v3865 = vsel %vm3699, %v3786, 0.0
        %v3866 = vsel %vm3700, %v3790, 0.0
        %v3867 = vsel %vm3701, %v3778, 0.0
        %v3868 = vsel %vm3702, %v3782, 0.0
        %v3869 = vsel %vm3703, %v3786, 0.0
        %v3870 = vsel %vm3704, %v3790, 0.0
        %v3871 = vsel %vm3705, %v3778, 0.0
        %v3872 = vsel %vm3706, %v3782, 0.0
        %v3873 = vsel %vm3707, %v3786, 0.0
        %v3874 = vsel %vm3708, %v3790, 0.0
        %v3875 = vsel %vm3709, %v3778, 0.0
        %v3876 = vsel %vm3710, %v3782, 0.0
        %v3877 = vsel %vm3711, %v3786, 0.0
        %v3878 = vsel %vm3712, %v3790, 0.0
        %v3879 = vsel %vm3713, %v3778, 0.0
        %v3880 = vsel %vm3714, %v3782, 0.0
        %v3881 = vsel %vm3715, %v3786, 0.0
        %v3882 = vsel %vm3716, %v3790, 0.0
        %v3883 = vsel %vm3717, %v3778, 0.0
        %v3884 = vsel %vm3718, %v3782, 0.0
        %v3885 = vsel %vm3719, %v3786, 0.0
        %v3886 = vsel %vm3720, %v3790, 0.0
        %v3887 = vsel %vm3721, %v3778, 0.0
        %v3888 = vsel %vm3722, %v3782, 0.0
        %v3889 = vsel %vm3723, %v3786, 0.0
        %v3890 = vsel %vm3724, %v3790, 0.0
        %v3891 = vsel %vm3725, %v3778, 0.0
        %v3892 = vsel %vm3726, %v3782, 0.0
        %v3893 = vsel %vm3727, %v3786, 0.0
        %v3894 = vsel %vm3728, %v3790, 0.0
        %v3895 = vsel %vm3729, %v3778, 0.0
        %v3896 = vsel %vm3730, %v3782, 0.0
        %v3897 = vsel %vm3731, %v3786, 0.0
        %v3898 = vsel %vm3732, %v3790, 0.0
        %v3899 = vsel %vm3733, %v3778, 0.0
        %v3900 = vsel %vm3734, %v3782, 0.0
        %v3901 = vsel %vm3735, %v3786, 0.0
        %v3902 = vsel %vm3736, %v3790, 0.0
        %v3903 = vsel %vm3737, %v3778, 0.0
        %v3904 = vsel %vm3738, %v3782, 0.0
        %v3905 = vsel %vm3739, %v3786, 0.0
        %v3906 = vsel %vm3740, %v3790, 0.0
        %v3907 = vsel %vm3741, %v3778, 0.0
        %v3908 = vsel %vm3742, %v3782, 0.0
        %v3909 = vsel %vm3743, %v3786, 0.0
        %v3910 = vsel %vm3744, %v3790, 0.0
        %v3911 = vsel %vm3745, %v3778, 0.0
        %v3912 = vsel %vm3746, %v3782, 0.0
        %v3913 = vsel %vm3747, %v3786, 0.0
        %v3914 = vsel %vm3748, %v3790, 0.0
        %v3915 = vsel %vm3749, %v3778, 0.0
        %v3916 = vsel %vm3750, %v3782, 0.0
        %v3917 = vsel %vm3751, %v3786, 0.0
        %v3918 = vsel %vm3752, %v3790, 0.0
        %v3919 = vadd.f32 %v3447, %v3791
        %v3920 = vadd.f32 %v3448, %v3792
        %v3921 = vadd.f32 %v3449, %v3793
        %v3922 = vadd.f32 %v3450, %v3794
        %v3923 = vadd.f32 %v3451, %v3795
        %v3924 = vadd.f32 %v3452, %v3796
        %v3925 = vadd.f32 %v3453, %v3797
        %v3926 = vadd.f32 %v3454, %v3798
        %v3927 = vadd.f32 %v3455, %v3799
        %v3928 = vadd.f32 %v3456, %v3800
        %v3929 = vadd.f32 %v3457, %v3801
        %v3930 = vadd.f32 %v3458, %v3802
        %v3931 = vadd.f32 %v3459, %v3803
        %v3932 = vadd.f32 %v3460, %v3804
        %v3933 = vadd.f32 %v3461, %v3805
        %v3934 = vadd.f32 %v3462, %v3806
        %v3935 = vadd.f32 %v3463, %v3807
        %v3936 = vadd.f32 %v3464, %v3808
        %v3937 = vadd.f32 %v3465, %v3809
        %v3938 = vadd.f32 %v3466, %v3810
        %v3939 = vadd.f32 %v3467, %v3811
        %v3940 = vadd.f32 %v3468, %v3812
        %v3941 = vadd.f32 %v3469, %v3813
        %v3942 = vadd.f32 %v3470, %v3814
        %v3943 = vadd.f32 %v3471, %v3815
        %v3944 = vadd.f32 %v3472, %v3816
        %v3945 = vadd.f32 %v3473, %v3817
        %v3946 = vadd.f32 %v3474, %v3818
        %v3947 = vadd.f32 %v3475, %v3819
        %v3948 = vadd.f32 %v3476, %v3820
        %v3949 = vadd.f32 %v3477, %v3821
        %v3950 = vadd.f32 %v3478, %v3822
        %v3951 = vadd.f32 %v3479, %v3823
        %v3952 = vadd.f32 %v3480, %v3824
        %v3953 = vadd.f32 %v3481, %v3825
        %v3954 = vadd.f32 %v3482, %v3826
        %v3955 = vadd.f32 %v3483, %v3827
        %v3956 = vadd.f32 %v3484, %v3828
        %v3957 = vadd.f32 %v3485, %v3829
        %v3958 = vadd.f32 %v3486, %v3830
        %v3959 = vadd.f32 %v3487, %v3831
        %v3960 = vadd.f32 %v3488, %v3832
        %v3961 = vadd.f32 %v3489, %v3833
        %v3962 = vadd.f32 %v3490, %v3834
        %v3963 = vadd.f32 %v3491, %v3835
        %v3964 = vadd.f32 %v3492, %v3836
        %v3965 = vadd.f32 %v3493, %v3837
        %v3966 = vadd.f32 %v3494, %v3838
        %v3967 = vadd.f32 %v3495, %v3839
        %v3968 = vadd.f32 %v3496, %v3840
        %v3969 = vadd.f32 %v3497, %v3841
        %v3970 = vadd.f32 %v3498, %v3842
        %v3971 = vadd.f32 %v3499, %v3843
        %v3972 = vadd.f32 %v3500, %v3844
        %v3973 = vadd.f32 %v3501, %v3845
        %v3974 = vadd.f32 %v3502, %v3846
        %v3975 = vadd.f32 %v3503, %v3847
        %v3976 = vadd.f32 %v3504, %v3848
        %v3977 = vadd.f32 %v3505, %v3849
        %v3978 = vadd.f32 %v3506, %v3850
        %v3979 = vadd.f32 %v3507, %v3851
        %v3980 = vadd.f32 %v3508, %v3852
        %v3981 = vadd.f32 %v3509, %v3853
        %v3982 = vadd.f32 %v3510, %v3854
        %v3983 = vadd.f32 %v3511, %v3855
        %v3984 = vadd.f32 %v3512, %v3856
        %v3985 = vadd.f32 %v3513, %v3857
        %v3986 = vadd.f32 %v3514, %v3858
        %v3987 = vadd.f32 %v3515, %v3859
        %v3988 = vadd.f32 %v3516, %v3860
        %v3989 = vadd.f32 %v3517, %v3861
        %v3990 = vadd.f32 %v3518, %v3862
        %v3991 = vadd.f32 %v3519, %v3863
        %v3992 = vadd.f32 %v3520, %v3864
        %v3993 = vadd.f32 %v3521, %v3865
        %v3994 = vadd.f32 %v3522, %v3866
        %v3995 = vadd.f32 %v3523, %v3867
        %v3996 = vadd.f32 %v3524, %v3868
        %v3997 = vadd.f32 %v3525, %v3869
        %v3998 = vadd.f32 %v3526, %v3870
        %v3999 = vadd.f32 %v3527, %v3871
        %v4000 = vadd.f32 %v3528, %v3872
        %v4001 = vadd.f32 %v3529, %v3873
        %v4002 = vadd.f32 %v3530, %v3874
        %v4003 = vadd.f32 %v3531, %v3875
        %v4004 = vadd.f32 %v3532, %v3876
        %v4005 = vadd.f32 %v3533, %v3877
        %v4006 = vadd.f32 %v3534, %v3878
        %v4007 = vadd.f32 %v3535, %v3879
        %v4008 = vadd.f32 %v3536, %v3880
        %v4009 = vadd.f32 %v3537, %v3881
        %v4010 = vadd.f32 %v3538, %v3882
        %v4011 = vadd.f32 %v3539, %v3883
        %v4012 = vadd.f32 %v3540, %v3884
        %v4013 = vadd.f32 %v3541, %v3885
        %v4014 = vadd.f32 %v3542, %v3886
        %v4015 = vadd.f32 %v3543, %v3887
        %v4016 = vadd.f32 %v3544, %v3888
        %v4017 = vadd.f32 %v3545, %v3889
        %v4018 = vadd.f32 %v3546, %v3890
        %v4019 = vadd.f32 %v3547, %v3891
        %v4020 = vadd.f32 %v3548, %v3892
        %v4021 = vadd.f32 %v3549, %v3893
        %v4022 = vadd.f32 %v3550, %v3894
        %v4023 = vadd.f32 %v3551, %v3895
        %v4024 = vadd.f32 %v3552, %v3896
        %v4025 = vadd.f32 %v3553, %v3897
        %v4026 = vadd.f32 %v3554, %v3898
        %v4027 = vadd.f32 %v3555, %v3899
        %v4028 = vadd.f32 %v3556, %v3900
        %v4029 = vadd.f32 %v3557, %v3901
        %v4030 = vadd.f32 %v3558, %v3902
        %v4031 = vadd.f32 %v3559, %v3903
        %v4032 = vadd.f32 %v3560, %v3904
        %v4033 = vadd.f32 %v3561, %v3905
        %v4034 = vadd.f32 %v3562, %v3906
        %v4035 = vadd.f32 %v3563, %v3907
        %v4036 = vadd.f32 %v3564, %v3908
        %v4037 = vadd.f32 %v3565, %v3909
        %v4038 = vadd.f32 %v3566, %v3910
        %v4039 = vadd.f32 %v3567, %v3911
        %v4040 = vadd.f32 %v3568, %v3912
        %v4041 = vadd.f32 %v3569, %v3913
        %v4042 = vadd.f32 %v3570, %v3914
        %v4043 = vadd.f32 %v3571, %v3915
        %v4044 = vadd.f32 %v3572, %v3916
        %v4045 = vadd.f32 %v3573, %v3917
        %v4046 = vadd.f32 %v3574, %v3918
        %v4047 = vmul.f32 %v3581, %v3108
        %v4048 = vmul.f32 %v3582, %v3110
        %v4049 = vadd.s32 %v3587, %v3116
        %v4050 = vadd.s32 %v3588, %v3118
        %v4051 = vlaneseq
        %v4052 = vshrl.u32 %v4051, 7
        %v4053 = vsub.s32 0, %v4052
        %v4054 = vrot.slane %v4049, %v4053
        %v4055 = vlaneseq
        %v4056 = vshrl.u32 %v4055, 7
        %v4057 = vsub.s32 4, %v4056
        %v4058 = vrot.slane %v4049, %v4057
        %v4059 = vlaneseq
        %v4060 = vshrl.u32 %v4059, 7
        %v4061 = vsub.s32 0, %v4060
        %v4062 = vrot.slane %v4050, %v4061
        %v4063 = vlaneseq
        %v4064 = vshrl.u32 %v4063, 7
        %v4065 = vsub.s32 4, %v4064
        %v4066 = vrot.slane %v4050, %v4065
        %v4067 = vlaneseq
        %v4068 = vshrl.u32 %v4067, 7
        %v4069 = vsub.s32 0, %v4068
        %v4070 = vrot.slane %v4054, %v4069
        %v4071 = vlaneseq
        %v4072 = vshrl.u32 %v4071, 7
        %v4073 = vsub.s32 0, %v4072
        %v4074 = vrot.slane %v4058, %v4073
        %v4075 = vlaneseq
        %v4076 = vshrl.u32 %v4075, 7
        %v4077 = vsub.s32 0, %v4076
        %v4078 = vrot.slane %v4062, %v4077
        %v4079 = vlaneseq
        %v4080 = vshrl.u32 %v4079, 7
        %v4081 = vsub.s32 0, %v4080
        %v4082 = vrot.slane %v4066, %v4081
        %vm4083 = vcmp.eq.s32.totalorder %v216, %v4070
        %vm4084 = vcmp.eq.s32.totalorder %v216, %v4074
        %vm4085 = vcmp.eq.s32.totalorder %v216, %v4078
        %vm4086 = vcmp.eq.s32.totalorder %v216, %v4082
        %vm4087 = vcmp.eq.s32.totalorder %v217, %v4070
        %vm4088 = vcmp.eq.s32.totalorder %v217, %v4074
        %vm4089 = vcmp.eq.s32.totalorder %v217, %v4078
        %vm4090 = vcmp.eq.s32.totalorder %v217, %v4082
        %vm4091 = vcmp.eq.s32.totalorder %v218, %v4070
        %vm4092 = vcmp.eq.s32.totalorder %v218, %v4074
        %vm4093 = vcmp.eq.s32.totalorder %v218, %v4078
        %vm4094 = vcmp.eq.s32.totalorder %v218, %v4082
        %vm4095 = vcmp.eq.s32.totalorder %v219, %v4070
        %vm4096 = vcmp.eq.s32.totalorder %v219, %v4074
        %vm4097 = vcmp.eq.s32.totalorder %v219, %v4078
        %vm4098 = vcmp.eq.s32.totalorder %v219, %v4082
        %vm4099 = vcmp.eq.s32.totalorder %v220, %v4070
        %vm4100 = vcmp.eq.s32.totalorder %v220, %v4074
        %vm4101 = vcmp.eq.s32.totalorder %v220, %v4078
        %vm4102 = vcmp.eq.s32.totalorder %v220, %v4082
        %vm4103 = vcmp.eq.s32.totalorder %v221, %v4070
        %vm4104 = vcmp.eq.s32.totalorder %v221, %v4074
        %vm4105 = vcmp.eq.s32.totalorder %v221, %v4078
        %vm4106 = vcmp.eq.s32.totalorder %v221, %v4082
        %vm4107 = vcmp.eq.s32.totalorder %v222, %v4070
        %vm4108 = vcmp.eq.s32.totalorder %v222, %v4074
        %vm4109 = vcmp.eq.s32.totalorder %v222, %v4078
        %vm4110 = vcmp.eq.s32.totalorder %v222, %v4082
        %vm4111 = vcmp.eq.s32.totalorder %v223, %v4070
        %vm4112 = vcmp.eq.s32.totalorder %v223, %v4074
        %vm4113 = vcmp.eq.s32.totalorder %v223, %v4078
        %vm4114 = vcmp.eq.s32.totalorder %v223, %v4082
        %vm4115 = vcmp.eq.s32.totalorder %v224, %v4070
        %vm4116 = vcmp.eq.s32.totalorder %v224, %v4074
        %vm4117 = vcmp.eq.s32.totalorder %v224, %v4078
        %vm4118 = vcmp.eq.s32.totalorder %v224, %v4082
        %vm4119 = vcmp.eq.s32.totalorder %v225, %v4070
        %vm4120 = vcmp.eq.s32.totalorder %v225, %v4074
        %vm4121 = vcmp.eq.s32.totalorder %v225, %v4078
        %vm4122 = vcmp.eq.s32.totalorder %v225, %v4082
        %vm4123 = vcmp.eq.s32.totalorder %v226, %v4070
        %vm4124 = vcmp.eq.s32.totalorder %v226, %v4074
        %vm4125 = vcmp.eq.s32.totalorder %v226, %v4078
        %vm4126 = vcmp.eq.s32.totalorder %v226, %v4082
        %vm4127 = vcmp.eq.s32.totalorder %v227, %v4070
        %vm4128 = vcmp.eq.s32.totalorder %v227, %v4074
        %vm4129 = vcmp.eq.s32.totalorder %v227, %v4078
        %vm4130 = vcmp.eq.s32.totalorder %v227, %v4082
        %vm4131 = vcmp.eq.s32.totalorder %v228, %v4070
        %vm4132 = vcmp.eq.s32.totalorder %v228, %v4074
        %vm4133 = vcmp.eq.s32.totalorder %v228, %v4078
        %vm4134 = vcmp.eq.s32.totalorder %v228, %v4082
        %vm4135 = vcmp.eq.s32.totalorder %v229, %v4070
        %vm4136 = vcmp.eq.s32.totalorder %v229, %v4074
        %vm4137 = vcmp.eq.s32.totalorder %v229, %v4078
        %vm4138 = vcmp.eq.s32.totalorder %v229, %v4082
        %vm4139 = vcmp.eq.s32.totalorder %v230, %v4070
        %vm4140 = vcmp.eq.s32.totalorder %v230, %v4074
        %vm4141 = vcmp.eq.s32.totalorder %v230, %v4078
        %vm4142 = vcmp.eq.s32.totalorder %v230, %v4082
        %vm4143 = vcmp.eq.s32.totalorder %v231, %v4070
        %vm4144 = vcmp.eq.s32.totalorder %v231, %v4074
        %vm4145 = vcmp.eq.s32.totalorder %v231, %v4078
        %vm4146 = vcmp.eq.s32.totalorder %v231, %v4082
        %vm4147 = vcmp.eq.s32.totalorder %v2605, %v4070
        %vm4148 = vcmp.eq.s32.totalorder %v2605, %v4074
        %vm4149 = vcmp.eq.s32.totalorder %v2605, %v4078
        %vm4150 = vcmp.eq.s32.totalorder %v2605, %v4082
        %vm4151 = vcmp.eq.s32.totalorder %v2606, %v4070
        %vm4152 = vcmp.eq.s32.totalorder %v2606, %v4074
        %vm4153 = vcmp.eq.s32.totalorder %v2606, %v4078
        %vm4154 = vcmp.eq.s32.totalorder %v2606, %v4082
        %vm4155 = vcmp.eq.s32.totalorder %v2607, %v4070
        %vm4156 = vcmp.eq.s32.totalorder %v2607, %v4074
        %vm4157 = vcmp.eq.s32.totalorder %v2607, %v4078
        %vm4158 = vcmp.eq.s32.totalorder %v2607, %v4082
        %vm4159 = vcmp.eq.s32.totalorder %v2608, %v4070
        %vm4160 = vcmp.eq.s32.totalorder %v2608, %v4074
        %vm4161 = vcmp.eq.s32.totalorder %v2608, %v4078
        %vm4162 = vcmp.eq.s32.totalorder %v2608, %v4082
        %vm4163 = vcmp.eq.s32.totalorder %v2609, %v4070
        %vm4164 = vcmp.eq.s32.totalorder %v2609, %v4074
        %vm4165 = vcmp.eq.s32.totalorder %v2609, %v4078
        %vm4166 = vcmp.eq.s32.totalorder %v2609, %v4082
        %vm4167 = vcmp.eq.s32.totalorder %v2610, %v4070
        %vm4168 = vcmp.eq.s32.totalorder %v2610, %v4074
        %vm4169 = vcmp.eq.s32.totalorder %v2610, %v4078
        %vm4170 = vcmp.eq.s32.totalorder %v2610, %v4082
        %vm4171 = vcmp.eq.s32.totalorder %v2611, %v4070
        %vm4172 = vcmp.eq.s32.totalorder %v2611, %v4074
        %vm4173 = vcmp.eq.s32.totalorder %v2611, %v4078
        %vm4174 = vcmp.eq.s32.totalorder %v2611, %v4082
        %vm4175 = vcmp.eq.s32.totalorder %v2612, %v4070
        %vm4176 = vcmp.eq.s32.totalorder %v2612, %v4074
        %vm4177 = vcmp.eq.s32.totalorder %v2612, %v4078
        %vm4178 = vcmp.eq.s32.totalorder %v2612, %v4082
        %vm4179 = vcmp.eq.s32.totalorder %v2613, %v4070
        %vm4180 = vcmp.eq.s32.totalorder %v2613, %v4074
        %vm4181 = vcmp.eq.s32.totalorder %v2613, %v4078
        %vm4182 = vcmp.eq.s32.totalorder %v2613, %v4082
        %vm4183 = vcmp.eq.s32.totalorder %v2614, %v4070
        %vm4184 = vcmp.eq.s32.totalorder %v2614, %v4074
        %vm4185 = vcmp.eq.s32.totalorder %v2614, %v4078
        %vm4186 = vcmp.eq.s32.totalorder %v2614, %v4082
        %vm4187 = vcmp.eq.s32.totalorder %v2615, %v4070
        %vm4188 = vcmp.eq.s32.totalorder %v2615, %v4074
        %vm4189 = vcmp.eq.s32.totalorder %v2615, %v4078
        %vm4190 = vcmp.eq.s32.totalorder %v2615, %v4082
        %vm4191 = vcmp.eq.s32.totalorder %v2616, %v4070
        %vm4192 = vcmp.eq.s32.totalorder %v2616, %v4074
        %vm4193 = vcmp.eq.s32.totalorder %v2616, %v4078
        %vm4194 = vcmp.eq.s32.totalorder %v2616, %v4082
        %vm4195 = vcmp.eq.s32.totalorder %v2617, %v4070
        %vm4196 = vcmp.eq.s32.totalorder %v2617, %v4074
        %vm4197 = vcmp.eq.s32.totalorder %v2617, %v4078
        %vm4198 = vcmp.eq.s32.totalorder %v2617, %v4082
        %vm4199 = vcmp.eq.s32.totalorder %v2618, %v4070
        %vm4200 = vcmp.eq.s32.totalorder %v2618, %v4074
        %vm4201 = vcmp.eq.s32.totalorder %v2618, %v4078
        %vm4202 = vcmp.eq.s32.totalorder %v2618, %v4082
        %vm4203 = vcmp.eq.s32.totalorder %v2619, %v4070
        %vm4204 = vcmp.eq.s32.totalorder %v2619, %v4074
        %vm4205 = vcmp.eq.s32.totalorder %v2619, %v4078
        %vm4206 = vcmp.eq.s32.totalorder %v2619, %v4082
        %vm4207 = vcmp.eq.s32.totalorder %v2620, %v4070
        %vm4208 = vcmp.eq.s32.totalorder %v2620, %v4074
        %vm4209 = vcmp.eq.s32.totalorder %v2620, %v4078
        %vm4210 = vcmp.eq.s32.totalorder %v2620, %v4082
        %v4213 = vlaneseq
        %v4214 = vshrl.u32 %v4213, 7
        %v4215 = vsub.s32 0, %v4214
        %v4216 = vrot.slane %v4047, %v4215
        %v4217 = vlaneseq
        %v4218 = vshrl.u32 %v4217, 7
        %v4219 = vsub.s32 4, %v4218
        %v4220 = vrot.slane %v4047, %v4219
        %v4221 = vlaneseq
        %v4222 = vshrl.u32 %v4221, 7
        %v4223 = vsub.s32 0, %v4222
        %v4224 = vrot.slane %v4048, %v4223
        %v4225 = vlaneseq
        %v4226 = vshrl.u32 %v4225, 7
        %v4227 = vsub.s32 4, %v4226
        %v4228 = vrot.slane %v4048, %v4227
        %v4233 = vlaneseq
        %v4234 = vshrl.u32 %v4233, 7
        %v4235 = vsub.s32 0, %v4234
        %v4236 = vrot.slane %v4216, %v4235
        %v4237 = vlaneseq
        %v4238 = vshrl.u32 %v4237, 7
        %v4239 = vsub.s32 0, %v4238
        %v4240 = vrot.slane %v4220, %v4239
        %v4241 = vlaneseq
        %v4242 = vshrl.u32 %v4241, 7
        %v4243 = vsub.s32 0, %v4242
        %v4244 = vrot.slane %v4224, %v4243
        %v4245 = vlaneseq
        %v4246 = vshrl.u32 %v4245, 7
        %v4247 = vsub.s32 0, %v4246
        %v4248 = vrot.slane %v4228, %v4247
        %v4249 = vsel %vm4083, %v4236, 0.0
        %v4250 = vsel %vm4084, %v4240, 0.0
        %v4251 = vsel %vm4085, %v4244, 0.0
        %v4252 = vsel %vm4086, %v4248, 0.0
        %v4253 = vsel %vm4087, %v4236, 0.0
        %v4254 = vsel %vm4088, %v4240, 0.0
        %v4255 = vsel %vm4089, %v4244, 0.0
        %v4256 = vsel %vm4090, %v4248, 0.0
        %v4257 = vsel %vm4091, %v4236, 0.0
        %v4258 = vsel %vm4092, %v4240, 0.0
        %v4259 = vsel %vm4093, %v4244, 0.0
        %v4260 = vsel %vm4094, %v4248, 0.0
        %v4261 = vsel %vm4095, %v4236, 0.0
        %v4262 = vsel %vm4096, %v4240, 0.0
        %v4263 = vsel %vm4097, %v4244, 0.0
        %v4264 = vsel %vm4098, %v4248, 0.0
        %v4265 = vsel %vm4099, %v4236, 0.0
        %v4266 = vsel %vm4100, %v4240, 0.0
        %v4267 = vsel %vm4101, %v4244, 0.0
        %v4268 = vsel %vm4102, %v4248, 0.0
        %v4269 = vsel %vm4103, %v4236, 0.0
        %v4270 = vsel %vm4104, %v4240, 0.0
        %v4271 = vsel %vm4105, %v4244, 0.0
        %v4272 = vsel %vm4106, %v4248, 0.0
        %v4273 = vsel %vm4107, %v4236, 0.0
        %v4274 = vsel %vm4108, %v4240, 0.0
        %v4275 = vsel %vm4109, %v4244, 0.0
        %v4276 = vsel %vm4110, %v4248, 0.0
        %v4277 = vsel %vm4111, %v4236, 0.0
        %v4278 = vsel %vm4112, %v4240, 0.0
        %v4279 = vsel %vm4113, %v4244, 0.0
        %v4280 = vsel %vm4114, %v4248, 0.0
        %v4281 = vsel %vm4115, %v4236, 0.0
        %v4282 = vsel %vm4116, %v4240, 0.0
        %v4283 = vsel %vm4117, %v4244, 0.0
        %v4284 = vsel %vm4118, %v4248, 0.0
        %v4285 = vsel %vm4119, %v4236, 0.0
        %v4286 = vsel %vm4120, %v4240, 0.0
        %v4287 = vsel %vm4121, %v4244, 0.0
        %v4288 = vsel %vm4122, %v4248, 0.0
        %v4289 = vsel %vm4123, %v4236, 0.0
        %v4290 = vsel %vm4124, %v4240, 0.0
        %v4291 = vsel %vm4125, %v4244, 0.0
        %v4292 = vsel %vm4126, %v4248, 0.0
        %v4293 = vsel %vm4127, %v4236, 0.0
        %v4294 = vsel %vm4128, %v4240, 0.0
        %v4295 = vsel %vm4129, %v4244, 0.0
        %v4296 = vsel %vm4130, %v4248, 0.0
        %v4297 = vsel %vm4131, %v4236, 0.0
        %v4298 = vsel %vm4132, %v4240, 0.0
        %v4299 = vsel %vm4133, %v4244, 0.0
        %v4300 = vsel %vm4134, %v4248, 0.0
        %v4301 = vsel %vm4135, %v4236, 0.0
        %v4302 = vsel %vm4136, %v4240, 0.0
        %v4303 = vsel %vm4137, %v4244, 0.0
        %v4304 = vsel %vm4138, %v4248, 0.0
        %v4305 = vsel %vm4139, %v4236, 0.0
        %v4306 = vsel %vm4140, %v4240, 0.0
        %v4307 = vsel %vm4141, %v4244, 0.0
        %v4308 = vsel %vm4142, %v4248, 0.0
        %v4309 = vsel %vm4143, %v4236, 0.0
        %v4310 = vsel %vm4144, %v4240, 0.0
        %v4311 = vsel %vm4145, %v4244, 0.0
        %v4312 = vsel %vm4146, %v4248, 0.0
        %v4313 = vsel %vm4147, %v4236, 0.0
        %v4314 = vsel %vm4148, %v4240, 0.0
        %v4315 = vsel %vm4149, %v4244, 0.0
        %v4316 = vsel %vm4150, %v4248, 0.0
        %v4317 = vsel %vm4151, %v4236, 0.0
        %v4318 = vsel %vm4152, %v4240, 0.0
        %v4319 = vsel %vm4153, %v4244, 0.0
        %v4320 = vsel %vm4154, %v4248, 0.0
        %v4321 = vsel %vm4155, %v4236, 0.0
        %v4322 = vsel %vm4156, %v4240, 0.0
        %v4323 = vsel %vm4157, %v4244, 0.0
        %v4324 = vsel %vm4158, %v4248, 0.0
        %v4325 = vsel %vm4159, %v4236, 0.0
        %v4326 = vsel %vm4160, %v4240, 0.0
        %v4327 = vsel %vm4161, %v4244, 0.0
        %v4328 = vsel %vm4162, %v4248, 0.0
        %v4329 = vsel %vm4163, %v4236, 0.0
        %v4330 = vsel %vm4164, %v4240, 0.0
        %v4331 = vsel %vm4165, %v4244, 0.0
        %v4332 = vsel %vm4166, %v4248, 0.0
        %v4333 = vsel %vm4167, %v4236, 0.0
        %v4334 = vsel %vm4168, %v4240, 0.0
        %v4335 = vsel %vm4169, %v4244, 0.0
        %v4336 = vsel %vm4170, %v4248, 0.0
        %v4337 = vsel %vm4171, %v4236, 0.0
        %v4338 = vsel %vm4172, %v4240, 0.0
        %v4339 = vsel %vm4173, %v4244, 0.0
        %v4340 = vsel %vm4174, %v4248, 0.0
        %v4341 = vsel %vm4175, %v4236, 0.0
        %v4342 = vsel %vm4176, %v4240, 0.0
        %v4343 = vsel %vm4177, %v4244, 0.0
        %v4344 = vsel %vm4178, %v4248, 0.0
        %v4345 = vsel %vm4179, %v4236, 0.0
        %v4346 = vsel %vm4180, %v4240, 0.0
        %v4347 = vsel %vm4181, %v4244, 0.0
        %v4348 = vsel %vm4182, %v4248, 0.0
        %v4349 = vsel %vm4183, %v4236, 0.0
        %v4350 = vsel %vm4184, %v4240, 0.0
        %v4351 = vsel %vm4185, %v4244, 0.0
        %v4352 = vsel %vm4186, %v4248, 0.0
        %v4353 = vsel %vm4187, %v4236, 0.0
        %v4354 = vsel %vm4188, %v4240, 0.0
        %v4355 = vsel %vm4189, %v4244, 0.0
        %v4356 = vsel %vm4190, %v4248, 0.0
        %v4357 = vsel %vm4191, %v4236, 0.0
        %v4358 = vsel %vm4192, %v4240, 0.0
        %v4359 = vsel %vm4193, %v4244, 0.0
        %v4360 = vsel %vm4194, %v4248, 0.0
        %v4361 = vsel %vm4195, %v4236, 0.0
        %v4362 = vsel %vm4196, %v4240, 0.0
        %v4363 = vsel %vm4197, %v4244, 0.0
        %v4364 = vsel %vm4198, %v4248, 0.0
        %v4365 = vsel %vm4199, %v4236, 0.0
        %v4366 = vsel %vm4200, %v4240, 0.0
        %v4367 = vsel %vm4201, %v4244, 0.0
        %v4368 = vsel %vm4202, %v4248, 0.0
        %v4369 = vsel %vm4203, %v4236, 0.0
        %v4370 = vsel %vm4204, %v4240, 0.0
        %v4371 = vsel %vm4205, %v4244, 0.0
        %v4372 = vsel %vm4206, %v4248, 0.0
        %v4373 = vsel %vm4207, %v4236, 0.0
        %v4374 = vsel %vm4208, %v4240, 0.0
        %v4375 = vsel %vm4209, %v4244, 0.0
        %v4376 = vsel %vm4210, %v4248, 0.0
        %v4377 = vadd.f32 %v3919, %v4249
        %v4378 = vadd.f32 %v3920, %v4250
        %v4379 = vadd.f32 %v3921, %v4251
        %v4380 = vadd.f32 %v3922, %v4252
        %v4381 = vadd.f32 %v3923, %v4253
        %v4382 = vadd.f32 %v3924, %v4254
        %v4383 = vadd.f32 %v3925, %v4255
        %v4384 = vadd.f32 %v3926, %v4256
        %v4385 = vadd.f32 %v3927, %v4257
        %v4386 = vadd.f32 %v3928, %v4258
        %v4387 = vadd.f32 %v3929, %v4259
        %v4388 = vadd.f32 %v3930, %v4260
        %v4389 = vadd.f32 %v3931, %v4261
        %v4390 = vadd.f32 %v3932, %v4262
        %v4391 = vadd.f32 %v3933, %v4263
        %v4392 = vadd.f32 %v3934, %v4264
        %v4393 = vadd.f32 %v3935, %v4265
        %v4394 = vadd.f32 %v3936, %v4266
        %v4395 = vadd.f32 %v3937, %v4267
        %v4396 = vadd.f32 %v3938, %v4268
        %v4397 = vadd.f32 %v3939, %v4269
        %v4398 = vadd.f32 %v3940, %v4270
        %v4399 = vadd.f32 %v3941, %v4271
        %v4400 = vadd.f32 %v3942, %v4272
        %v4401 = vadd.f32 %v3943, %v4273
        %v4402 = vadd.f32 %v3944, %v4274
        %v4403 = vadd.f32 %v3945, %v4275
        %v4404 = vadd.f32 %v3946, %v4276
        %v4405 = vadd.f32 %v3947, %v4277
        %v4406 = vadd.f32 %v3948, %v4278
        %v4407 = vadd.f32 %v3949, %v4279
        %v4408 = vadd.f32 %v3950, %v4280
        %v4409 = vadd.f32 %v3951, %v4281
        %v4410 = vadd.f32 %v3952, %v4282
        %v4411 = vadd.f32 %v3953, %v4283
        %v4412 = vadd.f32 %v3954, %v4284
        %v4413 = vadd.f32 %v3955, %v4285
        %v4414 = vadd.f32 %v3956, %v4286
        %v4415 = vadd.f32 %v3957, %v4287
        %v4416 = vadd.f32 %v3958, %v4288
        %v4417 = vadd.f32 %v3959, %v4289
        %v4418 = vadd.f32 %v3960, %v4290
        %v4419 = vadd.f32 %v3961, %v4291
        %v4420 = vadd.f32 %v3962, %v4292
        %v4421 = vadd.f32 %v3963, %v4293
        %v4422 = vadd.f32 %v3964, %v4294
        %v4423 = vadd.f32 %v3965, %v4295
        %v4424 = vadd.f32 %v3966, %v4296
        %v4425 = vadd.f32 %v3967, %v4297
        %v4426 = vadd.f32 %v3968, %v4298
        %v4427 = vadd.f32 %v3969, %v4299
        %v4428 = vadd.f32 %v3970, %v4300
        %v4429 = vadd.f32 %v3971, %v4301
        %v4430 = vadd.f32 %v3972, %v4302
        %v4431 = vadd.f32 %v3973, %v4303
        %v4432 = vadd.f32 %v3974, %v4304
        %v4433 = vadd.f32 %v3975, %v4305
        %v4434 = vadd.f32 %v3976, %v4306
        %v4435 = vadd.f32 %v3977, %v4307
        %v4436 = vadd.f32 %v3978, %v4308
        %v4437 = vadd.f32 %v3979, %v4309
        %v4438 = vadd.f32 %v3980, %v4310
        %v4439 = vadd.f32 %v3981, %v4311
        %v4440 = vadd.f32 %v3982, %v4312
        %v4441 = vadd.f32 %v3983, %v4313
        %v4442 = vadd.f32 %v3984, %v4314
        %v4443 = vadd.f32 %v3985, %v4315
        %v4444 = vadd.f32 %v3986, %v4316
        %v4445 = vadd.f32 %v3987, %v4317
        %v4446 = vadd.f32 %v3988, %v4318
        %v4447 = vadd.f32 %v3989, %v4319
        %v4448 = vadd.f32 %v3990, %v4320
        %v4449 = vadd.f32 %v3991, %v4321
        %v4450 = vadd.f32 %v3992, %v4322
        %v4451 = vadd.f32 %v3993, %v4323
        %v4452 = vadd.f32 %v3994, %v4324
        %v4453 = vadd.f32 %v3995, %v4325
        %v4454 = vadd.f32 %v3996, %v4326
        %v4455 = vadd.f32 %v3997, %v4327
        %v4456 = vadd.f32 %v3998, %v4328
        %v4457 = vadd.f32 %v3999, %v4329
        %v4458 = vadd.f32 %v4000, %v4330
        %v4459 = vadd.f32 %v4001, %v4331
        %v4460 = vadd.f32 %v4002, %v4332
        %v4461 = vadd.f32 %v4003, %v4333
        %v4462 = vadd.f32 %v4004, %v4334
        %v4463 = vadd.f32 %v4005, %v4335
        %v4464 = vadd.f32 %v4006, %v4336
        %v4465 = vadd.f32 %v4007, %v4337
        %v4466 = vadd.f32 %v4008, %v4338
        %v4467 = vadd.f32 %v4009, %v4339
        %v4468 = vadd.f32 %v4010, %v4340
        %v4469 = vadd.f32 %v4011, %v4341
        %v4470 = vadd.f32 %v4012, %v4342
        %v4471 = vadd.f32 %v4013, %v4343
        %v4472 = vadd.f32 %v4014, %v4344
        %v4473 = vadd.f32 %v4015, %v4345
        %v4474 = vadd.f32 %v4016, %v4346
        %v4475 = vadd.f32 %v4017, %v4347
        %v4476 = vadd.f32 %v4018, %v4348
        %v4477 = vadd.f32 %v4019, %v4349
        %v4478 = vadd.f32 %v4020, %v4350
        %v4479 = vadd.f32 %v4021, %v4351
        %v4480 = vadd.f32 %v4022, %v4352
        %v4481 = vadd.f32 %v4023, %v4353
        %v4482 = vadd.f32 %v4024, %v4354
        %v4483 = vadd.f32 %v4025, %v4355
        %v4484 = vadd.f32 %v4026, %v4356
        %v4485 = vadd.f32 %v4027, %v4357
        %v4486 = vadd.f32 %v4028, %v4358
        %v4487 = vadd.f32 %v4029, %v4359
        %v4488 = vadd.f32 %v4030, %v4360
        %v4489 = vadd.f32 %v4031, %v4361
        %v4490 = vadd.f32 %v4032, %v4362
        %v4491 = vadd.f32 %v4033, %v4363
        %v4492 = vadd.f32 %v4034, %v4364
        %v4493 = vadd.f32 %v4035, %v4365
        %v4494 = vadd.f32 %v4036, %v4366
        %v4495 = vadd.f32 %v4037, %v4367
        %v4496 = vadd.f32 %v4038, %v4368
        %v4497 = vadd.f32 %v4039, %v4369
        %v4498 = vadd.f32 %v4040, %v4370
        %v4499 = vadd.f32 %v4041, %v4371
        %v4500 = vadd.f32 %v4042, %v4372
        %v4501 = vadd.f32 %v4043, %v4373
        %v4502 = vadd.f32 %v4044, %v4374
        %v4503 = vadd.f32 %v4045, %v4375
        %v4504 = vadd.f32 %v4046, %v4376
        %v4505 = vmul.f32 %v2573, %v2624
        %v4506 = vmul.f32 %v2574, %v2626
        %v4507 = vadd.s32 %v2594, %v2632
        %v4508 = vadd.s32 %v2596, %v2634
        %v4509 = vmul.f32 %v4505, %v2638
        %v4510 = vmul.f32 %v4506, %v2640
        %v4511 = vadd.s32 %v4507, %v2646
        %v4512 = vadd.s32 %v4508, %v2648
        %v4513 = vlaneseq
        %v4514 = vshrl.u32 %v4513, 7
        %v4515 = vsub.s32 0, %v4514
        %v4516 = vrot.slane %v4511, %v4515
        %v4517 = vlaneseq
        %v4518 = vshrl.u32 %v4517, 7
        %v4519 = vsub.s32 4, %v4518
        %v4520 = vrot.slane %v4511, %v4519
        %v4521 = vlaneseq
        %v4522 = vshrl.u32 %v4521, 7
        %v4523 = vsub.s32 0, %v4522
        %v4524 = vrot.slane %v4512, %v4523
        %v4525 = vlaneseq
        %v4526 = vshrl.u32 %v4525, 7
        %v4527 = vsub.s32 4, %v4526
        %v4528 = vrot.slane %v4512, %v4527
        %v4529 = vlaneseq
        %v4530 = vshrl.u32 %v4529, 7
        %v4531 = vsub.s32 0, %v4530
        %v4532 = vrot.slane %v4516, %v4531
        %v4533 = vlaneseq
        %v4534 = vshrl.u32 %v4533, 7
        %v4535 = vsub.s32 0, %v4534
        %v4536 = vrot.slane %v4520, %v4535
        %v4537 = vlaneseq
        %v4538 = vshrl.u32 %v4537, 7
        %v4539 = vsub.s32 0, %v4538
        %v4540 = vrot.slane %v4524, %v4539
        %v4541 = vlaneseq
        %v4542 = vshrl.u32 %v4541, 7
        %v4543 = vsub.s32 0, %v4542
        %v4544 = vrot.slane %v4528, %v4543
        %vm4545 = vcmp.eq.s32.totalorder %v216, %v4532
        %vm4546 = vcmp.eq.s32.totalorder %v216, %v4536
        %vm4547 = vcmp.eq.s32.totalorder %v216, %v4540
        %vm4548 = vcmp.eq.s32.totalorder %v216, %v4544
        %vm4549 = vcmp.eq.s32.totalorder %v217, %v4532
        %vm4550 = vcmp.eq.s32.totalorder %v217, %v4536
        %vm4551 = vcmp.eq.s32.totalorder %v217, %v4540
        %vm4552 = vcmp.eq.s32.totalorder %v217, %v4544
        %vm4553 = vcmp.eq.s32.totalorder %v218, %v4532
        %vm4554 = vcmp.eq.s32.totalorder %v218, %v4536
        %vm4555 = vcmp.eq.s32.totalorder %v218, %v4540
        %vm4556 = vcmp.eq.s32.totalorder %v218, %v4544
        %vm4557 = vcmp.eq.s32.totalorder %v219, %v4532
        %vm4558 = vcmp.eq.s32.totalorder %v219, %v4536
        %vm4559 = vcmp.eq.s32.totalorder %v219, %v4540
        %vm4560 = vcmp.eq.s32.totalorder %v219, %v4544
        %vm4561 = vcmp.eq.s32.totalorder %v220, %v4532
        %vm4562 = vcmp.eq.s32.totalorder %v220, %v4536
        %vm4563 = vcmp.eq.s32.totalorder %v220, %v4540
        %vm4564 = vcmp.eq.s32.totalorder %v220, %v4544
        %vm4565 = vcmp.eq.s32.totalorder %v221, %v4532
        %vm4566 = vcmp.eq.s32.totalorder %v221, %v4536
        %vm4567 = vcmp.eq.s32.totalorder %v221, %v4540
        %vm4568 = vcmp.eq.s32.totalorder %v221, %v4544
        %vm4569 = vcmp.eq.s32.totalorder %v222, %v4532
        %vm4570 = vcmp.eq.s32.totalorder %v222, %v4536
        %vm4571 = vcmp.eq.s32.totalorder %v222, %v4540
        %vm4572 = vcmp.eq.s32.totalorder %v222, %v4544
        %vm4573 = vcmp.eq.s32.totalorder %v223, %v4532
        %vm4574 = vcmp.eq.s32.totalorder %v223, %v4536
        %vm4575 = vcmp.eq.s32.totalorder %v223, %v4540
        %vm4576 = vcmp.eq.s32.totalorder %v223, %v4544
        %vm4577 = vcmp.eq.s32.totalorder %v224, %v4532
        %vm4578 = vcmp.eq.s32.totalorder %v224, %v4536
        %vm4579 = vcmp.eq.s32.totalorder %v224, %v4540
        %vm4580 = vcmp.eq.s32.totalorder %v224, %v4544
        %vm4581 = vcmp.eq.s32.totalorder %v225, %v4532
        %vm4582 = vcmp.eq.s32.totalorder %v225, %v4536
        %vm4583 = vcmp.eq.s32.totalorder %v225, %v4540
        %vm4584 = vcmp.eq.s32.totalorder %v225, %v4544
        %vm4585 = vcmp.eq.s32.totalorder %v226, %v4532
        %vm4586 = vcmp.eq.s32.totalorder %v226, %v4536
        %vm4587 = vcmp.eq.s32.totalorder %v226, %v4540
        %vm4588 = vcmp.eq.s32.totalorder %v226, %v4544
        %vm4589 = vcmp.eq.s32.totalorder %v227, %v4532
        %vm4590 = vcmp.eq.s32.totalorder %v227, %v4536
        %vm4591 = vcmp.eq.s32.totalorder %v227, %v4540
        %vm4592 = vcmp.eq.s32.totalorder %v227, %v4544
        %vm4593 = vcmp.eq.s32.totalorder %v228, %v4532
        %vm4594 = vcmp.eq.s32.totalorder %v228, %v4536
        %vm4595 = vcmp.eq.s32.totalorder %v228, %v4540
        %vm4596 = vcmp.eq.s32.totalorder %v228, %v4544
        %vm4597 = vcmp.eq.s32.totalorder %v229, %v4532
        %vm4598 = vcmp.eq.s32.totalorder %v229, %v4536
        %vm4599 = vcmp.eq.s32.totalorder %v229, %v4540
        %vm4600 = vcmp.eq.s32.totalorder %v229, %v4544
        %vm4601 = vcmp.eq.s32.totalorder %v230, %v4532
        %vm4602 = vcmp.eq.s32.totalorder %v230, %v4536
        %vm4603 = vcmp.eq.s32.totalorder %v230, %v4540
        %vm4604 = vcmp.eq.s32.totalorder %v230, %v4544
        %vm4605 = vcmp.eq.s32.totalorder %v231, %v4532
        %vm4606 = vcmp.eq.s32.totalorder %v231, %v4536
        %vm4607 = vcmp.eq.s32.totalorder %v231, %v4540
        %vm4608 = vcmp.eq.s32.totalorder %v231, %v4544
        %vm4609 = vcmp.eq.s32.totalorder %v2605, %v4532
        %vm4610 = vcmp.eq.s32.totalorder %v2605, %v4536
        %vm4611 = vcmp.eq.s32.totalorder %v2605, %v4540
        %vm4612 = vcmp.eq.s32.totalorder %v2605, %v4544
        %vm4613 = vcmp.eq.s32.totalorder %v2606, %v4532
        %vm4614 = vcmp.eq.s32.totalorder %v2606, %v4536
        %vm4615 = vcmp.eq.s32.totalorder %v2606, %v4540
        %vm4616 = vcmp.eq.s32.totalorder %v2606, %v4544
        %vm4617 = vcmp.eq.s32.totalorder %v2607, %v4532
        %vm4618 = vcmp.eq.s32.totalorder %v2607, %v4536
        %vm4619 = vcmp.eq.s32.totalorder %v2607, %v4540
        %vm4620 = vcmp.eq.s32.totalorder %v2607, %v4544
        %vm4621 = vcmp.eq.s32.totalorder %v2608, %v4532
        %vm4622 = vcmp.eq.s32.totalorder %v2608, %v4536
        %vm4623 = vcmp.eq.s32.totalorder %v2608, %v4540
        %vm4624 = vcmp.eq.s32.totalorder %v2608, %v4544
        %vm4625 = vcmp.eq.s32.totalorder %v2609, %v4532
        %vm4626 = vcmp.eq.s32.totalorder %v2609, %v4536
        %vm4627 = vcmp.eq.s32.totalorder %v2609, %v4540
        %vm4628 = vcmp.eq.s32.totalorder %v2609, %v4544
        %vm4629 = vcmp.eq.s32.totalorder %v2610, %v4532
        %vm4630 = vcmp.eq.s32.totalorder %v2610, %v4536
        %vm4631 = vcmp.eq.s32.totalorder %v2610, %v4540
        %vm4632 = vcmp.eq.s32.totalorder %v2610, %v4544
        %vm4633 = vcmp.eq.s32.totalorder %v2611, %v4532
        %vm4634 = vcmp.eq.s32.totalorder %v2611, %v4536
        %vm4635 = vcmp.eq.s32.totalorder %v2611, %v4540
        %vm4636 = vcmp.eq.s32.totalorder %v2611, %v4544
        %vm4637 = vcmp.eq.s32.totalorder %v2612, %v4532
        %vm4638 = vcmp.eq.s32.totalorder %v2612, %v4536
        %vm4639 = vcmp.eq.s32.totalorder %v2612, %v4540
        %vm4640 = vcmp.eq.s32.totalorder %v2612, %v4544
        %vm4641 = vcmp.eq.s32.totalorder %v2613, %v4532
        %vm4642 = vcmp.eq.s32.totalorder %v2613, %v4536
        %vm4643 = vcmp.eq.s32.totalorder %v2613, %v4540
        %vm4644 = vcmp.eq.s32.totalorder %v2613, %v4544
        %vm4645 = vcmp.eq.s32.totalorder %v2614, %v4532
        %vm4646 = vcmp.eq.s32.totalorder %v2614, %v4536
        %vm4647 = vcmp.eq.s32.totalorder %v2614, %v4540
        %vm4648 = vcmp.eq.s32.totalorder %v2614, %v4544
        %vm4649 = vcmp.eq.s32.totalorder %v2615, %v4532
        %vm4650 = vcmp.eq.s32.totalorder %v2615, %v4536
        %vm4651 = vcmp.eq.s32.totalorder %v2615, %v4540
        %vm4652 = vcmp.eq.s32.totalorder %v2615, %v4544
        %vm4653 = vcmp.eq.s32.totalorder %v2616, %v4532
        %vm4654 = vcmp.eq.s32.totalorder %v2616, %v4536
        %vm4655 = vcmp.eq.s32.totalorder %v2616, %v4540
        %vm4656 = vcmp.eq.s32.totalorder %v2616, %v4544
        %vm4657 = vcmp.eq.s32.totalorder %v2617, %v4532
        %vm4658 = vcmp.eq.s32.totalorder %v2617, %v4536
        %vm4659 = vcmp.eq.s32.totalorder %v2617, %v4540
        %vm4660 = vcmp.eq.s32.totalorder %v2617, %v4544
        %vm4661 = vcmp.eq.s32.totalorder %v2618, %v4532
        %vm4662 = vcmp.eq.s32.totalorder %v2618, %v4536
        %vm4663 = vcmp.eq.s32.totalorder %v2618, %v4540
        %vm4664 = vcmp.eq.s32.totalorder %v2618, %v4544
        %vm4665 = vcmp.eq.s32.totalorder %v2619, %v4532
        %vm4666 = vcmp.eq.s32.totalorder %v2619, %v4536
        %vm4667 = vcmp.eq.s32.totalorder %v2619, %v4540
        %vm4668 = vcmp.eq.s32.totalorder %v2619, %v4544
        %vm4669 = vcmp.eq.s32.totalorder %v2620, %v4532
        %vm4670 = vcmp.eq.s32.totalorder %v2620, %v4536
        %vm4671 = vcmp.eq.s32.totalorder %v2620, %v4540
        %vm4672 = vcmp.eq.s32.totalorder %v2620, %v4544
        %v4675 = vlaneseq
        %v4676 = vshrl.u32 %v4675, 7
        %v4677 = vsub.s32 0, %v4676
        %v4678 = vrot.slane %v4509, %v4677
        %v4679 = vlaneseq
        %v4680 = vshrl.u32 %v4679, 7
        %v4681 = vsub.s32 4, %v4680
        %v4682 = vrot.slane %v4509, %v4681
        %v4683 = vlaneseq
        %v4684 = vshrl.u32 %v4683, 7
        %v4685 = vsub.s32 0, %v4684
        %v4686 = vrot.slane %v4510, %v4685
        %v4687 = vlaneseq
        %v4688 = vshrl.u32 %v4687, 7
        %v4689 = vsub.s32 4, %v4688
        %v4690 = vrot.slane %v4510, %v4689
        %v4695 = vlaneseq
        %v4696 = vshrl.u32 %v4695, 7
        %v4697 = vsub.s32 0, %v4696
        %v4698 = vrot.slane %v4678, %v4697
        %v4699 = vlaneseq
        %v4700 = vshrl.u32 %v4699, 7
        %v4701 = vsub.s32 0, %v4700
        %v4702 = vrot.slane %v4682, %v4701
        %v4703 = vlaneseq
        %v4704 = vshrl.u32 %v4703, 7
        %v4705 = vsub.s32 0, %v4704
        %v4706 = vrot.slane %v4686, %v4705
        %v4707 = vlaneseq
        %v4708 = vshrl.u32 %v4707, 7
        %v4709 = vsub.s32 0, %v4708
        %v4710 = vrot.slane %v4690, %v4709
        %v4711 = vsel %vm4545, %v4698, 0.0
        %v4712 = vsel %vm4546, %v4702, 0.0
        %v4713 = vsel %vm4547, %v4706, 0.0
        %v4714 = vsel %vm4548, %v4710, 0.0
        %v4715 = vsel %vm4549, %v4698, 0.0
        %v4716 = vsel %vm4550, %v4702, 0.0
        %v4717 = vsel %vm4551, %v4706, 0.0
        %v4718 = vsel %vm4552, %v4710, 0.0
        %v4719 = vsel %vm4553, %v4698, 0.0
        %v4720 = vsel %vm4554, %v4702, 0.0
        %v4721 = vsel %vm4555, %v4706, 0.0
        %v4722 = vsel %vm4556, %v4710, 0.0
        %v4723 = vsel %vm4557, %v4698, 0.0
        %v4724 = vsel %vm4558, %v4702, 0.0
        %v4725 = vsel %vm4559, %v4706, 0.0
        %v4726 = vsel %vm4560, %v4710, 0.0
        %v4727 = vsel %vm4561, %v4698, 0.0
        %v4728 = vsel %vm4562, %v4702, 0.0
        %v4729 = vsel %vm4563, %v4706, 0.0
        %v4730 = vsel %vm4564, %v4710, 0.0
        %v4731 = vsel %vm4565, %v4698, 0.0
        %v4732 = vsel %vm4566, %v4702, 0.0
        %v4733 = vsel %vm4567, %v4706, 0.0
        %v4734 = vsel %vm4568, %v4710, 0.0
        %v4735 = vsel %vm4569, %v4698, 0.0
        %v4736 = vsel %vm4570, %v4702, 0.0
        %v4737 = vsel %vm4571, %v4706, 0.0
        %v4738 = vsel %vm4572, %v4710, 0.0
        %v4739 = vsel %vm4573, %v4698, 0.0
        %v4740 = vsel %vm4574, %v4702, 0.0
        %v4741 = vsel %vm4575, %v4706, 0.0
        %v4742 = vsel %vm4576, %v4710, 0.0
        %v4743 = vsel %vm4577, %v4698, 0.0
        %v4744 = vsel %vm4578, %v4702, 0.0
        %v4745 = vsel %vm4579, %v4706, 0.0
        %v4746 = vsel %vm4580, %v4710, 0.0
        %v4747 = vsel %vm4581, %v4698, 0.0
        %v4748 = vsel %vm4582, %v4702, 0.0
        %v4749 = vsel %vm4583, %v4706, 0.0
        %v4750 = vsel %vm4584, %v4710, 0.0
        %v4751 = vsel %vm4585, %v4698, 0.0
        %v4752 = vsel %vm4586, %v4702, 0.0
        %v4753 = vsel %vm4587, %v4706, 0.0
        %v4754 = vsel %vm4588, %v4710, 0.0
        %v4755 = vsel %vm4589, %v4698, 0.0
        %v4756 = vsel %vm4590, %v4702, 0.0
        %v4757 = vsel %vm4591, %v4706, 0.0
        %v4758 = vsel %vm4592, %v4710, 0.0
        %v4759 = vsel %vm4593, %v4698, 0.0
        %v4760 = vsel %vm4594, %v4702, 0.0
        %v4761 = vsel %vm4595, %v4706, 0.0
        %v4762 = vsel %vm4596, %v4710, 0.0
        %v4763 = vsel %vm4597, %v4698, 0.0
        %v4764 = vsel %vm4598, %v4702, 0.0
        %v4765 = vsel %vm4599, %v4706, 0.0
        %v4766 = vsel %vm4600, %v4710, 0.0
        %v4767 = vsel %vm4601, %v4698, 0.0
        %v4768 = vsel %vm4602, %v4702, 0.0
        %v4769 = vsel %vm4603, %v4706, 0.0
        %v4770 = vsel %vm4604, %v4710, 0.0
        %v4771 = vsel %vm4605, %v4698, 0.0
        %v4772 = vsel %vm4606, %v4702, 0.0
        %v4773 = vsel %vm4607, %v4706, 0.0
        %v4774 = vsel %vm4608, %v4710, 0.0
        %v4775 = vsel %vm4609, %v4698, 0.0
        %v4776 = vsel %vm4610, %v4702, 0.0
        %v4777 = vsel %vm4611, %v4706, 0.0
        %v4778 = vsel %vm4612, %v4710, 0.0
        %v4779 = vsel %vm4613, %v4698, 0.0
        %v4780 = vsel %vm4614, %v4702, 0.0
        %v4781 = vsel %vm4615, %v4706, 0.0
        %v4782 = vsel %vm4616, %v4710, 0.0
        %v4783 = vsel %vm4617, %v4698, 0.0
        %v4784 = vsel %vm4618, %v4702, 0.0
        %v4785 = vsel %vm4619, %v4706, 0.0
        %v4786 = vsel %vm4620, %v4710, 0.0
        %v4787 = vsel %vm4621, %v4698, 0.0
        %v4788 = vsel %vm4622, %v4702, 0.0
        %v4789 = vsel %vm4623, %v4706, 0.0
        %v4790 = vsel %vm4624, %v4710, 0.0
        %v4791 = vsel %vm4625, %v4698, 0.0
        %v4792 = vsel %vm4626, %v4702, 0.0
        %v4793 = vsel %vm4627, %v4706, 0.0
        %v4794 = vsel %vm4628, %v4710, 0.0
        %v4795 = vsel %vm4629, %v4698, 0.0
        %v4796 = vsel %vm4630, %v4702, 0.0
        %v4797 = vsel %vm4631, %v4706, 0.0
        %v4798 = vsel %vm4632, %v4710, 0.0
        %v4799 = vsel %vm4633, %v4698, 0.0
        %v4800 = vsel %vm4634, %v4702, 0.0
        %v4801 = vsel %vm4635, %v4706, 0.0
        %v4802 = vsel %vm4636, %v4710, 0.0
        %v4803 = vsel %vm4637, %v4698, 0.0
        %v4804 = vsel %vm4638, %v4702, 0.0
        %v4805 = vsel %vm4639, %v4706, 0.0
        %v4806 = vsel %vm4640, %v4710, 0.0
        %v4807 = vsel %vm4641, %v4698, 0.0
        %v4808 = vsel %vm4642, %v4702, 0.0
        %v4809 = vsel %vm4643, %v4706, 0.0
        %v4810 = vsel %vm4644, %v4710, 0.0
        %v4811 = vsel %vm4645, %v4698, 0.0
        %v4812 = vsel %vm4646, %v4702, 0.0
        %v4813 = vsel %vm4647, %v4706, 0.0
        %v4814 = vsel %vm4648, %v4710, 0.0
        %v4815 = vsel %vm4649, %v4698, 0.0
        %v4816 = vsel %vm4650, %v4702, 0.0
        %v4817 = vsel %vm4651, %v4706, 0.0
        %v4818 = vsel %vm4652, %v4710, 0.0
        %v4819 = vsel %vm4653, %v4698, 0.0
        %v4820 = vsel %vm4654, %v4702, 0.0
        %v4821 = vsel %vm4655, %v4706, 0.0
        %v4822 = vsel %vm4656, %v4710, 0.0
        %v4823 = vsel %vm4657, %v4698, 0.0
        %v4824 = vsel %vm4658, %v4702, 0.0
        %v4825 = vsel %vm4659, %v4706, 0.0
        %v4826 = vsel %vm4660, %v4710, 0.0
        %v4827 = vsel %vm4661, %v4698, 0.0
        %v4828 = vsel %vm4662, %v4702, 0.0
        %v4829 = vsel %vm4663, %v4706, 0.0
        %v4830 = vsel %vm4664, %v4710, 0.0
        %v4831 = vsel %vm4665, %v4698, 0.0
        %v4832 = vsel %vm4666, %v4702, 0.0
        %v4833 = vsel %vm4667, %v4706, 0.0
        %v4834 = vsel %vm4668, %v4710, 0.0
        %v4835 = vsel %vm4669, %v4698, 0.0
        %v4836 = vsel %vm4670, %v4702, 0.0
        %v4837 = vsel %vm4671, %v4706, 0.0
        %v4838 = vsel %vm4672, %v4710, 0.0
        %v4839 = vadd.f32 %v4377, %v4711
        %v4840 = vadd.f32 %v4378, %v4712
        %v4841 = vadd.f32 %v4379, %v4713
        %v4842 = vadd.f32 %v4380, %v4714
        %v4843 = vadd.f32 %v4381, %v4715
        %v4844 = vadd.f32 %v4382, %v4716
        %v4845 = vadd.f32 %v4383, %v4717
        %v4846 = vadd.f32 %v4384, %v4718
        %v4847 = vadd.f32 %v4385, %v4719
        %v4848 = vadd.f32 %v4386, %v4720
        %v4849 = vadd.f32 %v4387, %v4721
        %v4850 = vadd.f32 %v4388, %v4722
        %v4851 = vadd.f32 %v4389, %v4723
        %v4852 = vadd.f32 %v4390, %v4724
        %v4853 = vadd.f32 %v4391, %v4725
        %v4854 = vadd.f32 %v4392, %v4726
        %v4855 = vadd.f32 %v4393, %v4727
        %v4856 = vadd.f32 %v4394, %v4728
        %v4857 = vadd.f32 %v4395, %v4729
        %v4858 = vadd.f32 %v4396, %v4730
        %v4859 = vadd.f32 %v4397, %v4731
        %v4860 = vadd.f32 %v4398, %v4732
        %v4861 = vadd.f32 %v4399, %v4733
        %v4862 = vadd.f32 %v4400, %v4734
        %v4863 = vadd.f32 %v4401, %v4735
        %v4864 = vadd.f32 %v4402, %v4736
        %v4865 = vadd.f32 %v4403, %v4737
        %v4866 = vadd.f32 %v4404, %v4738
        %v4867 = vadd.f32 %v4405, %v4739
        %v4868 = vadd.f32 %v4406, %v4740
        %v4869 = vadd.f32 %v4407, %v4741
        %v4870 = vadd.f32 %v4408, %v4742
        %v4871 = vadd.f32 %v4409, %v4743
        %v4872 = vadd.f32 %v4410, %v4744
        %v4873 = vadd.f32 %v4411, %v4745
        %v4874 = vadd.f32 %v4412, %v4746
        %v4875 = vadd.f32 %v4413, %v4747
        %v4876 = vadd.f32 %v4414, %v4748
        %v4877 = vadd.f32 %v4415, %v4749
        %v4878 = vadd.f32 %v4416, %v4750
        %v4879 = vadd.f32 %v4417, %v4751
        %v4880 = vadd.f32 %v4418, %v4752
        %v4881 = vadd.f32 %v4419, %v4753
        %v4882 = vadd.f32 %v4420, %v4754
        %v4883 = vadd.f32 %v4421, %v4755
        %v4884 = vadd.f32 %v4422, %v4756
        %v4885 = vadd.f32 %v4423, %v4757
        %v4886 = vadd.f32 %v4424, %v4758
        %v4887 = vadd.f32 %v4425, %v4759
        %v4888 = vadd.f32 %v4426, %v4760
        %v4889 = vadd.f32 %v4427, %v4761
        %v4890 = vadd.f32 %v4428, %v4762
        %v4891 = vadd.f32 %v4429, %v4763
        %v4892 = vadd.f32 %v4430, %v4764
        %v4893 = vadd.f32 %v4431, %v4765
        %v4894 = vadd.f32 %v4432, %v4766
        %v4895 = vadd.f32 %v4433, %v4767
        %v4896 = vadd.f32 %v4434, %v4768
        %v4897 = vadd.f32 %v4435, %v4769
        %v4898 = vadd.f32 %v4436, %v4770
        %v4899 = vadd.f32 %v4437, %v4771
        %v4900 = vadd.f32 %v4438, %v4772
        %v4901 = vadd.f32 %v4439, %v4773
        %v4902 = vadd.f32 %v4440, %v4774
        %v4903 = vadd.f32 %v4441, %v4775
        %v4904 = vadd.f32 %v4442, %v4776
        %v4905 = vadd.f32 %v4443, %v4777
        %v4906 = vadd.f32 %v4444, %v4778
        %v4907 = vadd.f32 %v4445, %v4779
        %v4908 = vadd.f32 %v4446, %v4780
        %v4909 = vadd.f32 %v4447, %v4781
        %v4910 = vadd.f32 %v4448, %v4782
        %v4911 = vadd.f32 %v4449, %v4783
        %v4912 = vadd.f32 %v4450, %v4784
        %v4913 = vadd.f32 %v4451, %v4785
        %v4914 = vadd.f32 %v4452, %v4786
        %v4915 = vadd.f32 %v4453, %v4787
        %v4916 = vadd.f32 %v4454, %v4788
        %v4917 = vadd.f32 %v4455, %v4789
        %v4918 = vadd.f32 %v4456, %v4790
        %v4919 = vadd.f32 %v4457, %v4791
        %v4920 = vadd.f32 %v4458, %v4792
        %v4921 = vadd.f32 %v4459, %v4793
        %v4922 = vadd.f32 %v4460, %v4794
        %v4923 = vadd.f32 %v4461, %v4795
        %v4924 = vadd.f32 %v4462, %v4796
        %v4925 = vadd.f32 %v4463, %v4797
        %v4926 = vadd.f32 %v4464, %v4798
        %v4927 = vadd.f32 %v4465, %v4799
        %v4928 = vadd.f32 %v4466, %v4800
        %v4929 = vadd.f32 %v4467, %v4801
        %v4930 = vadd.f32 %v4468, %v4802
        %v4931 = vadd.f32 %v4469, %v4803
        %v4932 = vadd.f32 %v4470, %v4804
        %v4933 = vadd.f32 %v4471, %v4805
        %v4934 = vadd.f32 %v4472, %v4806
        %v4935 = vadd.f32 %v4473, %v4807
        %v4936 = vadd.f32 %v4474, %v4808
        %v4937 = vadd.f32 %v4475, %v4809
        %v4938 = vadd.f32 %v4476, %v4810
        %v4939 = vadd.f32 %v4477, %v4811
        %v4940 = vadd.f32 %v4478, %v4812
        %v4941 = vadd.f32 %v4479, %v4813
        %v4942 = vadd.f32 %v4480, %v4814
        %v4943 = vadd.f32 %v4481, %v4815
        %v4944 = vadd.f32 %v4482, %v4816
        %v4945 = vadd.f32 %v4483, %v4817
        %v4946 = vadd.f32 %v4484, %v4818
        %v4947 = vadd.f32 %v4485, %v4819
        %v4948 = vadd.f32 %v4486, %v4820
        %v4949 = vadd.f32 %v4487, %v4821
        %v4950 = vadd.f32 %v4488, %v4822
        %v4951 = vadd.f32 %v4489, %v4823
        %v4952 = vadd.f32 %v4490, %v4824
        %v4953 = vadd.f32 %v4491, %v4825
        %v4954 = vadd.f32 %v4492, %v4826
        %v4955 = vadd.f32 %v4493, %v4827
        %v4956 = vadd.f32 %v4494, %v4828
        %v4957 = vadd.f32 %v4495, %v4829
        %v4958 = vadd.f32 %v4496, %v4830
        %v4959 = vadd.f32 %v4497, %v4831
        %v4960 = vadd.f32 %v4498, %v4832
        %v4961 = vadd.f32 %v4499, %v4833
        %v4962 = vadd.f32 %v4500, %v4834
        %v4963 = vadd.f32 %v4501, %v4835
        %v4964 = vadd.f32 %v4502, %v4836
        %v4965 = vadd.f32 %v4503, %v4837
        %v4966 = vadd.f32 %v4504, %v4838
        %v4967 = vmul.f32 %v4505, %v3108
        %v4968 = vmul.f32 %v4506, %v3110
        %v4969 = vadd.s32 %v4507, %v3116
        %v4970 = vadd.s32 %v4508, %v3118
        %v4971 = vlaneseq
        %v4972 = vshrl.u32 %v4971, 7
        %v4973 = vsub.s32 0, %v4972
        %v4974 = vrot.slane %v4969, %v4973
        %v4975 = vlaneseq
        %v4976 = vshrl.u32 %v4975, 7
        %v4977 = vsub.s32 4, %v4976
        %v4978 = vrot.slane %v4969, %v4977
        %v4979 = vlaneseq
        %v4980 = vshrl.u32 %v4979, 7
        %v4981 = vsub.s32 0, %v4980
        %v4982 = vrot.slane %v4970, %v4981
        %v4983 = vlaneseq
        %v4984 = vshrl.u32 %v4983, 7
        %v4985 = vsub.s32 4, %v4984
        %v4986 = vrot.slane %v4970, %v4985
        %v4987 = vlaneseq
        %v4988 = vshrl.u32 %v4987, 7
        %v4989 = vsub.s32 0, %v4988
        %v4990 = vrot.slane %v4974, %v4989
        %v4991 = vlaneseq
        %v4992 = vshrl.u32 %v4991, 7
        %v4993 = vsub.s32 0, %v4992
        %v4994 = vrot.slane %v4978, %v4993
        %v4995 = vlaneseq
        %v4996 = vshrl.u32 %v4995, 7
        %v4997 = vsub.s32 0, %v4996
        %v4998 = vrot.slane %v4982, %v4997
        %v4999 = vlaneseq
        %v5000 = vshrl.u32 %v4999, 7
        %v5001 = vsub.s32 0, %v5000
        %v5002 = vrot.slane %v4986, %v5001
        %vm5003 = vcmp.eq.s32.totalorder %v216, %v4990
        %vm5004 = vcmp.eq.s32.totalorder %v216, %v4994
        %vm5005 = vcmp.eq.s32.totalorder %v216, %v4998
        %vm5006 = vcmp.eq.s32.totalorder %v216, %v5002
        %vm5007 = vcmp.eq.s32.totalorder %v217, %v4990
        %vm5008 = vcmp.eq.s32.totalorder %v217, %v4994
        %vm5009 = vcmp.eq.s32.totalorder %v217, %v4998
        %vm5010 = vcmp.eq.s32.totalorder %v217, %v5002
        %vm5011 = vcmp.eq.s32.totalorder %v218, %v4990
        %vm5012 = vcmp.eq.s32.totalorder %v218, %v4994
        %vm5013 = vcmp.eq.s32.totalorder %v218, %v4998
        %vm5014 = vcmp.eq.s32.totalorder %v218, %v5002
        %vm5015 = vcmp.eq.s32.totalorder %v219, %v4990
        %vm5016 = vcmp.eq.s32.totalorder %v219, %v4994
        %vm5017 = vcmp.eq.s32.totalorder %v219, %v4998
        %vm5018 = vcmp.eq.s32.totalorder %v219, %v5002
        %vm5019 = vcmp.eq.s32.totalorder %v220, %v4990
        %vm5020 = vcmp.eq.s32.totalorder %v220, %v4994
        %vm5021 = vcmp.eq.s32.totalorder %v220, %v4998
        %vm5022 = vcmp.eq.s32.totalorder %v220, %v5002
        %vm5023 = vcmp.eq.s32.totalorder %v221, %v4990
        %vm5024 = vcmp.eq.s32.totalorder %v221, %v4994
        %vm5025 = vcmp.eq.s32.totalorder %v221, %v4998
        %vm5026 = vcmp.eq.s32.totalorder %v221, %v5002
        %vm5027 = vcmp.eq.s32.totalorder %v222, %v4990
        %vm5028 = vcmp.eq.s32.totalorder %v222, %v4994
        %vm5029 = vcmp.eq.s32.totalorder %v222, %v4998
        %vm5030 = vcmp.eq.s32.totalorder %v222, %v5002
        %vm5031 = vcmp.eq.s32.totalorder %v223, %v4990
        %vm5032 = vcmp.eq.s32.totalorder %v223, %v4994
        %vm5033 = vcmp.eq.s32.totalorder %v223, %v4998
        %vm5034 = vcmp.eq.s32.totalorder %v223, %v5002
        %vm5035 = vcmp.eq.s32.totalorder %v224, %v4990
        %vm5036 = vcmp.eq.s32.totalorder %v224, %v4994
        %vm5037 = vcmp.eq.s32.totalorder %v224, %v4998
        %vm5038 = vcmp.eq.s32.totalorder %v224, %v5002
        %vm5039 = vcmp.eq.s32.totalorder %v225, %v4990
        %vm5040 = vcmp.eq.s32.totalorder %v225, %v4994
        %vm5041 = vcmp.eq.s32.totalorder %v225, %v4998
        %vm5042 = vcmp.eq.s32.totalorder %v225, %v5002
        %vm5043 = vcmp.eq.s32.totalorder %v226, %v4990
        %vm5044 = vcmp.eq.s32.totalorder %v226, %v4994
        %vm5045 = vcmp.eq.s32.totalorder %v226, %v4998
        %vm5046 = vcmp.eq.s32.totalorder %v226, %v5002
        %vm5047 = vcmp.eq.s32.totalorder %v227, %v4990
        %vm5048 = vcmp.eq.s32.totalorder %v227, %v4994
        %vm5049 = vcmp.eq.s32.totalorder %v227, %v4998
        %vm5050 = vcmp.eq.s32.totalorder %v227, %v5002
        %vm5051 = vcmp.eq.s32.totalorder %v228, %v4990
        %vm5052 = vcmp.eq.s32.totalorder %v228, %v4994
        %vm5053 = vcmp.eq.s32.totalorder %v228, %v4998
        %vm5054 = vcmp.eq.s32.totalorder %v228, %v5002
        %vm5055 = vcmp.eq.s32.totalorder %v229, %v4990
        %vm5056 = vcmp.eq.s32.totalorder %v229, %v4994
        %vm5057 = vcmp.eq.s32.totalorder %v229, %v4998
        %vm5058 = vcmp.eq.s32.totalorder %v229, %v5002
        %vm5059 = vcmp.eq.s32.totalorder %v230, %v4990
        %vm5060 = vcmp.eq.s32.totalorder %v230, %v4994
        %vm5061 = vcmp.eq.s32.totalorder %v230, %v4998
        %vm5062 = vcmp.eq.s32.totalorder %v230, %v5002
        %vm5063 = vcmp.eq.s32.totalorder %v231, %v4990
        %vm5064 = vcmp.eq.s32.totalorder %v231, %v4994
        %vm5065 = vcmp.eq.s32.totalorder %v231, %v4998
        %vm5066 = vcmp.eq.s32.totalorder %v231, %v5002
        %vm5067 = vcmp.eq.s32.totalorder %v2605, %v4990
        %vm5068 = vcmp.eq.s32.totalorder %v2605, %v4994
        %vm5069 = vcmp.eq.s32.totalorder %v2605, %v4998
        %vm5070 = vcmp.eq.s32.totalorder %v2605, %v5002
        %vm5071 = vcmp.eq.s32.totalorder %v2606, %v4990
        %vm5072 = vcmp.eq.s32.totalorder %v2606, %v4994
        %vm5073 = vcmp.eq.s32.totalorder %v2606, %v4998
        %vm5074 = vcmp.eq.s32.totalorder %v2606, %v5002
        %vm5075 = vcmp.eq.s32.totalorder %v2607, %v4990
        %vm5076 = vcmp.eq.s32.totalorder %v2607, %v4994
        %vm5077 = vcmp.eq.s32.totalorder %v2607, %v4998
        %vm5078 = vcmp.eq.s32.totalorder %v2607, %v5002
        %vm5079 = vcmp.eq.s32.totalorder %v2608, %v4990
        %vm5080 = vcmp.eq.s32.totalorder %v2608, %v4994
        %vm5081 = vcmp.eq.s32.totalorder %v2608, %v4998
        %vm5082 = vcmp.eq.s32.totalorder %v2608, %v5002
        %vm5083 = vcmp.eq.s32.totalorder %v2609, %v4990
        %vm5084 = vcmp.eq.s32.totalorder %v2609, %v4994
        %vm5085 = vcmp.eq.s32.totalorder %v2609, %v4998
        %vm5086 = vcmp.eq.s32.totalorder %v2609, %v5002
        %vm5087 = vcmp.eq.s32.totalorder %v2610, %v4990
        %vm5088 = vcmp.eq.s32.totalorder %v2610, %v4994
        %vm5089 = vcmp.eq.s32.totalorder %v2610, %v4998
        %vm5090 = vcmp.eq.s32.totalorder %v2610, %v5002
        %vm5091 = vcmp.eq.s32.totalorder %v2611, %v4990
        %vm5092 = vcmp.eq.s32.totalorder %v2611, %v4994
        %vm5093 = vcmp.eq.s32.totalorder %v2611, %v4998
        %vm5094 = vcmp.eq.s32.totalorder %v2611, %v5002
        %vm5095 = vcmp.eq.s32.totalorder %v2612, %v4990
        %vm5096 = vcmp.eq.s32.totalorder %v2612, %v4994
        %vm5097 = vcmp.eq.s32.totalorder %v2612, %v4998
        %vm5098 = vcmp.eq.s32.totalorder %v2612, %v5002
        %vm5099 = vcmp.eq.s32.totalorder %v2613, %v4990
        %vm5100 = vcmp.eq.s32.totalorder %v2613, %v4994
        %vm5101 = vcmp.eq.s32.totalorder %v2613, %v4998
        %vm5102 = vcmp.eq.s32.totalorder %v2613, %v5002
        %vm5103 = vcmp.eq.s32.totalorder %v2614, %v4990
        %vm5104 = vcmp.eq.s32.totalorder %v2614, %v4994
        %vm5105 = vcmp.eq.s32.totalorder %v2614, %v4998
        %vm5106 = vcmp.eq.s32.totalorder %v2614, %v5002
        %vm5107 = vcmp.eq.s32.totalorder %v2615, %v4990
        %vm5108 = vcmp.eq.s32.totalorder %v2615, %v4994
        %vm5109 = vcmp.eq.s32.totalorder %v2615, %v4998
        %vm5110 = vcmp.eq.s32.totalorder %v2615, %v5002
        %vm5111 = vcmp.eq.s32.totalorder %v2616, %v4990
        %vm5112 = vcmp.eq.s32.totalorder %v2616, %v4994
        %vm5113 = vcmp.eq.s32.totalorder %v2616, %v4998
        %vm5114 = vcmp.eq.s32.totalorder %v2616, %v5002
        %vm5115 = vcmp.eq.s32.totalorder %v2617, %v4990
        %vm5116 = vcmp.eq.s32.totalorder %v2617, %v4994
        %vm5117 = vcmp.eq.s32.totalorder %v2617, %v4998
        %vm5118 = vcmp.eq.s32.totalorder %v2617, %v5002
        %vm5119 = vcmp.eq.s32.totalorder %v2618, %v4990
        %vm5120 = vcmp.eq.s32.totalorder %v2618, %v4994
        %vm5121 = vcmp.eq.s32.totalorder %v2618, %v4998
        %vm5122 = vcmp.eq.s32.totalorder %v2618, %v5002
        %vm5123 = vcmp.eq.s32.totalorder %v2619, %v4990
        %vm5124 = vcmp.eq.s32.totalorder %v2619, %v4994
        %vm5125 = vcmp.eq.s32.totalorder %v2619, %v4998
        %vm5126 = vcmp.eq.s32.totalorder %v2619, %v5002
        %vm5127 = vcmp.eq.s32.totalorder %v2620, %v4990
        %vm5128 = vcmp.eq.s32.totalorder %v2620, %v4994
        %vm5129 = vcmp.eq.s32.totalorder %v2620, %v4998
        %vm5130 = vcmp.eq.s32.totalorder %v2620, %v5002
        %v5133 = vlaneseq
        %v5134 = vshrl.u32 %v5133, 7
        %v5135 = vsub.s32 0, %v5134
        %v5136 = vrot.slane %v4967, %v5135
        %v5137 = vlaneseq
        %v5138 = vshrl.u32 %v5137, 7
        %v5139 = vsub.s32 4, %v5138
        %v5140 = vrot.slane %v4967, %v5139
        %v5141 = vlaneseq
        %v5142 = vshrl.u32 %v5141, 7
        %v5143 = vsub.s32 0, %v5142
        %v5144 = vrot.slane %v4968, %v5143
        %v5145 = vlaneseq
        %v5146 = vshrl.u32 %v5145, 7
        %v5147 = vsub.s32 4, %v5146
        %v5148 = vrot.slane %v4968, %v5147
        %v5153 = vlaneseq
        %v5154 = vshrl.u32 %v5153, 7
        %v5155 = vsub.s32 0, %v5154
        %v5156 = vrot.slane %v5136, %v5155
        %v5157 = vlaneseq
        %v5158 = vshrl.u32 %v5157, 7
        %v5159 = vsub.s32 0, %v5158
        %v5160 = vrot.slane %v5140, %v5159
        %v5161 = vlaneseq
        %v5162 = vshrl.u32 %v5161, 7
        %v5163 = vsub.s32 0, %v5162
        %v5164 = vrot.slane %v5144, %v5163
        %v5165 = vlaneseq
        %v5166 = vshrl.u32 %v5165, 7
        %v5167 = vsub.s32 0, %v5166
        %v5168 = vrot.slane %v5148, %v5167
        %v5169 = vsel %vm5003, %v5156, 0.0
        %v5170 = vsel %vm5004, %v5160, 0.0
        %v5171 = vsel %vm5005, %v5164, 0.0
        %v5172 = vsel %vm5006, %v5168, 0.0
        %v5173 = vsel %vm5007, %v5156, 0.0
        %v5174 = vsel %vm5008, %v5160, 0.0
        %v5175 = vsel %vm5009, %v5164, 0.0
        %v5176 = vsel %vm5010, %v5168, 0.0
        %v5177 = vsel %vm5011, %v5156, 0.0
        %v5178 = vsel %vm5012, %v5160, 0.0
        %v5179 = vsel %vm5013, %v5164, 0.0
        %v5180 = vsel %vm5014, %v5168, 0.0
        %v5181 = vsel %vm5015, %v5156, 0.0
        %v5182 = vsel %vm5016, %v5160, 0.0
        %v5183 = vsel %vm5017, %v5164, 0.0
        %v5184 = vsel %vm5018, %v5168, 0.0
        %v5185 = vsel %vm5019, %v5156, 0.0
        %v5186 = vsel %vm5020, %v5160, 0.0
        %v5187 = vsel %vm5021, %v5164, 0.0
        %v5188 = vsel %vm5022, %v5168, 0.0
        %v5189 = vsel %vm5023, %v5156, 0.0
        %v5190 = vsel %vm5024, %v5160, 0.0
        %v5191 = vsel %vm5025, %v5164, 0.0
        %v5192 = vsel %vm5026, %v5168, 0.0
        %v5193 = vsel %vm5027, %v5156, 0.0
        %v5194 = vsel %vm5028, %v5160, 0.0
        %v5195 = vsel %vm5029, %v5164, 0.0
        %v5196 = vsel %vm5030, %v5168, 0.0
        %v5197 = vsel %vm5031, %v5156, 0.0
        %v5198 = vsel %vm5032, %v5160, 0.0
        %v5199 = vsel %vm5033, %v5164, 0.0
        %v5200 = vsel %vm5034, %v5168, 0.0
        %v5201 = vsel %vm5035, %v5156, 0.0
        %v5202 = vsel %vm5036, %v5160, 0.0
        %v5203 = vsel %vm5037, %v5164, 0.0
        %v5204 = vsel %vm5038, %v5168, 0.0
        %v5205 = vsel %vm5039, %v5156, 0.0
        %v5206 = vsel %vm5040, %v5160, 0.0
        %v5207 = vsel %vm5041, %v5164, 0.0
        %v5208 = vsel %vm5042, %v5168, 0.0
        %v5209 = vsel %vm5043, %v5156, 0.0
        %v5210 = vsel %vm5044, %v5160, 0.0
        %v5211 = vsel %vm5045, %v5164, 0.0
        %v5212 = vsel %vm5046, %v5168, 0.0
        %v5213 = vsel %vm5047, %v5156, 0.0
        %v5214 = vsel %vm5048, %v5160, 0.0
        %v5215 = vsel %vm5049, %v5164, 0.0
        %v5216 = vsel %vm5050, %v5168, 0.0
        %v5217 = vsel %vm5051, %v5156, 0.0
        %v5218 = vsel %vm5052, %v5160, 0.0
        %v5219 = vsel %vm5053, %v5164, 0.0
        %v5220 = vsel %vm5054, %v5168, 0.0
        %v5221 = vsel %vm5055, %v5156, 0.0
        %v5222 = vsel %vm5056, %v5160, 0.0
        %v5223 = vsel %vm5057, %v5164, 0.0
        %v5224 = vsel %vm5058, %v5168, 0.0
        %v5225 = vsel %vm5059, %v5156, 0.0
        %v5226 = vsel %vm5060, %v5160, 0.0
        %v5227 = vsel %vm5061, %v5164, 0.0
        %v5228 = vsel %vm5062, %v5168, 0.0
        %v5229 = vsel %vm5063, %v5156, 0.0
        %v5230 = vsel %vm5064, %v5160, 0.0
        %v5231 = vsel %vm5065, %v5164, 0.0
        %v5232 = vsel %vm5066, %v5168, 0.0
        %v5233 = vsel %vm5067, %v5156, 0.0
        %v5234 = vsel %vm5068, %v5160, 0.0
        %v5235 = vsel %vm5069, %v5164, 0.0
        %v5236 = vsel %vm5070, %v5168, 0.0
        %v5237 = vsel %vm5071, %v5156, 0.0
        %v5238 = vsel %vm5072, %v5160, 0.0
        %v5239 = vsel %vm5073, %v5164, 0.0
        %v5240 = vsel %vm5074, %v5168, 0.0
        %v5241 = vsel %vm5075, %v5156, 0.0
        %v5242 = vsel %vm5076, %v5160, 0.0
        %v5243 = vsel %vm5077, %v5164, 0.0
        %v5244 = vsel %vm5078, %v5168, 0.0
        %v5245 = vsel %vm5079, %v5156, 0.0
        %v5246 = vsel %vm5080, %v5160, 0.0
        %v5247 = vsel %vm5081, %v5164, 0.0
        %v5248 = vsel %vm5082, %v5168, 0.0
        %v5249 = vsel %vm5083, %v5156, 0.0
        %v5250 = vsel %vm5084, %v5160, 0.0
        %v5251 = vsel %vm5085, %v5164, 0.0
        %v5252 = vsel %vm5086, %v5168, 0.0
        %v5253 = vsel %vm5087, %v5156, 0.0
        %v5254 = vsel %vm5088, %v5160, 0.0
        %v5255 = vsel %vm5089, %v5164, 0.0
        %v5256 = vsel %vm5090, %v5168, 0.0
        %v5257 = vsel %vm5091, %v5156, 0.0
        %v5258 = vsel %vm5092, %v5160, 0.0
        %v5259 = vsel %vm5093, %v5164, 0.0
        %v5260 = vsel %vm5094, %v5168, 0.0
        %v5261 = vsel %vm5095, %v5156, 0.0
        %v5262 = vsel %vm5096, %v5160, 0.0
        %v5263 = vsel %vm5097, %v5164, 0.0
        %v5264 = vsel %vm5098, %v5168, 0.0
        %v5265 = vsel %vm5099, %v5156, 0.0
        %v5266 = vsel %vm5100, %v5160, 0.0
        %v5267 = vsel %vm5101, %v5164, 0.0
        %v5268 = vsel %vm5102, %v5168, 0.0
        %v5269 = vsel %vm5103, %v5156, 0.0
        %v5270 = vsel %vm5104, %v5160, 0.0
        %v5271 = vsel %vm5105, %v5164, 0.0
        %v5272 = vsel %vm5106, %v5168, 0.0
        %v5273 = vsel %vm5107, %v5156, 0.0
        %v5274 = vsel %vm5108, %v5160, 0.0
        %v5275 = vsel %vm5109, %v5164, 0.0
        %v5276 = vsel %vm5110, %v5168, 0.0
        %v5277 = vsel %vm5111, %v5156, 0.0
        %v5278 = vsel %vm5112, %v5160, 0.0
        %v5279 = vsel %vm5113, %v5164, 0.0
        %v5280 = vsel %vm5114, %v5168, 0.0
        %v5281 = vsel %vm5115, %v5156, 0.0
        %v5282 = vsel %vm5116, %v5160, 0.0
        %v5283 = vsel %vm5117, %v5164, 0.0
        %v5284 = vsel %vm5118, %v5168, 0.0
        %v5285 = vsel %vm5119, %v5156, 0.0
        %v5286 = vsel %vm5120, %v5160, 0.0
        %v5287 = vsel %vm5121, %v5164, 0.0
        %v5288 = vsel %vm5122, %v5168, 0.0
        %v5289 = vsel %vm5123, %v5156, 0.0
        %v5290 = vsel %vm5124, %v5160, 0.0
        %v5291 = vsel %vm5125, %v5164, 0.0
        %v5292 = vsel %vm5126, %v5168, 0.0
        %v5293 = vsel %vm5127, %v5156, 0.0
        %v5294 = vsel %vm5128, %v5160, 0.0
        %v5295 = vsel %vm5129, %v5164, 0.0
        %v5296 = vsel %vm5130, %v5168, 0.0
        %v5297 = vadd.f32 %v4839, %v5169
        %v5298 = vadd.f32 %v4840, %v5170
        %v5299 = vadd.f32 %v4841, %v5171
        %v5300 = vadd.f32 %v4842, %v5172
        %v5301 = vadd.f32 %v4843, %v5173
        %v5302 = vadd.f32 %v4844, %v5174
        %v5303 = vadd.f32 %v4845, %v5175
        %v5304 = vadd.f32 %v4846, %v5176
        %v5305 = vadd.f32 %v4847, %v5177
        %v5306 = vadd.f32 %v4848, %v5178
        %v5307 = vadd.f32 %v4849, %v5179
        %v5308 = vadd.f32 %v4850, %v5180
        %v5309 = vadd.f32 %v4851, %v5181
        %v5310 = vadd.f32 %v4852, %v5182
        %v5311 = vadd.f32 %v4853, %v5183
        %v5312 = vadd.f32 %v4854, %v5184
        %v5313 = vadd.f32 %v4855, %v5185
        %v5314 = vadd.f32 %v4856, %v5186
        %v5315 = vadd.f32 %v4857, %v5187
        %v5316 = vadd.f32 %v4858, %v5188
        %v5317 = vadd.f32 %v4859, %v5189
        %v5318 = vadd.f32 %v4860, %v5190
        %v5319 = vadd.f32 %v4861, %v5191
        %v5320 = vadd.f32 %v4862, %v5192
        %v5321 = vadd.f32 %v4863, %v5193
        %v5322 = vadd.f32 %v4864, %v5194
        %v5323 = vadd.f32 %v4865, %v5195
        %v5324 = vadd.f32 %v4866, %v5196
        %v5325 = vadd.f32 %v4867, %v5197
        %v5326 = vadd.f32 %v4868, %v5198
        %v5327 = vadd.f32 %v4869, %v5199
        %v5328 = vadd.f32 %v4870, %v5200
        %v5329 = vadd.f32 %v4871, %v5201
        %v5330 = vadd.f32 %v4872, %v5202
        %v5331 = vadd.f32 %v4873, %v5203
        %v5332 = vadd.f32 %v4874, %v5204
        %v5333 = vadd.f32 %v4875, %v5205
        %v5334 = vadd.f32 %v4876, %v5206
        %v5335 = vadd.f32 %v4877, %v5207
        %v5336 = vadd.f32 %v4878, %v5208
        %v5337 = vadd.f32 %v4879, %v5209
        %v5338 = vadd.f32 %v4880, %v5210
        %v5339 = vadd.f32 %v4881, %v5211
        %v5340 = vadd.f32 %v4882, %v5212
        %v5341 = vadd.f32 %v4883, %v5213
        %v5342 = vadd.f32 %v4884, %v5214
        %v5343 = vadd.f32 %v4885, %v5215
        %v5344 = vadd.f32 %v4886, %v5216
        %v5345 = vadd.f32 %v4887, %v5217
        %v5346 = vadd.f32 %v4888, %v5218
        %v5347 = vadd.f32 %v4889, %v5219
        %v5348 = vadd.f32 %v4890, %v5220
        %v5349 = vadd.f32 %v4891, %v5221
        %v5350 = vadd.f32 %v4892, %v5222
        %v5351 = vadd.f32 %v4893, %v5223
        %v5352 = vadd.f32 %v4894, %v5224
        %v5353 = vadd.f32 %v4895, %v5225
        %v5354 = vadd.f32 %v4896, %v5226
        %v5355 = vadd.f32 %v4897, %v5227
        %v5356 = vadd.f32 %v4898, %v5228
        %v5357 = vadd.f32 %v4899, %v5229
        %v5358 = vadd.f32 %v4900, %v5230
        %v5359 = vadd.f32 %v4901, %v5231
        %v5360 = vadd.f32 %v4902, %v5232
        %v5361 = vadd.f32 %v4903, %v5233
        %v5362 = vadd.f32 %v4904, %v5234
        %v5363 = vadd.f32 %v4905, %v5235
        %v5364 = vadd.f32 %v4906, %v5236
        %v5365 = vadd.f32 %v4907, %v5237
        %v5366 = vadd.f32 %v4908, %v5238
        %v5367 = vadd.f32 %v4909, %v5239
        %v5368 = vadd.f32 %v4910, %v5240
        %v5369 = vadd.f32 %v4911, %v5241
        %v5370 = vadd.f32 %v4912, %v5242
        %v5371 = vadd.f32 %v4913, %v5243
        %v5372 = vadd.f32 %v4914, %v5244
        %v5373 = vadd.f32 %v4915, %v5245
        %v5374 = vadd.f32 %v4916, %v5246
        %v5375 = vadd.f32 %v4917, %v5247
        %v5376 = vadd.f32 %v4918, %v5248
        %v5377 = vadd.f32 %v4919, %v5249
        %v5378 = vadd.f32 %v4920, %v5250
        %v5379 = vadd.f32 %v4921, %v5251
        %v5380 = vadd.f32 %v4922, %v5252
        %v5381 = vadd.f32 %v4923, %v5253
        %v5382 = vadd.f32 %v4924, %v5254
        %v5383 = vadd.f32 %v4925, %v5255
        %v5384 = vadd.f32 %v4926, %v5256
        %v5385 = vadd.f32 %v4927, %v5257
        %v5386 = vadd.f32 %v4928, %v5258
        %v5387 = vadd.f32 %v4929, %v5259
        %v5388 = vadd.f32 %v4930, %v5260
        %v5389 = vadd.f32 %v4931, %v5261
        %v5390 = vadd.f32 %v4932, %v5262
        %v5391 = vadd.f32 %v4933, %v5263
        %v5392 = vadd.f32 %v4934, %v5264
        %v5393 = vadd.f32 %v4935, %v5265
        %v5394 = vadd.f32 %v4936, %v5266
        %v5395 = vadd.f32 %v4937, %v5267
        %v5396 = vadd.f32 %v4938, %v5268
        %v5397 = vadd.f32 %v4939, %v5269
        %v5398 = vadd.f32 %v4940, %v5270
        %v5399 = vadd.f32 %v4941, %v5271
        %v5400 = vadd.f32 %v4942, %v5272
        %v5401 = vadd.f32 %v4943, %v5273
        %v5402 = vadd.f32 %v4944, %v5274
        %v5403 = vadd.f32 %v4945, %v5275
        %v5404 = vadd.f32 %v4946, %v5276
        %v5405 = vadd.f32 %v4947, %v5277
        %v5406 = vadd.f32 %v4948, %v5278
        %v5407 = vadd.f32 %v4949, %v5279
        %v5408 = vadd.f32 %v4950, %v5280
        %v5409 = vadd.f32 %v4951, %v5281
        %v5410 = vadd.f32 %v4952, %v5282
        %v5411 = vadd.f32 %v4953, %v5283
        %v5412 = vadd.f32 %v4954, %v5284
        %v5413 = vadd.f32 %v4955, %v5285
        %v5414 = vadd.f32 %v4956, %v5286
        %v5415 = vadd.f32 %v4957, %v5287
        %v5416 = vadd.f32 %v4958, %v5288
        %v5417 = vadd.f32 %v4959, %v5289
        %v5418 = vadd.f32 %v4960, %v5290
        %v5419 = vadd.f32 %v4961, %v5291
        %v5420 = vadd.f32 %v4962, %v5292
        %v5421 = vadd.f32 %v4963, %v5293
        %v5422 = vadd.f32 %v4964, %v5294
        %v5423 = vadd.f32 %v4965, %v5295
        %v5424 = vadd.f32 %v4966, %v5296
        %v5425 = vmul.f32 %v2573, %v3576
        %v5426 = vmul.f32 %v2574, %v3578
        %v5427 = vadd.s32 %v2594, %v3584
        %v5428 = vadd.s32 %v2596, %v3586
        %v5429 = vmul.f32 %v5425, %v2638
        %v5430 = vmul.f32 %v5426, %v2640
        %v5431 = vadd.s32 %v5427, %v2646
        %v5432 = vadd.s32 %v5428, %v2648
        %v5433 = vlaneseq
        %v5434 = vshrl.u32 %v5433, 7
        %v5435 = vsub.s32 0, %v5434
        %v5436 = vrot.slane %v5431, %v5435
        %v5437 = vlaneseq
        %v5438 = vshrl.u32 %v5437, 7
        %v5439 = vsub.s32 4, %v5438
        %v5440 = vrot.slane %v5431, %v5439
        %v5441 = vlaneseq
        %v5442 = vshrl.u32 %v5441, 7
        %v5443 = vsub.s32 0, %v5442
        %v5444 = vrot.slane %v5432, %v5443
        %v5445 = vlaneseq
        %v5446 = vshrl.u32 %v5445, 7
        %v5447 = vsub.s32 4, %v5446
        %v5448 = vrot.slane %v5432, %v5447
        %v5449 = vlaneseq
        %v5450 = vshrl.u32 %v5449, 7
        %v5451 = vsub.s32 0, %v5450
        %v5452 = vrot.slane %v5436, %v5451
        %v5453 = vlaneseq
        %v5454 = vshrl.u32 %v5453, 7
        %v5455 = vsub.s32 0, %v5454
        %v5456 = vrot.slane %v5440, %v5455
        %v5457 = vlaneseq
        %v5458 = vshrl.u32 %v5457, 7
        %v5459 = vsub.s32 0, %v5458
        %v5460 = vrot.slane %v5444, %v5459
        %v5461 = vlaneseq
        %v5462 = vshrl.u32 %v5461, 7
        %v5463 = vsub.s32 0, %v5462
        %v5464 = vrot.slane %v5448, %v5463
        %vm5465 = vcmp.eq.s32.totalorder %v216, %v5452
        %vm5466 = vcmp.eq.s32.totalorder %v216, %v5456
        %vm5467 = vcmp.eq.s32.totalorder %v216, %v5460
        %vm5468 = vcmp.eq.s32.totalorder %v216, %v5464
        %vm5469 = vcmp.eq.s32.totalorder %v217, %v5452
        %vm5470 = vcmp.eq.s32.totalorder %v217, %v5456
        %vm5471 = vcmp.eq.s32.totalorder %v217, %v5460
        %vm5472 = vcmp.eq.s32.totalorder %v217, %v5464
        %vm5473 = vcmp.eq.s32.totalorder %v218, %v5452
        %vm5474 = vcmp.eq.s32.totalorder %v218, %v5456
        %vm5475 = vcmp.eq.s32.totalorder %v218, %v5460
        %vm5476 = vcmp.eq.s32.totalorder %v218, %v5464
        %vm5477 = vcmp.eq.s32.totalorder %v219, %v5452
        %vm5478 = vcmp.eq.s32.totalorder %v219, %v5456
        %vm5479 = vcmp.eq.s32.totalorder %v219, %v5460
        %vm5480 = vcmp.eq.s32.totalorder %v219, %v5464
        %vm5481 = vcmp.eq.s32.totalorder %v220, %v5452
        %vm5482 = vcmp.eq.s32.totalorder %v220, %v5456
        %vm5483 = vcmp.eq.s32.totalorder %v220, %v5460
        %vm5484 = vcmp.eq.s32.totalorder %v220, %v5464
        %vm5485 = vcmp.eq.s32.totalorder %v221, %v5452
        %vm5486 = vcmp.eq.s32.totalorder %v221, %v5456
        %vm5487 = vcmp.eq.s32.totalorder %v221, %v5460
        %vm5488 = vcmp.eq.s32.totalorder %v221, %v5464
        %vm5489 = vcmp.eq.s32.totalorder %v222, %v5452
        %vm5490 = vcmp.eq.s32.totalorder %v222, %v5456
        %vm5491 = vcmp.eq.s32.totalorder %v222, %v5460
        %vm5492 = vcmp.eq.s32.totalorder %v222, %v5464
        %vm5493 = vcmp.eq.s32.totalorder %v223, %v5452
        %vm5494 = vcmp.eq.s32.totalorder %v223, %v5456
        %vm5495 = vcmp.eq.s32.totalorder %v223, %v5460
        %vm5496 = vcmp.eq.s32.totalorder %v223, %v5464
        %vm5497 = vcmp.eq.s32.totalorder %v224, %v5452
        %vm5498 = vcmp.eq.s32.totalorder %v224, %v5456
        %vm5499 = vcmp.eq.s32.totalorder %v224, %v5460
        %vm5500 = vcmp.eq.s32.totalorder %v224, %v5464
        %vm5501 = vcmp.eq.s32.totalorder %v225, %v5452
        %vm5502 = vcmp.eq.s32.totalorder %v225, %v5456
        %vm5503 = vcmp.eq.s32.totalorder %v225, %v5460
        %vm5504 = vcmp.eq.s32.totalorder %v225, %v5464
        %vm5505 = vcmp.eq.s32.totalorder %v226, %v5452
        %vm5506 = vcmp.eq.s32.totalorder %v226, %v5456
        %vm5507 = vcmp.eq.s32.totalorder %v226, %v5460
        %vm5508 = vcmp.eq.s32.totalorder %v226, %v5464
        %vm5509 = vcmp.eq.s32.totalorder %v227, %v5452
        %vm5510 = vcmp.eq.s32.totalorder %v227, %v5456
        %vm5511 = vcmp.eq.s32.totalorder %v227, %v5460
        %vm5512 = vcmp.eq.s32.totalorder %v227, %v5464
        %vm5513 = vcmp.eq.s32.totalorder %v228, %v5452
        %vm5514 = vcmp.eq.s32.totalorder %v228, %v5456
        %vm5515 = vcmp.eq.s32.totalorder %v228, %v5460
        %vm5516 = vcmp.eq.s32.totalorder %v228, %v5464
        %vm5517 = vcmp.eq.s32.totalorder %v229, %v5452
        %vm5518 = vcmp.eq.s32.totalorder %v229, %v5456
        %vm5519 = vcmp.eq.s32.totalorder %v229, %v5460
        %vm5520 = vcmp.eq.s32.totalorder %v229, %v5464
        %vm5521 = vcmp.eq.s32.totalorder %v230, %v5452
        %vm5522 = vcmp.eq.s32.totalorder %v230, %v5456
        %vm5523 = vcmp.eq.s32.totalorder %v230, %v5460
        %vm5524 = vcmp.eq.s32.totalorder %v230, %v5464
        %vm5525 = vcmp.eq.s32.totalorder %v231, %v5452
        %vm5526 = vcmp.eq.s32.totalorder %v231, %v5456
        %vm5527 = vcmp.eq.s32.totalorder %v231, %v5460
        %vm5528 = vcmp.eq.s32.totalorder %v231, %v5464
        %vm5529 = vcmp.eq.s32.totalorder %v2605, %v5452
        %vm5530 = vcmp.eq.s32.totalorder %v2605, %v5456
        %vm5531 = vcmp.eq.s32.totalorder %v2605, %v5460
        %vm5532 = vcmp.eq.s32.totalorder %v2605, %v5464
        %vm5533 = vcmp.eq.s32.totalorder %v2606, %v5452
        %vm5534 = vcmp.eq.s32.totalorder %v2606, %v5456
        %vm5535 = vcmp.eq.s32.totalorder %v2606, %v5460
        %vm5536 = vcmp.eq.s32.totalorder %v2606, %v5464
        %vm5537 = vcmp.eq.s32.totalorder %v2607, %v5452
        %vm5538 = vcmp.eq.s32.totalorder %v2607, %v5456
        %vm5539 = vcmp.eq.s32.totalorder %v2607, %v5460
        %vm5540 = vcmp.eq.s32.totalorder %v2607, %v5464
        %vm5541 = vcmp.eq.s32.totalorder %v2608, %v5452
        %vm5542 = vcmp.eq.s32.totalorder %v2608, %v5456
        %vm5543 = vcmp.eq.s32.totalorder %v2608, %v5460
        %vm5544 = vcmp.eq.s32.totalorder %v2608, %v5464
        %vm5545 = vcmp.eq.s32.totalorder %v2609, %v5452
        %vm5546 = vcmp.eq.s32.totalorder %v2609, %v5456
        %vm5547 = vcmp.eq.s32.totalorder %v2609, %v5460
        %vm5548 = vcmp.eq.s32.totalorder %v2609, %v5464
        %vm5549 = vcmp.eq.s32.totalorder %v2610, %v5452
        %vm5550 = vcmp.eq.s32.totalorder %v2610, %v5456
        %vm5551 = vcmp.eq.s32.totalorder %v2610, %v5460
        %vm5552 = vcmp.eq.s32.totalorder %v2610, %v5464
        %vm5553 = vcmp.eq.s32.totalorder %v2611, %v5452
        %vm5554 = vcmp.eq.s32.totalorder %v2611, %v5456
        %vm5555 = vcmp.eq.s32.totalorder %v2611, %v5460
        %vm5556 = vcmp.eq.s32.totalorder %v2611, %v5464
        %vm5557 = vcmp.eq.s32.totalorder %v2612, %v5452
        %vm5558 = vcmp.eq.s32.totalorder %v2612, %v5456
        %vm5559 = vcmp.eq.s32.totalorder %v2612, %v5460
        %vm5560 = vcmp.eq.s32.totalorder %v2612, %v5464
        %vm5561 = vcmp.eq.s32.totalorder %v2613, %v5452
        %vm5562 = vcmp.eq.s32.totalorder %v2613, %v5456
        %vm5563 = vcmp.eq.s32.totalorder %v2613, %v5460
        %vm5564 = vcmp.eq.s32.totalorder %v2613, %v5464
        %vm5565 = vcmp.eq.s32.totalorder %v2614, %v5452
        %vm5566 = vcmp.eq.s32.totalorder %v2614, %v5456
        %vm5567 = vcmp.eq.s32.totalorder %v2614, %v5460
        %vm5568 = vcmp.eq.s32.totalorder %v2614, %v5464
        %vm5569 = vcmp.eq.s32.totalorder %v2615, %v5452
        %vm5570 = vcmp.eq.s32.totalorder %v2615, %v5456
        %vm5571 = vcmp.eq.s32.totalorder %v2615, %v5460
        %vm5572 = vcmp.eq.s32.totalorder %v2615, %v5464
        %vm5573 = vcmp.eq.s32.totalorder %v2616, %v5452
        %vm5574 = vcmp.eq.s32.totalorder %v2616, %v5456
        %vm5575 = vcmp.eq.s32.totalorder %v2616, %v5460
        %vm5576 = vcmp.eq.s32.totalorder %v2616, %v5464
        %vm5577 = vcmp.eq.s32.totalorder %v2617, %v5452
        %vm5578 = vcmp.eq.s32.totalorder %v2617, %v5456
        %vm5579 = vcmp.eq.s32.totalorder %v2617, %v5460
        %vm5580 = vcmp.eq.s32.totalorder %v2617, %v5464
        %vm5581 = vcmp.eq.s32.totalorder %v2618, %v5452
        %vm5582 = vcmp.eq.s32.totalorder %v2618, %v5456
        %vm5583 = vcmp.eq.s32.totalorder %v2618, %v5460
        %vm5584 = vcmp.eq.s32.totalorder %v2618, %v5464
        %vm5585 = vcmp.eq.s32.totalorder %v2619, %v5452
        %vm5586 = vcmp.eq.s32.totalorder %v2619, %v5456
        %vm5587 = vcmp.eq.s32.totalorder %v2619, %v5460
        %vm5588 = vcmp.eq.s32.totalorder %v2619, %v5464
        %vm5589 = vcmp.eq.s32.totalorder %v2620, %v5452
        %vm5590 = vcmp.eq.s32.totalorder %v2620, %v5456
        %vm5591 = vcmp.eq.s32.totalorder %v2620, %v5460
        %vm5592 = vcmp.eq.s32.totalorder %v2620, %v5464
        %v5595 = vlaneseq
        %v5596 = vshrl.u32 %v5595, 7
        %v5597 = vsub.s32 0, %v5596
        %v5598 = vrot.slane %v5429, %v5597
        %v5599 = vlaneseq
        %v5600 = vshrl.u32 %v5599, 7
        %v5601 = vsub.s32 4, %v5600
        %v5602 = vrot.slane %v5429, %v5601
        %v5603 = vlaneseq
        %v5604 = vshrl.u32 %v5603, 7
        %v5605 = vsub.s32 0, %v5604
        %v5606 = vrot.slane %v5430, %v5605
        %v5607 = vlaneseq
        %v5608 = vshrl.u32 %v5607, 7
        %v5609 = vsub.s32 4, %v5608
        %v5610 = vrot.slane %v5430, %v5609
        %v5615 = vlaneseq
        %v5616 = vshrl.u32 %v5615, 7
        %v5617 = vsub.s32 0, %v5616
        %v5618 = vrot.slane %v5598, %v5617
        %v5619 = vlaneseq
        %v5620 = vshrl.u32 %v5619, 7
        %v5621 = vsub.s32 0, %v5620
        %v5622 = vrot.slane %v5602, %v5621
        %v5623 = vlaneseq
        %v5624 = vshrl.u32 %v5623, 7
        %v5625 = vsub.s32 0, %v5624
        %v5626 = vrot.slane %v5606, %v5625
        %v5627 = vlaneseq
        %v5628 = vshrl.u32 %v5627, 7
        %v5629 = vsub.s32 0, %v5628
        %v5630 = vrot.slane %v5610, %v5629
        %v5631 = vsel %vm5465, %v5618, 0.0
        %v5632 = vsel %vm5466, %v5622, 0.0
        %v5633 = vsel %vm5467, %v5626, 0.0
        %v5634 = vsel %vm5468, %v5630, 0.0
        %v5635 = vsel %vm5469, %v5618, 0.0
        %v5636 = vsel %vm5470, %v5622, 0.0
        %v5637 = vsel %vm5471, %v5626, 0.0
        %v5638 = vsel %vm5472, %v5630, 0.0
        %v5639 = vsel %vm5473, %v5618, 0.0
        %v5640 = vsel %vm5474, %v5622, 0.0
        %v5641 = vsel %vm5475, %v5626, 0.0
        %v5642 = vsel %vm5476, %v5630, 0.0
        %v5643 = vsel %vm5477, %v5618, 0.0
        %v5644 = vsel %vm5478, %v5622, 0.0
        %v5645 = vsel %vm5479, %v5626, 0.0
        %v5646 = vsel %vm5480, %v5630, 0.0
        %v5647 = vsel %vm5481, %v5618, 0.0
        %v5648 = vsel %vm5482, %v5622, 0.0
        %v5649 = vsel %vm5483, %v5626, 0.0
        %v5650 = vsel %vm5484, %v5630, 0.0
        %v5651 = vsel %vm5485, %v5618, 0.0
        %v5652 = vsel %vm5486, %v5622, 0.0
        %v5653 = vsel %vm5487, %v5626, 0.0
        %v5654 = vsel %vm5488, %v5630, 0.0
        %v5655 = vsel %vm5489, %v5618, 0.0
        %v5656 = vsel %vm5490, %v5622, 0.0
        %v5657 = vsel %vm5491, %v5626, 0.0
        %v5658 = vsel %vm5492, %v5630, 0.0
        %v5659 = vsel %vm5493, %v5618, 0.0
        %v5660 = vsel %vm5494, %v5622, 0.0
        %v5661 = vsel %vm5495, %v5626, 0.0
        %v5662 = vsel %vm5496, %v5630, 0.0
        %v5663 = vsel %vm5497, %v5618, 0.0
        %v5664 = vsel %vm5498, %v5622, 0.0
        %v5665 = vsel %vm5499, %v5626, 0.0
        %v5666 = vsel %vm5500, %v5630, 0.0
        %v5667 = vsel %vm5501, %v5618, 0.0
        %v5668 = vsel %vm5502, %v5622, 0.0
        %v5669 = vsel %vm5503, %v5626, 0.0
        %v5670 = vsel %vm5504, %v5630, 0.0
        %v5671 = vsel %vm5505, %v5618, 0.0
        %v5672 = vsel %vm5506, %v5622, 0.0
        %v5673 = vsel %vm5507, %v5626, 0.0
        %v5674 = vsel %vm5508, %v5630, 0.0
        %v5675 = vsel %vm5509, %v5618, 0.0
        %v5676 = vsel %vm5510, %v5622, 0.0
        %v5677 = vsel %vm5511, %v5626, 0.0
        %v5678 = vsel %vm5512, %v5630, 0.0
        %v5679 = vsel %vm5513, %v5618, 0.0
        %v5680 = vsel %vm5514, %v5622, 0.0
        %v5681 = vsel %vm5515, %v5626, 0.0
        %v5682 = vsel %vm5516, %v5630, 0.0
        %v5683 = vsel %vm5517, %v5618, 0.0
        %v5684 = vsel %vm5518, %v5622, 0.0
        %v5685 = vsel %vm5519, %v5626, 0.0
        %v5686 = vsel %vm5520, %v5630, 0.0
        %v5687 = vsel %vm5521, %v5618, 0.0
        %v5688 = vsel %vm5522, %v5622, 0.0
        %v5689 = vsel %vm5523, %v5626, 0.0
        %v5690 = vsel %vm5524, %v5630, 0.0
        %v5691 = vsel %vm5525, %v5618, 0.0
        %v5692 = vsel %vm5526, %v5622, 0.0
        %v5693 = vsel %vm5527, %v5626, 0.0
        %v5694 = vsel %vm5528, %v5630, 0.0
        %v5695 = vsel %vm5529, %v5618, 0.0
        %v5696 = vsel %vm5530, %v5622, 0.0
        %v5697 = vsel %vm5531, %v5626, 0.0
        %v5698 = vsel %vm5532, %v5630, 0.0
        %v5699 = vsel %vm5533, %v5618, 0.0
        %v5700 = vsel %vm5534, %v5622, 0.0
        %v5701 = vsel %vm5535, %v5626, 0.0
        %v5702 = vsel %vm5536, %v5630, 0.0
        %v5703 = vsel %vm5537, %v5618, 0.0
        %v5704 = vsel %vm5538, %v5622, 0.0
        %v5705 = vsel %vm5539, %v5626, 0.0
        %v5706 = vsel %vm5540, %v5630, 0.0
        %v5707 = vsel %vm5541, %v5618, 0.0
        %v5708 = vsel %vm5542, %v5622, 0.0
        %v5709 = vsel %vm5543, %v5626, 0.0
        %v5710 = vsel %vm5544, %v5630, 0.0
        %v5711 = vsel %vm5545, %v5618, 0.0
        %v5712 = vsel %vm5546, %v5622, 0.0
        %v5713 = vsel %vm5547, %v5626, 0.0
        %v5714 = vsel %vm5548, %v5630, 0.0
        %v5715 = vsel %vm5549, %v5618, 0.0
        %v5716 = vsel %vm5550, %v5622, 0.0
        %v5717 = vsel %vm5551, %v5626, 0.0
        %v5718 = vsel %vm5552, %v5630, 0.0
        %v5719 = vsel %vm5553, %v5618, 0.0
        %v5720 = vsel %vm5554, %v5622, 0.0
        %v5721 = vsel %vm5555, %v5626, 0.0
        %v5722 = vsel %vm5556, %v5630, 0.0
        %v5723 = vsel %vm5557, %v5618, 0.0
        %v5724 = vsel %vm5558, %v5622, 0.0
        %v5725 = vsel %vm5559, %v5626, 0.0
        %v5726 = vsel %vm5560, %v5630, 0.0
        %v5727 = vsel %vm5561, %v5618, 0.0
        %v5728 = vsel %vm5562, %v5622, 0.0
        %v5729 = vsel %vm5563, %v5626, 0.0
        %v5730 = vsel %vm5564, %v5630, 0.0
        %v5731 = vsel %vm5565, %v5618, 0.0
        %v5732 = vsel %vm5566, %v5622, 0.0
        %v5733 = vsel %vm5567, %v5626, 0.0
        %v5734 = vsel %vm5568, %v5630, 0.0
        %v5735 = vsel %vm5569, %v5618, 0.0
        %v5736 = vsel %vm5570, %v5622, 0.0
        %v5737 = vsel %vm5571, %v5626, 0.0
        %v5738 = vsel %vm5572, %v5630, 0.0
        %v5739 = vsel %vm5573, %v5618, 0.0
        %v5740 = vsel %vm5574, %v5622, 0.0
        %v5741 = vsel %vm5575, %v5626, 0.0
        %v5742 = vsel %vm5576, %v5630, 0.0
        %v5743 = vsel %vm5577, %v5618, 0.0
        %v5744 = vsel %vm5578, %v5622, 0.0
        %v5745 = vsel %vm5579, %v5626, 0.0
        %v5746 = vsel %vm5580, %v5630, 0.0
        %v5747 = vsel %vm5581, %v5618, 0.0
        %v5748 = vsel %vm5582, %v5622, 0.0
        %v5749 = vsel %vm5583, %v5626, 0.0
        %v5750 = vsel %vm5584, %v5630, 0.0
        %v5751 = vsel %vm5585, %v5618, 0.0
        %v5752 = vsel %vm5586, %v5622, 0.0
        %v5753 = vsel %vm5587, %v5626, 0.0
        %v5754 = vsel %vm5588, %v5630, 0.0
        %v5755 = vsel %vm5589, %v5618, 0.0
        %v5756 = vsel %vm5590, %v5622, 0.0
        %v5757 = vsel %vm5591, %v5626, 0.0
        %v5758 = vsel %vm5592, %v5630, 0.0
        %v5759 = vadd.f32 %v5297, %v5631
        %v5760 = vadd.f32 %v5298, %v5632
        %v5761 = vadd.f32 %v5299, %v5633
        %v5762 = vadd.f32 %v5300, %v5634
        %v5763 = vadd.f32 %v5301, %v5635
        %v5764 = vadd.f32 %v5302, %v5636
        %v5765 = vadd.f32 %v5303, %v5637
        %v5766 = vadd.f32 %v5304, %v5638
        %v5767 = vadd.f32 %v5305, %v5639
        %v5768 = vadd.f32 %v5306, %v5640
        %v5769 = vadd.f32 %v5307, %v5641
        %v5770 = vadd.f32 %v5308, %v5642
        %v5771 = vadd.f32 %v5309, %v5643
        %v5772 = vadd.f32 %v5310, %v5644
        %v5773 = vadd.f32 %v5311, %v5645
        %v5774 = vadd.f32 %v5312, %v5646
        %v5775 = vadd.f32 %v5313, %v5647
        %v5776 = vadd.f32 %v5314, %v5648
        %v5777 = vadd.f32 %v5315, %v5649
        %v5778 = vadd.f32 %v5316, %v5650
        %v5779 = vadd.f32 %v5317, %v5651
        %v5780 = vadd.f32 %v5318, %v5652
        %v5781 = vadd.f32 %v5319, %v5653
        %v5782 = vadd.f32 %v5320, %v5654
        %v5783 = vadd.f32 %v5321, %v5655
        %v5784 = vadd.f32 %v5322, %v5656
        %v5785 = vadd.f32 %v5323, %v5657
        %v5786 = vadd.f32 %v5324, %v5658
        %v5787 = vadd.f32 %v5325, %v5659
        %v5788 = vadd.f32 %v5326, %v5660
        %v5789 = vadd.f32 %v5327, %v5661
        %v5790 = vadd.f32 %v5328, %v5662
        %v5791 = vadd.f32 %v5329, %v5663
        %v5792 = vadd.f32 %v5330, %v5664
        %v5793 = vadd.f32 %v5331, %v5665
        %v5794 = vadd.f32 %v5332, %v5666
        %v5795 = vadd.f32 %v5333, %v5667
        %v5796 = vadd.f32 %v5334, %v5668
        %v5797 = vadd.f32 %v5335, %v5669
        %v5798 = vadd.f32 %v5336, %v5670
        %v5799 = vadd.f32 %v5337, %v5671
        %v5800 = vadd.f32 %v5338, %v5672
        %v5801 = vadd.f32 %v5339, %v5673
        %v5802 = vadd.f32 %v5340, %v5674
        %v5803 = vadd.f32 %v5341, %v5675
        %v5804 = vadd.f32 %v5342, %v5676
        %v5805 = vadd.f32 %v5343, %v5677
        %v5806 = vadd.f32 %v5344, %v5678
        %v5807 = vadd.f32 %v5345, %v5679
        %v5808 = vadd.f32 %v5346, %v5680
        %v5809 = vadd.f32 %v5347, %v5681
        %v5810 = vadd.f32 %v5348, %v5682
        %v5811 = vadd.f32 %v5349, %v5683
        %v5812 = vadd.f32 %v5350, %v5684
        %v5813 = vadd.f32 %v5351, %v5685
        %v5814 = vadd.f32 %v5352, %v5686
        %v5815 = vadd.f32 %v5353, %v5687
        %v5816 = vadd.f32 %v5354, %v5688
        %v5817 = vadd.f32 %v5355, %v5689
        %v5818 = vadd.f32 %v5356, %v5690
        %v5819 = vadd.f32 %v5357, %v5691
        %v5820 = vadd.f32 %v5358, %v5692
        %v5821 = vadd.f32 %v5359, %v5693
        %v5822 = vadd.f32 %v5360, %v5694
        %v5823 = vadd.f32 %v5361, %v5695
        %v5824 = vadd.f32 %v5362, %v5696
        %v5825 = vadd.f32 %v5363, %v5697
        %v5826 = vadd.f32 %v5364, %v5698
        %v5827 = vadd.f32 %v5365, %v5699
        %v5828 = vadd.f32 %v5366, %v5700
        %v5829 = vadd.f32 %v5367, %v5701
        %v5830 = vadd.f32 %v5368, %v5702
        %v5831 = vadd.f32 %v5369, %v5703
        %v5832 = vadd.f32 %v5370, %v5704
        %v5833 = vadd.f32 %v5371, %v5705
        %v5834 = vadd.f32 %v5372, %v5706
        %v5835 = vadd.f32 %v5373, %v5707
        %v5836 = vadd.f32 %v5374, %v5708
        %v5837 = vadd.f32 %v5375, %v5709
        %v5838 = vadd.f32 %v5376, %v5710
        %v5839 = vadd.f32 %v5377, %v5711
        %v5840 = vadd.f32 %v5378, %v5712
        %v5841 = vadd.f32 %v5379, %v5713
        %v5842 = vadd.f32 %v5380, %v5714
        %v5843 = vadd.f32 %v5381, %v5715
        %v5844 = vadd.f32 %v5382, %v5716
        %v5845 = vadd.f32 %v5383, %v5717
        %v5846 = vadd.f32 %v5384, %v5718
        %v5847 = vadd.f32 %v5385, %v5719
        %v5848 = vadd.f32 %v5386, %v5720
        %v5849 = vadd.f32 %v5387, %v5721
        %v5850 = vadd.f32 %v5388, %v5722
        %v5851 = vadd.f32 %v5389, %v5723
        %v5852 = vadd.f32 %v5390, %v5724
        %v5853 = vadd.f32 %v5391, %v5725
        %v5854 = vadd.f32 %v5392, %v5726
        %v5855 = vadd.f32 %v5393, %v5727
        %v5856 = vadd.f32 %v5394, %v5728
        %v5857 = vadd.f32 %v5395, %v5729
        %v5858 = vadd.f32 %v5396, %v5730
        %v5859 = vadd.f32 %v5397, %v5731
        %v5860 = vadd.f32 %v5398, %v5732
        %v5861 = vadd.f32 %v5399, %v5733
        %v5862 = vadd.f32 %v5400, %v5734
        %v5863 = vadd.f32 %v5401, %v5735
        %v5864 = vadd.f32 %v5402, %v5736
        %v5865 = vadd.f32 %v5403, %v5737
        %v5866 = vadd.f32 %v5404, %v5738
        %v5867 = vadd.f32 %v5405, %v5739
        %v5868 = vadd.f32 %v5406, %v5740
        %v5869 = vadd.f32 %v5407, %v5741
        %v5870 = vadd.f32 %v5408, %v5742
        %v5871 = vadd.f32 %v5409, %v5743
        %v5872 = vadd.f32 %v5410, %v5744
        %v5873 = vadd.f32 %v5411, %v5745
        %v5874 = vadd.f32 %v5412, %v5746
        %v5875 = vadd.f32 %v5413, %v5747
        %v5876 = vadd.f32 %v5414, %v5748
        %v5877 = vadd.f32 %v5415, %v5749
        %v5878 = vadd.f32 %v5416, %v5750
        %v5879 = vadd.f32 %v5417, %v5751
        %v5880 = vadd.f32 %v5418, %v5752
        %v5881 = vadd.f32 %v5419, %v5753
        %v5882 = vadd.f32 %v5420, %v5754
        %v5883 = vadd.f32 %v5421, %v5755
        %v5884 = vadd.f32 %v5422, %v5756
        %v5885 = vadd.f32 %v5423, %v5757
        %v5886 = vadd.f32 %v5424, %v5758
        %v5887 = vmul.f32 %v5425, %v3108
        %v5888 = vmul.f32 %v5426, %v3110
        %v5889 = vadd.s32 %v5427, %v3116
        %v5890 = vadd.s32 %v5428, %v3118
        %v5891 = vlaneseq
        %v5892 = vshrl.u32 %v5891, 7
        %v5893 = vsub.s32 0, %v5892
        %v5894 = vrot.slane %v5889, %v5893
        %v5895 = vlaneseq
        %v5896 = vshrl.u32 %v5895, 7
        %v5897 = vsub.s32 4, %v5896
        %v5898 = vrot.slane %v5889, %v5897
        %v5899 = vlaneseq
        %v5900 = vshrl.u32 %v5899, 7
        %v5901 = vsub.s32 0, %v5900
        %v5902 = vrot.slane %v5890, %v5901
        %v5903 = vlaneseq
        %v5904 = vshrl.u32 %v5903, 7
        %v5905 = vsub.s32 4, %v5904
        %v5906 = vrot.slane %v5890, %v5905
        %v5907 = vlaneseq
        %v5908 = vshrl.u32 %v5907, 7
        %v5909 = vsub.s32 0, %v5908
        %v5910 = vrot.slane %v5894, %v5909
        %v5911 = vlaneseq
        %v5912 = vshrl.u32 %v5911, 7
        %v5913 = vsub.s32 0, %v5912
        %v5914 = vrot.slane %v5898, %v5913
        %v5915 = vlaneseq
        %v5916 = vshrl.u32 %v5915, 7
        %v5917 = vsub.s32 0, %v5916
        %v5918 = vrot.slane %v5902, %v5917
        %v5919 = vlaneseq
        %v5920 = vshrl.u32 %v5919, 7
        %v5921 = vsub.s32 0, %v5920
        %v5922 = vrot.slane %v5906, %v5921
        %vm5923 = vcmp.eq.s32.totalorder %v216, %v5910
        %vm5924 = vcmp.eq.s32.totalorder %v216, %v5914
        %vm5925 = vcmp.eq.s32.totalorder %v216, %v5918
        %vm5926 = vcmp.eq.s32.totalorder %v216, %v5922
        %vm5927 = vcmp.eq.s32.totalorder %v217, %v5910
        %vm5928 = vcmp.eq.s32.totalorder %v217, %v5914
        %vm5929 = vcmp.eq.s32.totalorder %v217, %v5918
        %vm5930 = vcmp.eq.s32.totalorder %v217, %v5922
        %vm5931 = vcmp.eq.s32.totalorder %v218, %v5910
        %vm5932 = vcmp.eq.s32.totalorder %v218, %v5914
        %vm5933 = vcmp.eq.s32.totalorder %v218, %v5918
        %vm5934 = vcmp.eq.s32.totalorder %v218, %v5922
        %vm5935 = vcmp.eq.s32.totalorder %v219, %v5910
        %vm5936 = vcmp.eq.s32.totalorder %v219, %v5914
        %vm5937 = vcmp.eq.s32.totalorder %v219, %v5918
        %vm5938 = vcmp.eq.s32.totalorder %v219, %v5922
        %vm5939 = vcmp.eq.s32.totalorder %v220, %v5910
        %vm5940 = vcmp.eq.s32.totalorder %v220, %v5914
        %vm5941 = vcmp.eq.s32.totalorder %v220, %v5918
        %vm5942 = vcmp.eq.s32.totalorder %v220, %v5922
        %vm5943 = vcmp.eq.s32.totalorder %v221, %v5910
        %vm5944 = vcmp.eq.s32.totalorder %v221, %v5914
        %vm5945 = vcmp.eq.s32.totalorder %v221, %v5918
        %vm5946 = vcmp.eq.s32.totalorder %v221, %v5922
        %vm5947 = vcmp.eq.s32.totalorder %v222, %v5910
        %vm5948 = vcmp.eq.s32.totalorder %v222, %v5914
        %vm5949 = vcmp.eq.s32.totalorder %v222, %v5918
        %vm5950 = vcmp.eq.s32.totalorder %v222, %v5922
        %vm5951 = vcmp.eq.s32.totalorder %v223, %v5910
        %vm5952 = vcmp.eq.s32.totalorder %v223, %v5914
        %vm5953 = vcmp.eq.s32.totalorder %v223, %v5918
        %vm5954 = vcmp.eq.s32.totalorder %v223, %v5922
        %vm5955 = vcmp.eq.s32.totalorder %v224, %v5910
        %vm5956 = vcmp.eq.s32.totalorder %v224, %v5914
        %vm5957 = vcmp.eq.s32.totalorder %v224, %v5918
        %vm5958 = vcmp.eq.s32.totalorder %v224, %v5922
        %vm5959 = vcmp.eq.s32.totalorder %v225, %v5910
        %vm5960 = vcmp.eq.s32.totalorder %v225, %v5914
        %vm5961 = vcmp.eq.s32.totalorder %v225, %v5918
        %vm5962 = vcmp.eq.s32.totalorder %v225, %v5922
        %vm5963 = vcmp.eq.s32.totalorder %v226, %v5910
        %vm5964 = vcmp.eq.s32.totalorder %v226, %v5914
        %vm5965 = vcmp.eq.s32.totalorder %v226, %v5918
        %vm5966 = vcmp.eq.s32.totalorder %v226, %v5922
        %vm5967 = vcmp.eq.s32.totalorder %v227, %v5910
        %vm5968 = vcmp.eq.s32.totalorder %v227, %v5914
        %vm5969 = vcmp.eq.s32.totalorder %v227, %v5918
        %vm5970 = vcmp.eq.s32.totalorder %v227, %v5922
        %vm5971 = vcmp.eq.s32.totalorder %v228, %v5910
        %vm5972 = vcmp.eq.s32.totalorder %v228, %v5914
        %vm5973 = vcmp.eq.s32.totalorder %v228, %v5918
        %vm5974 = vcmp.eq.s32.totalorder %v228, %v5922
        %vm5975 = vcmp.eq.s32.totalorder %v229, %v5910
        %vm5976 = vcmp.eq.s32.totalorder %v229, %v5914
        %vm5977 = vcmp.eq.s32.totalorder %v229, %v5918
        %vm5978 = vcmp.eq.s32.totalorder %v229, %v5922
        %vm5979 = vcmp.eq.s32.totalorder %v230, %v5910
        %vm5980 = vcmp.eq.s32.totalorder %v230, %v5914
        %vm5981 = vcmp.eq.s32.totalorder %v230, %v5918
        %vm5982 = vcmp.eq.s32.totalorder %v230, %v5922
        %vm5983 = vcmp.eq.s32.totalorder %v231, %v5910
        %vm5984 = vcmp.eq.s32.totalorder %v231, %v5914
        %vm5985 = vcmp.eq.s32.totalorder %v231, %v5918
        %vm5986 = vcmp.eq.s32.totalorder %v231, %v5922
        %vm5987 = vcmp.eq.s32.totalorder %v2605, %v5910
        %vm5988 = vcmp.eq.s32.totalorder %v2605, %v5914
        %vm5989 = vcmp.eq.s32.totalorder %v2605, %v5918
        %vm5990 = vcmp.eq.s32.totalorder %v2605, %v5922
        %vm5991 = vcmp.eq.s32.totalorder %v2606, %v5910
        %vm5992 = vcmp.eq.s32.totalorder %v2606, %v5914
        %vm5993 = vcmp.eq.s32.totalorder %v2606, %v5918
        %vm5994 = vcmp.eq.s32.totalorder %v2606, %v5922
        %vm5995 = vcmp.eq.s32.totalorder %v2607, %v5910
        %vm5996 = vcmp.eq.s32.totalorder %v2607, %v5914
        %vm5997 = vcmp.eq.s32.totalorder %v2607, %v5918
        %vm5998 = vcmp.eq.s32.totalorder %v2607, %v5922
        %vm5999 = vcmp.eq.s32.totalorder %v2608, %v5910
        %vm6000 = vcmp.eq.s32.totalorder %v2608, %v5914
        %vm6001 = vcmp.eq.s32.totalorder %v2608, %v5918
        %vm6002 = vcmp.eq.s32.totalorder %v2608, %v5922
        %vm6003 = vcmp.eq.s32.totalorder %v2609, %v5910
        %vm6004 = vcmp.eq.s32.totalorder %v2609, %v5914
        %vm6005 = vcmp.eq.s32.totalorder %v2609, %v5918
        %vm6006 = vcmp.eq.s32.totalorder %v2609, %v5922
        %vm6007 = vcmp.eq.s32.totalorder %v2610, %v5910
        %vm6008 = vcmp.eq.s32.totalorder %v2610, %v5914
        %vm6009 = vcmp.eq.s32.totalorder %v2610, %v5918
        %vm6010 = vcmp.eq.s32.totalorder %v2610, %v5922
        %vm6011 = vcmp.eq.s32.totalorder %v2611, %v5910
        %vm6012 = vcmp.eq.s32.totalorder %v2611, %v5914
        %vm6013 = vcmp.eq.s32.totalorder %v2611, %v5918
        %vm6014 = vcmp.eq.s32.totalorder %v2611, %v5922
        %vm6015 = vcmp.eq.s32.totalorder %v2612, %v5910
        %vm6016 = vcmp.eq.s32.totalorder %v2612, %v5914
        %vm6017 = vcmp.eq.s32.totalorder %v2612, %v5918
        %vm6018 = vcmp.eq.s32.totalorder %v2612, %v5922
        %vm6019 = vcmp.eq.s32.totalorder %v2613, %v5910
        %vm6020 = vcmp.eq.s32.totalorder %v2613, %v5914
        %vm6021 = vcmp.eq.s32.totalorder %v2613, %v5918
        %vm6022 = vcmp.eq.s32.totalorder %v2613, %v5922
        %vm6023 = vcmp.eq.s32.totalorder %v2614, %v5910
        %vm6024 = vcmp.eq.s32.totalorder %v2614, %v5914
        %vm6025 = vcmp.eq.s32.totalorder %v2614, %v5918
        %vm6026 = vcmp.eq.s32.totalorder %v2614, %v5922
        %vm6027 = vcmp.eq.s32.totalorder %v2615, %v5910
        %vm6028 = vcmp.eq.s32.totalorder %v2615, %v5914
        %vm6029 = vcmp.eq.s32.totalorder %v2615, %v5918
        %vm6030 = vcmp.eq.s32.totalorder %v2615, %v5922
        %vm6031 = vcmp.eq.s32.totalorder %v2616, %v5910
        %vm6032 = vcmp.eq.s32.totalorder %v2616, %v5914
        %vm6033 = vcmp.eq.s32.totalorder %v2616, %v5918
        %vm6034 = vcmp.eq.s32.totalorder %v2616, %v5922
        %vm6035 = vcmp.eq.s32.totalorder %v2617, %v5910
        %vm6036 = vcmp.eq.s32.totalorder %v2617, %v5914
        %vm6037 = vcmp.eq.s32.totalorder %v2617, %v5918
        %vm6038 = vcmp.eq.s32.totalorder %v2617, %v5922
        %vm6039 = vcmp.eq.s32.totalorder %v2618, %v5910
        %vm6040 = vcmp.eq.s32.totalorder %v2618, %v5914
        %vm6041 = vcmp.eq.s32.totalorder %v2618, %v5918
        %vm6042 = vcmp.eq.s32.totalorder %v2618, %v5922
        %vm6043 = vcmp.eq.s32.totalorder %v2619, %v5910
        %vm6044 = vcmp.eq.s32.totalorder %v2619, %v5914
        %vm6045 = vcmp.eq.s32.totalorder %v2619, %v5918
        %vm6046 = vcmp.eq.s32.totalorder %v2619, %v5922
        %vm6047 = vcmp.eq.s32.totalorder %v2620, %v5910
        %vm6048 = vcmp.eq.s32.totalorder %v2620, %v5914
        %vm6049 = vcmp.eq.s32.totalorder %v2620, %v5918
        %vm6050 = vcmp.eq.s32.totalorder %v2620, %v5922
        %v6053 = vlaneseq
        %v6054 = vshrl.u32 %v6053, 7
        %v6055 = vsub.s32 0, %v6054
        %v6056 = vrot.slane %v5887, %v6055
        %v6057 = vlaneseq
        %v6058 = vshrl.u32 %v6057, 7
        %v6059 = vsub.s32 4, %v6058
        %v6060 = vrot.slane %v5887, %v6059
        %v6061 = vlaneseq
        %v6062 = vshrl.u32 %v6061, 7
        %v6063 = vsub.s32 0, %v6062
        %v6064 = vrot.slane %v5888, %v6063
        %v6065 = vlaneseq
        %v6066 = vshrl.u32 %v6065, 7
        %v6067 = vsub.s32 4, %v6066
        %v6068 = vrot.slane %v5888, %v6067
        %v6073 = vlaneseq
        %v6074 = vshrl.u32 %v6073, 7
        %v6075 = vsub.s32 0, %v6074
        %v6076 = vrot.slane %v6056, %v6075
        %v6077 = vlaneseq
        %v6078 = vshrl.u32 %v6077, 7
        %v6079 = vsub.s32 0, %v6078
        %v6080 = vrot.slane %v6060, %v6079
        %v6081 = vlaneseq
        %v6082 = vshrl.u32 %v6081, 7
        %v6083 = vsub.s32 0, %v6082
        %v6084 = vrot.slane %v6064, %v6083
        %v6085 = vlaneseq
        %v6086 = vshrl.u32 %v6085, 7
        %v6087 = vsub.s32 0, %v6086
        %v6088 = vrot.slane %v6068, %v6087
        %v6089 = vsel %vm5923, %v6076, 0.0
        %v6090 = vsel %vm5924, %v6080, 0.0
        %v6091 = vsel %vm5925, %v6084, 0.0
        %v6092 = vsel %vm5926, %v6088, 0.0
        %v6093 = vsel %vm5927, %v6076, 0.0
        %v6094 = vsel %vm5928, %v6080, 0.0
        %v6095 = vsel %vm5929, %v6084, 0.0
        %v6096 = vsel %vm5930, %v6088, 0.0
        %v6097 = vsel %vm5931, %v6076, 0.0
        %v6098 = vsel %vm5932, %v6080, 0.0
        %v6099 = vsel %vm5933, %v6084, 0.0
        %v6100 = vsel %vm5934, %v6088, 0.0
        %v6101 = vsel %vm5935, %v6076, 0.0
        %v6102 = vsel %vm5936, %v6080, 0.0
        %v6103 = vsel %vm5937, %v6084, 0.0
        %v6104 = vsel %vm5938, %v6088, 0.0
        %v6105 = vsel %vm5939, %v6076, 0.0
        %v6106 = vsel %vm5940, %v6080, 0.0
        %v6107 = vsel %vm5941, %v6084, 0.0
        %v6108 = vsel %vm5942, %v6088, 0.0
        %v6109 = vsel %vm5943, %v6076, 0.0
        %v6110 = vsel %vm5944, %v6080, 0.0
        %v6111 = vsel %vm5945, %v6084, 0.0
        %v6112 = vsel %vm5946, %v6088, 0.0
        %v6113 = vsel %vm5947, %v6076, 0.0
        %v6114 = vsel %vm5948, %v6080, 0.0
        %v6115 = vsel %vm5949, %v6084, 0.0
        %v6116 = vsel %vm5950, %v6088, 0.0
        %v6117 = vsel %vm5951, %v6076, 0.0
        %v6118 = vsel %vm5952, %v6080, 0.0
        %v6119 = vsel %vm5953, %v6084, 0.0
        %v6120 = vsel %vm5954, %v6088, 0.0
        %v6121 = vsel %vm5955, %v6076, 0.0
        %v6122 = vsel %vm5956, %v6080, 0.0
        %v6123 = vsel %vm5957, %v6084, 0.0
        %v6124 = vsel %vm5958, %v6088, 0.0
        %v6125 = vsel %vm5959, %v6076, 0.0
        %v6126 = vsel %vm5960, %v6080, 0.0
        %v6127 = vsel %vm5961, %v6084, 0.0
        %v6128 = vsel %vm5962, %v6088, 0.0
        %v6129 = vsel %vm5963, %v6076, 0.0
        %v6130 = vsel %vm5964, %v6080, 0.0
        %v6131 = vsel %vm5965, %v6084, 0.0
        %v6132 = vsel %vm5966, %v6088, 0.0
        %v6133 = vsel %vm5967, %v6076, 0.0
        %v6134 = vsel %vm5968, %v6080, 0.0
        %v6135 = vsel %vm5969, %v6084, 0.0
        %v6136 = vsel %vm5970, %v6088, 0.0
        %v6137 = vsel %vm5971, %v6076, 0.0
        %v6138 = vsel %vm5972, %v6080, 0.0
        %v6139 = vsel %vm5973, %v6084, 0.0
        %v6140 = vsel %vm5974, %v6088, 0.0
        %v6141 = vsel %vm5975, %v6076, 0.0
        %v6142 = vsel %vm5976, %v6080, 0.0
        %v6143 = vsel %vm5977, %v6084, 0.0
        %v6144 = vsel %vm5978, %v6088, 0.0
        %v6145 = vsel %vm5979, %v6076, 0.0
        %v6146 = vsel %vm5980, %v6080, 0.0
        %v6147 = vsel %vm5981, %v6084, 0.0
        %v6148 = vsel %vm5982, %v6088, 0.0
        %v6149 = vsel %vm5983, %v6076, 0.0
        %v6150 = vsel %vm5984, %v6080, 0.0
        %v6151 = vsel %vm5985, %v6084, 0.0
        %v6152 = vsel %vm5986, %v6088, 0.0
        %v6153 = vsel %vm5987, %v6076, 0.0
        %v6154 = vsel %vm5988, %v6080, 0.0
        %v6155 = vsel %vm5989, %v6084, 0.0
        %v6156 = vsel %vm5990, %v6088, 0.0
        %v6157 = vsel %vm5991, %v6076, 0.0
        %v6158 = vsel %vm5992, %v6080, 0.0
        %v6159 = vsel %vm5993, %v6084, 0.0
        %v6160 = vsel %vm5994, %v6088, 0.0
        %v6161 = vsel %vm5995, %v6076, 0.0
        %v6162 = vsel %vm5996, %v6080, 0.0
        %v6163 = vsel %vm5997, %v6084, 0.0
        %v6164 = vsel %vm5998, %v6088, 0.0
        %v6165 = vsel %vm5999, %v6076, 0.0
        %v6166 = vsel %vm6000, %v6080, 0.0
        %v6167 = vsel %vm6001, %v6084, 0.0
        %v6168 = vsel %vm6002, %v6088, 0.0
        %v6169 = vsel %vm6003, %v6076, 0.0
        %v6170 = vsel %vm6004, %v6080, 0.0
        %v6171 = vsel %vm6005, %v6084, 0.0
        %v6172 = vsel %vm6006, %v6088, 0.0
        %v6173 = vsel %vm6007, %v6076, 0.0
        %v6174 = vsel %vm6008, %v6080, 0.0
        %v6175 = vsel %vm6009, %v6084, 0.0
        %v6176 = vsel %vm6010, %v6088, 0.0
        %v6177 = vsel %vm6011, %v6076, 0.0
        %v6178 = vsel %vm6012, %v6080, 0.0
        %v6179 = vsel %vm6013, %v6084, 0.0
        %v6180 = vsel %vm6014, %v6088, 0.0
        %v6181 = vsel %vm6015, %v6076, 0.0
        %v6182 = vsel %vm6016, %v6080, 0.0
        %v6183 = vsel %vm6017, %v6084, 0.0
        %v6184 = vsel %vm6018, %v6088, 0.0
        %v6185 = vsel %vm6019, %v6076, 0.0
        %v6186 = vsel %vm6020, %v6080, 0.0
        %v6187 = vsel %vm6021, %v6084, 0.0
        %v6188 = vsel %vm6022, %v6088, 0.0
        %v6189 = vsel %vm6023, %v6076, 0.0
        %v6190 = vsel %vm6024, %v6080, 0.0
        %v6191 = vsel %vm6025, %v6084, 0.0
        %v6192 = vsel %vm6026, %v6088, 0.0
        %v6193 = vsel %vm6027, %v6076, 0.0
        %v6194 = vsel %vm6028, %v6080, 0.0
        %v6195 = vsel %vm6029, %v6084, 0.0
        %v6196 = vsel %vm6030, %v6088, 0.0
        %v6197 = vsel %vm6031, %v6076, 0.0
        %v6198 = vsel %vm6032, %v6080, 0.0
        %v6199 = vsel %vm6033, %v6084, 0.0
        %v6200 = vsel %vm6034, %v6088, 0.0
        %v6201 = vsel %vm6035, %v6076, 0.0
        %v6202 = vsel %vm6036, %v6080, 0.0
        %v6203 = vsel %vm6037, %v6084, 0.0
        %v6204 = vsel %vm6038, %v6088, 0.0
        %v6205 = vsel %vm6039, %v6076, 0.0
        %v6206 = vsel %vm6040, %v6080, 0.0
        %v6207 = vsel %vm6041, %v6084, 0.0
        %v6208 = vsel %vm6042, %v6088, 0.0
        %v6209 = vsel %vm6043, %v6076, 0.0
        %v6210 = vsel %vm6044, %v6080, 0.0
        %v6211 = vsel %vm6045, %v6084, 0.0
        %v6212 = vsel %vm6046, %v6088, 0.0
        %v6213 = vsel %vm6047, %v6076, 0.0
        %v6214 = vsel %vm6048, %v6080, 0.0
        %v6215 = vsel %vm6049, %v6084, 0.0
        %v6216 = vsel %vm6050, %v6088, 0.0
        %v6217 = vadd.f32 %v5759, %v6089
        %v6218 = vadd.f32 %v5760, %v6090
        %v6219 = vadd.f32 %v5761, %v6091
        %v6220 = vadd.f32 %v5762, %v6092
        %v6221 = vadd.f32 %v5763, %v6093
        %v6222 = vadd.f32 %v5764, %v6094
        %v6223 = vadd.f32 %v5765, %v6095
        %v6224 = vadd.f32 %v5766, %v6096
        %v6225 = vadd.f32 %v5767, %v6097
        %v6226 = vadd.f32 %v5768, %v6098
        %v6227 = vadd.f32 %v5769, %v6099
        %v6228 = vadd.f32 %v5770, %v6100
        %v6229 = vadd.f32 %v5771, %v6101
        %v6230 = vadd.f32 %v5772, %v6102
        %v6231 = vadd.f32 %v5773, %v6103
        %v6232 = vadd.f32 %v5774, %v6104
        %v6233 = vadd.f32 %v5775, %v6105
        %v6234 = vadd.f32 %v5776, %v6106
        %v6235 = vadd.f32 %v5777, %v6107
        %v6236 = vadd.f32 %v5778, %v6108
        %v6237 = vadd.f32 %v5779, %v6109
        %v6238 = vadd.f32 %v5780, %v6110
        %v6239 = vadd.f32 %v5781, %v6111
        %v6240 = vadd.f32 %v5782, %v6112
        %v6241 = vadd.f32 %v5783, %v6113
        %v6242 = vadd.f32 %v5784, %v6114
        %v6243 = vadd.f32 %v5785, %v6115
        %v6244 = vadd.f32 %v5786, %v6116
        %v6245 = vadd.f32 %v5787, %v6117
        %v6246 = vadd.f32 %v5788, %v6118
        %v6247 = vadd.f32 %v5789, %v6119
        %v6248 = vadd.f32 %v5790, %v6120
        %v6249 = vadd.f32 %v5791, %v6121
        %v6250 = vadd.f32 %v5792, %v6122
        %v6251 = vadd.f32 %v5793, %v6123
        %v6252 = vadd.f32 %v5794, %v6124
        %v6253 = vadd.f32 %v5795, %v6125
        %v6254 = vadd.f32 %v5796, %v6126
        %v6255 = vadd.f32 %v5797, %v6127
        %v6256 = vadd.f32 %v5798, %v6128
        %v6257 = vadd.f32 %v5799, %v6129
        %v6258 = vadd.f32 %v5800, %v6130
        %v6259 = vadd.f32 %v5801, %v6131
        %v6260 = vadd.f32 %v5802, %v6132
        %v6261 = vadd.f32 %v5803, %v6133
        %v6262 = vadd.f32 %v5804, %v6134
        %v6263 = vadd.f32 %v5805, %v6135
        %v6264 = vadd.f32 %v5806, %v6136
        %v6265 = vadd.f32 %v5807, %v6137
        %v6266 = vadd.f32 %v5808, %v6138
        %v6267 = vadd.f32 %v5809, %v6139
        %v6268 = vadd.f32 %v5810, %v6140
        %v6269 = vadd.f32 %v5811, %v6141
        %v6270 = vadd.f32 %v5812, %v6142
        %v6271 = vadd.f32 %v5813, %v6143
        %v6272 = vadd.f32 %v5814, %v6144
        %v6273 = vadd.f32 %v5815, %v6145
        %v6274 = vadd.f32 %v5816, %v6146
        %v6275 = vadd.f32 %v5817, %v6147
        %v6276 = vadd.f32 %v5818, %v6148
        %v6277 = vadd.f32 %v5819, %v6149
        %v6278 = vadd.f32 %v5820, %v6150
        %v6279 = vadd.f32 %v5821, %v6151
        %v6280 = vadd.f32 %v5822, %v6152
        %v6281 = vadd.f32 %v5823, %v6153
        %v6282 = vadd.f32 %v5824, %v6154
        %v6283 = vadd.f32 %v5825, %v6155
        %v6284 = vadd.f32 %v5826, %v6156
        %v6285 = vadd.f32 %v5827, %v6157
        %v6286 = vadd.f32 %v5828, %v6158
        %v6287 = vadd.f32 %v5829, %v6159
        %v6288 = vadd.f32 %v5830, %v6160
        %v6289 = vadd.f32 %v5831, %v6161
        %v6290 = vadd.f32 %v5832, %v6162
        %v6291 = vadd.f32 %v5833, %v6163
        %v6292 = vadd.f32 %v5834, %v6164
        %v6293 = vadd.f32 %v5835, %v6165
        %v6294 = vadd.f32 %v5836, %v6166
        %v6295 = vadd.f32 %v5837, %v6167
        %v6296 = vadd.f32 %v5838, %v6168
        %v6297 = vadd.f32 %v5839, %v6169
        %v6298 = vadd.f32 %v5840, %v6170
        %v6299 = vadd.f32 %v5841, %v6171
        %v6300 = vadd.f32 %v5842, %v6172
        %v6301 = vadd.f32 %v5843, %v6173
        %v6302 = vadd.f32 %v5844, %v6174
        %v6303 = vadd.f32 %v5845, %v6175
        %v6304 = vadd.f32 %v5846, %v6176
        %v6305 = vadd.f32 %v5847, %v6177
        %v6306 = vadd.f32 %v5848, %v6178
        %v6307 = vadd.f32 %v5849, %v6179
        %v6308 = vadd.f32 %v5850, %v6180
        %v6309 = vadd.f32 %v5851, %v6181
        %v6310 = vadd.f32 %v5852, %v6182
        %v6311 = vadd.f32 %v5853, %v6183
        %v6312 = vadd.f32 %v5854, %v6184
        %v6313 = vadd.f32 %v5855, %v6185
        %v6314 = vadd.f32 %v5856, %v6186
        %v6315 = vadd.f32 %v5857, %v6187
        %v6316 = vadd.f32 %v5858, %v6188
        %v6317 = vadd.f32 %v5859, %v6189
        %v6318 = vadd.f32 %v5860, %v6190
        %v6319 = vadd.f32 %v5861, %v6191
        %v6320 = vadd.f32 %v5862, %v6192
        %v6321 = vadd.f32 %v5863, %v6193
        %v6322 = vadd.f32 %v5864, %v6194
        %v6323 = vadd.f32 %v5865, %v6195
        %v6324 = vadd.f32 %v5866, %v6196
        %v6325 = vadd.f32 %v5867, %v6197
        %v6326 = vadd.f32 %v5868, %v6198
        %v6327 = vadd.f32 %v5869, %v6199
        %v6328 = vadd.f32 %v5870, %v6200
        %v6329 = vadd.f32 %v5871, %v6201
        %v6330 = vadd.f32 %v5872, %v6202
        %v6331 = vadd.f32 %v5873, %v6203
        %v6332 = vadd.f32 %v5874, %v6204
        %v6333 = vadd.f32 %v5875, %v6205
        %v6334 = vadd.f32 %v5876, %v6206
        %v6335 = vadd.f32 %v5877, %v6207
        %v6336 = vadd.f32 %v5878, %v6208
        %v6337 = vadd.f32 %v5879, %v6209
        %v6338 = vadd.f32 %v5880, %v6210
        %v6339 = vadd.f32 %v5881, %v6211
        %v6340 = vadd.f32 %v5882, %v6212
        %v6341 = vadd.f32 %v5883, %v6213
        %v6342 = vadd.f32 %v5884, %v6214
        %v6343 = vadd.f32 %v5885, %v6215
        %v6344 = vadd.f32 %v5886, %v6216
        %v6345 = vld [vmem:[#allocation5] sm:$0xcc]
        %v6347 = vcombine.high %v6345, %v6345
        %v6348 = vrot.slane %v6345, 2
        %v6349 = vrot.slane %v6347, 2
        %6352 = vmatprep.subr.mxu0 %v6218
        %6353 = vmatpush1.msra.mxu0 %v6217
        %6354 = vmatprep.subr.mxu0 %v6222
        %6355 = vmatpush1.msra.mxu0 %v6221
        %6356 = vmatprep.subr.mxu0 %v6226
        %6357 = vmatpush1.msra.mxu0 %v6225
        %6358 = vmatprep.subr.mxu0 %v6230
        %6359 = vmatpush1.msra.mxu0 %v6229
        %6360 = vmatprep.subr.mxu0 %v6234
        %6361 = vmatpush1.msra.mxu0 %v6233
        %6362 = vmatprep.subr.mxu0 %v6238
        %6363 = vmatpush1.msra.mxu0 %v6237
        %6364 = vmatprep.subr.mxu0 %v6242
        %6365 = vmatpush1.msra.mxu0 %v6241
        %6366 = vmatprep.subr.mxu0 %v6246
        %6367 = vmatpush1.msra.mxu0 %v6245
        %6368 = vmatprep.subr.mxu0 %v6250
        %6369 = vmatpush1.msra.mxu0 %v6249
        %6370 = vmatprep.subr.mxu0 %v6254
        %6371 = vmatpush1.msra.mxu0 %v6253
        %6372 = vmatprep.subr.mxu0 %v6258
        %6373 = vmatpush1.msra.mxu0 %v6257
        %6374 = vmatprep.subr.mxu0 %v6262
        %6375 = vmatpush1.msra.mxu0 %v6261
        %6376 = vmatprep.subr.mxu0 %v6266
        %6377 = vmatpush1.msra.mxu0 %v6265
        %6378 = vmatprep.subr.mxu0 %v6270
        %6379 = vmatpush1.msra.mxu0 %v6269
        %6380 = vmatprep.subr.mxu0 %v6274
        %6381 = vmatpush1.msra.mxu0 %v6273
        %6382 = vmatprep.subr.mxu0 %v6278
        %6383 = vmatpush1.msra.mxu0 %v6277
        %6384 = vmatprep.subr.mxu0 %v6282
        %6385 = vmatpush1.msra.mxu0 %v6281
        %6386 = vmatprep.subr.mxu0 %v6286
        %6387 = vmatpush1.msra.mxu0 %v6285
        %6388 = vmatprep.subr.mxu0 %v6290
        %6389 = vmatpush1.msra.mxu0 %v6289
        %6390 = vmatprep.subr.mxu0 %v6294
        %6391 = vmatpush1.msra.mxu0 %v6293
        %6392 = vmatprep.subr.mxu0 %v6298
        %6393 = vmatpush1.msra.mxu0 %v6297
        %6394 = vmatprep.subr.mxu0 %v6302
        %6395 = vmatpush1.msra.mxu0 %v6301
        %6396 = vmatprep.subr.mxu0 %v6306
        %6397 = vmatpush1.msra.mxu0 %v6305
        %6398 = vmatprep.subr.mxu0 %v6310
        %6399 = vmatpush1.msra.mxu0 %v6309
        %6400 = vmatprep.subr.mxu0 %v6314
        %6401 = vmatpush1.msra.mxu0 %v6313
        %6402 = vmatprep.subr.mxu0 %v6318
        %6403 = vmatpush1.msra.mxu0 %v6317
        %6404 = vmatprep.subr.mxu0 %v6322
        %6405 = vmatpush1.msra.mxu0 %v6321
        %6406 = vmatprep.subr.mxu0 %v6326
        %6407 = vmatpush1.msra.mxu0 %v6325
        %6408 = vmatprep.subr.mxu0 %v6330
        %6409 = vmatpush1.msra.mxu0 %v6329
        %6410 = vmatprep.subr.mxu0 %v6334
        %6411 = vmatpush1.msra.mxu0 %v6333
        %6412 = vmatprep.subr.mxu0 %v6338
        %6413 = vmatpush1.msra.mxu0 %v6337
        %6414 = vmatprep.subr.mxu0 %v6342
        %6415 = vmatpush1.msra.mxu0 %v6341
        %6416 = vmatprep.mubr.f32.mxu0 %v6349
        %6417 = vmatmul.mubr.f32.gmra.mrb[0].mxu0 %v6348
        %v6418 = vpop.f32.mrb[0].mxu0
        %v6419 = vadd.f32 0.0, %v6418
        %v6420 = vpop.f32.mrb[0].mxu0
        %v6421 = vadd.f32 0.0, %v6420
        %6422 = vdwg.mxu0
        %6423 = vmatprep.subr.mxu0 %v6220
        %6424 = vmatpush1.msra.mxu0 %v6219
        %6425 = vmatprep.subr.mxu0 %v6224
        %6426 = vmatpush1.msra.mxu0 %v6223
        %6427 = vmatprep.subr.mxu0 %v6228
        %6428 = vmatpush1.msra.mxu0 %v6227
        %6429 = vmatprep.subr.mxu0 %v6232
        %6430 = vmatpush1.msra.mxu0 %v6231
        %6431 = vmatprep.subr.mxu0 %v6236
        %6432 = vmatpush1.msra.mxu0 %v6235
        %6433 = vmatprep.subr.mxu0 %v6240
        %6434 = vmatpush1.msra.mxu0 %v6239
        %6435 = vmatprep.subr.mxu0 %v6244
        %6436 = vmatpush1.msra.mxu0 %v6243
        %6437 = vmatprep.subr.mxu0 %v6248
        %6438 = vmatpush1.msra.mxu0 %v6247
        %6439 = vmatprep.subr.mxu0 %v6252
        %6440 = vmatpush1.msra.mxu0 %v6251
        %6441 = vmatprep.subr.mxu0 %v6256
        %6442 = vmatpush1.msra.mxu0 %v6255
        %6443 = vmatprep.subr.mxu0 %v6260
        %6444 = vmatpush1.msra.mxu0 %v6259
        %6445 = vmatprep.subr.mxu0 %v6264
        %6446 = vmatpush1.msra.mxu0 %v6263
        %6447 = vmatprep.subr.mxu0 %v6268
        %6448 = vmatpush1.msra.mxu0 %v6267
        %6449 = vmatprep.subr.mxu0 %v6272
        %6450 = vmatpush1.msra.mxu0 %v6271
        %6451 = vmatprep.subr.mxu0 %v6276
        %6452 = vmatpush1.msra.mxu0 %v6275
        %6453 = vmatprep.subr.mxu0 %v6280
        %6454 = vmatpush1.msra.mxu0 %v6279
        %6455 = vmatprep.subr.mxu0 %v6284
        %6456 = vmatpush1.msra.mxu0 %v6283
        %6457 = vmatprep.subr.mxu0 %v6288
        %6458 = vmatpush1.msra.mxu0 %v6287
        %6459 = vmatprep.subr.mxu0 %v6292
        %6460 = vmatpush1.msra.mxu0 %v6291
        %6461 = vmatprep.subr.mxu0 %v6296
        %6462 = vmatpush1.msra.mxu0 %v6295
        %6463 = vmatprep.subr.mxu0 %v6300
        %6464 = vmatpush1.msra.mxu0 %v6299
        %6465 = vmatprep.subr.mxu0 %v6304
        %6466 = vmatpush1.msra.mxu0 %v6303
        %6467 = vmatprep.subr.mxu0 %v6308
        %6468 = vmatpush1.msra.mxu0 %v6307
        %6469 = vmatprep.subr.mxu0 %v6312
        %6470 = vmatpush1.msra.mxu0 %v6311
        %6471 = vmatprep.subr.mxu0 %v6316
        %6472 = vmatpush1.msra.mxu0 %v6315
        %6473 = vmatprep.subr.mxu0 %v6320
        %6474 = vmatpush1.msra.mxu0 %v6319
        %6475 = vmatprep.subr.mxu0 %v6324
        %6476 = vmatpush1.msra.mxu0 %v6323
        %6477 = vmatprep.subr.mxu0 %v6328
        %6478 = vmatpush1.msra.mxu0 %v6327
        %6479 = vmatprep.subr.mxu0 %v6332
        %6480 = vmatpush1.msra.mxu0 %v6331
        %6481 = vmatprep.subr.mxu0 %v6336
        %6482 = vmatpush1.msra.mxu0 %v6335
        %6483 = vmatprep.subr.mxu0 %v6340
        %6484 = vmatpush1.msra.mxu0 %v6339
        %6485 = vmatprep.subr.mxu0 %v6344
        %6486 = vmatpush1.msra.mxu0 %v6343
        %6487 = vmatprep.mubr.f32.mxu0 %v6349
        %6488 = vmatmul.mubr.f32.gmra.mrb[0].mxu0 %v6348
        %v6489 = vpop.f32.mrb[0].mxu0
        %v6490 = vadd.f32 0.0, %v6489
        %v6491 = vpop.f32.mrb[0].mxu0
        %v6492 = vadd.f32 0.0, %v6491
        %6493 = vdwg.mxu0
        %v6498 = vrot.slane %v6419, 6
        %v6499 = vrot.slane %v6421, 6
        %v6500 = vrot.slane %v6490, 6
        %v6501 = vrot.slane %v6492, 6
        %6506 = vst [vmem:[%s172] sm:$0xc] %v6498
        %6507 = vst [vmem:[%s172 + $0x8] sm:$0xc] %v6499
        %6508 = vst [vmem:[%s172 + $0x10] sm:$0xc] %v6500
        %6509 = vst [vmem:[%s172 + $0x18] sm:$0xc] %v6501
        %6510 = vst [vmem:[%s172] sm:$0x30] 0.0
        %6511 = vst [vmem:[%s172 + $0x8] sm:$0x30] 0.0
        %6512 = vst [vmem:[%s172 + $0x10] sm:$0x30] 0.0
        %6513 = vst [vmem:[%s172 + $0x18] sm:$0x30] 0.0
        %6514 = vst [vmem:[%s172] sm:$0xc0] 0.0
        %6515 = vst [vmem:[%s172 + $0x8] sm:$0xc0] 0.0
        %6516 = vst [vmem:[%s172 + $0x10] sm:$0xc0] 0.0
        %6517 = vst [vmem:[%s172 + $0x18] sm:$0xc0] 0.0
        %s6518 = sand.u32 %s75, 1
        %s6519 = scalar_lea.sflag [#allocation4], %s6518
        %s6520 = sand.u32 %s75, 1
        %s6521 = smul.addr %s6520, 32
        %s6522 = scalar_lea.vmem [#allocation7], %s6521
        // Predicated region
        $region37: #{tpu_custom_call.1} parent=27 // pred_check
          %p6523 = pneg %p85
        $region38: #{tpu_custom_call.1} parent=27 // pred_check_branch
          %6525 = sbr.rel (%p6523) target = $region40
        $region39: #{tpu_custom_call.1} parent=27 // pred_region
          %s6526 = smul.u32 4, %s20
          %s6528 = ssub.s32 512, 512
          %6529 = vsyncadd %s6519, %s6528
          %s6530 = smul.addr %s6526, 128
          %s6531 = scalar_lea.hbm %s2, %s6530
          %s6533 = sshll.u32 %s6522, 4
          %s6534 = int_to_ptr.vmem [resolvable:$true] %s6533
          %6536 = dma.vmem_to_hbm [thread:$0]  %s6534, 512, %s6531, %s6519
        $region40: #{tpu_custom_call.1} parent=27 // pred_fallthru
          _
      $region28: #{tpu_custom_call.1} parent=5 // pred_fallthru
        _
      %p6537 = scmp.le.s32.totalorder 2, %s15
      // Predicated region
      $region41: #{tpu_custom_call.1} parent=5 // pred_check
        %p6538 = pneg %p6537
      $region42: #{tpu_custom_call.1} parent=5 // pred_check_branch
        %6540 = sbr.rel (%p6538) target = $region44
      $region43: #{tpu_custom_call.1} parent=5 // pred_region
        %s6541 = ssub.s32 %s15, 2
        // Predicated region
        $region45: #{tpu_custom_call.1} parent=43 // pred_check
          %p6542 = pneg %p91
        $region46: #{tpu_custom_call.1} parent=43 // pred_check_branch
          %6544 = sbr.rel (%p6542) target = $region48
        $region47: #{tpu_custom_call.1} parent=43 // pred_region
          %s6545 = sand.u32 %s76, 1
          %s6546 = scalar_lea.sflag [#allocation4], %s6545
          %s6547 = sand.u32 %s76, 1
          %s6548 = smul.addr %s6547, 32
          %s6549 = scalar_lea.vmem [#allocation7], %s6548
          %6550 = dma.done %s6546, 512
        $region48: #{tpu_custom_call.1} parent=43 // pred_fallthru
          _
      $region44: #{tpu_custom_call.1} parent=5 // pred_fallthru
        _
    $region6: #{tpu_custom_call.1} parent=1 // loop_footer
      %s19 = sadd.s32 1, %s15
    $region7: #{tpu_custom_call.1} parent=1 // loop_footer_branch
      %14 = sbr.rel target = $region3
    $region8: #{tpu_custom_call.1} parent=1 // loop_exit
      _
    %6551 = vsyncpa [#allocation3], 1
    %s6552 = scalar_lea.sflag [#allocation3], 1
    %6553 = vsyncpa %s6552, 1
    %6554 = vsyncpa [#allocation6], 1
    %6555 = vsyncpa [#allocation4], 1
    %s6556 = scalar_lea.sflag [#allocation4], 1
    %6557 = vsyncpa %s6556, 1

</llo_original>
